<compile_context>
chip_gen: v7x
topology: tpu7x:2x2x1
jax: 0.10.0
libtpu: 0.0.40
codegen_flags: <defaults>
</compile_context>

<pallas_src>
import functools

import jax
import jax.numpy as jnp
from jax.experimental import pallas as pl
from jax.experimental.pallas import tpu as pltpu


# ---------------------------------------------------------------------------
# Fused kernel: Q|K|V projections + per-group MHA + wo + add/LN1 + FFN + add/LN2
# ---------------------------------------------------------------------------
def _group_attn_ffn_kernel(n_head, d_head, n_grp, grp_size, eps, approx_recip,
                           fea_ref, pos_ref, mbias_ref,
                           wqk_ref, bqk_ref, wv_ref, bv_ref, wo_ref, bo_ref,
                           g1_ref, be1_ref, w1_ref, b1_ref, w2_ref, b2_ref,
                           g2_ref, be2_ref,
                           out_ref):
    f32 = jnp.float32
    bf16 = jnp.bfloat16
    d_f = n_head * d_head
    rows = n_grp * grp_size

    # Residual / V input (f32); q = k input is feat + pos, add fused in-kernel.
    res = fea_ref[...]                                       # (rows, d_f) f32
    x_qk = (res + pos_ref[...].astype(f32)).astype(bf16)
    x_v = res.astype(bf16)

    # Fused Q|K projection (softmax scale folded into wq/bq) + V projection.
    qkp = jnp.dot(x_qk, wqk_ref[...], preferred_element_type=f32) + bqk_ref[...]
    vp = jnp.dot(x_v, wv_ref[...], preferred_element_type=f32) + bv_ref[...]

    # Cast once; reshapes only split leading dims (layout-cheap).
    q3 = qkp[:, :d_f].astype(bf16).reshape(n_grp, grp_size, d_f)
    k3 = qkp[:, d_f:].astype(bf16).reshape(n_grp, grp_size, d_f)
    v3 = vp.astype(bf16).reshape(n_grp, grp_size, d_f)
    mbias = mbias_ref[...][:, None, :]            # (n_grp, 1, S) key-mask bias
    wo = wo_ref[...]                              # (d_f, d_f) bf16

    # TODO(synk): replace with a single jnp.einsum('gqhd,gkhd->ghqk') pair once
    # multi-batch-dim dot_general lowers on the target Mosaic version.
    attn = None
    for h in range(n_head):                       # static 4-iteration loop
        sl = slice(h * d_head, (h + 1) * d_head)
        s = jnp.einsum("gqd,gkd->gqk", q3[:, :, sl], k3[:, :, sl],
                       preferred_element_type=f32)           # (G, S, S)
        s = s + mbias
        m = jnp.max(s, axis=-1, keepdims=True)
        e = jnp.exp(s - m)
        denom = jnp.sum(e, axis=-1, keepdims=True)
        if approx_recip:
            p = e * pl.reciprocal(denom, approx=True)        # EUP divide
        else:
            p = e / denom                                    # exact (checks)
        pv = jnp.einsum("gqk,gkd->gqd", p.astype(bf16), v3[:, :, sl],
                        preferred_element_type=f32)          # (G, S, d_h)
        # Fold the head directly into the output projection (no lane-concat).
        contrib = jnp.dot(pv.reshape(rows, d_head).astype(bf16), wo[sl, :],
                          preferred_element_type=f32)
        attn = contrib if attn is None else attn + contrib
    attn = attn + bo_ref[...]

    def layernorm(x, g, b):
        mu = jnp.mean(x, axis=-1, keepdims=True)
        xc = x - mu
        var = jnp.mean(xc * xc, axis=-1, keepdims=True)
        return xc * jax.lax.rsqrt(var + eps) * g + b

    # add + LN1 + FFN + add + LN2 on the same VMEM-resident rows.
    xn = layernorm(attn + res, g1_ref[...], be1_ref[...])
    h1 = jnp.dot(xn.astype(bf16), w1_ref[...],
                 preferred_element_type=f32) + b1_ref[...]
    h1 = jnp.maximum(h1, 0.0)                                # relu
    y = jnp.dot(h1.astype(bf16), w2_ref[...],
                preferred_element_type=f32) + b2_ref[...]
    out_ref[...] = layernorm(y + xn, g2_ref[...], be2_ref[...]).astype(out_ref.dtype)


# ---------------------------------------------------------------------------
# Wrapper
# ---------------------------------------------------------------------------
def _pick_groups_per_block(n_groups, group_size, target_rows=256, min_grid=4):
    """Largest divisor of n_groups keeping rows <= target and grid >= min_grid."""
    cands = [d for d in range(1, n_groups + 1)
             if n_groups % d == 0
             and ((d * group_size) % 8 == 0 or d == n_groups)]
    fits = [d for d in cands if d * group_size <= target_rows]
    deep = [d for d in fits if n_groups // d >= min_grid]
    if deep:
        return max(deep)
    if fits:
        return max(fits)
    return min(cands)


def group_attention_forward(feat, p2g_idx, g2p_flat_idx, pig_msk, pos_emb, params,
                            n_head, *, target_rows=256, min_grid=4,
                            approx_softmax=True, interpret=False):
    """Pallas implementation of GroupAttention.forward (eval mode)."""
    N, d_f = feat.shape
    n_groups, group_size = p2g_idx.shape
    d_h = d_f // n_head
    scale = float(d_f) ** (-0.5)
    d_ffn = params["w1"].shape[1]
    bf16, f32 = jnp.bfloat16, jnp.float32
    full2 = lambda g: (0, 0)

    gb = _pick_groups_per_block(n_groups, group_size, target_rows, min_grid)
    rows = gb * group_size
    n_steps = n_groups // gb
    total_rows = n_groups * group_size

    # ---- point -> group gather (XLA glue; see TODO in header) ----
    grp_fea = feat[p2g_idx].reshape(total_rows, d_f)                     # f32
    grp_pos = pos_emb[p2g_idx].reshape(total_rows, d_f).astype(bf16)
    # key_mask -> additive bias, lane-packed 2-D (G, S); large finite negative
    # keeps a fully-masked group NaN-free.
    mbias = jnp.where(pig_msk, -1e30, 0.0).astype(f32)                   # (G, S)

    # ---- weights: fold softmax scale into wq/bq, fuse Q|K, cast to bf16 ----
    wqk = jnp.concatenate([params["wq"] * scale, params["wk"]], axis=1).astype(bf16)
    bqk = jnp.concatenate([params["bq"] * scale, params["bk"]], axis=1).astype(f32)

    # ---- advisory cost estimate for XLA scheduling around the custom call ----
    flops = (2 * total_rows * d_f * (2 * d_f)                    # Q|K proj
             + 2 * total_rows * d_f * d_f                        # V proj
             + 4 * n_groups * n_head * group_size * group_size * d_h  # scores+PV
             + 2 * total_rows * d_f * d_f                        # output proj
             + 2 * total_rows * d_f * d_ffn                      # FFN up
             + 2 * total_rows * d_ffn * d_f)                     # FFN down
    transcendentals = (n_groups * n_head * group_size * group_size
                       + 2 * total_rows)
    bytes_accessed = (4 * total_rows * d_f + 2 * total_rows * d_f
                      + 4 * n_groups * group_size
                      + 2 * (2 * d_f * d_f + 2 * d_f * d_f + d_f * d_ffn + d_ffn * d_f)
                      + 4 * (9 * d_f + d_ffn)
                      + 4 * total_rows * d_f)

    kernel = functools.partial(_group_attn_ffn_kernel, n_head, d_h, gb,
                               group_size, 1e-5, approx_softmax)

    out_grouped = pl.pallas_call(
        kernel,
        out_shape=jax.ShapeDtypeStruct((total_rows, d_f), f32),
        grid=(n_steps,),
        in_specs=[
            pl.BlockSpec((rows, d_f), lambda g: (g, 0)),          # grouped feat
            pl.BlockSpec((rows, d_f), lambda g: (g, 0)),          # grouped pos
            pl.BlockSpec((gb, group_size), lambda g: (g, 0)),     # key-mask bias
            pl.BlockSpec((d_f, 2 * d_f), full2), pl.BlockSpec((1, 2 * d_f), full2),  # wqk,bqk
            pl.BlockSpec((d_f, d_f), full2), pl.BlockSpec((1, d_f), full2),          # wv,bv
            pl.BlockSpec((d_f, d_f), full2), pl.BlockSpec((1, d_f), full2),          # wo,bo
            pl.BlockSpec((1, d_f), full2), pl.BlockSpec((1, d_f), full2),            # ln1
            pl.BlockSpec((d_f, d_ffn), full2), pl.BlockSpec((1, d_ffn), full2),      # w1,b1
            pl.BlockSpec((d_ffn, d_f), full2), pl.BlockSpec((1, d_f), full2),        # w2,b2
            pl.BlockSpec((1, d_f), full2), pl.BlockSpec((1, d_f), full2),            # ln2
        ],
        out_specs=pl.BlockSpec((rows, d_f), lambda g: (g, 0)),
        compiler_params=None if interpret else pltpu.CompilerParams(
            dimension_semantics=("parallel",)),
        cost_estimate=None if interpret else pl.CostEstimate(
            flops=int(flops), transcendentals=int(transcendentals),
            bytes_accessed=int(bytes_accessed)),
        interpret=interpret,
    )(grp_fea, grp_pos, mbias,
      wqk, bqk,
      params["wv"].astype(bf16), params["bv"],
      params["wo"].astype(bf16), params["bo"],
      params["ln1_g"], params["ln1_b"],
      params["w1"].astype(bf16), params["b1"],
      params["w2"].astype(bf16), params["b2"],
      params["ln2_g"], params["ln2_b"])

    # ---- group -> point reorder of the final output only (XLA glue) ----
    # Valid because LN/FFN are row-wise and slot g2p_flat_idx[i] holds point i.
    return out_grouped[g2p_flat_idx]


# ---------------------------------------------------------------------------
# Pure-JAX f32 reference (mirrors the PyTorch forward, eval mode)
# ---------------------------------------------------------------------------
def reference_forward(feat, p2g_idx, g2p_flat_idx, pig_msk, pos_emb, params, n_head):
    N, d_f = feat.shape
    G, S = p2g_idx.shape
    d_h = d_f // n_head
    scale = float(d_f) ** (-0.5)

    grp_fea = feat[p2g_idx]
    grp_pos = pos_emb[p2g_idx]
    qk = grp_fea + grp_pos
    v_in = grp_fea

    q = qk @ params["wq"] + params["bq"]
    k = qk @ params["wk"] + params["bk"]
    v = v_in @ params["wv"] + params["bv"]

    def split_heads(x):   # (G, S, d_f) -> (G, n_head, S, d_h)
        return x.reshape(G, S, n_head, d_h).transpose(0, 2, 1, 3)

    qh, kh, vh = split_heads(q), split_heads(k), split_heads(v)
    attn = scale * jnp.einsum("ghqd,ghkd->ghqk", qh, kh)
    bias = jnp.where(pig_msk, -jnp.inf, 0.0)[:, None, None, :]
    attn = attn + bias
    p = jax.nn.softmax(attn, axis=-1)
    x = jnp.einsum("ghqk,ghkd->ghqd", p, vh)
    x = x.transpose(0, 2, 1, 3).reshape(G, S, d_f)
    x = x @ params["wo"] + params["bo"]

    attn_pts = x.reshape(G * S, d_f)[g2p_flat_idx]

    def layernorm(x, g, b, eps=1e-5):
        mu = jnp.mean(x, axis=-1, keepdims=True)
        var = jnp.mean((x - mu) ** 2, axis=-1, keepdims=True)
        return (x - mu) / jnp.sqrt(var + eps) * g + b

    feat1 = layernorm(attn_pts + feat, params["ln1_g"], params["ln1_b"])
    h = jnp.maximum(feat1 @ params["w1"] + params["b1"], 0.0)
    y = h @ params["w2"] + params["b2"]
    return layernorm(y + feat1, params["ln2_g"], params["ln2_b"])


# ---------------------------------------------------------------------------
# Deterministic parameter init (matches nn.Module __init__ shapes)
# ---------------------------------------------------------------------------
def xavier_uniform(key, fan_in, fan_out):
    bound = (6.0 / (fan_in + fan_out)) ** 0.5
    return jax.random.uniform(key, (fan_in, fan_out), jnp.float32, -bound, bound)


def make_params(key, d_feat, d_ffn):
    ks = jax.random.split(key, 6)
    z = lambda n: jnp.zeros((1, n), jnp.float32)
    return {
        # attention linears stored as (in, out) so kernels compute x @ W + b
        "wq": xavier_uniform(ks[0], d_feat, d_feat), "bq": z(d_feat),
        "wk": xavier_uniform(ks[1], d_feat, d_feat), "bk": z(d_feat),
        "wv": xavier_uniform(ks[2], d_feat, d_feat), "bv": z(d_feat),
        "wo": xavier_uniform(ks[3], d_feat, d_feat), "bo": z(d_feat),
        # layer norms
        "ln1_g": jnp.ones((1, d_feat), jnp.float32), "ln1_b": z(d_feat),
        "ln2_g": jnp.ones((1, d_feat), jnp.float32), "ln2_b": z(d_feat),
        # ffn
        "w1": xavier_uniform(ks[4], d_feat, d_ffn), "b1": z(d_ffn),
        "w2": xavier_uniform(ks[5], d_ffn, d_feat), "b2": z(d_feat),
    }


# ---------------------------------------------------------------------------
if __name__ == "__main__":
    d_feat, d_ffn, n_head = 64, 128, 4
    n_groups, group_size = 64, 8
    N = n_groups * group_size

    key = jax.random.PRNGKey(0)
    k_feat, k_pos, k_perm, k_par = jax.random.split(key, 4)

    feat = jax.random.normal(k_feat, (N, d_feat), jnp.float32)
    pos_emb = jax.random.normal(k_pos, (N, d_feat), jnp.float32)

    # point->group assignment: a permutation of all N points into G groups of S
    perm = jax.random.permutation(k_perm, N)
    p2g_idx = perm.reshape(n_groups, group_size)                  # (G, S)
    # inverse mapping: flat index into (G*S) per point
    g2p_flat_idx = jnp.zeros((N,), jnp.int32).at[p2g_idx.reshape(-1)].set(
        jnp.arange(N, dtype=jnp.int32))
    # key mask: last slot of every group is masked (True == padded/invalid)
    pig_msk = jnp.zeros((n_groups, group_size), jnp.bool_).at[:, -1].set(True)

    params = make_params(k_par, d_feat, d_ffn)

    # Fast TPU path (bf16 MXU inputs, approx reciprocal).
    out = group_attention_forward(feat, p2g_idx, g2p_flat_idx, pig_msk, pos_emb,
                                  params, n_head)
    out = jax.block_until_ready(out)

    # Correctness build: same kernel in interpret mode with exact softmax divide
    # -> tight comparison that catches TPU lowering / layout bugs without the
    # bf16-vs-f32 reference gap hiding them.
    chk = group_attention_forward(feat, p2g_idx, g2p_flat_idx, pig_msk, pos_emb,
                                  params, n_head, approx_softmax=False,
                                  interpret=True)
    chk = jax.block_until_ready(chk)

    ref = reference_forward(feat, p2g_idx, g2p_flat_idx, pig_msk, pos_emb,
                            params, n_head)

    assert out.shape == (N, d_feat)
    assert bool(jnp.isfinite(out).all())
    # Loose check vs. pure-f32 reference: gap is dominated by bf16 MXU inputs
    # plus the EUP approximate reciprocal on the fast path.
    assert jnp.allclose(out, ref, atol=1e-1, rtol=1e-1), \
        f"max abs err vs f32 reference {jnp.max(jnp.abs(out - ref))}"
    # Tight check vs. the numerics-matched interpret run of the same kernel.
    assert jnp.allclose(out, chk, atol=2e-2, rtol=2e-2), \
        f"max abs err vs interpret kernel {jnp.max(jnp.abs(out - chk))}"
    print("KERNEL_OK")
</pallas_src>

<mosaic_0001>
module attributes {stable_mosaic.version = 11 : i64} {
  func.func @_group_attn_ffn_kernel(%arg0: i32, %arg1: memref<128x64xf32, #tpu.memory_space<vmem>>, %arg2: memref<128x64xbf16, #tpu.memory_space<vmem>>, %arg3: memref<16x8xf32, #tpu.memory_space<vmem>>, %arg4: memref<64x128xbf16, #tpu.memory_space<vmem>>, %arg5: memref<1x128xf32, #tpu.memory_space<vmem>>, %arg6: memref<64x64xbf16, #tpu.memory_space<vmem>>, %arg7: memref<1x64xf32, #tpu.memory_space<vmem>>, %arg8: memref<64x64xbf16, #tpu.memory_space<vmem>>, %arg9: memref<1x64xf32, #tpu.memory_space<vmem>>, %arg10: memref<1x64xf32, #tpu.memory_space<vmem>>, %arg11: memref<1x64xf32, #tpu.memory_space<vmem>>, %arg12: memref<64x128xbf16, #tpu.memory_space<vmem>>, %arg13: memref<1x128xf32, #tpu.memory_space<vmem>>, %arg14: memref<128x64xbf16, #tpu.memory_space<vmem>>, %arg15: memref<1x64xf32, #tpu.memory_space<vmem>>, %arg16: memref<1x64xf32, #tpu.memory_space<vmem>>, %arg17: memref<1x64xf32, #tpu.memory_space<vmem>>, %arg18: memref<128x64xf32, #tpu.memory_space<vmem>>) attributes {dimension_semantics = [#tpu.dimension_semantics<parallel>], iteration_bounds = array<i64: 4>, scalar_prefetch = 0 : i64, scratch_operands = 0 : i64, tpu.core_type = #tpu.core_type<tc>, window_params = [{transform_indices = @transform_0, window_bounds = array<i64: 128, 64>}, {transform_indices = @transform_1, window_bounds = array<i64: 128, 64>}, {transform_indices = @transform_2, window_bounds = array<i64: 16, 8>}, {pipeline_mode = #tpu.pipeline_mode<synchronous>, transform_indices = @transform_3, window_bounds = array<i64: 64, 128>}, {pipeline_mode = #tpu.pipeline_mode<synchronous>, transform_indices = @transform_4, window_bounds = array<i64: 1, 128>}, {pipeline_mode = #tpu.pipeline_mode<synchronous>, transform_indices = @transform_5, window_bounds = array<i64: 64, 64>}, {pipeline_mode = #tpu.pipeline_mode<synchronous>, transform_indices = @transform_6, window_bounds = array<i64: 1, 64>}, {pipeline_mode = #tpu.pipeline_mode<synchronous>, transform_indices = @transform_7, window_bounds = array<i64: 64, 64>}, {pipeline_mode = #tpu.pipeline_mode<synchronous>, transform_indices = @transform_8, window_bounds = array<i64: 1, 64>}, {pipeline_mode = #tpu.pipeline_mode<synchronous>, transform_indices = @transform_9, window_bounds = array<i64: 1, 64>}, {pipeline_mode = #tpu.pipeline_mode<synchronous>, transform_indices = @transform_10, window_bounds = array<i64: 1, 64>}, {pipeline_mode = #tpu.pipeline_mode<synchronous>, transform_indices = @transform_11, window_bounds = array<i64: 64, 128>}, {pipeline_mode = #tpu.pipeline_mode<synchronous>, transform_indices = @transform_12, window_bounds = array<i64: 1, 128>}, {pipeline_mode = #tpu.pipeline_mode<synchronous>, transform_indices = @transform_13, window_bounds = array<i64: 128, 64>}, {pipeline_mode = #tpu.pipeline_mode<synchronous>, transform_indices = @transform_14, window_bounds = array<i64: 1, 64>}, {pipeline_mode = #tpu.pipeline_mode<synchronous>, transform_indices = @transform_15, window_bounds = array<i64: 1, 64>}, {pipeline_mode = #tpu.pipeline_mode<synchronous>, transform_indices = @transform_16, window_bounds = array<i64: 1, 64>}, {transform_indices = @transform_17, window_bounds = array<i64: 128, 64>}]} {
    %c0 = arith.constant 0 : index
    %c0_0 = arith.constant 0 : index
    %0 = vector.load %arg1[%c0, %c0_0] : memref<128x64xf32, #tpu.memory_space<vmem>>, vector<128x64xf32>
    %c0_1 = arith.constant 0 : index
    %c0_2 = arith.constant 0 : index
    %1 = vector.load %arg2[%c0_1, %c0_2] : memref<128x64xbf16, #tpu.memory_space<vmem>>, vector<128x64xbf16>
    %2 = arith.extf %1 : vector<128x64xbf16> to vector<128x64xf32>
    %3 = arith.addf %0, %2 : vector<128x64xf32>
    %4 = arith.truncf %3 : vector<128x64xf32> to vector<128x64xbf16>
    %5 = arith.truncf %0 : vector<128x64xf32> to vector<128x64xbf16>
    %c0_3 = arith.constant 0 : index
    %c0_4 = arith.constant 0 : index
    %6 = vector.load %arg4[%c0_3, %c0_4] : memref<64x128xbf16, #tpu.memory_space<vmem>>, vector<64x128xbf16>
    %cst = arith.constant dense<0.000000e+00> : vector<128x128xf32>
    %7 = tpu.matmul %4, %6, %cst {dimension_numbers = #tpu.dot_dimension_numbers<[1], [0], [0], [1], [0, 0, 1, 1], [], []>} : vector<128x64xbf16>, vector<64x128xbf16>, vector<128x128xf32> -> vector<128x128xf32>
    %c0_5 = arith.constant 0 : index
    %c0_6 = arith.constant 0 : index
    %8 = vector.load %arg5[%c0_5, %c0_6] : memref<1x128xf32, #tpu.memory_space<vmem>>, vector<1x128xf32>
    %9 = vector.broadcast %8 : vector<1x128xf32> to vector<128x128xf32>
    %10 = arith.addf %7, %9 : vector<128x128xf32>
    %c0_7 = arith.constant 0 : index
    %c0_8 = arith.constant 0 : index
    %11 = vector.load %arg6[%c0_7, %c0_8] : memref<64x64xbf16, #tpu.memory_space<vmem>>, vector<64x64xbf16>
    %cst_9 = arith.constant dense<0.000000e+00> : vector<128x64xf32>
    %12 = tpu.matmul %5, %11, %cst_9 {dimension_numbers = #tpu.dot_dimension_numbers<[1], [0], [0], [1], [0, 0, 1, 1], [], []>} : vector<128x64xbf16>, vector<64x64xbf16>, vector<128x64xf32> -> vector<128x64xf32>
    %c0_10 = arith.constant 0 : index
    %c0_11 = arith.constant 0 : index
    %13 = vector.load %arg7[%c0_10, %c0_11] : memref<1x64xf32, #tpu.memory_space<vmem>>, vector<1x64xf32>
    %14 = vector.broadcast %13 : vector<1x64xf32> to vector<128x64xf32>
    %15 = arith.addf %12, %14 : vector<128x64xf32>
    %16 = vector.extract_strided_slice %10 {offsets = [0, 0], sizes = [128, 64], strides = [1, 1]} : vector<128x128xf32> to vector<128x64xf32>
    %17 = arith.truncf %16 : vector<128x64xf32> to vector<128x64xbf16>
    %18 = vector.shape_cast %17 : vector<128x64xbf16> to vector<16x8x64xbf16>
    %19 = vector.extract_strided_slice %10 {offsets = [0, 64], sizes = [128, 64], strides = [1, 1]} : vector<128x128xf32> to vector<128x64xf32>
    %20 = arith.truncf %19 : vector<128x64xf32> to vector<128x64xbf16>
    %21 = vector.shape_cast %20 : vector<128x64xbf16> to vector<16x8x64xbf16>
    %22 = arith.truncf %15 : vector<128x64xf32> to vector<128x64xbf16>
    %23 = vector.shape_cast %22 : vector<128x64xbf16> to vector<16x8x64xbf16>
    %c0_12 = arith.constant 0 : index
    %c0_13 = arith.constant 0 : index
    %24 = vector.load %arg3[%c0_12, %c0_13] : memref<16x8xf32, #tpu.memory_space<vmem>>, vector<16x8xf32>
    %25 = vector.shape_cast %24 : vector<16x8xf32> to vector<16x1x8xf32>
    %c0_14 = arith.constant 0 : index
    %c0_15 = arith.constant 0 : index
    %26 = vector.load %arg8[%c0_14, %c0_15] : memref<64x64xbf16, #tpu.memory_space<vmem>>, vector<64x64xbf16>
    %27 = vector.extract_strided_slice %18 {offsets = [0, 0, 0], sizes = [16, 8, 16], strides = [1, 1, 1]} : vector<16x8x64xbf16> to vector<16x8x16xbf16>
    %28 = vector.extract_strided_slice %21 {offsets = [0, 0, 0], sizes = [16, 8, 16], strides = [1, 1, 1]} : vector<16x8x64xbf16> to vector<16x8x16xbf16>
    "tpu.trace_start"() <{level = 10 : i32, message = "gqd,gkd->gqk"}> : () -> ()
    %cst_16 = arith.constant dense<0.000000e+00> : vector<16x8x8xf32>
    %29 = tpu.matmul %27, %28, %cst_16 {dimension_numbers = #tpu.dot_dimension_numbers<[2], [2], [1], [1], [0, 0, 0, 1, 1, 1], [0], [0]>} : vector<16x8x16xbf16>, vector<16x8x16xbf16>, vector<16x8x8xf32> -> vector<16x8x8xf32>
    "tpu.trace_stop"() : () -> ()
    %30 = vector.broadcast %25 : vector<16x1x8xf32> to vector<16x8x8xf32>
    %31 = arith.addf %29, %30 : vector<16x8x8xf32>
    %cst_17 = arith.constant dense<0xFF800000> : vector<16x8xf32>
    %32 = vector.multi_reduction <maximumf>, %31, %cst_17 [2] : vector<16x8x8xf32> to vector<16x8xf32>
    %33 = vector.shape_cast %32 : vector<16x8xf32> to vector<16x8x1xf32>
    %34 = vector.broadcast %33 : vector<16x8x1xf32> to vector<16x8x8xf32>
    %35 = arith.subf %31, %34 : vector<16x8x8xf32>
    %36 = math.exp %35 : vector<16x8x8xf32>
    %cst_18 = arith.constant dense<0.000000e+00> : vector<16x8xf32>
    %37 = vector.multi_reduction <add>, %36, %cst_18 [2] : vector<16x8x8xf32> to vector<16x8xf32>
    %38 = vector.shape_cast %37 : vector<16x8xf32> to vector<16x8x1xf32>
    %39 = tpu.reciprocal %38 {approx = true} : vector<16x8x1xf32> -> vector<16x8x1xf32>
    %40 = vector.broadcast %39 : vector<16x8x1xf32> to vector<16x8x8xf32>
    %41 = arith.mulf %36, %40 : vector<16x8x8xf32>
    %42 = arith.truncf %41 : vector<16x8x8xf32> to vector<16x8x8xbf16>
    %43 = vector.extract_strided_slice %23 {offsets = [0, 0, 0], sizes = [16, 8, 16], strides = [1, 1, 1]} : vector<16x8x64xbf16> to vector<16x8x16xbf16>
    "tpu.trace_start"() <{level = 10 : i32, message = "gqk,gkd->gqd"}> : () -> ()
    %cst_19 = arith.constant dense<0.000000e+00> : vector<16x8x16xf32>
    %44 = tpu.matmul %42, %43, %cst_19 {dimension_numbers = #tpu.dot_dimension_numbers<[2], [1], [1], [2], [0, 0, 0, 1, 1, 2], [0], [0]>} : vector<16x8x8xbf16>, vector<16x8x16xbf16>, vector<16x8x16xf32> -> vector<16x8x16xf32>
    "tpu.trace_stop"() : () -> ()
    %45 = vector.shape_cast %44 : vector<16x8x16xf32> to vector<128x16xf32>
    %46 = arith.truncf %45 : vector<128x16xf32> to vector<128x16xbf16>
    %47 = vector.extract_strided_slice %26 {offsets = [0, 0], sizes = [16, 64], strides = [1, 1]} : vector<64x64xbf16> to vector<16x64xbf16>
    %cst_20 = arith.constant dense<0.000000e+00> : vector<128x64xf32>
    %48 = tpu.matmul %46, %47, %cst_20 {dimension_numbers = #tpu.dot_dimension_numbers<[1], [0], [0], [1], [0, 0, 1, 1], [], []>} : vector<128x16xbf16>, vector<16x64xbf16>, vector<128x64xf32> -> vector<128x64xf32>
    %49 = vector.extract_strided_slice %18 {offsets = [0, 0, 16], sizes = [16, 8, 16], strides = [1, 1, 1]} : vector<16x8x64xbf16> to vector<16x8x16xbf16>
    %50 = vector.extract_strided_slice %21 {offsets = [0, 0, 16], sizes = [16, 8, 16], strides = [1, 1, 1]} : vector<16x8x64xbf16> to vector<16x8x16xbf16>
    "tpu.trace_start"() <{level = 10 : i32, message = "gqd,gkd->gqk"}> : () -> ()
    %cst_21 = arith.constant dense<0.000000e+00> : vector<16x8x8xf32>
    %51 = tpu.matmul %49, %50, %cst_21 {dimension_numbers = #tpu.dot_dimension_numbers<[2], [2], [1], [1], [0, 0, 0, 1, 1, 1], [0], [0]>} : vector<16x8x16xbf16>, vector<16x8x16xbf16>, vector<16x8x8xf32> -> vector<16x8x8xf32>
    "tpu.trace_stop"() : () -> ()
    %52 = vector.broadcast %25 : vector<16x1x8xf32> to vector<16x8x8xf32>
    %53 = arith.addf %51, %52 : vector<16x8x8xf32>
    %cst_22 = arith.constant dense<0xFF800000> : vector<16x8xf32>
    %54 = vector.multi_reduction <maximumf>, %53, %cst_22 [2] : vector<16x8x8xf32> to vector<16x8xf32>
    %55 = vector.shape_cast %54 : vector<16x8xf32> to vector<16x8x1xf32>
    %56 = vector.broadcast %55 : vector<16x8x1xf32> to vector<16x8x8xf32>
    %57 = arith.subf %53, %56 : vector<16x8x8xf32>
    %58 = math.exp %57 : vector<16x8x8xf32>
    %cst_23 = arith.constant dense<0.000000e+00> : vector<16x8xf32>
    %59 = vector.multi_reduction <add>, %58, %cst_23 [2] : vector<16x8x8xf32> to vector<16x8xf32>
    %60 = vector.shape_cast %59 : vector<16x8xf32> to vector<16x8x1xf32>
    %61 = tpu.reciprocal %60 {approx = true} : vector<16x8x1xf32> -> vector<16x8x1xf32>
    %62 = vector.broadcast %61 : vector<16x8x1xf32> to vector<16x8x8xf32>
    %63 = arith.mulf %58, %62 : vector<16x8x8xf32>
    %64 = arith.truncf %63 : vector<16x8x8xf32> to vector<16x8x8xbf16>
    %65 = vector.extract_strided_slice %23 {offsets = [0, 0, 16], sizes = [16, 8, 16], strides = [1, 1, 1]} : vector<16x8x64xbf16> to vector<16x8x16xbf16>
    "tpu.trace_start"() <{level = 10 : i32, message = "gqk,gkd->gqd"}> : () -> ()
    %cst_24 = arith.constant dense<0.000000e+00> : vector<16x8x16xf32>
    %66 = tpu.matmul %64, %65, %cst_24 {dimension_numbers = #tpu.dot_dimension_numbers<[2], [1], [1], [2], [0, 0, 0, 1, 1, 2], [0], [0]>} : vector<16x8x8xbf16>, vector<16x8x16xbf16>, vector<16x8x16xf32> -> vector<16x8x16xf32>
    "tpu.trace_stop"() : () -> ()
    %67 = vector.shape_cast %66 : vector<16x8x16xf32> to vector<128x16xf32>
    %68 = arith.truncf %67 : vector<128x16xf32> to vector<128x16xbf16>
    %69 = vector.extract_strided_slice %26 {offsets = [16, 0], sizes = [16, 64], strides = [1, 1]} : vector<64x64xbf16> to vector<16x64xbf16>
    %cst_25 = arith.constant dense<0.000000e+00> : vector<128x64xf32>
    %70 = tpu.matmul %68, %69, %cst_25 {dimension_numbers = #tpu.dot_dimension_numbers<[1], [0], [0], [1], [0, 0, 1, 1], [], []>} : vector<128x16xbf16>, vector<16x64xbf16>, vector<128x64xf32> -> vector<128x64xf32>
    %71 = arith.addf %48, %70 : vector<128x64xf32>
    %72 = vector.extract_strided_slice %18 {offsets = [0, 0, 32], sizes = [16, 8, 16], strides = [1, 1, 1]} : vector<16x8x64xbf16> to vector<16x8x16xbf16>
    %73 = vector.extract_strided_slice %21 {offsets = [0, 0, 32], sizes = [16, 8, 16], strides = [1, 1, 1]} : vector<16x8x64xbf16> to vector<16x8x16xbf16>
    "tpu.trace_start"() <{level = 10 : i32, message = "gqd,gkd->gqk"}> : () -> ()
    %cst_26 = arith.constant dense<0.000000e+00> : vector<16x8x8xf32>
    %74 = tpu.matmul %72, %73, %cst_26 {dimension_numbers = #tpu.dot_dimension_numbers<[2], [2], [1], [1], [0, 0, 0, 1, 1, 1], [0], [0]>} : vector<16x8x16xbf16>, vector<16x8x16xbf16>, vector<16x8x8xf32> -> vector<16x8x8xf32>
    "tpu.trace_stop"() : () -> ()
    %75 = vector.broadcast %25 : vector<16x1x8xf32> to vector<16x8x8xf32>
    %76 = arith.addf %74, %75 : vector<16x8x8xf32>
    %cst_27 = arith.constant dense<0xFF800000> : vector<16x8xf32>
    %77 = vector.multi_reduction <maximumf>, %76, %cst_27 [2] : vector<16x8x8xf32> to vector<16x8xf32>
    %78 = vector.shape_cast %77 : vector<16x8xf32> to vector<16x8x1xf32>
    %79 = vector.broadcast %78 : vector<16x8x1xf32> to vector<16x8x8xf32>
    %80 = arith.subf %76, %79 : vector<16x8x8xf32>
    %81 = math.exp %80 : vector<16x8x8xf32>
    %cst_28 = arith.constant dense<0.000000e+00> : vector<16x8xf32>
    %82 = vector.multi_reduction <add>, %81, %cst_28 [2] : vector<16x8x8xf32> to vector<16x8xf32>
    %83 = vector.shape_cast %82 : vector<16x8xf32> to vector<16x8x1xf32>
    %84 = tpu.reciprocal %83 {approx = true} : vector<16x8x1xf32> -> vector<16x8x1xf32>
    %85 = vector.broadcast %84 : vector<16x8x1xf32> to vector<16x8x8xf32>
    %86 = arith.mulf %81, %85 : vector<16x8x8xf32>
    %87 = arith.truncf %86 : vector<16x8x8xf32> to vector<16x8x8xbf16>
    %88 = vector.extract_strided_slice %23 {offsets = [0, 0, 32], sizes = [16, 8, 16], strides = [1, 1, 1]} : vector<16x8x64xbf16> to vector<16x8x16xbf16>
    "tpu.trace_start"() <{level = 10 : i32, message = "gqk,gkd->gqd"}> : () -> ()
    %cst_29 = arith.constant dense<0.000000e+00> : vector<16x8x16xf32>
    %89 = tpu.matmul %87, %88, %cst_29 {dimension_numbers = #tpu.dot_dimension_numbers<[2], [1], [1], [2], [0, 0, 0, 1, 1, 2], [0], [0]>} : vector<16x8x8xbf16>, vector<16x8x16xbf16>, vector<16x8x16xf32> -> vector<16x8x16xf32>
    "tpu.trace_stop"() : () -> ()
    %90 = vector.shape_cast %89 : vector<16x8x16xf32> to vector<128x16xf32>
    %91 = arith.truncf %90 : vector<128x16xf32> to vector<128x16xbf16>
    %92 = vector.extract_strided_slice %26 {offsets = [32, 0], sizes = [16, 64], strides = [1, 1]} : vector<64x64xbf16> to vector<16x64xbf16>
    %cst_30 = arith.constant dense<0.000000e+00> : vector<128x64xf32>
    %93 = tpu.matmul %91, %92, %cst_30 {dimension_numbers = #tpu.dot_dimension_numbers<[1], [0], [0], [1], [0, 0, 1, 1], [], []>} : vector<128x16xbf16>, vector<16x64xbf16>, vector<128x64xf32> -> vector<128x64xf32>
    %94 = arith.addf %71, %93 : vector<128x64xf32>
    %95 = vector.extract_strided_slice %18 {offsets = [0, 0, 48], sizes = [16, 8, 16], strides = [1, 1, 1]} : vector<16x8x64xbf16> to vector<16x8x16xbf16>
    %96 = vector.extract_strided_slice %21 {offsets = [0, 0, 48], sizes = [16, 8, 16], strides = [1, 1, 1]} : vector<16x8x64xbf16> to vector<16x8x16xbf16>
    "tpu.trace_start"() <{level = 10 : i32, message = "gqd,gkd->gqk"}> : () -> ()
    %cst_31 = arith.constant dense<0.000000e+00> : vector<16x8x8xf32>
    %97 = tpu.matmul %95, %96, %cst_31 {dimension_numbers = #tpu.dot_dimension_numbers<[2], [2], [1], [1], [0, 0, 0, 1, 1, 1], [0], [0]>} : vector<16x8x16xbf16>, vector<16x8x16xbf16>, vector<16x8x8xf32> -> vector<16x8x8xf32>
    "tpu.trace_stop"() : () -> ()
    %98 = vector.broadcast %25 : vector<16x1x8xf32> to vector<16x8x8xf32>
    %99 = arith.addf %97, %98 : vector<16x8x8xf32>
    %cst_32 = arith.constant dense<0xFF800000> : vector<16x8xf32>
    %100 = vector.multi_reduction <maximumf>, %99, %cst_32 [2] : vector<16x8x8xf32> to vector<16x8xf32>
    %101 = vector.shape_cast %100 : vector<16x8xf32> to vector<16x8x1xf32>
    %102 = vector.broadcast %101 : vector<16x8x1xf32> to vector<16x8x8xf32>
    %103 = arith.subf %99, %102 : vector<16x8x8xf32>
    %104 = math.exp %103 : vector<16x8x8xf32>
    %cst_33 = arith.constant dense<0.000000e+00> : vector<16x8xf32>
    %105 = vector.multi_reduction <add>, %104, %cst_33 [2] : vector<16x8x8xf32> to vector<16x8xf32>
    %106 = vector.shape_cast %105 : vector<16x8xf32> to vector<16x8x1xf32>
    %107 = tpu.reciprocal %106 {approx = true} : vector<16x8x1xf32> -> vector<16x8x1xf32>
    %108 = vector.broadcast %107 : vector<16x8x1xf32> to vector<16x8x8xf32>
    %109 = arith.mulf %104, %108 : vector<16x8x8xf32>
    %110 = arith.truncf %109 : vector<16x8x8xf32> to vector<16x8x8xbf16>
    %111 = vector.extract_strided_slice %23 {offsets = [0, 0, 48], sizes = [16, 8, 16], strides = [1, 1, 1]} : vector<16x8x64xbf16> to vector<16x8x16xbf16>
    "tpu.trace_start"() <{level = 10 : i32, message = "gqk,gkd->gqd"}> : () -> ()
    %cst_34 = arith.constant dense<0.000000e+00> : vector<16x8x16xf32>
    %112 = tpu.matmul %110, %111, %cst_34 {dimension_numbers = #tpu.dot_dimension_numbers<[2], [1], [1], [2], [0, 0, 0, 1, 1, 2], [0], [0]>} : vector<16x8x8xbf16>, vector<16x8x16xbf16>, vector<16x8x16xf32> -> vector<16x8x16xf32>
    "tpu.trace_stop"() : () -> ()
    %113 = vector.shape_cast %112 : vector<16x8x16xf32> to vector<128x16xf32>
    %114 = arith.truncf %113 : vector<128x16xf32> to vector<128x16xbf16>
    %115 = vector.extract_strided_slice %26 {offsets = [48, 0], sizes = [16, 64], strides = [1, 1]} : vector<64x64xbf16> to vector<16x64xbf16>
    %cst_35 = arith.constant dense<0.000000e+00> : vector<128x64xf32>
    %116 = tpu.matmul %114, %115, %cst_35 {dimension_numbers = #tpu.dot_dimension_numbers<[1], [0], [0], [1], [0, 0, 1, 1], [], []>} : vector<128x16xbf16>, vector<16x64xbf16>, vector<128x64xf32> -> vector<128x64xf32>
    %117 = arith.addf %94, %116 : vector<128x64xf32>
    %c0_36 = arith.constant 0 : index
    %c0_37 = arith.constant 0 : index
    %118 = vector.load %arg9[%c0_36, %c0_37] : memref<1x64xf32, #tpu.memory_space<vmem>>, vector<1x64xf32>
    %119 = vector.broadcast %118 : vector<1x64xf32> to vector<128x64xf32>
    %120 = arith.addf %117, %119 : vector<128x64xf32>
    %121 = arith.addf %120, %0 : vector<128x64xf32>
    %c0_38 = arith.constant 0 : index
    %c0_39 = arith.constant 0 : index
    %122 = vector.load %arg10[%c0_38, %c0_39] : memref<1x64xf32, #tpu.memory_space<vmem>>, vector<1x64xf32>
    %c0_40 = arith.constant 0 : index
    %c0_41 = arith.constant 0 : index
    %123 = vector.load %arg11[%c0_40, %c0_41] : memref<1x64xf32, #tpu.memory_space<vmem>>, vector<1x64xf32>
    %cst_42 = arith.constant dense<0.000000e+00> : vector<128xf32>
    %124 = vector.multi_reduction <add>, %121, %cst_42 [1] : vector<128x64xf32> to vector<128xf32>
    %125 = vector.shape_cast %124 : vector<128xf32> to vector<128x1xf32>
    %cst_43 = arith.constant 6.400000e+01 : f32
    %126 = vector.broadcast %cst_43 : f32 to vector<128x1xf32>
    %127 = arith.divf %125, %126 : vector<128x1xf32>
    %128 = vector.broadcast %127 : vector<128x1xf32> to vector<128x64xf32>
    %129 = arith.subf %121, %128 : vector<128x64xf32>
    %130 = arith.mulf %129, %129 : vector<128x64xf32>
    %cst_44 = arith.constant dense<0.000000e+00> : vector<128xf32>
    %131 = vector.multi_reduction <add>, %130, %cst_44 [1] : vector<128x64xf32> to vector<128xf32>
    %132 = vector.shape_cast %131 : vector<128xf32> to vector<128x1xf32>
    %cst_45 = arith.constant 6.400000e+01 : f32
    %133 = vector.broadcast %cst_45 : f32 to vector<128x1xf32>
    %134 = arith.divf %132, %133 : vector<128x1xf32>
    %cst_46 = arith.constant 9.99999974E-6 : f32
    %135 = vector.broadcast %cst_46 : f32 to vector<128x1xf32>
    %136 = arith.addf %134, %135 : vector<128x1xf32>
    %137 = math.rsqrt %136 : vector<128x1xf32>
    %138 = vector.broadcast %137 : vector<128x1xf32> to vector<128x64xf32>
    %139 = arith.mulf %129, %138 : vector<128x64xf32>
    %140 = vector.broadcast %122 : vector<1x64xf32> to vector<128x64xf32>
    %141 = arith.mulf %139, %140 : vector<128x64xf32>
    %142 = vector.broadcast %123 : vector<1x64xf32> to vector<128x64xf32>
    %143 = arith.addf %141, %142 : vector<128x64xf32>
    %144 = arith.truncf %143 : vector<128x64xf32> to vector<128x64xbf16>
    %c0_47 = arith.constant 0 : index
    %c0_48 = arith.constant 0 : index
    %145 = vector.load %arg12[%c0_47, %c0_48] : memref<64x128xbf16, #tpu.memory_space<vmem>>, vector<64x128xbf16>
    %cst_49 = arith.constant dense<0.000000e+00> : vector<128x128xf32>
    %146 = tpu.matmul %144, %145, %cst_49 {dimension_numbers = #tpu.dot_dimension_numbers<[1], [0], [0], [1], [0, 0, 1, 1], [], []>} : vector<128x64xbf16>, vector<64x128xbf16>, vector<128x128xf32> -> vector<128x128xf32>
    %c0_50 = arith.constant 0 : index
    %c0_51 = arith.constant 0 : index
    %147 = vector.load %arg13[%c0_50, %c0_51] : memref<1x128xf32, #tpu.memory_space<vmem>>, vector<1x128xf32>
    %148 = vector.broadcast %147 : vector<1x128xf32> to vector<128x128xf32>
    %149 = arith.addf %146, %148 : vector<128x128xf32>
    %cst_52 = arith.constant 0.000000e+00 : f32
    %150 = vector.broadcast %cst_52 : f32 to vector<128x128xf32>
    %151 = arith.maximumf %149, %150 : vector<128x128xf32>
    %152 = arith.truncf %151 : vector<128x128xf32> to vector<128x128xbf16>
    %c0_53 = arith.constant 0 : index
    %c0_54 = arith.constant 0 : index
    %153 = vector.load %arg14[%c0_53, %c0_54] : memref<128x64xbf16, #tpu.memory_space<vmem>>, vector<128x64xbf16>
    %cst_55 = arith.constant dense<0.000000e+00> : vector<128x64xf32>
    %154 = tpu.matmul %152, %153, %cst_55 {dimension_numbers = #tpu.dot_dimension_numbers<[1], [0], [0], [1], [0, 0, 1, 1], [], []>} : vector<128x128xbf16>, vector<128x64xbf16>, vector<128x64xf32> -> vector<128x64xf32>
    %c0_56 = arith.constant 0 : index
    %c0_57 = arith.constant 0 : index
    %155 = vector.load %arg15[%c0_56, %c0_57] : memref<1x64xf32, #tpu.memory_space<vmem>>, vector<1x64xf32>
    %156 = vector.broadcast %155 : vector<1x64xf32> to vector<128x64xf32>
    %157 = arith.addf %154, %156 : vector<128x64xf32>
    %158 = arith.addf %157, %143 : vector<128x64xf32>
    %c0_58 = arith.constant 0 : index
    %c0_59 = arith.constant 0 : index
    %159 = vector.load %arg16[%c0_58, %c0_59] : memref<1x64xf32, #tpu.memory_space<vmem>>, vector<1x64xf32>
    %c0_60 = arith.constant 0 : index
    %c0_61 = arith.constant 0 : index
    %160 = vector.load %arg17[%c0_60, %c0_61] : memref<1x64xf32, #tpu.memory_space<vmem>>, vector<1x64xf32>
    %cst_62 = arith.constant dense<0.000000e+00> : vector<128xf32>
    %161 = vector.multi_reduction <add>, %158, %cst_62 [1] : vector<128x64xf32> to vector<128xf32>
    %162 = vector.shape_cast %161 : vector<128xf32> to vector<128x1xf32>
    %cst_63 = arith.constant 6.400000e+01 : f32
    %163 = vector.broadcast %cst_63 : f32 to vector<128x1xf32>
    %164 = arith.divf %162, %163 : vector<128x1xf32>
    %165 = vector.broadcast %164 : vector<128x1xf32> to vector<128x64xf32>
    %166 = arith.subf %158, %165 : vector<128x64xf32>
    %167 = arith.mulf %166, %166 : vector<128x64xf32>
    %cst_64 = arith.constant dense<0.000000e+00> : vector<128xf32>
    %168 = vector.multi_reduction <add>, %167, %cst_64 [1] : vector<128x64xf32> to vector<128xf32>
    %169 = vector.shape_cast %168 : vector<128xf32> to vector<128x1xf32>
    %cst_65 = arith.constant 6.400000e+01 : f32
    %170 = vector.broadcast %cst_65 : f32 to vector<128x1xf32>
    %171 = arith.divf %169, %170 : vector<128x1xf32>
    %cst_66 = arith.constant 9.99999974E-6 : f32
    %172 = vector.broadcast %cst_66 : f32 to vector<128x1xf32>
    %173 = arith.addf %171, %172 : vector<128x1xf32>
    %174 = math.rsqrt %173 : vector<128x1xf32>
    %175 = vector.broadcast %174 : vector<128x1xf32> to vector<128x64xf32>
    %176 = arith.mulf %166, %175 : vector<128x64xf32>
    %177 = vector.broadcast %159 : vector<1x64xf32> to vector<128x64xf32>
    %178 = arith.mulf %176, %177 : vector<128x64xf32>
    %179 = vector.broadcast %160 : vector<1x64xf32> to vector<128x64xf32>
    %180 = arith.addf %178, %179 : vector<128x64xf32>
    %c0_67 = arith.constant 0 : index
    %c0_68 = arith.constant 0 : index
    %181 = vector.load %arg18[%c0_67, %c0_68] : memref<128x64xf32, #tpu.memory_space<vmem>>, vector<128x64xf32>
    tpu.vector_store %arg18[%c0_67, %c0_68], %180 {strides = array<i32>} : memref<128x64xf32, #tpu.memory_space<vmem>>, vector<128x64xf32>,
    return
  }
  func.func @transform_0(%arg0: i32) -> (i32, i32) {
    %c0_i32 = arith.constant 0 : i32
    %c0_i32_0 = arith.constant 0 : i32
    return %arg0, %c0_i32 : i32, i32
  }
  func.func @transform_1(%arg0: i32) -> (i32, i32) {
    %c0_i32 = arith.constant 0 : i32
    %c0_i32_0 = arith.constant 0 : i32
    return %arg0, %c0_i32 : i32, i32
  }
  func.func @transform_2(%arg0: i32) -> (i32, i32) {
    %c0_i32 = arith.constant 0 : i32
    %c0_i32_0 = arith.constant 0 : i32
    return %arg0, %c0_i32 : i32, i32
  }
  func.func @transform_3(%arg0: i32) -> (i32, i32) {
    %c0_i32 = arith.constant 0 : i32
    %c0_i32_0 = arith.constant 0 : i32
    %c0_i32_1 = arith.constant 0 : i32
    return %c0_i32, %c0_i32_0 : i32, i32
  }
  func.func @transform_4(%arg0: i32) -> (i32, i32) {
    %c0_i32 = arith.constant 0 : i32
    %c0_i32_0 = arith.constant 0 : i32
    %c0_i32_1 = arith.constant 0 : i32
    return %c0_i32, %c0_i32_0 : i32, i32
  }
  func.func @transform_5(%arg0: i32) -> (i32, i32) {
    %c0_i32 = arith.constant 0 : i32
    %c0_i32_0 = arith.constant 0 : i32
    %c0_i32_1 = arith.constant 0 : i32
    return %c0_i32, %c0_i32_0 : i32, i32
  }
  func.func @transform_6(%arg0: i32) -> (i32, i32) {
    %c0_i32 = arith.constant 0 : i32
    %c0_i32_0 = arith.constant 0 : i32
    %c0_i32_1 = arith.constant 0 : i32
    return %c0_i32, %c0_i32_0 : i32, i32
  }
  func.func @transform_7(%arg0: i32) -> (i32, i32) {
    %c0_i32 = arith.constant 0 : i32
    %c0_i32_0 = arith.constant 0 : i32
    %c0_i32_1 = arith.constant 0 : i32
    return %c0_i32, %c0_i32_0 : i32, i32
  }
  func.func @transform_8(%arg0: i32) -> (i32, i32) {
    %c0_i32 = arith.constant 0 : i32
    %c0_i32_0 = arith.constant 0 : i32
    %c0_i32_1 = arith.constant 0 : i32
    return %c0_i32, %c0_i32_0 : i32, i32
  }
  func.func @transform_9(%arg0: i32) -> (i32, i32) {
    %c0_i32 = arith.constant 0 : i32
    %c0_i32_0 = arith.constant 0 : i32
    %c0_i32_1 = arith.constant 0 : i32
    return %c0_i32, %c0_i32_0 : i32, i32
  }
  func.func @transform_10(%arg0: i32) -> (i32, i32) {
    %c0_i32 = arith.constant 0 : i32
    %c0_i32_0 = arith.constant 0 : i32
    %c0_i32_1 = arith.constant 0 : i32
    return %c0_i32, %c0_i32_0 : i32, i32
  }
  func.func @transform_11(%arg0: i32) -> (i32, i32) {
    %c0_i32 = arith.constant 0 : i32
    %c0_i32_0 = arith.constant 0 : i32
    %c0_i32_1 = arith.constant 0 : i32
    return %c0_i32, %c0_i32_0 : i32, i32
  }
  func.func @transform_12(%arg0: i32) -> (i32, i32) {
    %c0_i32 = arith.constant 0 : i32
    %c0_i32_0 = arith.constant 0 : i32
    %c0_i32_1 = arith.constant 0 : i32
    return %c0_i32, %c0_i32_0 : i32, i32
  }
  func.func @transform_13(%arg0: i32) -> (i32, i32) {
    %c0_i32 = arith.constant 0 : i32
    %c0_i32_0 = arith.constant 0 : i32
    %c0_i32_1 = arith.constant 0 : i32
    return %c0_i32, %c0_i32_0 : i32, i32
  }
  func.func @transform_14(%arg0: i32) -> (i32, i32) {
    %c0_i32 = arith.constant 0 : i32
    %c0_i32_0 = arith.constant 0 : i32
    %c0_i32_1 = arith.constant 0 : i32
    return %c0_i32, %c0_i32_0 : i32, i32
  }
  func.func @transform_15(%arg0: i32) -> (i32, i32) {
    %c0_i32 = arith.constant 0 : i32
    %c0_i32_0 = arith.constant 0 : i32
    %c0_i32_1 = arith.constant 0 : i32
    return %c0_i32, %c0_i32_0 : i32, i32
  }
  func.func @transform_16(%arg0: i32) -> (i32, i32) {
    %c0_i32 = arith.constant 0 : i32
    %c0_i32_0 = arith.constant 0 : i32
    %c0_i32_1 = arith.constant 0 : i32
    return %c0_i32, %c0_i32_0 : i32, i32
  }
  func.func @transform_17(%arg0: i32) -> (i32, i32) {
    %c0_i32 = arith.constant 0 : i32
    %c0_i32_0 = arith.constant 0 : i32
    return %arg0, %c0_i32 : i32, i32
  }
}

</mosaic_0001>

<llo_original>
// kernel: tpu_custom_call.1
$region0: #{tpu_custom_call.1}
  #allocation0 [shape = 'u32[]', space=smem, size = 0x4, offset = 0x4, fixed_abs, tag = 'smem constant byte address 0x4 - core index']
  #allocation1 [shape = 'u32[144,128]{1,0:T(1,128)}', space=vmem, size = 0x12000, scoped, tag = 'internal scratch']
  %s0 = inlined_call_operand.vmem [shape: f32[512,64], index: 0, kind: input, shape index: {}]
  %s1 = inlined_call_operand.vmem [shape: bf16[512,64], index: 1, kind: input, shape index: {}]
  %s2 = inlined_call_operand.vmem [shape: f32[64,8], index: 2, kind: input, shape index: {}]
  %s3 = inlined_call_operand.vmem [shape: bf16[64,128], index: 3, kind: input, shape index: {}]
  %s4 = inlined_call_operand.vmem [shape: f32[1,128], index: 4, kind: input, shape index: {}]
  %s5 = inlined_call_operand.vmem [shape: bf16[64,64], index: 5, kind: input, shape index: {}]
  %s6 = inlined_call_operand.vmem [shape: f32[1,64], index: 6, kind: input, shape index: {}]
  %s7 = inlined_call_operand.vmem [shape: bf16[64,64], index: 7, kind: input, shape index: {}]
  %s8 = inlined_call_operand.vmem [shape: f32[1,64], index: 8, kind: input, shape index: {}]
  %s9 = inlined_call_operand.vmem [shape: f32[1,64], index: 9, kind: input, shape index: {}]
  %s10 = inlined_call_operand.vmem [shape: f32[1,64], index: 10, kind: input, shape index: {}]
  %s11 = inlined_call_operand.vmem [shape: bf16[64,128], index: 11, kind: input, shape index: {}]
  %s12 = inlined_call_operand.vmem [shape: f32[1,128], index: 12, kind: input, shape index: {}]
  %s13 = inlined_call_operand.vmem [shape: bf16[128,64], index: 13, kind: input, shape index: {}]
  %s14 = inlined_call_operand.vmem [shape: f32[1,64], index: 14, kind: input, shape index: {}]
  %s15 = inlined_call_operand.vmem [shape: f32[1,64], index: 15, kind: input, shape index: {}]
  %s16 = inlined_call_operand.vmem [shape: f32[1,64], index: 16, kind: input, shape index: {}]
  %s17 = inlined_call_operand.vmem [shape: f32[512,64], index: 17, kind: output, shape index: {}]
  %s18 = sld [smem:[#allocation0]]
  $region101: #{tpu_custom_call.1} parent=0
    _
  %s20 = ssub.s32 1, %s18
  %s21 = scalar_select 0, %s20, %s18
  loop: start=0, step=1, limit=6
  $region2: #{tpu_custom_call.1} parent=0 // loop_pre_header
    _
  $region3: #{tpu_custom_call.1} parent=0 // loop_header
    %s23 = sphi 0, %s27
    %p24 = scmp.ge.s32.totalorder %s23, 6
    %s33 = sphi 0, %s35
    %s36 = sphi 0, %s33
    %s37 = sphi 0, %s36
    %s53 = sphi 0, %s37
    %s59 = sphi 0, %s61
    %s62 = sphi 0, %s59
    %s63 = sphi 0, %s62
    %s79 = sphi 0, %s63
    %s85 = sphi 0, %s87
    %s88 = sphi 0, %s85
    %s89 = sphi 0, %s88
    %s105 = sphi 0, %s89
    %s109 = sphi 0, %s109
    %s111 = sphi 0, %s109
    %s112 = sphi 0, %s111
    %s126 = sphi 0, %s112
    %s130 = sphi 0, %s130
    %s132 = sphi 0, %s130
    %s133 = sphi 0, %s132
    %s147 = sphi 0, %s133
    %s151 = sphi 0, %s151
    %s153 = sphi 0, %s151
    %s154 = sphi 0, %s153
    %s168 = sphi 0, %s154
    %s172 = sphi 0, %s172
    %s174 = sphi 0, %s172
    %s175 = sphi 0, %s174
    %s189 = sphi 0, %s175
    %s193 = sphi 0, %s193
    %s195 = sphi 0, %s193
    %s196 = sphi 0, %s195
    %s210 = sphi 0, %s196
    %s214 = sphi 0, %s214
    %s216 = sphi 0, %s214
    %s217 = sphi 0, %s216
    %s231 = sphi 0, %s217
    %s235 = sphi 0, %s235
    %s237 = sphi 0, %s235
    %s238 = sphi 0, %s237
    %s252 = sphi 0, %s238
    %s256 = sphi 0, %s256
    %s258 = sphi 0, %s256
    %s259 = sphi 0, %s258
    %s273 = sphi 0, %s259
    %s277 = sphi 0, %s277
    %s279 = sphi 0, %s277
    %s280 = sphi 0, %s279
    %s294 = sphi 0, %s280
    %s298 = sphi 0, %s298
    %s300 = sphi 0, %s298
    %s301 = sphi 0, %s300
    %s315 = sphi 0, %s301
    %s319 = sphi 0, %s319
    %s321 = sphi 0, %s319
    %s322 = sphi 0, %s321
    %s336 = sphi 0, %s322
    %s340 = sphi 0, %s340
    %s342 = sphi 0, %s340
    %s343 = sphi 0, %s342
    %s357 = sphi 0, %s343
    %s361 = sphi 0, %s361
    %s363 = sphi 0, %s361
    %s364 = sphi 0, %s363
    %s378 = sphi 0, %s364
    %s382 = sphi 0, %s382
    %s384 = sphi 0, %s382
    %s385 = sphi 0, %s384
    %s399 = sphi 0, %s385
    %s405 = sphi 0, %s407
    %s408 = sphi 0, %s405
    %s409 = sphi 0, %s408
    %s425 = sphi 0, %s409
  $region4: #{tpu_custom_call.1} parent=0 // loop_header_branch
    %26 = sbr.rel (%p24) target = $region8
  $region5: #{tpu_custom_call.1} parent=0 // loop_body
    %s28 = ssub.s32 %s23, 1
    %s29 = ssub.s32 %s23, 2
    %s30 = sadd.s32 %s23, 1
    %s31 = ssub.s32 %s23, %s30
    %p32 = scmp.eq.s32.totalorder %s31, 0
    %s34 = sadd.s32 %s33, 1
    %s35 = scalar_select %p32, %s33, %s34
    %p38 = pneg %p32
    %p39 = scmp.eq.s32.totalorder %s23, 3
    %p40 = por %p38, %p39
    %p41 = scmp.ne.s32.totalorder %s33, %s36
    %p42 = scmp.eq.s32.totalorder %s23, 0
    %p43 = por %p41, %p42
    %p44 = scmp.ne.s32.totalorder %s33, %s36
    %p45 = scmp.eq.s32.totalorder %s28, 3
    %p46 = por %p44, %p45
    %p47 = scmp.ne.s32.totalorder %s36, %s37
    %p48 = scmp.eq.s32.totalorder %s28, 0
    %p49 = por %p47, %p48
    %p50 = scmp.ne.s32.totalorder %s36, %s37
    %p51 = scmp.eq.s32.totalorder %s29, 3
    %p52 = por %p50, %p51
    %p54 = scmp.ne.s32.totalorder %s37, %s53
    %p55 = scmp.eq.s32.totalorder %s29, 0
    %p56 = por %p54, %p55
    %s57 = ssub.s32 %s23, %s30
    %p58 = scmp.eq.s32.totalorder %s57, 0
    %s60 = sadd.s32 %s59, 1
    %s61 = scalar_select %p58, %s59, %s60
    %p64 = pneg %p58
    %p65 = scmp.eq.s32.totalorder %s23, 3
    %p66 = por %p64, %p65
    %p67 = scmp.ne.s32.totalorder %s59, %s62
    %p68 = scmp.eq.s32.totalorder %s23, 0
    %p69 = por %p67, %p68
    %p70 = scmp.ne.s32.totalorder %s59, %s62
    %p71 = scmp.eq.s32.totalorder %s28, 3
    %p72 = por %p70, %p71
    %p73 = scmp.ne.s32.totalorder %s62, %s63
    %p74 = scmp.eq.s32.totalorder %s28, 0
    %p75 = por %p73, %p74
    %p76 = scmp.ne.s32.totalorder %s62, %s63
    %p77 = scmp.eq.s32.totalorder %s29, 3
    %p78 = por %p76, %p77
    %p80 = scmp.ne.s32.totalorder %s63, %s79
    %p81 = scmp.eq.s32.totalorder %s29, 0
    %p82 = por %p80, %p81
    %s83 = ssub.s32 %s23, %s30
    %p84 = scmp.eq.s32.totalorder %s83, 0
    %s86 = sadd.s32 %s85, 1
    %s87 = scalar_select %p84, %s85, %s86
    %p90 = pneg %p84
    %p91 = scmp.eq.s32.totalorder %s23, 3
    %p92 = por %p90, %p91
    %p93 = scmp.ne.s32.totalorder %s85, %s88
    %p94 = scmp.eq.s32.totalorder %s23, 0
    %p95 = por %p93, %p94
    %p96 = scmp.ne.s32.totalorder %s85, %s88
    %p97 = scmp.eq.s32.totalorder %s28, 3
    %p98 = por %p96, %p97
    %p99 = scmp.ne.s32.totalorder %s88, %s89
    %p100 = scmp.eq.s32.totalorder %s28, 0
    %p101 = por %p99, %p100
    %p102 = scmp.ne.s32.totalorder %s88, %s89
    %p103 = scmp.eq.s32.totalorder %s29, 3
    %p104 = por %p102, %p103
    %p106 = scmp.ne.s32.totalorder %s89, %s105
    %p107 = scmp.eq.s32.totalorder %s29, 0
    %p108 = por %p106, %p107
    %s110 = sadd.s32 %s109, 1
    %p113 = scmp.eq.s32.totalorder %s23, 3
    %p114 = scmp.ne.s32.totalorder %s109, %s111
    %p115 = scmp.eq.s32.totalorder %s23, 0
    %p116 = por %p114, %p115
    %p117 = scmp.ne.s32.totalorder %s109, %s111
    %p118 = scmp.eq.s32.totalorder %s28, 3
    %p119 = por %p117, %p118
    %p120 = scmp.ne.s32.totalorder %s111, %s112
    %p121 = scmp.eq.s32.totalorder %s28, 0
    %p122 = por %p120, %p121
    %p123 = scmp.ne.s32.totalorder %s111, %s112
    %p124 = scmp.eq.s32.totalorder %s29, 3
    %p125 = por %p123, %p124
    %p127 = scmp.ne.s32.totalorder %s112, %s126
    %p128 = scmp.eq.s32.totalorder %s29, 0
    %p129 = por %p127, %p128
    %s131 = sadd.s32 %s130, 1
    %p134 = scmp.eq.s32.totalorder %s23, 3
    %p135 = scmp.ne.s32.totalorder %s130, %s132
    %p136 = scmp.eq.s32.totalorder %s23, 0
    %p137 = por %p135, %p136
    %p138 = scmp.ne.s32.totalorder %s130, %s132
    %p139 = scmp.eq.s32.totalorder %s28, 3
    %p140 = por %p138, %p139
    %p141 = scmp.ne.s32.totalorder %s132, %s133
    %p142 = scmp.eq.s32.totalorder %s28, 0
    %p143 = por %p141, %p142
    %p144 = scmp.ne.s32.totalorder %s132, %s133
    %p145 = scmp.eq.s32.totalorder %s29, 3
    %p146 = por %p144, %p145
    %p148 = scmp.ne.s32.totalorder %s133, %s147
    %p149 = scmp.eq.s32.totalorder %s29, 0
    %p150 = por %p148, %p149
    %s152 = sadd.s32 %s151, 1
    %p155 = scmp.eq.s32.totalorder %s23, 3
    %p156 = scmp.ne.s32.totalorder %s151, %s153
    %p157 = scmp.eq.s32.totalorder %s23, 0
    %p158 = por %p156, %p157
    %p159 = scmp.ne.s32.totalorder %s151, %s153
    %p160 = scmp.eq.s32.totalorder %s28, 3
    %p161 = por %p159, %p160
    %p162 = scmp.ne.s32.totalorder %s153, %s154
    %p163 = scmp.eq.s32.totalorder %s28, 0
    %p164 = por %p162, %p163
    %p165 = scmp.ne.s32.totalorder %s153, %s154
    %p166 = scmp.eq.s32.totalorder %s29, 3
    %p167 = por %p165, %p166
    %p169 = scmp.ne.s32.totalorder %s154, %s168
    %p170 = scmp.eq.s32.totalorder %s29, 0
    %p171 = por %p169, %p170
    %s173 = sadd.s32 %s172, 1
    %p176 = scmp.eq.s32.totalorder %s23, 3
    %p177 = scmp.ne.s32.totalorder %s172, %s174
    %p178 = scmp.eq.s32.totalorder %s23, 0
    %p179 = por %p177, %p178
    %p180 = scmp.ne.s32.totalorder %s172, %s174
    %p181 = scmp.eq.s32.totalorder %s28, 3
    %p182 = por %p180, %p181
    %p183 = scmp.ne.s32.totalorder %s174, %s175
    %p184 = scmp.eq.s32.totalorder %s28, 0
    %p185 = por %p183, %p184
    %p186 = scmp.ne.s32.totalorder %s174, %s175
    %p187 = scmp.eq.s32.totalorder %s29, 3
    %p188 = por %p186, %p187
    %p190 = scmp.ne.s32.totalorder %s175, %s189
    %p191 = scmp.eq.s32.totalorder %s29, 0
    %p192 = por %p190, %p191
    %s194 = sadd.s32 %s193, 1
    %p197 = scmp.eq.s32.totalorder %s23, 3
    %p198 = scmp.ne.s32.totalorder %s193, %s195
    %p199 = scmp.eq.s32.totalorder %s23, 0
    %p200 = por %p198, %p199
    %p201 = scmp.ne.s32.totalorder %s193, %s195
    %p202 = scmp.eq.s32.totalorder %s28, 3
    %p203 = por %p201, %p202
    %p204 = scmp.ne.s32.totalorder %s195, %s196
    %p205 = scmp.eq.s32.totalorder %s28, 0
    %p206 = por %p204, %p205
    %p207 = scmp.ne.s32.totalorder %s195, %s196
    %p208 = scmp.eq.s32.totalorder %s29, 3
    %p209 = por %p207, %p208
    %p211 = scmp.ne.s32.totalorder %s196, %s210
    %p212 = scmp.eq.s32.totalorder %s29, 0
    %p213 = por %p211, %p212
    %s215 = sadd.s32 %s214, 1
    %p218 = scmp.eq.s32.totalorder %s23, 3
    %p219 = scmp.ne.s32.totalorder %s214, %s216
    %p220 = scmp.eq.s32.totalorder %s23, 0
    %p221 = por %p219, %p220
    %p222 = scmp.ne.s32.totalorder %s214, %s216
    %p223 = scmp.eq.s32.totalorder %s28, 3
    %p224 = por %p222, %p223
    %p225 = scmp.ne.s32.totalorder %s216, %s217
    %p226 = scmp.eq.s32.totalorder %s28, 0
    %p227 = por %p225, %p226
    %p228 = scmp.ne.s32.totalorder %s216, %s217
    %p229 = scmp.eq.s32.totalorder %s29, 3
    %p230 = por %p228, %p229
    %p232 = scmp.ne.s32.totalorder %s217, %s231
    %p233 = scmp.eq.s32.totalorder %s29, 0
    %p234 = por %p232, %p233
    %s236 = sadd.s32 %s235, 1
    %p239 = scmp.eq.s32.totalorder %s23, 3
    %p240 = scmp.ne.s32.totalorder %s235, %s237
    %p241 = scmp.eq.s32.totalorder %s23, 0
    %p242 = por %p240, %p241
    %p243 = scmp.ne.s32.totalorder %s235, %s237
    %p244 = scmp.eq.s32.totalorder %s28, 3
    %p245 = por %p243, %p244
    %p246 = scmp.ne.s32.totalorder %s237, %s238
    %p247 = scmp.eq.s32.totalorder %s28, 0
    %p248 = por %p246, %p247
    %p249 = scmp.ne.s32.totalorder %s237, %s238
    %p250 = scmp.eq.s32.totalorder %s29, 3
    %p251 = por %p249, %p250
    %p253 = scmp.ne.s32.totalorder %s238, %s252
    %p254 = scmp.eq.s32.totalorder %s29, 0
    %p255 = por %p253, %p254
    %s257 = sadd.s32 %s256, 1
    %p260 = scmp.eq.s32.totalorder %s23, 3
    %p261 = scmp.ne.s32.totalorder %s256, %s258
    %p262 = scmp.eq.s32.totalorder %s23, 0
    %p263 = por %p261, %p262
    %p264 = scmp.ne.s32.totalorder %s256, %s258
    %p265 = scmp.eq.s32.totalorder %s28, 3
    %p266 = por %p264, %p265
    %p267 = scmp.ne.s32.totalorder %s258, %s259
    %p268 = scmp.eq.s32.totalorder %s28, 0
    %p269 = por %p267, %p268
    %p270 = scmp.ne.s32.totalorder %s258, %s259
    %p271 = scmp.eq.s32.totalorder %s29, 3
    %p272 = por %p270, %p271
    %p274 = scmp.ne.s32.totalorder %s259, %s273
    %p275 = scmp.eq.s32.totalorder %s29, 0
    %p276 = por %p274, %p275
    %s278 = sadd.s32 %s277, 1
    %p281 = scmp.eq.s32.totalorder %s23, 3
    %p282 = scmp.ne.s32.totalorder %s277, %s279
    %p283 = scmp.eq.s32.totalorder %s23, 0
    %p284 = por %p282, %p283
    %p285 = scmp.ne.s32.totalorder %s277, %s279
    %p286 = scmp.eq.s32.totalorder %s28, 3
    %p287 = por %p285, %p286
    %p288 = scmp.ne.s32.totalorder %s279, %s280
    %p289 = scmp.eq.s32.totalorder %s28, 0
    %p290 = por %p288, %p289
    %p291 = scmp.ne.s32.totalorder %s279, %s280
    %p292 = scmp.eq.s32.totalorder %s29, 3
    %p293 = por %p291, %p292
    %p295 = scmp.ne.s32.totalorder %s280, %s294
    %p296 = scmp.eq.s32.totalorder %s29, 0
    %p297 = por %p295, %p296
    %s299 = sadd.s32 %s298, 1
    %p302 = scmp.eq.s32.totalorder %s23, 3
    %p303 = scmp.ne.s32.totalorder %s298, %s300
    %p304 = scmp.eq.s32.totalorder %s23, 0
    %p305 = por %p303, %p304
    %p306 = scmp.ne.s32.totalorder %s298, %s300
    %p307 = scmp.eq.s32.totalorder %s28, 3
    %p308 = por %p306, %p307
    %p309 = scmp.ne.s32.totalorder %s300, %s301
    %p310 = scmp.eq.s32.totalorder %s28, 0
    %p311 = por %p309, %p310
    %p312 = scmp.ne.s32.totalorder %s300, %s301
    %p313 = scmp.eq.s32.totalorder %s29, 3
    %p314 = por %p312, %p313
    %p316 = scmp.ne.s32.totalorder %s301, %s315
    %p317 = scmp.eq.s32.totalorder %s29, 0
    %p318 = por %p316, %p317
    %s320 = sadd.s32 %s319, 1
    %p323 = scmp.eq.s32.totalorder %s23, 3
    %p324 = scmp.ne.s32.totalorder %s319, %s321
    %p325 = scmp.eq.s32.totalorder %s23, 0
    %p326 = por %p324, %p325
    %p327 = scmp.ne.s32.totalorder %s319, %s321
    %p328 = scmp.eq.s32.totalorder %s28, 3
    %p329 = por %p327, %p328
    %p330 = scmp.ne.s32.totalorder %s321, %s322
    %p331 = scmp.eq.s32.totalorder %s28, 0
    %p332 = por %p330, %p331
    %p333 = scmp.ne.s32.totalorder %s321, %s322
    %p334 = scmp.eq.s32.totalorder %s29, 3
    %p335 = por %p333, %p334
    %p337 = scmp.ne.s32.totalorder %s322, %s336
    %p338 = scmp.eq.s32.totalorder %s29, 0
    %p339 = por %p337, %p338
    %s341 = sadd.s32 %s340, 1
    %p344 = scmp.eq.s32.totalorder %s23, 3
    %p345 = scmp.ne.s32.totalorder %s340, %s342
    %p346 = scmp.eq.s32.totalorder %s23, 0
    %p347 = por %p345, %p346
    %p348 = scmp.ne.s32.totalorder %s340, %s342
    %p349 = scmp.eq.s32.totalorder %s28, 3
    %p350 = por %p348, %p349
    %p351 = scmp.ne.s32.totalorder %s342, %s343
    %p352 = scmp.eq.s32.totalorder %s28, 0
    %p353 = por %p351, %p352
    %p354 = scmp.ne.s32.totalorder %s342, %s343
    %p355 = scmp.eq.s32.totalorder %s29, 3
    %p356 = por %p354, %p355
    %p358 = scmp.ne.s32.totalorder %s343, %s357
    %p359 = scmp.eq.s32.totalorder %s29, 0
    %p360 = por %p358, %p359
    %s362 = sadd.s32 %s361, 1
    %p365 = scmp.eq.s32.totalorder %s23, 3
    %p366 = scmp.ne.s32.totalorder %s361, %s363
    %p367 = scmp.eq.s32.totalorder %s23, 0
    %p368 = por %p366, %p367
    %p369 = scmp.ne.s32.totalorder %s361, %s363
    %p370 = scmp.eq.s32.totalorder %s28, 3
    %p371 = por %p369, %p370
    %p372 = scmp.ne.s32.totalorder %s363, %s364
    %p373 = scmp.eq.s32.totalorder %s28, 0
    %p374 = por %p372, %p373
    %p375 = scmp.ne.s32.totalorder %s363, %s364
    %p376 = scmp.eq.s32.totalorder %s29, 3
    %p377 = por %p375, %p376
    %p379 = scmp.ne.s32.totalorder %s364, %s378
    %p380 = scmp.eq.s32.totalorder %s29, 0
    %p381 = por %p379, %p380
    %s383 = sadd.s32 %s382, 1
    %p386 = scmp.eq.s32.totalorder %s23, 3
    %p387 = scmp.ne.s32.totalorder %s382, %s384
    %p388 = scmp.eq.s32.totalorder %s23, 0
    %p389 = por %p387, %p388
    %p390 = scmp.ne.s32.totalorder %s382, %s384
    %p391 = scmp.eq.s32.totalorder %s28, 3
    %p392 = por %p390, %p391
    %p393 = scmp.ne.s32.totalorder %s384, %s385
    %p394 = scmp.eq.s32.totalorder %s28, 0
    %p395 = por %p393, %p394
    %p396 = scmp.ne.s32.totalorder %s384, %s385
    %p397 = scmp.eq.s32.totalorder %s29, 3
    %p398 = por %p396, %p397
    %p400 = scmp.ne.s32.totalorder %s385, %s399
    %p401 = scmp.eq.s32.totalorder %s29, 0
    %p402 = por %p400, %p401
    %s403 = ssub.s32 %s23, %s30
    %p404 = scmp.eq.s32.totalorder %s403, 0
    %s406 = sadd.s32 %s405, 1
    %s407 = scalar_select %p404, %s405, %s406
    %p410 = pneg %p404
    %p411 = scmp.eq.s32.totalorder %s23, 3
    %p412 = por %p410, %p411
    %p413 = scmp.ne.s32.totalorder %s405, %s408
    %p414 = scmp.eq.s32.totalorder %s23, 0
    %p415 = por %p413, %p414
    %p416 = scmp.ne.s32.totalorder %s405, %s408
    %p417 = scmp.eq.s32.totalorder %s28, 3
    %p418 = por %p416, %p417
    %p419 = scmp.ne.s32.totalorder %s408, %s409
    %p420 = scmp.eq.s32.totalorder %s28, 0
    %p421 = por %p419, %p420
    %p422 = scmp.ne.s32.totalorder %s408, %s409
    %p423 = scmp.eq.s32.totalorder %s29, 3
    %p424 = por %p422, %p423
    %p426 = scmp.ne.s32.totalorder %s409, %s425
    %p427 = scmp.eq.s32.totalorder %s29, 0
    %p428 = por %p426, %p427
    %p429 = scmp.le.s32.totalorder 1, %s23
    %p430 = scmp.lt.s32.totalorder %s23, 5
    %p431 = pnand %p429, %p430
    %p432 = pneg %p431
    // Predicated region
    $region9: #{tpu_custom_call.1} parent=5 // pred_check
      _
    $region10: #{tpu_custom_call.1} parent=5 // pred_check_branch
      %434 = sbr.rel (%p431) target = $region12
    $region11: #{tpu_custom_call.1} parent=5 // pred_region
      %s435 = ssub.s32 %s23, 1
      // Predicated region
      $region13: #{tpu_custom_call.1} parent=11 // pred_check
        %p436 = pneg %p122
      $region14: #{tpu_custom_call.1} parent=11 // pred_check_branch
        %438 = sbr.rel (%p436) target = $region16
      $region15: #{tpu_custom_call.1} parent=11 // pred_region
        _
      $region16: #{tpu_custom_call.1} parent=11 // pred_fallthru
        _
      // Predicated region
      $region17: #{tpu_custom_call.1} parent=11 // pred_check
        %p439 = pneg %p143
      $region18: #{tpu_custom_call.1} parent=11 // pred_check_branch
        %441 = sbr.rel (%p439) target = $region20
      $region19: #{tpu_custom_call.1} parent=11 // pred_region
        _
      $region20: #{tpu_custom_call.1} parent=11 // pred_fallthru
        _
      // Predicated region
      $region21: #{tpu_custom_call.1} parent=11 // pred_check
        %p442 = pneg %p164
      $region22: #{tpu_custom_call.1} parent=11 // pred_check_branch
        %444 = sbr.rel (%p442) target = $region24
      $region23: #{tpu_custom_call.1} parent=11 // pred_region
        _
      $region24: #{tpu_custom_call.1} parent=11 // pred_fallthru
        _
      // Predicated region
      $region25: #{tpu_custom_call.1} parent=11 // pred_check
        %p445 = pneg %p185
      $region26: #{tpu_custom_call.1} parent=11 // pred_check_branch
        %447 = sbr.rel (%p445) target = $region28
      $region27: #{tpu_custom_call.1} parent=11 // pred_region
        _
      $region28: #{tpu_custom_call.1} parent=11 // pred_fallthru
        _
      // Predicated region
      $region29: #{tpu_custom_call.1} parent=11 // pred_check
        %p448 = pneg %p206
      $region30: #{tpu_custom_call.1} parent=11 // pred_check_branch
        %450 = sbr.rel (%p448) target = $region32
      $region31: #{tpu_custom_call.1} parent=11 // pred_region
        _
      $region32: #{tpu_custom_call.1} parent=11 // pred_fallthru
        _
      // Predicated region
      $region33: #{tpu_custom_call.1} parent=11 // pred_check
        %p451 = pneg %p227
      $region34: #{tpu_custom_call.1} parent=11 // pred_check_branch
        %453 = sbr.rel (%p451) target = $region36
      $region35: #{tpu_custom_call.1} parent=11 // pred_region
        _
      $region36: #{tpu_custom_call.1} parent=11 // pred_fallthru
        _
      // Predicated region
      $region37: #{tpu_custom_call.1} parent=11 // pred_check
        %p454 = pneg %p248
      $region38: #{tpu_custom_call.1} parent=11 // pred_check_branch
        %456 = sbr.rel (%p454) target = $region40
      $region39: #{tpu_custom_call.1} parent=11 // pred_region
        _
      $region40: #{tpu_custom_call.1} parent=11 // pred_fallthru
        _
      // Predicated region
      $region41: #{tpu_custom_call.1} parent=11 // pred_check
        %p457 = pneg %p269
      $region42: #{tpu_custom_call.1} parent=11 // pred_check_branch
        %459 = sbr.rel (%p457) target = $region44
      $region43: #{tpu_custom_call.1} parent=11 // pred_region
        _
      $region44: #{tpu_custom_call.1} parent=11 // pred_fallthru
        _
      // Predicated region
      $region45: #{tpu_custom_call.1} parent=11 // pred_check
        %p460 = pneg %p290
      $region46: #{tpu_custom_call.1} parent=11 // pred_check_branch
        %462 = sbr.rel (%p460) target = $region48
      $region47: #{tpu_custom_call.1} parent=11 // pred_region
        _
      $region48: #{tpu_custom_call.1} parent=11 // pred_fallthru
        _
      // Predicated region
      $region49: #{tpu_custom_call.1} parent=11 // pred_check
        %p463 = pneg %p311
      $region50: #{tpu_custom_call.1} parent=11 // pred_check_branch
        %465 = sbr.rel (%p463) target = $region52
      $region51: #{tpu_custom_call.1} parent=11 // pred_region
        _
      $region52: #{tpu_custom_call.1} parent=11 // pred_fallthru
        _
      // Predicated region
      $region53: #{tpu_custom_call.1} parent=11 // pred_check
        %p466 = pneg %p332
      $region54: #{tpu_custom_call.1} parent=11 // pred_check_branch
        %468 = sbr.rel (%p466) target = $region56
      $region55: #{tpu_custom_call.1} parent=11 // pred_region
        _
      $region56: #{tpu_custom_call.1} parent=11 // pred_fallthru
        _
      // Predicated region
      $region57: #{tpu_custom_call.1} parent=11 // pred_check
        %p469 = pneg %p353
      $region58: #{tpu_custom_call.1} parent=11 // pred_check_branch
        %471 = sbr.rel (%p469) target = $region60
      $region59: #{tpu_custom_call.1} parent=11 // pred_region
        _
      $region60: #{tpu_custom_call.1} parent=11 // pred_fallthru
        _
      // Predicated region
      $region61: #{tpu_custom_call.1} parent=11 // pred_check
        %p472 = pneg %p374
      $region62: #{tpu_custom_call.1} parent=11 // pred_check_branch
        %474 = sbr.rel (%p472) target = $region64
      $region63: #{tpu_custom_call.1} parent=11 // pred_region
        _
      $region64: #{tpu_custom_call.1} parent=11 // pred_fallthru
        _
      // Predicated region
      $region65: #{tpu_custom_call.1} parent=11 // pred_check
        %p475 = pneg %p395
      $region66: #{tpu_custom_call.1} parent=11 // pred_check_branch
        %477 = sbr.rel (%p475) target = $region68
      $region67: #{tpu_custom_call.1} parent=11 // pred_region
        _
      $region68: #{tpu_custom_call.1} parent=11 // pred_fallthru
        _
    $region12: #{tpu_custom_call.1} parent=5 // pred_fallthru
      _
    %p478 = scmp.lt.s32.totalorder %s23, 4
    // Predicated region
    $region69: #{tpu_custom_call.1} parent=5 // pred_check
      %p479 = pneg %p478
    $region70: #{tpu_custom_call.1} parent=5 // pred_check_branch
      %481 = sbr.rel (%p479) target = $region72
    $region71: #{tpu_custom_call.1} parent=5 // pred_region
      // Predicated region
      $region73: #{tpu_custom_call.1} parent=71 // pred_check
        %p482 = pneg %p43
      $region74: #{tpu_custom_call.1} parent=71 // pred_check_branch
        %484 = sbr.rel (%p482) target = $region76
      $region75: #{tpu_custom_call.1} parent=71 // pred_region
        %s485 = smul.u32 16, %s23
        %p486 = scmp.lt.s32.totalorder %s485, 63
        %s487 = scalar_select %p486, %s485, 63
        %s488 = smul.addr %s487, 8
        %s489 = scalar_lea.vmem %s0, %s488
        %s490 = smul.u32 16, %s23
      $region76: #{tpu_custom_call.1} parent=71 // pred_fallthru
        _
      // Predicated region
      $region77: #{tpu_custom_call.1} parent=71 // pred_check
        %p491 = pneg %p69
      $region78: #{tpu_custom_call.1} parent=71 // pred_check_branch
        %493 = sbr.rel (%p491) target = $region80
      $region79: #{tpu_custom_call.1} parent=71 // pred_region
        %s494 = smul.u32 16, %s23
        %p495 = scmp.lt.s32.totalorder %s494, 63
        %s496 = scalar_select %p495, %s494, 63
        %s497 = smul.addr %s496, 4
        %s498 = scalar_lea.vmem %s1, %s497
        %s499 = smul.u32 16, %s23
      $region80: #{tpu_custom_call.1} parent=71 // pred_fallthru
        _
      // Predicated region
      $region81: #{tpu_custom_call.1} parent=71 // pred_check
        %p500 = pneg %p95
      $region82: #{tpu_custom_call.1} parent=71 // pred_check_branch
        %502 = sbr.rel (%p500) target = $region84
      $region83: #{tpu_custom_call.1} parent=71 // pred_region
        %s503 = smul.u32 2, %s23
        %p504 = scmp.lt.s32.totalorder %s503, 7
        %s505 = scalar_select %p504, %s503, 7
        %s506 = smul.addr %s505, 8
        %s507 = scalar_lea.vmem %s2, %s506
        %s508 = smul.u32 2, %s23
      $region84: #{tpu_custom_call.1} parent=71 // pred_fallthru
        _
    $region72: #{tpu_custom_call.1} parent=5 // pred_fallthru
      _
    %p509 = scmp.le.s32.totalorder 1, %s23
    %p510 = scmp.lt.s32.totalorder %s23, 5
    %p511 = pnand %p509, %p510
    %p512 = pneg %p511
    // Predicated region
    $region85: #{tpu_custom_call.1} parent=5 // pred_check
      _
    $region86: #{tpu_custom_call.1} parent=5 // pred_check_branch
      %514 = sbr.rel (%p511) target = $region88
    $region87: #{tpu_custom_call.1} parent=5 // pred_region
      %s515 = ssub.s32 %s23, 1
      %s516 = smul.u32 16, %s28
      %p517 = scmp.lt.s32.totalorder %s516, 63
      %s518 = scalar_select %p517, %s516, 63
      %s519 = smul.addr %s518, 8
      %s520 = scalar_lea.vmem %s0, %s519
      %p521 = pneg %p49
      %p522 = pneg %p46
      %s523 = smul.u32 16, %s28
      %p524 = scmp.lt.s32.totalorder %s523, 63
      %s525 = scalar_select %p524, %s523, 63
      %s526 = smul.addr %s525, 4
      %s527 = scalar_lea.vmem %s1, %s526
      %p528 = pneg %p75
      %p529 = pneg %p72
      %s530 = smul.u32 2, %s28
      %p531 = scmp.lt.s32.totalorder %s530, 7
      %s532 = scalar_select %p531, %s530, 7
      %s533 = smul.addr %s532, 8
      %s534 = scalar_lea.vmem %s2, %s533
      %p535 = pneg %p101
      %p536 = pneg %p98
      %p537 = pneg %p122
      %p538 = pneg %p119
      %p539 = pneg %p143
      %p540 = pneg %p140
      %p541 = pneg %p164
      %p542 = pneg %p161
      %p543 = pneg %p185
      %p544 = pneg %p182
      %p545 = pneg %p206
      %p546 = pneg %p203
      %p547 = pneg %p227
      %p548 = pneg %p224
      %p549 = pneg %p248
      %p550 = pneg %p245
      %p551 = pneg %p269
      %p552 = pneg %p266
      %p553 = pneg %p290
      %p554 = pneg %p287
      %p555 = pneg %p311
      %p556 = pneg %p308
      %p557 = pneg %p332
      %p558 = pneg %p329
      %p559 = pneg %p353
      %p560 = pneg %p350
      %p561 = pneg %p374
      %p562 = pneg %p371
      %p563 = pneg %p395
      %p564 = pneg %p392
      %p565 = pneg %p421
      %p566 = pneg %p418
      %s567 = smul.u32 16, %s28
      %p568 = scmp.lt.s32.totalorder %s567, 63
      %s569 = scalar_select %p568, %s567, 63
      %s570 = smul.addr %s569, 8
      %s571 = scalar_lea.vmem %s17, %s570
      %s572 = smul.u32 16, %s28
      %p573 = scmp.lt.s32.totalorder %s572, 63
      %s574 = scalar_select %p573, %s572, 63
      %s575 = smul.addr %s574, 8
      %s576 = scalar_lea.vmem %s0, %s575
      %s577 = smul.u32 16, %s28
      %s578 = smul.u32 16, %s28
      %p579 = scmp.lt.s32.totalorder %s578, 63
      %s580 = scalar_select %p579, %s578, 63
      %s581 = smul.addr %s580, 4
      %s582 = scalar_lea.vmem %s1, %s581
      %s583 = smul.u32 16, %s28
      %s584 = smul.u32 2, %s28
      %p585 = scmp.lt.s32.totalorder %s584, 7
      %s586 = scalar_select %p585, %s584, 7
      %s587 = smul.addr %s586, 8
      %s588 = scalar_lea.vmem %s2, %s587
      %s589 = smul.u32 2, %s28
      %s590 = smul.u32 16, %s28
      %p591 = scmp.lt.s32.totalorder %s590, 63
      %s592 = scalar_select %p591, %s590, 63
      %s593 = smul.addr %s592, 8
      %s594 = scalar_lea.vmem %s17, %s593
      %s595 = smul.u32 16, %s28
      %v597 = vld [vmem:[%s576] sm:$0xff]
      %v598 = vld [vmem:[%s576 + $0x8] sm:$0xff]
      %v599 = vld [vmem:[%s576 + $0x10] sm:$0xff]
      %v600 = vld [vmem:[%s576 + $0x18] sm:$0xff]
      %v601 = vld [vmem:[%s576 + $0x20] sm:$0xff]
      %v602 = vld [vmem:[%s576 + $0x28] sm:$0xff]
      %v603 = vld [vmem:[%s576 + $0x30] sm:$0xff]
      %v604 = vld [vmem:[%s576 + $0x38] sm:$0xff]
      %v605 = vld [vmem:[%s576 + $0x40] sm:$0xff]
      %v606 = vld [vmem:[%s576 + $0x48] sm:$0xff]
      %v607 = vld [vmem:[%s576 + $0x50] sm:$0xff]
      %v608 = vld [vmem:[%s576 + $0x58] sm:$0xff]
      %v609 = vld [vmem:[%s576 + $0x60] sm:$0xff]
      %v610 = vld [vmem:[%s576 + $0x68] sm:$0xff]
      %v611 = vld [vmem:[%s576 + $0x70] sm:$0xff]
      %v612 = vld [vmem:[%s576 + $0x78] sm:$0xff]
      %v613 = vld [vmem:[%s582] sm:$0xf]
      %v614 = vld [vmem:[%s582 + $0x4] sm:$0xf]
      %v615 = vld [vmem:[%s582 + $0x8] sm:$0xf]
      %v616 = vld [vmem:[%s582 + $0xc] sm:$0xf]
      %v617 = vld [vmem:[%s582 + $0x10] sm:$0xf]
      %v618 = vld [vmem:[%s582 + $0x14] sm:$0xf]
      %v619 = vld [vmem:[%s582 + $0x18] sm:$0xf]
      %v620 = vld [vmem:[%s582 + $0x1c] sm:$0xf]
      %v621 = vld [vmem:[%s582 + $0x20] sm:$0xf]
      %v622 = vld [vmem:[%s582 + $0x24] sm:$0xf]
      %v623 = vld [vmem:[%s582 + $0x28] sm:$0xf]
      %v624 = vld [vmem:[%s582 + $0x2c] sm:$0xf]
      %v625 = vld [vmem:[%s582 + $0x30] sm:$0xf]
      %v626 = vld [vmem:[%s582 + $0x34] sm:$0xf]
      %v627 = vld [vmem:[%s582 + $0x38] sm:$0xf]
      %v628 = vld [vmem:[%s582 + $0x3c] sm:$0xf]
      %v629 = vunpack.c.l.bf16 %v613
      %v630 = vunpack.c.l.bf16 %v614
      %v631 = vunpack.c.l.bf16 %v615
      %v632 = vunpack.c.l.bf16 %v616
      %v633 = vunpack.c.l.bf16 %v617
      %v634 = vunpack.c.l.bf16 %v618
      %v635 = vunpack.c.l.bf16 %v619
      %v636 = vunpack.c.l.bf16 %v620
      %v637 = vunpack.c.l.bf16 %v621
      %v638 = vunpack.c.l.bf16 %v622
      %v639 = vunpack.c.l.bf16 %v623
      %v640 = vunpack.c.l.bf16 %v624
      %v641 = vunpack.c.l.bf16 %v625
      %v642 = vunpack.c.l.bf16 %v626
      %v643 = vunpack.c.l.bf16 %v627
      %v644 = vunpack.c.l.bf16 %v628
      %v645 = vadd.f32 %v597, %v629
      %v646 = vadd.f32 %v598, %v630
      %v647 = vadd.f32 %v599, %v631
      %v648 = vadd.f32 %v600, %v632
      %v649 = vadd.f32 %v601, %v633
      %v650 = vadd.f32 %v602, %v634
      %v651 = vadd.f32 %v603, %v635
      %v652 = vadd.f32 %v604, %v636
      %v653 = vadd.f32 %v605, %v637
      %v654 = vadd.f32 %v606, %v638
      %v655 = vadd.f32 %v607, %v639
      %v656 = vadd.f32 %v608, %v640
      %v657 = vadd.f32 %v609, %v641
      %v658 = vadd.f32 %v610, %v642
      %v659 = vadd.f32 %v611, %v643
      %v660 = vadd.f32 %v612, %v644
      %v661 = vpack.c.bf16 %v646, %v645
      %v662 = vpack.c.bf16 %v648, %v647
      %v663 = vpack.c.bf16 %v650, %v649
      %v664 = vpack.c.bf16 %v652, %v651
      %v665 = vpack.c.bf16 %v654, %v653
      %v666 = vpack.c.bf16 %v656, %v655
      %v667 = vpack.c.bf16 %v658, %v657
      %v668 = vpack.c.bf16 %v660, %v659
      %v669 = vpack.c.bf16 %v598, %v597
      %v670 = vpack.c.bf16 %v600, %v599
      %v671 = vpack.c.bf16 %v602, %v601
      %v672 = vpack.c.bf16 %v604, %v603
      %v673 = vpack.c.bf16 %v606, %v605
      %v674 = vpack.c.bf16 %v608, %v607
      %v675 = vpack.c.bf16 %v610, %v609
      %v676 = vpack.c.bf16 %v612, %v611
      %v677 = vld [vmem:[%s3] sm:$0xf]
      %v678 = vld [vmem:[%s3 + $0x4] sm:$0xf]
      %v679 = vld [vmem:[%s3 + $0x8] sm:$0xf]
      %v680 = vld [vmem:[%s3 + $0xc] sm:$0xf]
      %v681 = vld [vmem:[%s3 + $0x10] sm:$0xf]
      %v682 = vld [vmem:[%s3 + $0x14] sm:$0xf]
      %v683 = vld [vmem:[%s3 + $0x18] sm:$0xf]
      %v684 = vld [vmem:[%s3 + $0x1c] sm:$0xf]
      %v685 = vld [vmem:[%s4] sm:$0x1]
      %v687 = vlaneseq
      %v688 = vshrl.u32 %v687, 7
      %v689 = vsub.s32 0, %v688
      %v690 = vrot.slane %v685, %v689
      %v700 = vunpack.c.l.b16 %v677
      %v701 = vunpack.c.l.b16 %v678
      %v702 = vunpack.c.l.b16 %v679
      %v703 = vunpack.c.l.b16 %v680
      %v704 = vunpack.c.l.b16 %v681
      %v705 = vunpack.c.l.b16 %v682
      %v706 = vunpack.c.l.b16 %v683
      %v707 = vunpack.c.l.b16 %v684
      %v708 = vpack.c.b16 %v701, %v700
      %v709 = vpack.c.b16 %v703, %v702
      %v710 = vpack.c.b16 %v705, %v704
      %v711 = vpack.c.b16 %v707, %v706
      %vm716 = vcmask 523264
      %v718 = vsel %vm716, %v661, 0
      %v721 = vsel %vm716, %v662, 0
      %v724 = vsel %vm716, %v663, 0
      %v727 = vsel %vm716, %v664, 0
      %v730 = vsel %vm716, %v665, 0
      %v733 = vsel %vm716, %v666, 0
      %v736 = vsel %vm716, %v667, 0
      %v739 = vsel %vm716, %v668, 0
      %741 = vmatprep.subr.bf16.mxu0 0
      %742 = vmatpush1.bf16.msra.mxu0 %v708
      %743 = vmatprep.subr.bf16.mxu0 0
      %744 = vmatpush1.bf16.msra.mxu0 %v709
      %745 = vmatprep.subr.bf16.mxu0 0
      %746 = vmatpush1.bf16.msra.mxu0 %v710
      %747 = vmatprep.subr.bf16.mxu0 0
      %748 = vmatpush1.bf16.msra.mxu0 %v711
      %749 = vmatprep.subr.bf16.mxu0 0
      %750 = vmatpush1.bf16.msra.mxu0 0
      %751 = vmatprep.subr.bf16.mxu0 0
      %752 = vmatpush1.bf16.msra.mxu0 0
      %753 = vmatprep.subr.bf16.mxu0 0
      %754 = vmatpush1.bf16.msra.mxu0 0
      %755 = vmatprep.subr.bf16.mxu0 0
      %756 = vmatpush1.bf16.msra.mxu0 0
      %757 = vmatprep.subr.bf16.mxu0 0
      %758 = vmatpush1.bf16.msra.mxu0 0
      %759 = vmatprep.subr.bf16.mxu0 0
      %760 = vmatpush1.bf16.msra.mxu0 0
      %761 = vmatprep.subr.bf16.mxu0 0
      %762 = vmatpush1.bf16.msra.mxu0 0
      %763 = vmatprep.subr.bf16.mxu0 0
      %764 = vmatpush1.bf16.msra.mxu0 0
      %765 = vmatprep.subr.bf16.mxu0 0
      %766 = vmatpush1.bf16.msra.mxu0 0
      %767 = vmatprep.subr.bf16.mxu0 0
      %768 = vmatpush1.bf16.msra.mxu0 0
      %769 = vmatprep.subr.bf16.mxu0 0
      %770 = vmatpush1.bf16.msra.mxu0 0
      %771 = vmatprep.subr.bf16.mxu0 0
      %772 = vmatpush1.bf16.msra.mxu0 0
      %773 = vmatprep.mubr.bf16.mxu0 0
      %774 = vmatmul.mubr.bf16.gmra.mrb[0].mxu0 %v718
      %v775 = vpop.f32.mrb[0].mxu0
      %v776 = vadd.f32 %v690, %v775
      %v777 = vpop.f32.mrb[0].mxu0
      %v778 = vpop.f32.mrb[0].mxu0
      %v779 = vadd.f32 %v690, %v778
      %v780 = vpop.f32.mrb[0].mxu0
      %781 = vmatprep.mubr.bf16.mxu0 0
      %782 = vmatmul.mubr.bf16.gmra.mrb[0].mxu0 %v721
      %v783 = vpop.f32.mrb[0].mxu0
      %v784 = vadd.f32 %v690, %v783
      %v785 = vpop.f32.mrb[0].mxu0
      %v786 = vpop.f32.mrb[0].mxu0
      %v787 = vadd.f32 %v690, %v786
      %v788 = vpop.f32.mrb[0].mxu0
      %789 = vmatprep.mubr.bf16.mxu0 0
      %790 = vmatmul.mubr.bf16.gmra.mrb[0].mxu0 %v724
      %v791 = vpop.f32.mrb[0].mxu0
      %v792 = vadd.f32 %v690, %v791
      %v793 = vpop.f32.mrb[0].mxu0
      %v794 = vpop.f32.mrb[0].mxu0
      %v795 = vadd.f32 %v690, %v794
      %v796 = vpop.f32.mrb[0].mxu0
      %797 = vmatprep.mubr.bf16.mxu0 0
      %798 = vmatmul.mubr.bf16.gmra.mrb[0].mxu0 %v727
      %v799 = vpop.f32.mrb[0].mxu0
      %v800 = vadd.f32 %v690, %v799
      %v801 = vpop.f32.mrb[0].mxu0
      %v802 = vpop.f32.mrb[0].mxu0
      %v803 = vadd.f32 %v690, %v802
      %v804 = vpop.f32.mrb[0].mxu0
      %805 = vmatprep.mubr.bf16.mxu0 0
      %806 = vmatmul.mubr.bf16.gmra.mrb[0].mxu0 %v730
      %v807 = vpop.f32.mrb[0].mxu0
      %v808 = vadd.f32 %v690, %v807
      %v809 = vpop.f32.mrb[0].mxu0
      %v810 = vpop.f32.mrb[0].mxu0
      %v811 = vadd.f32 %v690, %v810
      %v812 = vpop.f32.mrb[0].mxu0
      %813 = vmatprep.mubr.bf16.mxu0 0
      %814 = vmatmul.mubr.bf16.gmra.mrb[0].mxu0 %v733
      %v815 = vpop.f32.mrb[0].mxu0
      %v816 = vadd.f32 %v690, %v815
      %v817 = vpop.f32.mrb[0].mxu0
      %v818 = vpop.f32.mrb[0].mxu0
      %v819 = vadd.f32 %v690, %v818
      %v820 = vpop.f32.mrb[0].mxu0
      %821 = vmatprep.mubr.bf16.mxu0 0
      %822 = vmatmul.mubr.bf16.gmra.mrb[0].mxu0 %v736
      %v823 = vpop.f32.mrb[0].mxu0
      %v824 = vadd.f32 %v690, %v823
      %v825 = vpop.f32.mrb[0].mxu0
      %v826 = vpop.f32.mrb[0].mxu0
      %v827 = vadd.f32 %v690, %v826
      %v828 = vpop.f32.mrb[0].mxu0
      %829 = vmatprep.mubr.bf16.mxu0 0
      %830 = vmatmul.mubr.bf16.gmra.mrb[0].mxu0 %v739
      %v831 = vpop.f32.mrb[0].mxu0
      %v832 = vadd.f32 %v690, %v831
      %v833 = vpop.f32.mrb[0].mxu0
      %v834 = vpop.f32.mrb[0].mxu0
      %v835 = vadd.f32 %v690, %v834
      %v836 = vpop.f32.mrb[0].mxu0
      %837 = vdwg.mxu0
      %v838 = vld [vmem:[%s5] sm:$0xf]
      %v839 = vld [vmem:[%s5 + $0x4] sm:$0xf]
      %v840 = vld [vmem:[%s5 + $0x8] sm:$0xf]
      %v841 = vld [vmem:[%s5 + $0xc] sm:$0xf]
      %v842 = vld [vmem:[%s5 + $0x10] sm:$0xf]
      %v843 = vld [vmem:[%s5 + $0x14] sm:$0xf]
      %v844 = vld [vmem:[%s5 + $0x18] sm:$0xf]
      %v845 = vld [vmem:[%s5 + $0x1c] sm:$0xf]
      %v846 = vld [vmem:[%s6] sm:$0x1]
      %v848 = vlaneseq
      %v849 = vshrl.u32 %v848, 7
      %v850 = vsub.s32 0, %v849
      %v851 = vrot.slane %v846, %v850
      %v861 = vunpack.c.l.b16 %v838
      %v862 = vunpack.c.l.b16 %v839
      %v863 = vunpack.c.l.b16 %v840
      %v864 = vunpack.c.l.b16 %v841
      %v865 = vunpack.c.l.b16 %v842
      %v866 = vunpack.c.l.b16 %v843
      %v867 = vunpack.c.l.b16 %v844
      %v868 = vunpack.c.l.b16 %v845
      %v869 = vpack.c.b16 %v862, %v861
      %v870 = vpack.c.b16 %v864, %v863
      %v871 = vpack.c.b16 %v866, %v865
      %v872 = vpack.c.b16 %v868, %v867
      %v878 = vsel %vm716, %v669, 0
      %v881 = vsel %vm716, %v670, 0
      %v884 = vsel %vm716, %v671, 0
      %v887 = vsel %vm716, %v672, 0
      %v890 = vsel %vm716, %v673, 0
      %v893 = vsel %vm716, %v674, 0
      %v896 = vsel %vm716, %v675, 0
      %v899 = vsel %vm716, %v676, 0
      %901 = vmatprep.subr.bf16.mxu0 0
      %902 = vmatpush1.bf16.msra.mxu0 %v869
      %903 = vmatprep.subr.bf16.mxu0 0
      %904 = vmatpush1.bf16.msra.mxu0 %v870
      %905 = vmatprep.subr.bf16.mxu0 0
      %906 = vmatpush1.bf16.msra.mxu0 %v871
      %907 = vmatprep.subr.bf16.mxu0 0
      %908 = vmatpush1.bf16.msra.mxu0 %v872
      %909 = vmatprep.subr.bf16.mxu0 0
      %910 = vmatpush1.bf16.msra.mxu0 0
      %911 = vmatprep.subr.bf16.mxu0 0
      %912 = vmatpush1.bf16.msra.mxu0 0
      %913 = vmatprep.subr.bf16.mxu0 0
      %914 = vmatpush1.bf16.msra.mxu0 0
      %915 = vmatprep.subr.bf16.mxu0 0
      %916 = vmatpush1.bf16.msra.mxu0 0
      %917 = vmatprep.subr.bf16.mxu0 0
      %918 = vmatpush1.bf16.msra.mxu0 0
      %919 = vmatprep.subr.bf16.mxu0 0
      %920 = vmatpush1.bf16.msra.mxu0 0
      %921 = vmatprep.subr.bf16.mxu0 0
      %922 = vmatpush1.bf16.msra.mxu0 0
      %923 = vmatprep.subr.bf16.mxu0 0
      %924 = vmatpush1.bf16.msra.mxu0 0
      %925 = vmatprep.subr.bf16.mxu0 0
      %926 = vmatpush1.bf16.msra.mxu0 0
      %927 = vmatprep.subr.bf16.mxu0 0
      %928 = vmatpush1.bf16.msra.mxu0 0
      %929 = vmatprep.subr.bf16.mxu0 0
      %930 = vmatpush1.bf16.msra.mxu0 0
      %931 = vmatprep.subr.bf16.mxu0 0
      %932 = vmatpush1.bf16.msra.mxu0 0
      %933 = vmatprep.mubr.bf16.mxu0 0
      %934 = vmatmul.mubr.bf16.gmra.mrb[0].mxu0 %v878
      %v935 = vpop.f32.mrb[0].mxu0
      %v936 = vadd.f32 %v851, %v935
      %v937 = vpop.f32.mrb[0].mxu0
      %v938 = vpop.f32.mrb[0].mxu0
      %v939 = vadd.f32 %v851, %v938
      %v940 = vpop.f32.mrb[0].mxu0
      %941 = vmatprep.mubr.bf16.mxu0 0
      %942 = vmatmul.mubr.bf16.gmra.mrb[0].mxu0 %v881
      %v943 = vpop.f32.mrb[0].mxu0
      %v944 = vadd.f32 %v851, %v943
      %v945 = vpop.f32.mrb[0].mxu0
      %v946 = vpop.f32.mrb[0].mxu0
      %v947 = vadd.f32 %v851, %v946
      %v948 = vpop.f32.mrb[0].mxu0
      %949 = vmatprep.mubr.bf16.mxu0 0
      %950 = vmatmul.mubr.bf16.gmra.mrb[0].mxu0 %v884
      %v951 = vpop.f32.mrb[0].mxu0
      %v952 = vadd.f32 %v851, %v951
      %v953 = vpop.f32.mrb[0].mxu0
      %v954 = vpop.f32.mrb[0].mxu0
      %v955 = vadd.f32 %v851, %v954
      %v956 = vpop.f32.mrb[0].mxu0
      %957 = vmatprep.mubr.bf16.mxu0 0
      %958 = vmatmul.mubr.bf16.gmra.mrb[0].mxu0 %v887
      %v959 = vpop.f32.mrb[0].mxu0
      %v960 = vadd.f32 %v851, %v959
      %v961 = vpop.f32.mrb[0].mxu0
      %v962 = vpop.f32.mrb[0].mxu0
      %v963 = vadd.f32 %v851, %v962
      %v964 = vpop.f32.mrb[0].mxu0
      %965 = vmatprep.mubr.bf16.mxu0 0
      %966 = vmatmul.mubr.bf16.gmra.mrb[0].mxu0 %v890
      %v967 = vpop.f32.mrb[0].mxu0
      %v968 = vadd.f32 %v851, %v967
      %v969 = vpop.f32.mrb[0].mxu0
      %v970 = vpop.f32.mrb[0].mxu0
      %v971 = vadd.f32 %v851, %v970
      %v972 = vpop.f32.mrb[0].mxu0
      %973 = vmatprep.mubr.bf16.mxu0 0
      %974 = vmatmul.mubr.bf16.gmra.mrb[0].mxu0 %v893
      %v975 = vpop.f32.mrb[0].mxu0
      %v976 = vadd.f32 %v851, %v975
      %v977 = vpop.f32.mrb[0].mxu0
      %v978 = vpop.f32.mrb[0].mxu0
      %v979 = vadd.f32 %v851, %v978
      %v980 = vpop.f32.mrb[0].mxu0
      %981 = vmatprep.mubr.bf16.mxu0 0
      %982 = vmatmul.mubr.bf16.gmra.mrb[0].mxu0 %v896
      %v983 = vpop.f32.mrb[0].mxu0
      %v984 = vadd.f32 %v851, %v983
      %v985 = vpop.f32.mrb[0].mxu0
      %v986 = vpop.f32.mrb[0].mxu0
      %v987 = vadd.f32 %v851, %v986
      %v988 = vpop.f32.mrb[0].mxu0
      %989 = vmatprep.mubr.bf16.mxu0 0
      %990 = vmatmul.mubr.bf16.gmra.mrb[0].mxu0 %v899
      %v991 = vpop.f32.mrb[0].mxu0
      %v992 = vadd.f32 %v851, %v991
      %v993 = vpop.f32.mrb[0].mxu0
      %v994 = vpop.f32.mrb[0].mxu0
      %v995 = vadd.f32 %v851, %v994
      %v996 = vpop.f32.mrb[0].mxu0
      %997 = vdwg.mxu0
      %v998 = vpack.c.bf16 %v779, %v776
      %v999 = vpack.c.bf16 %v787, %v784
      %v1000 = vpack.c.bf16 %v795, %v792
      %v1001 = vpack.c.bf16 %v803, %v800
      %v1002 = vpack.c.bf16 %v811, %v808
      %v1003 = vpack.c.bf16 %v819, %v816
      %v1004 = vpack.c.bf16 %v827, %v824
      %v1005 = vpack.c.bf16 %v835, %v832
      %v1014 = vunpack.c.l.b16 %v998
      %v1015 = vunpack.c.h.b16 %v998
      %v1016 = vunpack.c.l.b16 %v999
      %v1017 = vunpack.c.h.b16 %v999
      %v1018 = vunpack.c.l.b16 %v1000
      %v1019 = vunpack.c.h.b16 %v1000
      %v1020 = vunpack.c.l.b16 %v1001
      %v1021 = vunpack.c.h.b16 %v1001
      %v1022 = vunpack.c.l.b16 %v1002
      %v1023 = vunpack.c.h.b16 %v1002
      %v1024 = vunpack.c.l.b16 %v1003
      %v1025 = vunpack.c.h.b16 %v1003
      %v1026 = vunpack.c.l.b16 %v1004
      %v1027 = vunpack.c.h.b16 %v1004
      %v1028 = vunpack.c.l.b16 %v1005
      %v1029 = vunpack.c.h.b16 %v1005
      %v1030 = vpack.c.b16 %v1014, %v1014
      %v1031 = vpack.c.b16 %v1015, %v1015
      %v1032 = vpack.c.b16 %v1016, %v1016
      %v1033 = vpack.c.b16 %v1017, %v1017
      %v1034 = vpack.c.b16 %v1018, %v1018
      %v1035 = vpack.c.b16 %v1019, %v1019
      %v1036 = vpack.c.b16 %v1020, %v1020
      %v1037 = vpack.c.b16 %v1021, %v1021
      %v1038 = vpack.c.b16 %v1022, %v1022
      %v1039 = vpack.c.b16 %v1023, %v1023
      %v1040 = vpack.c.b16 %v1024, %v1024
      %v1041 = vpack.c.b16 %v1025, %v1025
      %v1042 = vpack.c.b16 %v1026, %v1026
      %v1043 = vpack.c.b16 %v1027, %v1027
      %v1044 = vpack.c.b16 %v1028, %v1028
      %v1045 = vpack.c.b16 %v1029, %v1029
      %v1046 = vpack.c.bf16 %v939, %v936
      %v1047 = vpack.c.bf16 %v947, %v944
      %v1048 = vpack.c.bf16 %v955, %v952
      %v1049 = vpack.c.bf16 %v963, %v960
      %v1050 = vpack.c.bf16 %v971, %v968
      %v1051 = vpack.c.bf16 %v979, %v976
      %v1052 = vpack.c.bf16 %v987, %v984
      %v1053 = vpack.c.bf16 %v995, %v992
      %v1062 = vunpack.c.l.b16 %v1046
      %v1063 = vunpack.c.h.b16 %v1046
      %v1064 = vunpack.c.l.b16 %v1047
      %v1065 = vunpack.c.h.b16 %v1047
      %v1066 = vunpack.c.l.b16 %v1048
      %v1067 = vunpack.c.h.b16 %v1048
      %v1068 = vunpack.c.l.b16 %v1049
      %v1069 = vunpack.c.h.b16 %v1049
      %v1070 = vunpack.c.l.b16 %v1050
      %v1071 = vunpack.c.h.b16 %v1050
      %v1072 = vunpack.c.l.b16 %v1051
      %v1073 = vunpack.c.h.b16 %v1051
      %v1074 = vunpack.c.l.b16 %v1052
      %v1075 = vunpack.c.h.b16 %v1052
      %v1076 = vunpack.c.l.b16 %v1053
      %v1077 = vunpack.c.h.b16 %v1053
      %v1078 = vpack.c.b16 %v1062, %v1062
      %v1079 = vpack.c.b16 %v1063, %v1063
      %v1080 = vpack.c.b16 %v1064, %v1064
      %v1081 = vpack.c.b16 %v1065, %v1065
      %v1082 = vpack.c.b16 %v1066, %v1066
      %v1083 = vpack.c.b16 %v1067, %v1067
      %v1084 = vpack.c.b16 %v1068, %v1068
      %v1085 = vpack.c.b16 %v1069, %v1069
      %v1086 = vpack.c.b16 %v1070, %v1070
      %v1087 = vpack.c.b16 %v1071, %v1071
      %v1088 = vpack.c.b16 %v1072, %v1072
      %v1089 = vpack.c.b16 %v1073, %v1073
      %v1090 = vpack.c.b16 %v1074, %v1074
      %v1091 = vpack.c.b16 %v1075, %v1075
      %v1092 = vpack.c.b16 %v1076, %v1076
      %v1093 = vpack.c.b16 %v1077, %v1077
      %v1094 = vld [vmem:[%s588] sm:$0xff]
      %v1095 = vld [vmem:[%s588 + $0x8] sm:$0xff]
      %v1098 = vcombine.high %v1094, %v1094
      %v1100 = vunpack.c.l.s4 1966171168
      %v1101 = vunpack.c.0.s8 %v1100
      %v1102 = vlaneseq
      %v1103 = vshrl.u32 %v1102, 7
      %v1104 = vsub.s32 %v1101, %v1103
      %v1105 = vrot.slane %v1094, %v1104
      %v1107 = vunpack.c.l.s4 1966171168
      %v1108 = vunpack.c.0.s8 %v1107
      %v1109 = vlaneseq
      %v1110 = vshrl.u32 %v1109, 7
      %v1111 = vsub.s32 %v1108, %v1110
      %v1112 = vrot.slane %v1098, %v1111
      %v1113 = vcombine.high %v1105, %v1105
      %v1114 = vcombine.high %v1112, %v1112
      %v1116 = vunpack.c.l.s4 1966171168
      %v1117 = vunpack.c.0.s8 %v1116
      %v1118 = vlaneseq
      %v1119 = vshrl.u32 %v1118, 7
      %v1120 = vsub.s32 %v1117, %v1119
      %v1121 = vrot.slane %v1105, %v1120
      %v1123 = vunpack.c.l.s4 1966171168
      %v1124 = vunpack.c.0.s8 %v1123
      %v1125 = vlaneseq
      %v1126 = vshrl.u32 %v1125, 7
      %v1127 = vsub.s32 %v1124, %v1126
      %v1128 = vrot.slane %v1112, %v1127
      %v1130 = vunpack.c.l.s4 1966171168
      %v1131 = vunpack.c.0.s8 %v1130
      %v1132 = vlaneseq
      %v1133 = vshrl.u32 %v1132, 7
      %v1134 = vsub.s32 %v1131, %v1133
      %v1135 = vrot.slane %v1113, %v1134
      %v1137 = vunpack.c.l.s4 1966171168
      %v1138 = vunpack.c.0.s8 %v1137
      %v1139 = vlaneseq
      %v1140 = vshrl.u32 %v1139, 7
      %v1141 = vsub.s32 %v1138, %v1140
      %v1142 = vrot.slane %v1114, %v1141
      %v1143 = vcombine.high %v1121, %v1121
      %v1144 = vcombine.high %v1128, %v1128
      %v1145 = vcombine.high %v1135, %v1135
      %v1146 = vcombine.high %v1142, %v1142
      %v1147 = vcombine.high %v1095, %v1095
      %v1149 = vunpack.c.l.s4 1966171168
      %v1150 = vunpack.c.0.s8 %v1149
      %v1151 = vlaneseq
      %v1152 = vshrl.u32 %v1151, 7
      %v1153 = vsub.s32 %v1150, %v1152
      %v1154 = vrot.slane %v1095, %v1153
      %v1156 = vunpack.c.l.s4 1966171168
      %v1157 = vunpack.c.0.s8 %v1156
      %v1158 = vlaneseq
      %v1159 = vshrl.u32 %v1158, 7
      %v1160 = vsub.s32 %v1157, %v1159
      %v1161 = vrot.slane %v1147, %v1160
      %v1162 = vcombine.high %v1154, %v1154
      %v1163 = vcombine.high %v1161, %v1161
      %v1165 = vunpack.c.l.s4 1966171168
      %v1166 = vunpack.c.0.s8 %v1165
      %v1167 = vlaneseq
      %v1168 = vshrl.u32 %v1167, 7
      %v1169 = vsub.s32 %v1166, %v1168
      %v1170 = vrot.slane %v1154, %v1169
      %v1172 = vunpack.c.l.s4 1966171168
      %v1173 = vunpack.c.0.s8 %v1172
      %v1174 = vlaneseq
      %v1175 = vshrl.u32 %v1174, 7
      %v1176 = vsub.s32 %v1173, %v1175
      %v1177 = vrot.slane %v1161, %v1176
      %v1179 = vunpack.c.l.s4 1966171168
      %v1180 = vunpack.c.0.s8 %v1179
      %v1181 = vlaneseq
      %v1182 = vshrl.u32 %v1181, 7
      %v1183 = vsub.s32 %v1180, %v1182
      %v1184 = vrot.slane %v1162, %v1183
      %v1186 = vunpack.c.l.s4 1966171168
      %v1187 = vunpack.c.0.s8 %v1186
      %v1188 = vlaneseq
      %v1189 = vshrl.u32 %v1188, 7
      %v1190 = vsub.s32 %v1187, %v1189
      %v1191 = vrot.slane %v1163, %v1190
      %v1192 = vcombine.high %v1170, %v1170
      %v1193 = vcombine.high %v1177, %v1177
      %v1194 = vcombine.high %v1184, %v1184
      %v1195 = vcombine.high %v1191, %v1191
      %v1196 = vld [vmem:[%s7] sm:$0xf]
      %v1197 = vld [vmem:[%s7 + $0x4] sm:$0xf]
      %v1198 = vld [vmem:[%s7 + $0x8] sm:$0xf]
      %v1199 = vld [vmem:[%s7 + $0xc] sm:$0xf]
      %v1200 = vld [vmem:[%s7 + $0x10] sm:$0xf]
      %v1201 = vld [vmem:[%s7 + $0x14] sm:$0xf]
      %v1202 = vld [vmem:[%s7 + $0x18] sm:$0xf]
      %v1203 = vld [vmem:[%s7 + $0x1c] sm:$0xf]
      %v1204 = vlaneseq
      %v1205 = vshrl.u32 %v1204, 7
      %v1206 = vsub.s32 0, %v1205
      %v1207 = vrot.slane %v1121, %v1206
      %v1208 = vlaneseq
      %v1209 = vshrl.u32 %v1208, 7
      %v1210 = vsub.s32 0, %v1209
      %v1211 = vrot.slane %v1135, %v1210
      %v1212 = vlaneseq
      %v1213 = vshrl.u32 %v1212, 7
      %v1214 = vsub.s32 0, %v1213
      %v1215 = vrot.slane %v1143, %v1214
      %v1216 = vlaneseq
      %v1217 = vshrl.u32 %v1216, 7
      %v1218 = vsub.s32 0, %v1217
      %v1219 = vrot.slane %v1145, %v1218
      %v1220 = vlaneseq
      %v1221 = vshrl.u32 %v1220, 7
      %v1222 = vsub.s32 0, %v1221
      %v1223 = vrot.slane %v1128, %v1222
      %v1224 = vlaneseq
      %v1225 = vshrl.u32 %v1224, 7
      %v1226 = vsub.s32 0, %v1225
      %v1227 = vrot.slane %v1142, %v1226
      %v1228 = vlaneseq
      %v1229 = vshrl.u32 %v1228, 7
      %v1230 = vsub.s32 0, %v1229
      %v1231 = vrot.slane %v1144, %v1230
      %v1232 = vlaneseq
      %v1233 = vshrl.u32 %v1232, 7
      %v1234 = vsub.s32 0, %v1233
      %v1235 = vrot.slane %v1146, %v1234
      %v1236 = vlaneseq
      %v1237 = vshrl.u32 %v1236, 7
      %v1238 = vsub.s32 0, %v1237
      %v1239 = vrot.slane %v1170, %v1238
      %v1240 = vlaneseq
      %v1241 = vshrl.u32 %v1240, 7
      %v1242 = vsub.s32 0, %v1241
      %v1243 = vrot.slane %v1184, %v1242
      %v1244 = vlaneseq
      %v1245 = vshrl.u32 %v1244, 7
      %v1246 = vsub.s32 0, %v1245
      %v1247 = vrot.slane %v1192, %v1246
      %v1248 = vlaneseq
      %v1249 = vshrl.u32 %v1248, 7
      %v1250 = vsub.s32 0, %v1249
      %v1251 = vrot.slane %v1194, %v1250
      %v1252 = vlaneseq
      %v1253 = vshrl.u32 %v1252, 7
      %v1254 = vsub.s32 0, %v1253
      %v1255 = vrot.slane %v1177, %v1254
      %v1256 = vlaneseq
      %v1257 = vshrl.u32 %v1256, 7
      %v1258 = vsub.s32 0, %v1257
      %v1259 = vrot.slane %v1191, %v1258
      %v1260 = vlaneseq
      %v1261 = vshrl.u32 %v1260, 7
      %v1262 = vsub.s32 0, %v1261
      %v1263 = vrot.slane %v1193, %v1262
      %v1264 = vlaneseq
      %v1265 = vshrl.u32 %v1264, 7
      %v1266 = vsub.s32 0, %v1265
      %v1267 = vrot.slane %v1195, %v1266
      %1284 = vrot.lane.b32.xlu0 %v1030, 64
      %v1285 = vpop.permute.xlu0 %1284
      %vm1286 = vcmask 130048
      %v1288 = vsel %vm1286, %v1030, 0
      %v1291 = vsel %vm1286, %v1285, 0
      %1293 = vmatprep.subr.bf16.mxu0 0
      %1294 = vmatpush1.bf16.xpose.msra.mxu0 %v1291
      %1295 = vmatprep.subr.bf16.mxu0 0
      %1296 = vmatpush1.bf16.xpose.msra.mxu0 0
      %1297 = vmatprep.subr.bf16.mxu0 0
      %1298 = vmatpush1.bf16.xpose.msra.mxu0 0
      %1299 = vmatprep.subr.bf16.mxu0 0
      %1300 = vmatpush1.bf16.xpose.msra.mxu0 0
      %1301 = vmatprep.subr.bf16.mxu0 0
      %1302 = vmatpush1.bf16.xpose.msra.mxu0 0
      %1303 = vmatprep.subr.bf16.mxu0 0
      %1304 = vmatpush1.bf16.xpose.msra.mxu0 0
      %1305 = vmatprep.subr.bf16.mxu0 0
      %1306 = vmatpush1.bf16.xpose.msra.mxu0 0
      %1307 = vmatprep.subr.bf16.mxu0 0
      %1308 = vmatpush1.bf16.xpose.msra.mxu0 0
      %1309 = vmatprep.subr.bf16.mxu0 0
      %1310 = vmatpush1.bf16.xpose.msra.mxu0 0
      %1311 = vmatprep.subr.bf16.mxu0 0
      %1312 = vmatpush1.bf16.xpose.msra.mxu0 0
      %1313 = vmatprep.subr.bf16.mxu0 0
      %1314 = vmatpush1.bf16.xpose.msra.mxu0 0
      %1315 = vmatprep.subr.bf16.mxu0 0
      %1316 = vmatpush1.bf16.xpose.msra.mxu0 0
      %1317 = vmatprep.subr.bf16.mxu0 0
      %1318 = vmatpush1.bf16.xpose.msra.mxu0 0
      %1319 = vmatprep.subr.bf16.mxu0 0
      %1320 = vmatpush1.bf16.xpose.msra.mxu0 0
      %1321 = vmatprep.subr.bf16.mxu0 0
      %1322 = vmatpush1.bf16.xpose.msra.mxu0 0
      %1323 = vmatprep.subr.bf16.mxu0 0
      %1324 = vmatpush1.bf16.xpose.msra.mxu0 0
      %1325 = vmatprep.mubr.bf16.mxu0 0
      %1326 = vmatmul.mubr.bf16.gmra.mrb[0].mxu0 %v1288
      %v1327 = vpop.f32.mrb[0].mxu0
      %v1328 = vadd.f32 %v1207, %v1327
      %v1329 = vpop.f32.mrb[0].mxu0
      %v1330 = vpop.f32.mrb[0].mxu0
      %v1331 = vpop.f32.mrb[0].mxu0
      %1332 = vdwg.mxu0
      %1333 = vrot.lane.b32.xlu0 %v1031, 64
      %v1334 = vpop.permute.xlu0 %1333
      %v1336 = vsel %vm1286, %v1031, 0
      %v1339 = vsel %vm1286, %v1334, 0
      %1341 = vmatprep.subr.bf16.mxu0 0
      %1342 = vmatpush1.bf16.xpose.msra.mxu0 %v1339
      %1343 = vmatprep.subr.bf16.mxu0 0
      %1344 = vmatpush1.bf16.xpose.msra.mxu0 0
      %1345 = vmatprep.subr.bf16.mxu0 0
      %1346 = vmatpush1.bf16.xpose.msra.mxu0 0
      %1347 = vmatprep.subr.bf16.mxu0 0
      %1348 = vmatpush1.bf16.xpose.msra.mxu0 0
      %1349 = vmatprep.subr.bf16.mxu0 0
      %1350 = vmatpush1.bf16.xpose.msra.mxu0 0
      %1351 = vmatprep.subr.bf16.mxu0 0
      %1352 = vmatpush1.bf16.xpose.msra.mxu0 0
      %1353 = vmatprep.subr.bf16.mxu0 0
      %1354 = vmatpush1.bf16.xpose.msra.mxu0 0
      %1355 = vmatprep.subr.bf16.mxu0 0
      %1356 = vmatpush1.bf16.xpose.msra.mxu0 0
      %1357 = vmatprep.subr.bf16.mxu0 0
      %1358 = vmatpush1.bf16.xpose.msra.mxu0 0
      %1359 = vmatprep.subr.bf16.mxu0 0
      %1360 = vmatpush1.bf16.xpose.msra.mxu0 0
      %1361 = vmatprep.subr.bf16.mxu0 0
      %1362 = vmatpush1.bf16.xpose.msra.mxu0 0
      %1363 = vmatprep.subr.bf16.mxu0 0
      %1364 = vmatpush1.bf16.xpose.msra.mxu0 0
      %1365 = vmatprep.subr.bf16.mxu0 0
      %1366 = vmatpush1.bf16.xpose.msra.mxu0 0
      %1367 = vmatprep.subr.bf16.mxu0 0
      %1368 = vmatpush1.bf16.xpose.msra.mxu0 0
      %1369 = vmatprep.subr.bf16.mxu0 0
      %1370 = vmatpush1.bf16.xpose.msra.mxu0 0
      %1371 = vmatprep.subr.bf16.mxu0 0
      %1372 = vmatpush1.bf16.xpose.msra.mxu0 0
      %1373 = vmatprep.mubr.bf16.mxu0 0
      %1374 = vmatmul.mubr.bf16.gmra.mrb[0].mxu0 %v1336
      %v1375 = vpop.f32.mrb[0].mxu0
      %v1376 = vadd.f32 %v1211, %v1375
      %v1377 = vpop.f32.mrb[0].mxu0
      %v1378 = vpop.f32.mrb[0].mxu0
      %v1379 = vpop.f32.mrb[0].mxu0
      %1380 = vdwg.mxu0
      %1381 = vrot.lane.b32.xlu0 %v1032, 64
      %v1382 = vpop.permute.xlu0 %1381
      %v1384 = vsel %vm1286, %v1032, 0
      %v1387 = vsel %vm1286, %v1382, 0
      %1389 = vmatprep.subr.bf16.mxu0 0
      %1390 = vmatpush1.bf16.xpose.msra.mxu0 %v1387
      %1391 = vmatprep.subr.bf16.mxu0 0
      %1392 = vmatpush1.bf16.xpose.msra.mxu0 0
      %1393 = vmatprep.subr.bf16.mxu0 0
      %1394 = vmatpush1.bf16.xpose.msra.mxu0 0
      %1395 = vmatprep.subr.bf16.mxu0 0
      %1396 = vmatpush1.bf16.xpose.msra.mxu0 0
      %1397 = vmatprep.subr.bf16.mxu0 0
      %1398 = vmatpush1.bf16.xpose.msra.mxu0 0
      %1399 = vmatprep.subr.bf16.mxu0 0
      %1400 = vmatpush1.bf16.xpose.msra.mxu0 0
      %1401 = vmatprep.subr.bf16.mxu0 0
      %1402 = vmatpush1.bf16.xpose.msra.mxu0 0
      %1403 = vmatprep.subr.bf16.mxu0 0
      %1404 = vmatpush1.bf16.xpose.msra.mxu0 0
      %1405 = vmatprep.subr.bf16.mxu0 0
      %1406 = vmatpush1.bf16.xpose.msra.mxu0 0
      %1407 = vmatprep.subr.bf16.mxu0 0
      %1408 = vmatpush1.bf16.xpose.msra.mxu0 0
      %1409 = vmatprep.subr.bf16.mxu0 0
      %1410 = vmatpush1.bf16.xpose.msra.mxu0 0
      %1411 = vmatprep.subr.bf16.mxu0 0
      %1412 = vmatpush1.bf16.xpose.msra.mxu0 0
      %1413 = vmatprep.subr.bf16.mxu0 0
      %1414 = vmatpush1.bf16.xpose.msra.mxu0 0
      %1415 = vmatprep.subr.bf16.mxu0 0
      %1416 = vmatpush1.bf16.xpose.msra.mxu0 0
      %1417 = vmatprep.subr.bf16.mxu0 0
      %1418 = vmatpush1.bf16.xpose.msra.mxu0 0
      %1419 = vmatprep.subr.bf16.mxu0 0
      %1420 = vmatpush1.bf16.xpose.msra.mxu0 0
      %1421 = vmatprep.mubr.bf16.mxu0 0
      %1422 = vmatmul.mubr.bf16.gmra.mrb[0].mxu0 %v1384
      %v1423 = vpop.f32.mrb[0].mxu0
      %v1424 = vadd.f32 %v1215, %v1423
      %v1425 = vpop.f32.mrb[0].mxu0
      %v1426 = vpop.f32.mrb[0].mxu0
      %v1427 = vpop.f32.mrb[0].mxu0
      %1428 = vdwg.mxu0
      %1429 = vrot.lane.b32.xlu0 %v1033, 64
      %v1430 = vpop.permute.xlu0 %1429
      %v1432 = vsel %vm1286, %v1033, 0
      %v1435 = vsel %vm1286, %v1430, 0
      %1437 = vmatprep.subr.bf16.mxu0 0
      %1438 = vmatpush1.bf16.xpose.msra.mxu0 %v1435
      %1439 = vmatprep.subr.bf16.mxu0 0
      %1440 = vmatpush1.bf16.xpose.msra.mxu0 0
      %1441 = vmatprep.subr.bf16.mxu0 0
      %1442 = vmatpush1.bf16.xpose.msra.mxu0 0
      %1443 = vmatprep.subr.bf16.mxu0 0
      %1444 = vmatpush1.bf16.xpose.msra.mxu0 0
      %1445 = vmatprep.subr.bf16.mxu0 0
      %1446 = vmatpush1.bf16.xpose.msra.mxu0 0
      %1447 = vmatprep.subr.bf16.mxu0 0
      %1448 = vmatpush1.bf16.xpose.msra.mxu0 0
      %1449 = vmatprep.subr.bf16.mxu0 0
      %1450 = vmatpush1.bf16.xpose.msra.mxu0 0
      %1451 = vmatprep.subr.bf16.mxu0 0
      %1452 = vmatpush1.bf16.xpose.msra.mxu0 0
      %1453 = vmatprep.subr.bf16.mxu0 0
      %1454 = vmatpush1.bf16.xpose.msra.mxu0 0
      %1455 = vmatprep.subr.bf16.mxu0 0
      %1456 = vmatpush1.bf16.xpose.msra.mxu0 0
      %1457 = vmatprep.subr.bf16.mxu0 0
      %1458 = vmatpush1.bf16.xpose.msra.mxu0 0
      %1459 = vmatprep.subr.bf16.mxu0 0
      %1460 = vmatpush1.bf16.xpose.msra.mxu0 0
      %1461 = vmatprep.subr.bf16.mxu0 0
      %1462 = vmatpush1.bf16.xpose.msra.mxu0 0
      %1463 = vmatprep.subr.bf16.mxu0 0
      %1464 = vmatpush1.bf16.xpose.msra.mxu0 0
      %1465 = vmatprep.subr.bf16.mxu0 0
      %1466 = vmatpush1.bf16.xpose.msra.mxu0 0
      %1467 = vmatprep.subr.bf16.mxu0 0
      %1468 = vmatpush1.bf16.xpose.msra.mxu0 0
      %1469 = vmatprep.mubr.bf16.mxu0 0
      %1470 = vmatmul.mubr.bf16.gmra.mrb[0].mxu0 %v1432
      %v1471 = vpop.f32.mrb[0].mxu0
      %v1472 = vadd.f32 %v1219, %v1471
      %v1473 = vpop.f32.mrb[0].mxu0
      %v1474 = vpop.f32.mrb[0].mxu0
      %v1475 = vpop.f32.mrb[0].mxu0
      %1476 = vdwg.mxu0
      %1477 = vrot.lane.b32.xlu0 %v1034, 64
      %v1478 = vpop.permute.xlu0 %1477
      %v1480 = vsel %vm1286, %v1034, 0
      %v1483 = vsel %vm1286, %v1478, 0
      %1485 = vmatprep.subr.bf16.mxu0 0
      %1486 = vmatpush1.bf16.xpose.msra.mxu0 %v1483
      %1487 = vmatprep.subr.bf16.mxu0 0
      %1488 = vmatpush1.bf16.xpose.msra.mxu0 0
      %1489 = vmatprep.subr.bf16.mxu0 0
      %1490 = vmatpush1.bf16.xpose.msra.mxu0 0
      %1491 = vmatprep.subr.bf16.mxu0 0
      %1492 = vmatpush1.bf16.xpose.msra.mxu0 0
      %1493 = vmatprep.subr.bf16.mxu0 0
      %1494 = vmatpush1.bf16.xpose.msra.mxu0 0
      %1495 = vmatprep.subr.bf16.mxu0 0
      %1496 = vmatpush1.bf16.xpose.msra.mxu0 0
      %1497 = vmatprep.subr.bf16.mxu0 0
      %1498 = vmatpush1.bf16.xpose.msra.mxu0 0
      %1499 = vmatprep.subr.bf16.mxu0 0
      %1500 = vmatpush1.bf16.xpose.msra.mxu0 0
      %1501 = vmatprep.subr.bf16.mxu0 0
      %1502 = vmatpush1.bf16.xpose.msra.mxu0 0
      %1503 = vmatprep.subr.bf16.mxu0 0
      %1504 = vmatpush1.bf16.xpose.msra.mxu0 0
      %1505 = vmatprep.subr.bf16.mxu0 0
      %1506 = vmatpush1.bf16.xpose.msra.mxu0 0
      %1507 = vmatprep.subr.bf16.mxu0 0
      %1508 = vmatpush1.bf16.xpose.msra.mxu0 0
      %1509 = vmatprep.subr.bf16.mxu0 0
      %1510 = vmatpush1.bf16.xpose.msra.mxu0 0
      %1511 = vmatprep.subr.bf16.mxu0 0
      %1512 = vmatpush1.bf16.xpose.msra.mxu0 0
      %1513 = vmatprep.subr.bf16.mxu0 0
      %1514 = vmatpush1.bf16.xpose.msra.mxu0 0
      %1515 = vmatprep.subr.bf16.mxu0 0
      %1516 = vmatpush1.bf16.xpose.msra.mxu0 0
      %1517 = vmatprep.mubr.bf16.mxu0 0
      %1518 = vmatmul.mubr.bf16.gmra.mrb[0].mxu0 %v1480
      %v1519 = vpop.f32.mrb[0].mxu0
      %v1520 = vadd.f32 %v1223, %v1519
      %v1521 = vpop.f32.mrb[0].mxu0
      %v1522 = vpop.f32.mrb[0].mxu0
      %v1523 = vpop.f32.mrb[0].mxu0
      %1524 = vdwg.mxu0
      %1525 = vrot.lane.b32.xlu0 %v1035, 64
      %v1526 = vpop.permute.xlu0 %1525
      %v1528 = vsel %vm1286, %v1035, 0
      %v1531 = vsel %vm1286, %v1526, 0
      %1533 = vmatprep.subr.bf16.mxu0 0
      %1534 = vmatpush1.bf16.xpose.msra.mxu0 %v1531
      %1535 = vmatprep.subr.bf16.mxu0 0
      %1536 = vmatpush1.bf16.xpose.msra.mxu0 0
      %1537 = vmatprep.subr.bf16.mxu0 0
      %1538 = vmatpush1.bf16.xpose.msra.mxu0 0
      %1539 = vmatprep.subr.bf16.mxu0 0
      %1540 = vmatpush1.bf16.xpose.msra.mxu0 0
      %1541 = vmatprep.subr.bf16.mxu0 0
      %1542 = vmatpush1.bf16.xpose.msra.mxu0 0
      %1543 = vmatprep.subr.bf16.mxu0 0
      %1544 = vmatpush1.bf16.xpose.msra.mxu0 0
      %1545 = vmatprep.subr.bf16.mxu0 0
      %1546 = vmatpush1.bf16.xpose.msra.mxu0 0
      %1547 = vmatprep.subr.bf16.mxu0 0
      %1548 = vmatpush1.bf16.xpose.msra.mxu0 0
      %1549 = vmatprep.subr.bf16.mxu0 0
      %1550 = vmatpush1.bf16.xpose.msra.mxu0 0
      %1551 = vmatprep.subr.bf16.mxu0 0
      %1552 = vmatpush1.bf16.xpose.msra.mxu0 0
      %1553 = vmatprep.subr.bf16.mxu0 0
      %1554 = vmatpush1.bf16.xpose.msra.mxu0 0
      %1555 = vmatprep.subr.bf16.mxu0 0
      %1556 = vmatpush1.bf16.xpose.msra.mxu0 0
      %1557 = vmatprep.subr.bf16.mxu0 0
      %1558 = vmatpush1.bf16.xpose.msra.mxu0 0
      %1559 = vmatprep.subr.bf16.mxu0 0
      %1560 = vmatpush1.bf16.xpose.msra.mxu0 0
      %1561 = vmatprep.subr.bf16.mxu0 0
      %1562 = vmatpush1.bf16.xpose.msra.mxu0 0
      %1563 = vmatprep.subr.bf16.mxu0 0
      %1564 = vmatpush1.bf16.xpose.msra.mxu0 0
      %1565 = vmatprep.mubr.bf16.mxu0 0
      %1566 = vmatmul.mubr.bf16.gmra.mrb[0].mxu0 %v1528
      %v1567 = vpop.f32.mrb[0].mxu0
      %v1568 = vadd.f32 %v1227, %v1567
      %v1569 = vpop.f32.mrb[0].mxu0
      %v1570 = vpop.f32.mrb[0].mxu0
      %v1571 = vpop.f32.mrb[0].mxu0
      %1572 = vdwg.mxu0
      %1573 = vrot.lane.b32.xlu0 %v1036, 64
      %v1574 = vpop.permute.xlu0 %1573
      %v1576 = vsel %vm1286, %v1036, 0
      %v1579 = vsel %vm1286, %v1574, 0
      %1581 = vmatprep.subr.bf16.mxu0 0
      %1582 = vmatpush1.bf16.xpose.msra.mxu0 %v1579
      %1583 = vmatprep.subr.bf16.mxu0 0
      %1584 = vmatpush1.bf16.xpose.msra.mxu0 0
      %1585 = vmatprep.subr.bf16.mxu0 0
      %1586 = vmatpush1.bf16.xpose.msra.mxu0 0
      %1587 = vmatprep.subr.bf16.mxu0 0
      %1588 = vmatpush1.bf16.xpose.msra.mxu0 0
      %1589 = vmatprep.subr.bf16.mxu0 0
      %1590 = vmatpush1.bf16.xpose.msra.mxu0 0
      %1591 = vmatprep.subr.bf16.mxu0 0
      %1592 = vmatpush1.bf16.xpose.msra.mxu0 0
      %1593 = vmatprep.subr.bf16.mxu0 0
      %1594 = vmatpush1.bf16.xpose.msra.mxu0 0
      %1595 = vmatprep.subr.bf16.mxu0 0
      %1596 = vmatpush1.bf16.xpose.msra.mxu0 0
      %1597 = vmatprep.subr.bf16.mxu0 0
      %1598 = vmatpush1.bf16.xpose.msra.mxu0 0
      %1599 = vmatprep.subr.bf16.mxu0 0
      %1600 = vmatpush1.bf16.xpose.msra.mxu0 0
      %1601 = vmatprep.subr.bf16.mxu0 0
      %1602 = vmatpush1.bf16.xpose.msra.mxu0 0
      %1603 = vmatprep.subr.bf16.mxu0 0
      %1604 = vmatpush1.bf16.xpose.msra.mxu0 0
      %1605 = vmatprep.subr.bf16.mxu0 0
      %1606 = vmatpush1.bf16.xpose.msra.mxu0 0
      %1607 = vmatprep.subr.bf16.mxu0 0
      %1608 = vmatpush1.bf16.xpose.msra.mxu0 0
      %1609 = vmatprep.subr.bf16.mxu0 0
      %1610 = vmatpush1.bf16.xpose.msra.mxu0 0
      %1611 = vmatprep.subr.bf16.mxu0 0
      %1612 = vmatpush1.bf16.xpose.msra.mxu0 0
      %1613 = vmatprep.mubr.bf16.mxu0 0
      %1614 = vmatmul.mubr.bf16.gmra.mrb[0].mxu0 %v1576
      %v1615 = vpop.f32.mrb[0].mxu0
      %v1616 = vadd.f32 %v1231, %v1615
      %v1617 = vpop.f32.mrb[0].mxu0
      %v1618 = vpop.f32.mrb[0].mxu0
      %v1619 = vpop.f32.mrb[0].mxu0
      %1620 = vdwg.mxu0
      %1621 = vrot.lane.b32.xlu0 %v1037, 64
      %v1622 = vpop.permute.xlu0 %1621
      %v1624 = vsel %vm1286, %v1037, 0
      %v1627 = vsel %vm1286, %v1622, 0
      %1629 = vmatprep.subr.bf16.mxu0 0
      %1630 = vmatpush1.bf16.xpose.msra.mxu0 %v1627
      %1631 = vmatprep.subr.bf16.mxu0 0
      %1632 = vmatpush1.bf16.xpose.msra.mxu0 0
      %1633 = vmatprep.subr.bf16.mxu0 0
      %1634 = vmatpush1.bf16.xpose.msra.mxu0 0
      %1635 = vmatprep.subr.bf16.mxu0 0
      %1636 = vmatpush1.bf16.xpose.msra.mxu0 0
      %1637 = vmatprep.subr.bf16.mxu0 0
      %1638 = vmatpush1.bf16.xpose.msra.mxu0 0
      %1639 = vmatprep.subr.bf16.mxu0 0
      %1640 = vmatpush1.bf16.xpose.msra.mxu0 0
      %1641 = vmatprep.subr.bf16.mxu0 0
      %1642 = vmatpush1.bf16.xpose.msra.mxu0 0
      %1643 = vmatprep.subr.bf16.mxu0 0
      %1644 = vmatpush1.bf16.xpose.msra.mxu0 0
      %1645 = vmatprep.subr.bf16.mxu0 0
      %1646 = vmatpush1.bf16.xpose.msra.mxu0 0
      %1647 = vmatprep.subr.bf16.mxu0 0
      %1648 = vmatpush1.bf16.xpose.msra.mxu0 0
      %1649 = vmatprep.subr.bf16.mxu0 0
      %1650 = vmatpush1.bf16.xpose.msra.mxu0 0
      %1651 = vmatprep.subr.bf16.mxu0 0
      %1652 = vmatpush1.bf16.xpose.msra.mxu0 0
      %1653 = vmatprep.subr.bf16.mxu0 0
      %1654 = vmatpush1.bf16.xpose.msra.mxu0 0
      %1655 = vmatprep.subr.bf16.mxu0 0
      %1656 = vmatpush1.bf16.xpose.msra.mxu0 0
      %1657 = vmatprep.subr.bf16.mxu0 0
      %1658 = vmatpush1.bf16.xpose.msra.mxu0 0
      %1659 = vmatprep.subr.bf16.mxu0 0
      %1660 = vmatpush1.bf16.xpose.msra.mxu0 0
      %1661 = vmatprep.mubr.bf16.mxu0 0
      %1662 = vmatmul.mubr.bf16.gmra.mrb[0].mxu0 %v1624
      %v1663 = vpop.f32.mrb[0].mxu0
      %v1664 = vadd.f32 %v1235, %v1663
      %v1665 = vpop.f32.mrb[0].mxu0
      %v1666 = vpop.f32.mrb[0].mxu0
      %v1667 = vpop.f32.mrb[0].mxu0
      %1668 = vdwg.mxu0
      %1669 = vrot.lane.b32.xlu0 %v1038, 64
      %v1670 = vpop.permute.xlu0 %1669
      %v1672 = vsel %vm1286, %v1038, 0
      %v1675 = vsel %vm1286, %v1670, 0
      %1677 = vmatprep.subr.bf16.mxu0 0
      %1678 = vmatpush1.bf16.xpose.msra.mxu0 %v1675
      %1679 = vmatprep.subr.bf16.mxu0 0
      %1680 = vmatpush1.bf16.xpose.msra.mxu0 0
      %1681 = vmatprep.subr.bf16.mxu0 0
      %1682 = vmatpush1.bf16.xpose.msra.mxu0 0
      %1683 = vmatprep.subr.bf16.mxu0 0
      %1684 = vmatpush1.bf16.xpose.msra.mxu0 0
      %1685 = vmatprep.subr.bf16.mxu0 0
      %1686 = vmatpush1.bf16.xpose.msra.mxu0 0
      %1687 = vmatprep.subr.bf16.mxu0 0
      %1688 = vmatpush1.bf16.xpose.msra.mxu0 0
      %1689 = vmatprep.subr.bf16.mxu0 0
      %1690 = vmatpush1.bf16.xpose.msra.mxu0 0
      %1691 = vmatprep.subr.bf16.mxu0 0
      %1692 = vmatpush1.bf16.xpose.msra.mxu0 0
      %1693 = vmatprep.subr.bf16.mxu0 0
      %1694 = vmatpush1.bf16.xpose.msra.mxu0 0
      %1695 = vmatprep.subr.bf16.mxu0 0
      %1696 = vmatpush1.bf16.xpose.msra.mxu0 0
      %1697 = vmatprep.subr.bf16.mxu0 0
      %1698 = vmatpush1.bf16.xpose.msra.mxu0 0
      %1699 = vmatprep.subr.bf16.mxu0 0
      %1700 = vmatpush1.bf16.xpose.msra.mxu0 0
      %1701 = vmatprep.subr.bf16.mxu0 0
      %1702 = vmatpush1.bf16.xpose.msra.mxu0 0
      %1703 = vmatprep.subr.bf16.mxu0 0
      %1704 = vmatpush1.bf16.xpose.msra.mxu0 0
      %1705 = vmatprep.subr.bf16.mxu0 0
      %1706 = vmatpush1.bf16.xpose.msra.mxu0 0
      %1707 = vmatprep.subr.bf16.mxu0 0
      %1708 = vmatpush1.bf16.xpose.msra.mxu0 0
      %1709 = vmatprep.mubr.bf16.mxu0 0
      %1710 = vmatmul.mubr.bf16.gmra.mrb[0].mxu0 %v1672
      %v1711 = vpop.f32.mrb[0].mxu0
      %v1712 = vadd.f32 %v1239, %v1711
      %v1713 = vpop.f32.mrb[0].mxu0
      %v1714 = vpop.f32.mrb[0].mxu0
      %v1715 = vpop.f32.mrb[0].mxu0
      %1716 = vdwg.mxu0
      %1717 = vrot.lane.b32.xlu0 %v1039, 64
      %v1718 = vpop.permute.xlu0 %1717
      %v1720 = vsel %vm1286, %v1039, 0
      %v1723 = vsel %vm1286, %v1718, 0
      %1725 = vmatprep.subr.bf16.mxu0 0
      %1726 = vmatpush1.bf16.xpose.msra.mxu0 %v1723
      %1727 = vmatprep.subr.bf16.mxu0 0
      %1728 = vmatpush1.bf16.xpose.msra.mxu0 0
      %1729 = vmatprep.subr.bf16.mxu0 0
      %1730 = vmatpush1.bf16.xpose.msra.mxu0 0
      %1731 = vmatprep.subr.bf16.mxu0 0
      %1732 = vmatpush1.bf16.xpose.msra.mxu0 0
      %1733 = vmatprep.subr.bf16.mxu0 0
      %1734 = vmatpush1.bf16.xpose.msra.mxu0 0
      %1735 = vmatprep.subr.bf16.mxu0 0
      %1736 = vmatpush1.bf16.xpose.msra.mxu0 0
      %1737 = vmatprep.subr.bf16.mxu0 0
      %1738 = vmatpush1.bf16.xpose.msra.mxu0 0
      %1739 = vmatprep.subr.bf16.mxu0 0
      %1740 = vmatpush1.bf16.xpose.msra.mxu0 0
      %1741 = vmatprep.subr.bf16.mxu0 0
      %1742 = vmatpush1.bf16.xpose.msra.mxu0 0
      %1743 = vmatprep.subr.bf16.mxu0 0
      %1744 = vmatpush1.bf16.xpose.msra.mxu0 0
      %1745 = vmatprep.subr.bf16.mxu0 0
      %1746 = vmatpush1.bf16.xpose.msra.mxu0 0
      %1747 = vmatprep.subr.bf16.mxu0 0
      %1748 = vmatpush1.bf16.xpose.msra.mxu0 0
      %1749 = vmatprep.subr.bf16.mxu0 0
      %1750 = vmatpush1.bf16.xpose.msra.mxu0 0
      %1751 = vmatprep.subr.bf16.mxu0 0
      %1752 = vmatpush1.bf16.xpose.msra.mxu0 0
      %1753 = vmatprep.subr.bf16.mxu0 0
      %1754 = vmatpush1.bf16.xpose.msra.mxu0 0
      %1755 = vmatprep.subr.bf16.mxu0 0
      %1756 = vmatpush1.bf16.xpose.msra.mxu0 0
      %1757 = vmatprep.mubr.bf16.mxu0 0
      %1758 = vmatmul.mubr.bf16.gmra.mrb[0].mxu0 %v1720
      %v1759 = vpop.f32.mrb[0].mxu0
      %v1760 = vadd.f32 %v1243, %v1759
      %v1761 = vpop.f32.mrb[0].mxu0
      %v1762 = vpop.f32.mrb[0].mxu0
      %v1763 = vpop.f32.mrb[0].mxu0
      %1764 = vdwg.mxu0
      %1765 = vrot.lane.b32.xlu0 %v1040, 64
      %v1766 = vpop.permute.xlu0 %1765
      %v1768 = vsel %vm1286, %v1040, 0
      %v1771 = vsel %vm1286, %v1766, 0
      %1773 = vmatprep.subr.bf16.mxu0 0
      %1774 = vmatpush1.bf16.xpose.msra.mxu0 %v1771
      %1775 = vmatprep.subr.bf16.mxu0 0
      %1776 = vmatpush1.bf16.xpose.msra.mxu0 0
      %1777 = vmatprep.subr.bf16.mxu0 0
      %1778 = vmatpush1.bf16.xpose.msra.mxu0 0
      %1779 = vmatprep.subr.bf16.mxu0 0
      %1780 = vmatpush1.bf16.xpose.msra.mxu0 0
      %1781 = vmatprep.subr.bf16.mxu0 0
      %1782 = vmatpush1.bf16.xpose.msra.mxu0 0
      %1783 = vmatprep.subr.bf16.mxu0 0
      %1784 = vmatpush1.bf16.xpose.msra.mxu0 0
      %1785 = vmatprep.subr.bf16.mxu0 0
      %1786 = vmatpush1.bf16.xpose.msra.mxu0 0
      %1787 = vmatprep.subr.bf16.mxu0 0
      %1788 = vmatpush1.bf16.xpose.msra.mxu0 0
      %1789 = vmatprep.subr.bf16.mxu0 0
      %1790 = vmatpush1.bf16.xpose.msra.mxu0 0
      %1791 = vmatprep.subr.bf16.mxu0 0
      %1792 = vmatpush1.bf16.xpose.msra.mxu0 0
      %1793 = vmatprep.subr.bf16.mxu0 0
      %1794 = vmatpush1.bf16.xpose.msra.mxu0 0
      %1795 = vmatprep.subr.bf16.mxu0 0
      %1796 = vmatpush1.bf16.xpose.msra.mxu0 0
      %1797 = vmatprep.subr.bf16.mxu0 0
      %1798 = vmatpush1.bf16.xpose.msra.mxu0 0
      %1799 = vmatprep.subr.bf16.mxu0 0
      %1800 = vmatpush1.bf16.xpose.msra.mxu0 0
      %1801 = vmatprep.subr.bf16.mxu0 0
      %1802 = vmatpush1.bf16.xpose.msra.mxu0 0
      %1803 = vmatprep.subr.bf16.mxu0 0
      %1804 = vmatpush1.bf16.xpose.msra.mxu0 0
      %1805 = vmatprep.mubr.bf16.mxu0 0
      %1806 = vmatmul.mubr.bf16.gmra.mrb[0].mxu0 %v1768
      %v1807 = vpop.f32.mrb[0].mxu0
      %v1808 = vadd.f32 %v1247, %v1807
      %v1809 = vpop.f32.mrb[0].mxu0
      %v1810 = vpop.f32.mrb[0].mxu0
      %v1811 = vpop.f32.mrb[0].mxu0
      %1812 = vdwg.mxu0
      %1813 = vrot.lane.b32.xlu0 %v1041, 64
      %v1814 = vpop.permute.xlu0 %1813
      %v1816 = vsel %vm1286, %v1041, 0
      %v1819 = vsel %vm1286, %v1814, 0
      %1821 = vmatprep.subr.bf16.mxu0 0
      %1822 = vmatpush1.bf16.xpose.msra.mxu0 %v1819
      %1823 = vmatprep.subr.bf16.mxu0 0
      %1824 = vmatpush1.bf16.xpose.msra.mxu0 0
      %1825 = vmatprep.subr.bf16.mxu0 0
      %1826 = vmatpush1.bf16.xpose.msra.mxu0 0
      %1827 = vmatprep.subr.bf16.mxu0 0
      %1828 = vmatpush1.bf16.xpose.msra.mxu0 0
      %1829 = vmatprep.subr.bf16.mxu0 0
      %1830 = vmatpush1.bf16.xpose.msra.mxu0 0
      %1831 = vmatprep.subr.bf16.mxu0 0
      %1832 = vmatpush1.bf16.xpose.msra.mxu0 0
      %1833 = vmatprep.subr.bf16.mxu0 0
      %1834 = vmatpush1.bf16.xpose.msra.mxu0 0
      %1835 = vmatprep.subr.bf16.mxu0 0
      %1836 = vmatpush1.bf16.xpose.msra.mxu0 0
      %1837 = vmatprep.subr.bf16.mxu0 0
      %1838 = vmatpush1.bf16.xpose.msra.mxu0 0
      %1839 = vmatprep.subr.bf16.mxu0 0
      %1840 = vmatpush1.bf16.xpose.msra.mxu0 0
      %1841 = vmatprep.subr.bf16.mxu0 0
      %1842 = vmatpush1.bf16.xpose.msra.mxu0 0
      %1843 = vmatprep.subr.bf16.mxu0 0
      %1844 = vmatpush1.bf16.xpose.msra.mxu0 0
      %1845 = vmatprep.subr.bf16.mxu0 0
      %1846 = vmatpush1.bf16.xpose.msra.mxu0 0
      %1847 = vmatprep.subr.bf16.mxu0 0
      %1848 = vmatpush1.bf16.xpose.msra.mxu0 0
      %1849 = vmatprep.subr.bf16.mxu0 0
      %1850 = vmatpush1.bf16.xpose.msra.mxu0 0
      %1851 = vmatprep.subr.bf16.mxu0 0
      %1852 = vmatpush1.bf16.xpose.msra.mxu0 0
      %1853 = vmatprep.mubr.bf16.mxu0 0
      %1854 = vmatmul.mubr.bf16.gmra.mrb[0].mxu0 %v1816
      %v1855 = vpop.f32.mrb[0].mxu0
      %v1856 = vadd.f32 %v1251, %v1855
      %v1857 = vpop.f32.mrb[0].mxu0
      %v1858 = vpop.f32.mrb[0].mxu0
      %v1859 = vpop.f32.mrb[0].mxu0
      %1860 = vdwg.mxu0
      %1861 = vrot.lane.b32.xlu0 %v1042, 64
      %v1862 = vpop.permute.xlu0 %1861
      %v1864 = vsel %vm1286, %v1042, 0
      %v1867 = vsel %vm1286, %v1862, 0
      %1869 = vmatprep.subr.bf16.mxu0 0
      %1870 = vmatpush1.bf16.xpose.msra.mxu0 %v1867
      %1871 = vmatprep.subr.bf16.mxu0 0
      %1872 = vmatpush1.bf16.xpose.msra.mxu0 0
      %1873 = vmatprep.subr.bf16.mxu0 0
      %1874 = vmatpush1.bf16.xpose.msra.mxu0 0
      %1875 = vmatprep.subr.bf16.mxu0 0
      %1876 = vmatpush1.bf16.xpose.msra.mxu0 0
      %1877 = vmatprep.subr.bf16.mxu0 0
      %1878 = vmatpush1.bf16.xpose.msra.mxu0 0
      %1879 = vmatprep.subr.bf16.mxu0 0
      %1880 = vmatpush1.bf16.xpose.msra.mxu0 0
      %1881 = vmatprep.subr.bf16.mxu0 0
      %1882 = vmatpush1.bf16.xpose.msra.mxu0 0
      %1883 = vmatprep.subr.bf16.mxu0 0
      %1884 = vmatpush1.bf16.xpose.msra.mxu0 0
      %1885 = vmatprep.subr.bf16.mxu0 0
      %1886 = vmatpush1.bf16.xpose.msra.mxu0 0
      %1887 = vmatprep.subr.bf16.mxu0 0
      %1888 = vmatpush1.bf16.xpose.msra.mxu0 0
      %1889 = vmatprep.subr.bf16.mxu0 0
      %1890 = vmatpush1.bf16.xpose.msra.mxu0 0
      %1891 = vmatprep.subr.bf16.mxu0 0
      %1892 = vmatpush1.bf16.xpose.msra.mxu0 0
      %1893 = vmatprep.subr.bf16.mxu0 0
      %1894 = vmatpush1.bf16.xpose.msra.mxu0 0
      %1895 = vmatprep.subr.bf16.mxu0 0
      %1896 = vmatpush1.bf16.xpose.msra.mxu0 0
      %1897 = vmatprep.subr.bf16.mxu0 0
      %1898 = vmatpush1.bf16.xpose.msra.mxu0 0
      %1899 = vmatprep.subr.bf16.mxu0 0
      %1900 = vmatpush1.bf16.xpose.msra.mxu0 0
      %1901 = vmatprep.mubr.bf16.mxu0 0
      %1902 = vmatmul.mubr.bf16.gmra.mrb[0].mxu0 %v1864
      %v1903 = vpop.f32.mrb[0].mxu0
      %v1904 = vadd.f32 %v1255, %v1903
      %v1905 = vpop.f32.mrb[0].mxu0
      %v1906 = vpop.f32.mrb[0].mxu0
      %v1907 = vpop.f32.mrb[0].mxu0
      %1908 = vdwg.mxu0
      %1909 = vrot.lane.b32.xlu0 %v1043, 64
      %v1910 = vpop.permute.xlu0 %1909
      %v1912 = vsel %vm1286, %v1043, 0
      %v1915 = vsel %vm1286, %v1910, 0
      %1917 = vmatprep.subr.bf16.mxu0 0
      %1918 = vmatpush1.bf16.xpose.msra.mxu0 %v1915
      %1919 = vmatprep.subr.bf16.mxu0 0
      %1920 = vmatpush1.bf16.xpose.msra.mxu0 0
      %1921 = vmatprep.subr.bf16.mxu0 0
      %1922 = vmatpush1.bf16.xpose.msra.mxu0 0
      %1923 = vmatprep.subr.bf16.mxu0 0
      %1924 = vmatpush1.bf16.xpose.msra.mxu0 0
      %1925 = vmatprep.subr.bf16.mxu0 0
      %1926 = vmatpush1.bf16.xpose.msra.mxu0 0
      %1927 = vmatprep.subr.bf16.mxu0 0
      %1928 = vmatpush1.bf16.xpose.msra.mxu0 0
      %1929 = vmatprep.subr.bf16.mxu0 0
      %1930 = vmatpush1.bf16.xpose.msra.mxu0 0
      %1931 = vmatprep.subr.bf16.mxu0 0
      %1932 = vmatpush1.bf16.xpose.msra.mxu0 0
      %1933 = vmatprep.subr.bf16.mxu0 0
      %1934 = vmatpush1.bf16.xpose.msra.mxu0 0
      %1935 = vmatprep.subr.bf16.mxu0 0
      %1936 = vmatpush1.bf16.xpose.msra.mxu0 0
      %1937 = vmatprep.subr.bf16.mxu0 0
      %1938 = vmatpush1.bf16.xpose.msra.mxu0 0
      %1939 = vmatprep.subr.bf16.mxu0 0
      %1940 = vmatpush1.bf16.xpose.msra.mxu0 0
      %1941 = vmatprep.subr.bf16.mxu0 0
      %1942 = vmatpush1.bf16.xpose.msra.mxu0 0
      %1943 = vmatprep.subr.bf16.mxu0 0
      %1944 = vmatpush1.bf16.xpose.msra.mxu0 0
      %1945 = vmatprep.subr.bf16.mxu0 0
      %1946 = vmatpush1.bf16.xpose.msra.mxu0 0
      %1947 = vmatprep.subr.bf16.mxu0 0
      %1948 = vmatpush1.bf16.xpose.msra.mxu0 0
      %1949 = vmatprep.mubr.bf16.mxu0 0
      %1950 = vmatmul.mubr.bf16.gmra.mrb[0].mxu0 %v1912
      %v1951 = vpop.f32.mrb[0].mxu0
      %v1952 = vadd.f32 %v1259, %v1951
      %v1953 = vpop.f32.mrb[0].mxu0
      %v1954 = vpop.f32.mrb[0].mxu0
      %v1955 = vpop.f32.mrb[0].mxu0
      %1956 = vdwg.mxu0
      %1957 = vrot.lane.b32.xlu0 %v1044, 64
      %v1958 = vpop.permute.xlu0 %1957
      %v1960 = vsel %vm1286, %v1044, 0
      %v1963 = vsel %vm1286, %v1958, 0
      %1965 = vmatprep.subr.bf16.mxu0 0
      %1966 = vmatpush1.bf16.xpose.msra.mxu0 %v1963
      %1967 = vmatprep.subr.bf16.mxu0 0
      %1968 = vmatpush1.bf16.xpose.msra.mxu0 0
      %1969 = vmatprep.subr.bf16.mxu0 0
      %1970 = vmatpush1.bf16.xpose.msra.mxu0 0
      %1971 = vmatprep.subr.bf16.mxu0 0
      %1972 = vmatpush1.bf16.xpose.msra.mxu0 0
      %1973 = vmatprep.subr.bf16.mxu0 0
      %1974 = vmatpush1.bf16.xpose.msra.mxu0 0
      %1975 = vmatprep.subr.bf16.mxu0 0
      %1976 = vmatpush1.bf16.xpose.msra.mxu0 0
      %1977 = vmatprep.subr.bf16.mxu0 0
      %1978 = vmatpush1.bf16.xpose.msra.mxu0 0
      %1979 = vmatprep.subr.bf16.mxu0 0
      %1980 = vmatpush1.bf16.xpose.msra.mxu0 0
      %1981 = vmatprep.subr.bf16.mxu0 0
      %1982 = vmatpush1.bf16.xpose.msra.mxu0 0
      %1983 = vmatprep.subr.bf16.mxu0 0
      %1984 = vmatpush1.bf16.xpose.msra.mxu0 0
      %1985 = vmatprep.subr.bf16.mxu0 0
      %1986 = vmatpush1.bf16.xpose.msra.mxu0 0
      %1987 = vmatprep.subr.bf16.mxu0 0
      %1988 = vmatpush1.bf16.xpose.msra.mxu0 0
      %1989 = vmatprep.subr.bf16.mxu0 0
      %1990 = vmatpush1.bf16.xpose.msra.mxu0 0
      %1991 = vmatprep.subr.bf16.mxu0 0
      %1992 = vmatpush1.bf16.xpose.msra.mxu0 0
      %1993 = vmatprep.subr.bf16.mxu0 0
      %1994 = vmatpush1.bf16.xpose.msra.mxu0 0
      %1995 = vmatprep.subr.bf16.mxu0 0
      %1996 = vmatpush1.bf16.xpose.msra.mxu0 0
      %1997 = vmatprep.mubr.bf16.mxu0 0
      %1998 = vmatmul.mubr.bf16.gmra.mrb[0].mxu0 %v1960
      %v1999 = vpop.f32.mrb[0].mxu0
      %v2000 = vadd.f32 %v1263, %v1999
      %v2001 = vpop.f32.mrb[0].mxu0
      %v2002 = vpop.f32.mrb[0].mxu0
      %v2003 = vpop.f32.mrb[0].mxu0
      %2004 = vdwg.mxu0
      %2005 = vrot.lane.b32.xlu0 %v1045, 64
      %v2006 = vpop.permute.xlu0 %2005
      %v2008 = vsel %vm1286, %v1045, 0
      %v2011 = vsel %vm1286, %v2006, 0
      %2013 = vmatprep.subr.bf16.mxu0 0
      %2014 = vmatpush1.bf16.xpose.msra.mxu0 %v2011
      %2015 = vmatprep.subr.bf16.mxu0 0
      %2016 = vmatpush1.bf16.xpose.msra.mxu0 0
      %2017 = vmatprep.subr.bf16.mxu0 0
      %2018 = vmatpush1.bf16.xpose.msra.mxu0 0
      %2019 = vmatprep.subr.bf16.mxu0 0
      %2020 = vmatpush1.bf16.xpose.msra.mxu0 0
      %2021 = vmatprep.subr.bf16.mxu0 0
      %2022 = vmatpush1.bf16.xpose.msra.mxu0 0
      %2023 = vmatprep.subr.bf16.mxu0 0
      %2024 = vmatpush1.bf16.xpose.msra.mxu0 0
      %2025 = vmatprep.subr.bf16.mxu0 0
      %2026 = vmatpush1.bf16.xpose.msra.mxu0 0
      %2027 = vmatprep.subr.bf16.mxu0 0
      %2028 = vmatpush1.bf16.xpose.msra.mxu0 0
      %2029 = vmatprep.subr.bf16.mxu0 0
      %2030 = vmatpush1.bf16.xpose.msra.mxu0 0
      %2031 = vmatprep.subr.bf16.mxu0 0
      %2032 = vmatpush1.bf16.xpose.msra.mxu0 0
      %2033 = vmatprep.subr.bf16.mxu0 0
      %2034 = vmatpush1.bf16.xpose.msra.mxu0 0
      %2035 = vmatprep.subr.bf16.mxu0 0
      %2036 = vmatpush1.bf16.xpose.msra.mxu0 0
      %2037 = vmatprep.subr.bf16.mxu0 0
      %2038 = vmatpush1.bf16.xpose.msra.mxu0 0
      %2039 = vmatprep.subr.bf16.mxu0 0
      %2040 = vmatpush1.bf16.xpose.msra.mxu0 0
      %2041 = vmatprep.subr.bf16.mxu0 0
      %2042 = vmatpush1.bf16.xpose.msra.mxu0 0
      %2043 = vmatprep.subr.bf16.mxu0 0
      %2044 = vmatpush1.bf16.xpose.msra.mxu0 0
      %2045 = vmatprep.mubr.bf16.mxu0 0
      %2046 = vmatmul.mubr.bf16.gmra.mrb[0].mxu0 %v2008
      %v2047 = vpop.f32.mrb[0].mxu0
      %v2048 = vadd.f32 %v1267, %v2047
      %v2049 = vpop.f32.mrb[0].mxu0
      %v2050 = vpop.f32.mrb[0].mxu0
      %v2051 = vpop.f32.mrb[0].mxu0
      %2052 = vdwg.mxu0
      %vm2053 = vcmask 64512
      %v2054 = vsel %vm2053, %v1328, -inf
      %2055 = vmax.xlane.f32.xlu0 %v2054
      %v2056 = vpop.xlane.xlu0 %2055
      %v2057 = vsel %vm2053, %v1376, -inf
      %2058 = vmax.xlane.f32.xlu0 %v2057
      %v2059 = vpop.xlane.xlu0 %2058
      %v2060 = vsel %vm2053, %v1424, -inf
      %2061 = vmax.xlane.f32.xlu0 %v2060
      %v2062 = vpop.xlane.xlu0 %2061
      %v2063 = vsel %vm2053, %v1472, -inf
      %2064 = vmax.xlane.f32.xlu0 %v2063
      %v2065 = vpop.xlane.xlu0 %2064
      %v2066 = vsel %vm2053, %v1520, -inf
      %2067 = vmax.xlane.f32.xlu0 %v2066
      %v2068 = vpop.xlane.xlu0 %2067
      %v2069 = vsel %vm2053, %v1568, -inf
      %2070 = vmax.xlane.f32.xlu0 %v2069
      %v2071 = vpop.xlane.xlu0 %2070
      %v2072 = vsel %vm2053, %v1616, -inf
      %2073 = vmax.xlane.f32.xlu0 %v2072
      %v2074 = vpop.xlane.xlu0 %2073
      %v2075 = vsel %vm2053, %v1664, -inf
      %2076 = vmax.xlane.f32.xlu0 %v2075
      %v2077 = vpop.xlane.xlu0 %2076
      %v2078 = vsel %vm2053, %v1712, -inf
      %2079 = vmax.xlane.f32.xlu0 %v2078
      %v2080 = vpop.xlane.xlu0 %2079
      %v2081 = vsel %vm2053, %v1760, -inf
      %2082 = vmax.xlane.f32.xlu0 %v2081
      %v2083 = vpop.xlane.xlu0 %2082
      %v2084 = vsel %vm2053, %v1808, -inf
      %2085 = vmax.xlane.f32.xlu0 %v2084
      %v2086 = vpop.xlane.xlu0 %2085
      %v2087 = vsel %vm2053, %v1856, -inf
      %2088 = vmax.xlane.f32.xlu0 %v2087
      %v2089 = vpop.xlane.xlu0 %2088
      %v2090 = vsel %vm2053, %v1904, -inf
      %2091 = vmax.xlane.f32.xlu0 %v2090
      %v2092 = vpop.xlane.xlu0 %2091
      %v2093 = vsel %vm2053, %v1952, -inf
      %2094 = vmax.xlane.f32.xlu0 %v2093
      %v2095 = vpop.xlane.xlu0 %2094
      %v2096 = vsel %vm2053, %v2000, -inf
      %2097 = vmax.xlane.f32.xlu0 %v2096
      %v2098 = vpop.xlane.xlu0 %2097
      %v2099 = vsel %vm2053, %v2048, -inf
      %2100 = vmax.xlane.f32.xlu0 %v2099
      %v2101 = vpop.xlane.xlu0 %2100
      %v2102 = vsub.f32 %v1328, %v2056
      %v2103 = vsub.f32 %v1376, %v2059
      %v2104 = vsub.f32 %v1424, %v2062
      %v2105 = vsub.f32 %v1472, %v2065
      %v2106 = vsub.f32 %v1520, %v2068
      %v2107 = vsub.f32 %v1568, %v2071
      %v2108 = vsub.f32 %v1616, %v2074
      %v2109 = vsub.f32 %v1664, %v2077
      %v2110 = vsub.f32 %v1712, %v2080
      %v2111 = vsub.f32 %v1760, %v2083
      %v2112 = vsub.f32 %v1808, %v2086
      %v2113 = vsub.f32 %v1856, %v2089
      %v2114 = vsub.f32 %v1904, %v2092
      %v2115 = vsub.f32 %v1952, %v2095
      %v2116 = vsub.f32 %v2000, %v2098
      %v2117 = vsub.f32 %v2048, %v2101
      %v2118 = vmul.f32 %v2102, 1.442695
      %v2119 = vpow.pop %v2118
      %v2120 = vmul.f32 %v2103, 1.442695
      %v2121 = vpow.pop %v2120
      %v2122 = vmul.f32 %v2104, 1.442695
      %v2123 = vpow.pop %v2122
      %v2124 = vmul.f32 %v2105, 1.442695
      %v2125 = vpow.pop %v2124
      %v2126 = vmul.f32 %v2106, 1.442695
      %v2127 = vpow.pop %v2126
      %v2128 = vmul.f32 %v2107, 1.442695
      %v2129 = vpow.pop %v2128
      %v2130 = vmul.f32 %v2108, 1.442695
      %v2131 = vpow.pop %v2130
      %v2132 = vmul.f32 %v2109, 1.442695
      %v2133 = vpow.pop %v2132
      %v2134 = vmul.f32 %v2110, 1.442695
      %v2135 = vpow.pop %v2134
      %v2136 = vmul.f32 %v2111, 1.442695
      %v2137 = vpow.pop %v2136
      %v2138 = vmul.f32 %v2112, 1.442695
      %v2139 = vpow.pop %v2138
      %v2140 = vmul.f32 %v2113, 1.442695
      %v2141 = vpow.pop %v2140
      %v2142 = vmul.f32 %v2114, 1.442695
      %v2143 = vpow.pop %v2142
      %v2144 = vmul.f32 %v2115, 1.442695
      %v2145 = vpow.pop %v2144
      %v2146 = vmul.f32 %v2116, 1.442695
      %v2147 = vpow.pop %v2146
      %v2148 = vmul.f32 %v2117, 1.442695
      %v2149 = vpow.pop %v2148
      %v2150 = vsel %vm2053, %v2119, 0.0
      %2151 = vadd.xlane.f32.xlu0 %v2150
      %v2152 = vpop.xlane.xlu0 %2151
      %v2153 = vsel %vm2053, %v2121, 0.0
      %2154 = vadd.xlane.f32.xlu0 %v2153
      %v2155 = vpop.xlane.xlu0 %2154
      %v2156 = vsel %vm2053, %v2123, 0.0
      %2157 = vadd.xlane.f32.xlu0 %v2156
      %v2158 = vpop.xlane.xlu0 %2157
      %v2159 = vsel %vm2053, %v2125, 0.0
      %2160 = vadd.xlane.f32.xlu0 %v2159
      %v2161 = vpop.xlane.xlu0 %2160
      %v2162 = vsel %vm2053, %v2127, 0.0
      %2163 = vadd.xlane.f32.xlu0 %v2162
      %v2164 = vpop.xlane.xlu0 %2163
      %v2165 = vsel %vm2053, %v2129, 0.0
      %2166 = vadd.xlane.f32.xlu0 %v2165
      %v2167 = vpop.xlane.xlu0 %2166
      %v2168 = vsel %vm2053, %v2131, 0.0
      %2169 = vadd.xlane.f32.xlu0 %v2168
      %v2170 = vpop.xlane.xlu0 %2169
      %v2171 = vsel %vm2053, %v2133, 0.0
      %2172 = vadd.xlane.f32.xlu0 %v2171
      %v2173 = vpop.xlane.xlu0 %2172
      %v2174 = vsel %vm2053, %v2135, 0.0
      %2175 = vadd.xlane.f32.xlu0 %v2174
      %v2176 = vpop.xlane.xlu0 %2175
      %v2177 = vsel %vm2053, %v2137, 0.0
      %2178 = vadd.xlane.f32.xlu0 %v2177
      %v2179 = vpop.xlane.xlu0 %2178
      %v2180 = vsel %vm2053, %v2139, 0.0
      %2181 = vadd.xlane.f32.xlu0 %v2180
      %v2182 = vpop.xlane.xlu0 %2181
      %v2183 = vsel %vm2053, %v2141, 0.0
      %2184 = vadd.xlane.f32.xlu0 %v2183
      %v2185 = vpop.xlane.xlu0 %2184
      %v2186 = vsel %vm2053, %v2143, 0.0
      %2187 = vadd.xlane.f32.xlu0 %v2186
      %v2188 = vpop.xlane.xlu0 %2187
      %v2189 = vsel %vm2053, %v2145, 0.0
      %2190 = vadd.xlane.f32.xlu0 %v2189
      %v2191 = vpop.xlane.xlu0 %2190
      %v2192 = vsel %vm2053, %v2147, 0.0
      %2193 = vadd.xlane.f32.xlu0 %v2192
      %v2194 = vpop.xlane.xlu0 %2193
      %v2195 = vsel %vm2053, %v2149, 0.0
      %2196 = vadd.xlane.f32.xlu0 %v2195
      %v2197 = vpop.xlane.xlu0 %2196
      %v2198 = vrcp.pop %v2152
      %v2199 = vrcp.pop %v2155
      %v2200 = vrcp.pop %v2158
      %v2201 = vrcp.pop %v2161
      %v2202 = vrcp.pop %v2164
      %v2203 = vrcp.pop %v2167
      %v2204 = vrcp.pop %v2170
      %v2205 = vrcp.pop %v2173
      %v2206 = vrcp.pop %v2176
      %v2207 = vrcp.pop %v2179
      %v2208 = vrcp.pop %v2182
      %v2209 = vrcp.pop %v2185
      %v2210 = vrcp.pop %v2188
      %v2211 = vrcp.pop %v2191
      %v2212 = vrcp.pop %v2194
      %v2213 = vrcp.pop %v2197
      %v2214 = vmul.f32 %v2119, %v2198
      %v2215 = vmul.f32 %v2121, %v2199
      %v2216 = vmul.f32 %v2123, %v2200
      %v2217 = vmul.f32 %v2125, %v2201
      %v2218 = vmul.f32 %v2127, %v2202
      %v2219 = vmul.f32 %v2129, %v2203
      %v2220 = vmul.f32 %v2131, %v2204
      %v2221 = vmul.f32 %v2133, %v2205
      %v2222 = vmul.f32 %v2135, %v2206
      %v2223 = vmul.f32 %v2137, %v2207
      %v2224 = vmul.f32 %v2139, %v2208
      %v2225 = vmul.f32 %v2141, %v2209
      %v2226 = vmul.f32 %v2143, %v2210
      %v2227 = vmul.f32 %v2145, %v2211
      %v2228 = vmul.f32 %v2147, %v2212
      %v2229 = vmul.f32 %v2149, %v2213
      %v2230 = vpack.c.bf16 %v2214, %v2214
      %v2231 = vpack.c.bf16 %v2215, %v2215
      %v2232 = vpack.c.bf16 %v2216, %v2216
      %v2233 = vpack.c.bf16 %v2217, %v2217
      %v2234 = vpack.c.bf16 %v2218, %v2218
      %v2235 = vpack.c.bf16 %v2219, %v2219
      %v2236 = vpack.c.bf16 %v2220, %v2220
      %v2237 = vpack.c.bf16 %v2221, %v2221
      %v2238 = vpack.c.bf16 %v2222, %v2222
      %v2239 = vpack.c.bf16 %v2223, %v2223
      %v2240 = vpack.c.bf16 %v2224, %v2224
      %v2241 = vpack.c.bf16 %v2225, %v2225
      %v2242 = vpack.c.bf16 %v2226, %v2226
      %v2243 = vpack.c.bf16 %v2227, %v2227
      %v2244 = vpack.c.bf16 %v2228, %v2228
      %v2245 = vpack.c.bf16 %v2229, %v2229
      %v2247 = vsel %vm2053, %v2230, 0
      %vm2249 = vcmask 1043456
      %v2251 = vsel %vm2249, %v1078, 0
      %2253 = vmatprep.subr.bf16.mxu0 0
      %2254 = vmatpush1.bf16.msra.mxu0 %v2251
      %2255 = vmatprep.subr.bf16.mxu0 0
      %2256 = vmatpush1.bf16.msra.mxu0 0
      %2257 = vmatprep.subr.bf16.mxu0 0
      %2258 = vmatpush1.bf16.msra.mxu0 0
      %2259 = vmatprep.subr.bf16.mxu0 0
      %2260 = vmatpush1.bf16.msra.mxu0 0
      %2261 = vmatprep.subr.bf16.mxu0 0
      %2262 = vmatpush1.bf16.msra.mxu0 0
      %2263 = vmatprep.subr.bf16.mxu0 0
      %2264 = vmatpush1.bf16.msra.mxu0 0
      %2265 = vmatprep.subr.bf16.mxu0 0
      %2266 = vmatpush1.bf16.msra.mxu0 0
      %2267 = vmatprep.subr.bf16.mxu0 0
      %2268 = vmatpush1.bf16.msra.mxu0 0
      %2269 = vmatprep.subr.bf16.mxu0 0
      %2270 = vmatpush1.bf16.msra.mxu0 0
      %2271 = vmatprep.subr.bf16.mxu0 0
      %2272 = vmatpush1.bf16.msra.mxu0 0
      %2273 = vmatprep.subr.bf16.mxu0 0
      %2274 = vmatpush1.bf16.msra.mxu0 0
      %2275 = vmatprep.subr.bf16.mxu0 0
      %2276 = vmatpush1.bf16.msra.mxu0 0
      %2277 = vmatprep.subr.bf16.mxu0 0
      %2278 = vmatpush1.bf16.msra.mxu0 0
      %2279 = vmatprep.subr.bf16.mxu0 0
      %2280 = vmatpush1.bf16.msra.mxu0 0
      %2281 = vmatprep.subr.bf16.mxu0 0
      %2282 = vmatpush1.bf16.msra.mxu0 0
      %2283 = vmatprep.subr.bf16.mxu0 0
      %2284 = vmatpush1.bf16.msra.mxu0 0
      %2285 = vmatprep.mubr.bf16.mxu0 0
      %2286 = vmatmul.mubr.bf16.gmra.mrb[0].mxu0 %v2247
      %v2287 = vpop.f32.mrb[0].mxu0
      %v2288 = vadd.f32 0.0, %v2287
      %v2289 = vpop.f32.mrb[0].mxu0
      %v2290 = vpop.f32.mrb[0].mxu0
      %v2291 = vpop.f32.mrb[0].mxu0
      %2292 = vdwg.mxu0
      %v2294 = vsel %vm2053, %v2231, 0
      %v2297 = vsel %vm2249, %v1079, 0
      %2299 = vmatprep.subr.bf16.mxu0 0
      %2300 = vmatpush1.bf16.msra.mxu0 %v2297
      %2301 = vmatprep.subr.bf16.mxu0 0
      %2302 = vmatpush1.bf16.msra.mxu0 0
      %2303 = vmatprep.subr.bf16.mxu0 0
      %2304 = vmatpush1.bf16.msra.mxu0 0
      %2305 = vmatprep.subr.bf16.mxu0 0
      %2306 = vmatpush1.bf16.msra.mxu0 0
      %2307 = vmatprep.subr.bf16.mxu0 0
      %2308 = vmatpush1.bf16.msra.mxu0 0
      %2309 = vmatprep.subr.bf16.mxu0 0
      %2310 = vmatpush1.bf16.msra.mxu0 0
      %2311 = vmatprep.subr.bf16.mxu0 0
      %2312 = vmatpush1.bf16.msra.mxu0 0
      %2313 = vmatprep.subr.bf16.mxu0 0
      %2314 = vmatpush1.bf16.msra.mxu0 0
      %2315 = vmatprep.subr.bf16.mxu0 0
      %2316 = vmatpush1.bf16.msra.mxu0 0
      %2317 = vmatprep.subr.bf16.mxu0 0
      %2318 = vmatpush1.bf16.msra.mxu0 0
      %2319 = vmatprep.subr.bf16.mxu0 0
      %2320 = vmatpush1.bf16.msra.mxu0 0
      %2321 = vmatprep.subr.bf16.mxu0 0
      %2322 = vmatpush1.bf16.msra.mxu0 0
      %2323 = vmatprep.subr.bf16.mxu0 0
      %2324 = vmatpush1.bf16.msra.mxu0 0
      %2325 = vmatprep.subr.bf16.mxu0 0
      %2326 = vmatpush1.bf16.msra.mxu0 0
      %2327 = vmatprep.subr.bf16.mxu0 0
      %2328 = vmatpush1.bf16.msra.mxu0 0
      %2329 = vmatprep.subr.bf16.mxu0 0
      %2330 = vmatpush1.bf16.msra.mxu0 0
      %2331 = vmatprep.mubr.bf16.mxu0 0
      %2332 = vmatmul.mubr.bf16.gmra.mrb[0].mxu0 %v2294
      %v2333 = vpop.f32.mrb[0].mxu0
      %v2334 = vadd.f32 0.0, %v2333
      %v2335 = vpop.f32.mrb[0].mxu0
      %v2336 = vpop.f32.mrb[0].mxu0
      %v2337 = vpop.f32.mrb[0].mxu0
      %2338 = vdwg.mxu0
      %v2340 = vsel %vm2053, %v2232, 0
      %v2343 = vsel %vm2249, %v1080, 0
      %2345 = vmatprep.subr.bf16.mxu0 0
      %2346 = vmatpush1.bf16.msra.mxu0 %v2343
      %2347 = vmatprep.subr.bf16.mxu0 0
      %2348 = vmatpush1.bf16.msra.mxu0 0
      %2349 = vmatprep.subr.bf16.mxu0 0
      %2350 = vmatpush1.bf16.msra.mxu0 0
      %2351 = vmatprep.subr.bf16.mxu0 0
      %2352 = vmatpush1.bf16.msra.mxu0 0
      %2353 = vmatprep.subr.bf16.mxu0 0
      %2354 = vmatpush1.bf16.msra.mxu0 0
      %2355 = vmatprep.subr.bf16.mxu0 0
      %2356 = vmatpush1.bf16.msra.mxu0 0
      %2357 = vmatprep.subr.bf16.mxu0 0
      %2358 = vmatpush1.bf16.msra.mxu0 0
      %2359 = vmatprep.subr.bf16.mxu0 0
      %2360 = vmatpush1.bf16.msra.mxu0 0
      %2361 = vmatprep.subr.bf16.mxu0 0
      %2362 = vmatpush1.bf16.msra.mxu0 0
      %2363 = vmatprep.subr.bf16.mxu0 0
      %2364 = vmatpush1.bf16.msra.mxu0 0
      %2365 = vmatprep.subr.bf16.mxu0 0
      %2366 = vmatpush1.bf16.msra.mxu0 0
      %2367 = vmatprep.subr.bf16.mxu0 0
      %2368 = vmatpush1.bf16.msra.mxu0 0
      %2369 = vmatprep.subr.bf16.mxu0 0
      %2370 = vmatpush1.bf16.msra.mxu0 0
      %2371 = vmatprep.subr.bf16.mxu0 0
      %2372 = vmatpush1.bf16.msra.mxu0 0
      %2373 = vmatprep.subr.bf16.mxu0 0
      %2374 = vmatpush1.bf16.msra.mxu0 0
      %2375 = vmatprep.subr.bf16.mxu0 0
      %2376 = vmatpush1.bf16.msra.mxu0 0
      %2377 = vmatprep.mubr.bf16.mxu0 0
      %2378 = vmatmul.mubr.bf16.gmra.mrb[0].mxu0 %v2340
      %v2379 = vpop.f32.mrb[0].mxu0
      %v2380 = vadd.f32 0.0, %v2379
      %v2381 = vpop.f32.mrb[0].mxu0
      %v2382 = vpop.f32.mrb[0].mxu0
      %v2383 = vpop.f32.mrb[0].mxu0
      %2384 = vdwg.mxu0
      %v2386 = vsel %vm2053, %v2233, 0
      %v2389 = vsel %vm2249, %v1081, 0
      %2391 = vmatprep.subr.bf16.mxu0 0
      %2392 = vmatpush1.bf16.msra.mxu0 %v2389
      %2393 = vmatprep.subr.bf16.mxu0 0
      %2394 = vmatpush1.bf16.msra.mxu0 0
      %2395 = vmatprep.subr.bf16.mxu0 0
      %2396 = vmatpush1.bf16.msra.mxu0 0
      %2397 = vmatprep.subr.bf16.mxu0 0
      %2398 = vmatpush1.bf16.msra.mxu0 0
      %2399 = vmatprep.subr.bf16.mxu0 0
      %2400 = vmatpush1.bf16.msra.mxu0 0
      %2401 = vmatprep.subr.bf16.mxu0 0
      %2402 = vmatpush1.bf16.msra.mxu0 0
      %2403 = vmatprep.subr.bf16.mxu0 0
      %2404 = vmatpush1.bf16.msra.mxu0 0
      %2405 = vmatprep.subr.bf16.mxu0 0
      %2406 = vmatpush1.bf16.msra.mxu0 0
      %2407 = vmatprep.subr.bf16.mxu0 0
      %2408 = vmatpush1.bf16.msra.mxu0 0
      %2409 = vmatprep.subr.bf16.mxu0 0
      %2410 = vmatpush1.bf16.msra.mxu0 0
      %2411 = vmatprep.subr.bf16.mxu0 0
      %2412 = vmatpush1.bf16.msra.mxu0 0
      %2413 = vmatprep.subr.bf16.mxu0 0
      %2414 = vmatpush1.bf16.msra.mxu0 0
      %2415 = vmatprep.subr.bf16.mxu0 0
      %2416 = vmatpush1.bf16.msra.mxu0 0
      %2417 = vmatprep.subr.bf16.mxu0 0
      %2418 = vmatpush1.bf16.msra.mxu0 0
      %2419 = vmatprep.subr.bf16.mxu0 0
      %2420 = vmatpush1.bf16.msra.mxu0 0
      %2421 = vmatprep.subr.bf16.mxu0 0
      %2422 = vmatpush1.bf16.msra.mxu0 0
      %2423 = vmatprep.mubr.bf16.mxu0 0
      %2424 = vmatmul.mubr.bf16.gmra.mrb[0].mxu0 %v2386
      %v2425 = vpop.f32.mrb[0].mxu0
      %v2426 = vadd.f32 0.0, %v2425
      %v2427 = vpop.f32.mrb[0].mxu0
      %v2428 = vpop.f32.mrb[0].mxu0
      %v2429 = vpop.f32.mrb[0].mxu0
      %2430 = vdwg.mxu0
      %v2432 = vsel %vm2053, %v2234, 0
      %v2435 = vsel %vm2249, %v1082, 0
      %2437 = vmatprep.subr.bf16.mxu0 0
      %2438 = vmatpush1.bf16.msra.mxu0 %v2435
      %2439 = vmatprep.subr.bf16.mxu0 0
      %2440 = vmatpush1.bf16.msra.mxu0 0
      %2441 = vmatprep.subr.bf16.mxu0 0
      %2442 = vmatpush1.bf16.msra.mxu0 0
      %2443 = vmatprep.subr.bf16.mxu0 0
      %2444 = vmatpush1.bf16.msra.mxu0 0
      %2445 = vmatprep.subr.bf16.mxu0 0
      %2446 = vmatpush1.bf16.msra.mxu0 0
      %2447 = vmatprep.subr.bf16.mxu0 0
      %2448 = vmatpush1.bf16.msra.mxu0 0
      %2449 = vmatprep.subr.bf16.mxu0 0
      %2450 = vmatpush1.bf16.msra.mxu0 0
      %2451 = vmatprep.subr.bf16.mxu0 0
      %2452 = vmatpush1.bf16.msra.mxu0 0
      %2453 = vmatprep.subr.bf16.mxu0 0
      %2454 = vmatpush1.bf16.msra.mxu0 0
      %2455 = vmatprep.subr.bf16.mxu0 0
      %2456 = vmatpush1.bf16.msra.mxu0 0
      %2457 = vmatprep.subr.bf16.mxu0 0
      %2458 = vmatpush1.bf16.msra.mxu0 0
      %2459 = vmatprep.subr.bf16.mxu0 0
      %2460 = vmatpush1.bf16.msra.mxu0 0
      %2461 = vmatprep.subr.bf16.mxu0 0
      %2462 = vmatpush1.bf16.msra.mxu0 0
      %2463 = vmatprep.subr.bf16.mxu0 0
      %2464 = vmatpush1.bf16.msra.mxu0 0
      %2465 = vmatprep.subr.bf16.mxu0 0
      %2466 = vmatpush1.bf16.msra.mxu0 0
      %2467 = vmatprep.subr.bf16.mxu0 0
      %2468 = vmatpush1.bf16.msra.mxu0 0
      %2469 = vmatprep.mubr.bf16.mxu0 0
      %2470 = vmatmul.mubr.bf16.gmra.mrb[0].mxu0 %v2432
      %v2471 = vpop.f32.mrb[0].mxu0
      %v2472 = vadd.f32 0.0, %v2471
      %v2473 = vpop.f32.mrb[0].mxu0
      %v2474 = vpop.f32.mrb[0].mxu0
      %v2475 = vpop.f32.mrb[0].mxu0
      %2476 = vdwg.mxu0
      %v2478 = vsel %vm2053, %v2235, 0
      %v2481 = vsel %vm2249, %v1083, 0
      %2483 = vmatprep.subr.bf16.mxu0 0
      %2484 = vmatpush1.bf16.msra.mxu0 %v2481
      %2485 = vmatprep.subr.bf16.mxu0 0
      %2486 = vmatpush1.bf16.msra.mxu0 0
      %2487 = vmatprep.subr.bf16.mxu0 0
      %2488 = vmatpush1.bf16.msra.mxu0 0
      %2489 = vmatprep.subr.bf16.mxu0 0
      %2490 = vmatpush1.bf16.msra.mxu0 0
      %2491 = vmatprep.subr.bf16.mxu0 0
      %2492 = vmatpush1.bf16.msra.mxu0 0
      %2493 = vmatprep.subr.bf16.mxu0 0
      %2494 = vmatpush1.bf16.msra.mxu0 0
      %2495 = vmatprep.subr.bf16.mxu0 0
      %2496 = vmatpush1.bf16.msra.mxu0 0
      %2497 = vmatprep.subr.bf16.mxu0 0
      %2498 = vmatpush1.bf16.msra.mxu0 0
      %2499 = vmatprep.subr.bf16.mxu0 0
      %2500 = vmatpush1.bf16.msra.mxu0 0
      %2501 = vmatprep.subr.bf16.mxu0 0
      %2502 = vmatpush1.bf16.msra.mxu0 0
      %2503 = vmatprep.subr.bf16.mxu0 0
      %2504 = vmatpush1.bf16.msra.mxu0 0
      %2505 = vmatprep.subr.bf16.mxu0 0
      %2506 = vmatpush1.bf16.msra.mxu0 0
      %2507 = vmatprep.subr.bf16.mxu0 0
      %2508 = vmatpush1.bf16.msra.mxu0 0
      %2509 = vmatprep.subr.bf16.mxu0 0
      %2510 = vmatpush1.bf16.msra.mxu0 0
      %2511 = vmatprep.subr.bf16.mxu0 0
      %2512 = vmatpush1.bf16.msra.mxu0 0
      %2513 = vmatprep.subr.bf16.mxu0 0
      %2514 = vmatpush1.bf16.msra.mxu0 0
      %2515 = vmatprep.mubr.bf16.mxu0 0
      %2516 = vmatmul.mubr.bf16.gmra.mrb[0].mxu0 %v2478
      %v2517 = vpop.f32.mrb[0].mxu0
      %v2518 = vadd.f32 0.0, %v2517
      %v2519 = vpop.f32.mrb[0].mxu0
      %v2520 = vpop.f32.mrb[0].mxu0
      %v2521 = vpop.f32.mrb[0].mxu0
      %2522 = vdwg.mxu0
      %v2524 = vsel %vm2053, %v2236, 0
      %v2527 = vsel %vm2249, %v1084, 0
      %2529 = vmatprep.subr.bf16.mxu0 0
      %2530 = vmatpush1.bf16.msra.mxu0 %v2527
      %2531 = vmatprep.subr.bf16.mxu0 0
      %2532 = vmatpush1.bf16.msra.mxu0 0
      %2533 = vmatprep.subr.bf16.mxu0 0
      %2534 = vmatpush1.bf16.msra.mxu0 0
      %2535 = vmatprep.subr.bf16.mxu0 0
      %2536 = vmatpush1.bf16.msra.mxu0 0
      %2537 = vmatprep.subr.bf16.mxu0 0
      %2538 = vmatpush1.bf16.msra.mxu0 0
      %2539 = vmatprep.subr.bf16.mxu0 0
      %2540 = vmatpush1.bf16.msra.mxu0 0
      %2541 = vmatprep.subr.bf16.mxu0 0
      %2542 = vmatpush1.bf16.msra.mxu0 0
      %2543 = vmatprep.subr.bf16.mxu0 0
      %2544 = vmatpush1.bf16.msra.mxu0 0
      %2545 = vmatprep.subr.bf16.mxu0 0
      %2546 = vmatpush1.bf16.msra.mxu0 0
      %2547 = vmatprep.subr.bf16.mxu0 0
      %2548 = vmatpush1.bf16.msra.mxu0 0
      %2549 = vmatprep.subr.bf16.mxu0 0
      %2550 = vmatpush1.bf16.msra.mxu0 0
      %2551 = vmatprep.subr.bf16.mxu0 0
      %2552 = vmatpush1.bf16.msra.mxu0 0
      %2553 = vmatprep.subr.bf16.mxu0 0
      %2554 = vmatpush1.bf16.msra.mxu0 0
      %2555 = vmatprep.subr.bf16.mxu0 0
      %2556 = vmatpush1.bf16.msra.mxu0 0
      %2557 = vmatprep.subr.bf16.mxu0 0
      %2558 = vmatpush1.bf16.msra.mxu0 0
      %2559 = vmatprep.subr.bf16.mxu0 0
      %2560 = vmatpush1.bf16.msra.mxu0 0
      %2561 = vmatprep.mubr.bf16.mxu0 0
      %2562 = vmatmul.mubr.bf16.gmra.mrb[0].mxu0 %v2524
      %v2563 = vpop.f32.mrb[0].mxu0
      %v2564 = vadd.f32 0.0, %v2563
      %v2565 = vpop.f32.mrb[0].mxu0
      %v2566 = vpop.f32.mrb[0].mxu0
      %v2567 = vpop.f32.mrb[0].mxu0
      %2568 = vdwg.mxu0
      %v2570 = vsel %vm2053, %v2237, 0
      %v2573 = vsel %vm2249, %v1085, 0
      %2575 = vmatprep.subr.bf16.mxu0 0
      %2576 = vmatpush1.bf16.msra.mxu0 %v2573
      %2577 = vmatprep.subr.bf16.mxu0 0
      %2578 = vmatpush1.bf16.msra.mxu0 0
      %2579 = vmatprep.subr.bf16.mxu0 0
      %2580 = vmatpush1.bf16.msra.mxu0 0
      %2581 = vmatprep.subr.bf16.mxu0 0
      %2582 = vmatpush1.bf16.msra.mxu0 0
      %2583 = vmatprep.subr.bf16.mxu0 0
      %2584 = vmatpush1.bf16.msra.mxu0 0
      %2585 = vmatprep.subr.bf16.mxu0 0
      %2586 = vmatpush1.bf16.msra.mxu0 0
      %2587 = vmatprep.subr.bf16.mxu0 0
      %2588 = vmatpush1.bf16.msra.mxu0 0
      %2589 = vmatprep.subr.bf16.mxu0 0
      %2590 = vmatpush1.bf16.msra.mxu0 0
      %2591 = vmatprep.subr.bf16.mxu0 0
      %2592 = vmatpush1.bf16.msra.mxu0 0
      %2593 = vmatprep.subr.bf16.mxu0 0
      %2594 = vmatpush1.bf16.msra.mxu0 0
      %2595 = vmatprep.subr.bf16.mxu0 0
      %2596 = vmatpush1.bf16.msra.mxu0 0
      %2597 = vmatprep.subr.bf16.mxu0 0
      %2598 = vmatpush1.bf16.msra.mxu0 0
      %2599 = vmatprep.subr.bf16.mxu0 0
      %2600 = vmatpush1.bf16.msra.mxu0 0
      %2601 = vmatprep.subr.bf16.mxu0 0
      %2602 = vmatpush1.bf16.msra.mxu0 0
      %2603 = vmatprep.subr.bf16.mxu0 0
      %2604 = vmatpush1.bf16.msra.mxu0 0
      %2605 = vmatprep.subr.bf16.mxu0 0
      %2606 = vmatpush1.bf16.msra.mxu0 0
      %2607 = vmatprep.mubr.bf16.mxu0 0
      %2608 = vmatmul.mubr.bf16.gmra.mrb[0].mxu0 %v2570
      %v2609 = vpop.f32.mrb[0].mxu0
      %v2610 = vadd.f32 0.0, %v2609
      %v2611 = vpop.f32.mrb[0].mxu0
      %v2612 = vpop.f32.mrb[0].mxu0
      %v2613 = vpop.f32.mrb[0].mxu0
      %2614 = vdwg.mxu0
      %v2616 = vsel %vm2053, %v2238, 0
      %v2619 = vsel %vm2249, %v1086, 0
      %2621 = vmatprep.subr.bf16.mxu0 0
      %2622 = vmatpush1.bf16.msra.mxu0 %v2619
      %2623 = vmatprep.subr.bf16.mxu0 0
      %2624 = vmatpush1.bf16.msra.mxu0 0
      %2625 = vmatprep.subr.bf16.mxu0 0
      %2626 = vmatpush1.bf16.msra.mxu0 0
      %2627 = vmatprep.subr.bf16.mxu0 0
      %2628 = vmatpush1.bf16.msra.mxu0 0
      %2629 = vmatprep.subr.bf16.mxu0 0
      %2630 = vmatpush1.bf16.msra.mxu0 0
      %2631 = vmatprep.subr.bf16.mxu0 0
      %2632 = vmatpush1.bf16.msra.mxu0 0
      %2633 = vmatprep.subr.bf16.mxu0 0
      %2634 = vmatpush1.bf16.msra.mxu0 0
      %2635 = vmatprep.subr.bf16.mxu0 0
      %2636 = vmatpush1.bf16.msra.mxu0 0
      %2637 = vmatprep.subr.bf16.mxu0 0
      %2638 = vmatpush1.bf16.msra.mxu0 0
      %2639 = vmatprep.subr.bf16.mxu0 0
      %2640 = vmatpush1.bf16.msra.mxu0 0
      %2641 = vmatprep.subr.bf16.mxu0 0
      %2642 = vmatpush1.bf16.msra.mxu0 0
      %2643 = vmatprep.subr.bf16.mxu0 0
      %2644 = vmatpush1.bf16.msra.mxu0 0
      %2645 = vmatprep.subr.bf16.mxu0 0
      %2646 = vmatpush1.bf16.msra.mxu0 0
      %2647 = vmatprep.subr.bf16.mxu0 0
      %2648 = vmatpush1.bf16.msra.mxu0 0
      %2649 = vmatprep.subr.bf16.mxu0 0
      %2650 = vmatpush1.bf16.msra.mxu0 0
      %2651 = vmatprep.subr.bf16.mxu0 0
      %2652 = vmatpush1.bf16.msra.mxu0 0
      %2653 = vmatprep.mubr.bf16.mxu0 0
      %2654 = vmatmul.mubr.bf16.gmra.mrb[0].mxu0 %v2616
      %v2655 = vpop.f32.mrb[0].mxu0
      %v2656 = vadd.f32 0.0, %v2655
      %v2657 = vpop.f32.mrb[0].mxu0
      %v2658 = vpop.f32.mrb[0].mxu0
      %v2659 = vpop.f32.mrb[0].mxu0
      %2660 = vdwg.mxu0
      %v2662 = vsel %vm2053, %v2239, 0
      %v2665 = vsel %vm2249, %v1087, 0
      %2667 = vmatprep.subr.bf16.mxu0 0
      %2668 = vmatpush1.bf16.msra.mxu0 %v2665
      %2669 = vmatprep.subr.bf16.mxu0 0
      %2670 = vmatpush1.bf16.msra.mxu0 0
      %2671 = vmatprep.subr.bf16.mxu0 0
      %2672 = vmatpush1.bf16.msra.mxu0 0
      %2673 = vmatprep.subr.bf16.mxu0 0
      %2674 = vmatpush1.bf16.msra.mxu0 0
      %2675 = vmatprep.subr.bf16.mxu0 0
      %2676 = vmatpush1.bf16.msra.mxu0 0
      %2677 = vmatprep.subr.bf16.mxu0 0
      %2678 = vmatpush1.bf16.msra.mxu0 0
      %2679 = vmatprep.subr.bf16.mxu0 0
      %2680 = vmatpush1.bf16.msra.mxu0 0
      %2681 = vmatprep.subr.bf16.mxu0 0
      %2682 = vmatpush1.bf16.msra.mxu0 0
      %2683 = vmatprep.subr.bf16.mxu0 0
      %2684 = vmatpush1.bf16.msra.mxu0 0
      %2685 = vmatprep.subr.bf16.mxu0 0
      %2686 = vmatpush1.bf16.msra.mxu0 0
      %2687 = vmatprep.subr.bf16.mxu0 0
      %2688 = vmatpush1.bf16.msra.mxu0 0
      %2689 = vmatprep.subr.bf16.mxu0 0
      %2690 = vmatpush1.bf16.msra.mxu0 0
      %2691 = vmatprep.subr.bf16.mxu0 0
      %2692 = vmatpush1.bf16.msra.mxu0 0
      %2693 = vmatprep.subr.bf16.mxu0 0
      %2694 = vmatpush1.bf16.msra.mxu0 0
      %2695 = vmatprep.subr.bf16.mxu0 0
      %2696 = vmatpush1.bf16.msra.mxu0 0
      %2697 = vmatprep.subr.bf16.mxu0 0
      %2698 = vmatpush1.bf16.msra.mxu0 0
      %2699 = vmatprep.mubr.bf16.mxu0 0
      %2700 = vmatmul.mubr.bf16.gmra.mrb[0].mxu0 %v2662
      %v2701 = vpop.f32.mrb[0].mxu0
      %v2702 = vadd.f32 0.0, %v2701
      %v2703 = vpop.f32.mrb[0].mxu0
      %v2704 = vpop.f32.mrb[0].mxu0
      %v2705 = vpop.f32.mrb[0].mxu0
      %2706 = vdwg.mxu0
      %v2708 = vsel %vm2053, %v2240, 0
      %v2711 = vsel %vm2249, %v1088, 0
      %2713 = vmatprep.subr.bf16.mxu0 0
      %2714 = vmatpush1.bf16.msra.mxu0 %v2711
      %2715 = vmatprep.subr.bf16.mxu0 0
      %2716 = vmatpush1.bf16.msra.mxu0 0
      %2717 = vmatprep.subr.bf16.mxu0 0
      %2718 = vmatpush1.bf16.msra.mxu0 0
      %2719 = vmatprep.subr.bf16.mxu0 0
      %2720 = vmatpush1.bf16.msra.mxu0 0
      %2721 = vmatprep.subr.bf16.mxu0 0
      %2722 = vmatpush1.bf16.msra.mxu0 0
      %2723 = vmatprep.subr.bf16.mxu0 0
      %2724 = vmatpush1.bf16.msra.mxu0 0
      %2725 = vmatprep.subr.bf16.mxu0 0
      %2726 = vmatpush1.bf16.msra.mxu0 0
      %2727 = vmatprep.subr.bf16.mxu0 0
      %2728 = vmatpush1.bf16.msra.mxu0 0
      %2729 = vmatprep.subr.bf16.mxu0 0
      %2730 = vmatpush1.bf16.msra.mxu0 0
      %2731 = vmatprep.subr.bf16.mxu0 0
      %2732 = vmatpush1.bf16.msra.mxu0 0
      %2733 = vmatprep.subr.bf16.mxu0 0
      %2734 = vmatpush1.bf16.msra.mxu0 0
      %2735 = vmatprep.subr.bf16.mxu0 0
      %2736 = vmatpush1.bf16.msra.mxu0 0
      %2737 = vmatprep.subr.bf16.mxu0 0
      %2738 = vmatpush1.bf16.msra.mxu0 0
      %2739 = vmatprep.subr.bf16.mxu0 0
      %2740 = vmatpush1.bf16.msra.mxu0 0
      %2741 = vmatprep.subr.bf16.mxu0 0
      %2742 = vmatpush1.bf16.msra.mxu0 0
      %2743 = vmatprep.subr.bf16.mxu0 0
      %2744 = vmatpush1.bf16.msra.mxu0 0
      %2745 = vmatprep.mubr.bf16.mxu0 0
      %2746 = vmatmul.mubr.bf16.gmra.mrb[0].mxu0 %v2708
      %v2747 = vpop.f32.mrb[0].mxu0
      %v2748 = vadd.f32 0.0, %v2747
      %v2749 = vpop.f32.mrb[0].mxu0
      %v2750 = vpop.f32.mrb[0].mxu0
      %v2751 = vpop.f32.mrb[0].mxu0
      %2752 = vdwg.mxu0
      %v2754 = vsel %vm2053, %v2241, 0
      %v2757 = vsel %vm2249, %v1089, 0
      %2759 = vmatprep.subr.bf16.mxu0 0
      %2760 = vmatpush1.bf16.msra.mxu0 %v2757
      %2761 = vmatprep.subr.bf16.mxu0 0
      %2762 = vmatpush1.bf16.msra.mxu0 0
      %2763 = vmatprep.subr.bf16.mxu0 0
      %2764 = vmatpush1.bf16.msra.mxu0 0
      %2765 = vmatprep.subr.bf16.mxu0 0
      %2766 = vmatpush1.bf16.msra.mxu0 0
      %2767 = vmatprep.subr.bf16.mxu0 0
      %2768 = vmatpush1.bf16.msra.mxu0 0
      %2769 = vmatprep.subr.bf16.mxu0 0
      %2770 = vmatpush1.bf16.msra.mxu0 0
      %2771 = vmatprep.subr.bf16.mxu0 0
      %2772 = vmatpush1.bf16.msra.mxu0 0
      %2773 = vmatprep.subr.bf16.mxu0 0
      %2774 = vmatpush1.bf16.msra.mxu0 0
      %2775 = vmatprep.subr.bf16.mxu0 0
      %2776 = vmatpush1.bf16.msra.mxu0 0
      %2777 = vmatprep.subr.bf16.mxu0 0
      %2778 = vmatpush1.bf16.msra.mxu0 0
      %2779 = vmatprep.subr.bf16.mxu0 0
      %2780 = vmatpush1.bf16.msra.mxu0 0
      %2781 = vmatprep.subr.bf16.mxu0 0
      %2782 = vmatpush1.bf16.msra.mxu0 0
      %2783 = vmatprep.subr.bf16.mxu0 0
      %2784 = vmatpush1.bf16.msra.mxu0 0
      %2785 = vmatprep.subr.bf16.mxu0 0
      %2786 = vmatpush1.bf16.msra.mxu0 0
      %2787 = vmatprep.subr.bf16.mxu0 0
      %2788 = vmatpush1.bf16.msra.mxu0 0
      %2789 = vmatprep.subr.bf16.mxu0 0
      %2790 = vmatpush1.bf16.msra.mxu0 0
      %2791 = vmatprep.mubr.bf16.mxu0 0
      %2792 = vmatmul.mubr.bf16.gmra.mrb[0].mxu0 %v2754
      %v2793 = vpop.f32.mrb[0].mxu0
      %v2794 = vadd.f32 0.0, %v2793
      %v2795 = vpop.f32.mrb[0].mxu0
      %v2796 = vpop.f32.mrb[0].mxu0
      %v2797 = vpop.f32.mrb[0].mxu0
      %2798 = vdwg.mxu0
      %v2800 = vsel %vm2053, %v2242, 0
      %v2803 = vsel %vm2249, %v1090, 0
      %2805 = vmatprep.subr.bf16.mxu0 0
      %2806 = vmatpush1.bf16.msra.mxu0 %v2803
      %2807 = vmatprep.subr.bf16.mxu0 0
      %2808 = vmatpush1.bf16.msra.mxu0 0
      %2809 = vmatprep.subr.bf16.mxu0 0
      %2810 = vmatpush1.bf16.msra.mxu0 0
      %2811 = vmatprep.subr.bf16.mxu0 0
      %2812 = vmatpush1.bf16.msra.mxu0 0
      %2813 = vmatprep.subr.bf16.mxu0 0
      %2814 = vmatpush1.bf16.msra.mxu0 0
      %2815 = vmatprep.subr.bf16.mxu0 0
      %2816 = vmatpush1.bf16.msra.mxu0 0
      %2817 = vmatprep.subr.bf16.mxu0 0
      %2818 = vmatpush1.bf16.msra.mxu0 0
      %2819 = vmatprep.subr.bf16.mxu0 0
      %2820 = vmatpush1.bf16.msra.mxu0 0
      %2821 = vmatprep.subr.bf16.mxu0 0
      %2822 = vmatpush1.bf16.msra.mxu0 0
      %2823 = vmatprep.subr.bf16.mxu0 0
      %2824 = vmatpush1.bf16.msra.mxu0 0
      %2825 = vmatprep.subr.bf16.mxu0 0
      %2826 = vmatpush1.bf16.msra.mxu0 0
      %2827 = vmatprep.subr.bf16.mxu0 0
      %2828 = vmatpush1.bf16.msra.mxu0 0
      %2829 = vmatprep.subr.bf16.mxu0 0
      %2830 = vmatpush1.bf16.msra.mxu0 0
      %2831 = vmatprep.subr.bf16.mxu0 0
      %2832 = vmatpush1.bf16.msra.mxu0 0
      %2833 = vmatprep.subr.bf16.mxu0 0
      %2834 = vmatpush1.bf16.msra.mxu0 0
      %2835 = vmatprep.subr.bf16.mxu0 0
      %2836 = vmatpush1.bf16.msra.mxu0 0
      %2837 = vmatprep.mubr.bf16.mxu0 0
      %2838 = vmatmul.mubr.bf16.gmra.mrb[0].mxu0 %v2800
      %v2839 = vpop.f32.mrb[0].mxu0
      %v2840 = vadd.f32 0.0, %v2839
      %v2841 = vpop.f32.mrb[0].mxu0
      %v2842 = vpop.f32.mrb[0].mxu0
      %v2843 = vpop.f32.mrb[0].mxu0
      %2844 = vdwg.mxu0
      %v2846 = vsel %vm2053, %v2243, 0
      %v2849 = vsel %vm2249, %v1091, 0
      %2851 = vmatprep.subr.bf16.mxu0 0
      %2852 = vmatpush1.bf16.msra.mxu0 %v2849
      %2853 = vmatprep.subr.bf16.mxu0 0
      %2854 = vmatpush1.bf16.msra.mxu0 0
      %2855 = vmatprep.subr.bf16.mxu0 0
      %2856 = vmatpush1.bf16.msra.mxu0 0
      %2857 = vmatprep.subr.bf16.mxu0 0
      %2858 = vmatpush1.bf16.msra.mxu0 0
      %2859 = vmatprep.subr.bf16.mxu0 0
      %2860 = vmatpush1.bf16.msra.mxu0 0
      %2861 = vmatprep.subr.bf16.mxu0 0
      %2862 = vmatpush1.bf16.msra.mxu0 0
      %2863 = vmatprep.subr.bf16.mxu0 0
      %2864 = vmatpush1.bf16.msra.mxu0 0
      %2865 = vmatprep.subr.bf16.mxu0 0
      %2866 = vmatpush1.bf16.msra.mxu0 0
      %2867 = vmatprep.subr.bf16.mxu0 0
      %2868 = vmatpush1.bf16.msra.mxu0 0
      %2869 = vmatprep.subr.bf16.mxu0 0
      %2870 = vmatpush1.bf16.msra.mxu0 0
      %2871 = vmatprep.subr.bf16.mxu0 0
      %2872 = vmatpush1.bf16.msra.mxu0 0
      %2873 = vmatprep.subr.bf16.mxu0 0
      %2874 = vmatpush1.bf16.msra.mxu0 0
      %2875 = vmatprep.subr.bf16.mxu0 0
      %2876 = vmatpush1.bf16.msra.mxu0 0
      %2877 = vmatprep.subr.bf16.mxu0 0
      %2878 = vmatpush1.bf16.msra.mxu0 0
      %2879 = vmatprep.subr.bf16.mxu0 0
      %2880 = vmatpush1.bf16.msra.mxu0 0
      %2881 = vmatprep.subr.bf16.mxu0 0
      %2882 = vmatpush1.bf16.msra.mxu0 0
      %2883 = vmatprep.mubr.bf16.mxu0 0
      %2884 = vmatmul.mubr.bf16.gmra.mrb[0].mxu0 %v2846
      %v2885 = vpop.f32.mrb[0].mxu0
      %v2886 = vadd.f32 0.0, %v2885
      %v2887 = vpop.f32.mrb[0].mxu0
      %v2888 = vpop.f32.mrb[0].mxu0
      %v2889 = vpop.f32.mrb[0].mxu0
      %2890 = vdwg.mxu0
      %v2892 = vsel %vm2053, %v2244, 0
      %v2895 = vsel %vm2249, %v1092, 0
      %2897 = vmatprep.subr.bf16.mxu0 0
      %2898 = vmatpush1.bf16.msra.mxu0 %v2895
      %2899 = vmatprep.subr.bf16.mxu0 0
      %2900 = vmatpush1.bf16.msra.mxu0 0
      %2901 = vmatprep.subr.bf16.mxu0 0
      %2902 = vmatpush1.bf16.msra.mxu0 0
      %2903 = vmatprep.subr.bf16.mxu0 0
      %2904 = vmatpush1.bf16.msra.mxu0 0
      %2905 = vmatprep.subr.bf16.mxu0 0
      %2906 = vmatpush1.bf16.msra.mxu0 0
      %2907 = vmatprep.subr.bf16.mxu0 0
      %2908 = vmatpush1.bf16.msra.mxu0 0
      %2909 = vmatprep.subr.bf16.mxu0 0
      %2910 = vmatpush1.bf16.msra.mxu0 0
      %2911 = vmatprep.subr.bf16.mxu0 0
      %2912 = vmatpush1.bf16.msra.mxu0 0
      %2913 = vmatprep.subr.bf16.mxu0 0
      %2914 = vmatpush1.bf16.msra.mxu0 0
      %2915 = vmatprep.subr.bf16.mxu0 0
      %2916 = vmatpush1.bf16.msra.mxu0 0
      %2917 = vmatprep.subr.bf16.mxu0 0
      %2918 = vmatpush1.bf16.msra.mxu0 0
      %2919 = vmatprep.subr.bf16.mxu0 0
      %2920 = vmatpush1.bf16.msra.mxu0 0
      %2921 = vmatprep.subr.bf16.mxu0 0
      %2922 = vmatpush1.bf16.msra.mxu0 0
      %2923 = vmatprep.subr.bf16.mxu0 0
      %2924 = vmatpush1.bf16.msra.mxu0 0
      %2925 = vmatprep.subr.bf16.mxu0 0
      %2926 = vmatpush1.bf16.msra.mxu0 0
      %2927 = vmatprep.subr.bf16.mxu0 0
      %2928 = vmatpush1.bf16.msra.mxu0 0
      %2929 = vmatprep.mubr.bf16.mxu0 0
      %2930 = vmatmul.mubr.bf16.gmra.mrb[0].mxu0 %v2892
      %v2931 = vpop.f32.mrb[0].mxu0
      %v2932 = vadd.f32 0.0, %v2931
      %v2933 = vpop.f32.mrb[0].mxu0
      %v2934 = vpop.f32.mrb[0].mxu0
      %v2935 = vpop.f32.mrb[0].mxu0
      %2936 = vdwg.mxu0
      %v2938 = vsel %vm2053, %v2245, 0
      %v2941 = vsel %vm2249, %v1093, 0
      %2943 = vmatprep.subr.bf16.mxu0 0
      %2944 = vmatpush1.bf16.msra.mxu0 %v2941
      %2945 = vmatprep.subr.bf16.mxu0 0
      %2946 = vmatpush1.bf16.msra.mxu0 0
      %2947 = vmatprep.subr.bf16.mxu0 0
      %2948 = vmatpush1.bf16.msra.mxu0 0
      %2949 = vmatprep.subr.bf16.mxu0 0
      %2950 = vmatpush1.bf16.msra.mxu0 0
      %2951 = vmatprep.subr.bf16.mxu0 0
      %2952 = vmatpush1.bf16.msra.mxu0 0
      %2953 = vmatprep.subr.bf16.mxu0 0
      %2954 = vmatpush1.bf16.msra.mxu0 0
      %2955 = vmatprep.subr.bf16.mxu0 0
      %2956 = vmatpush1.bf16.msra.mxu0 0
      %2957 = vmatprep.subr.bf16.mxu0 0
      %2958 = vmatpush1.bf16.msra.mxu0 0
      %2959 = vmatprep.subr.bf16.mxu0 0
      %2960 = vmatpush1.bf16.msra.mxu0 0
      %2961 = vmatprep.subr.bf16.mxu0 0
      %2962 = vmatpush1.bf16.msra.mxu0 0
      %2963 = vmatprep.subr.bf16.mxu0 0
      %2964 = vmatpush1.bf16.msra.mxu0 0
      %2965 = vmatprep.subr.bf16.mxu0 0
      %2966 = vmatpush1.bf16.msra.mxu0 0
      %2967 = vmatprep.subr.bf16.mxu0 0
      %2968 = vmatpush1.bf16.msra.mxu0 0
      %2969 = vmatprep.subr.bf16.mxu0 0
      %2970 = vmatpush1.bf16.msra.mxu0 0
      %2971 = vmatprep.subr.bf16.mxu0 0
      %2972 = vmatpush1.bf16.msra.mxu0 0
      %2973 = vmatprep.subr.bf16.mxu0 0
      %2974 = vmatpush1.bf16.msra.mxu0 0
      %2975 = vmatprep.mubr.bf16.mxu0 0
      %2976 = vmatmul.mubr.bf16.gmra.mrb[0].mxu0 %v2938
      %v2977 = vpop.f32.mrb[0].mxu0
      %v2978 = vadd.f32 0.0, %v2977
      %v2979 = vpop.f32.mrb[0].mxu0
      %v2980 = vpop.f32.mrb[0].mxu0
      %v2981 = vpop.f32.mrb[0].mxu0
      %2982 = vdwg.mxu0
      %v2983 = vpack.c.bf16 %v2334, %v2288
      %v2984 = vpack.c.bf16 %v2426, %v2380
      %v2985 = vpack.c.bf16 %v2518, %v2472
      %v2986 = vpack.c.bf16 %v2610, %v2564
      %v2987 = vpack.c.bf16 %v2702, %v2656
      %v2988 = vpack.c.bf16 %v2794, %v2748
      %v2989 = vpack.c.bf16 %v2886, %v2840
      %v2990 = vpack.c.bf16 %v2978, %v2932
      %2991 = vrot.lane.b32.xlu0 %v1030, 112
      %v2992 = vpop.permute.xlu0 %2991
      %2993 = vrot.lane.b32.xlu0 %v1030, 48
      %v2994 = vpop.permute.xlu0 %2993
      %v2996 = vsel %vm1286, %v2992, 0
      %v2999 = vsel %vm1286, %v2994, 0
      %3001 = vmatprep.subr.bf16.mxu0 0
      %3002 = vmatpush1.bf16.xpose.msra.mxu0 %v2999
      %3003 = vmatprep.subr.bf16.mxu0 0
      %3004 = vmatpush1.bf16.xpose.msra.mxu0 0
      %3005 = vmatprep.subr.bf16.mxu0 0
      %3006 = vmatpush1.bf16.xpose.msra.mxu0 0
      %3007 = vmatprep.subr.bf16.mxu0 0
      %3008 = vmatpush1.bf16.xpose.msra.mxu0 0
      %3009 = vmatprep.subr.bf16.mxu0 0
      %3010 = vmatpush1.bf16.xpose.msra.mxu0 0
      %3011 = vmatprep.subr.bf16.mxu0 0
      %3012 = vmatpush1.bf16.xpose.msra.mxu0 0
      %3013 = vmatprep.subr.bf16.mxu0 0
      %3014 = vmatpush1.bf16.xpose.msra.mxu0 0
      %3015 = vmatprep.subr.bf16.mxu0 0
      %3016 = vmatpush1.bf16.xpose.msra.mxu0 0
      %3017 = vmatprep.subr.bf16.mxu0 0
      %3018 = vmatpush1.bf16.xpose.msra.mxu0 0
      %3019 = vmatprep.subr.bf16.mxu0 0
      %3020 = vmatpush1.bf16.xpose.msra.mxu0 0
      %3021 = vmatprep.subr.bf16.mxu0 0
      %3022 = vmatpush1.bf16.xpose.msra.mxu0 0
      %3023 = vmatprep.subr.bf16.mxu0 0
      %3024 = vmatpush1.bf16.xpose.msra.mxu0 0
      %3025 = vmatprep.subr.bf16.mxu0 0
      %3026 = vmatpush1.bf16.xpose.msra.mxu0 0
      %3027 = vmatprep.subr.bf16.mxu0 0
      %3028 = vmatpush1.bf16.xpose.msra.mxu0 0
      %3029 = vmatprep.subr.bf16.mxu0 0
      %3030 = vmatpush1.bf16.xpose.msra.mxu0 0
      %3031 = vmatprep.subr.bf16.mxu0 0
      %3032 = vmatpush1.bf16.xpose.msra.mxu0 0
      %3033 = vmatprep.mubr.bf16.mxu0 0
      %3034 = vmatmul.mubr.bf16.gmra.mrb[0].mxu0 %v2996
      %v3035 = vpop.f32.mrb[0].mxu0
      %v3036 = vadd.f32 %v1207, %v3035
      %v3037 = vpop.f32.mrb[0].mxu0
      %v3038 = vpop.f32.mrb[0].mxu0
      %v3039 = vpop.f32.mrb[0].mxu0
      %3040 = vdwg.mxu0
      %3041 = vrot.lane.b32.xlu0 %v1031, 112
      %v3042 = vpop.permute.xlu0 %3041
      %3043 = vrot.lane.b32.xlu0 %v1031, 48
      %v3044 = vpop.permute.xlu0 %3043
      %v3046 = vsel %vm1286, %v3042, 0
      %v3049 = vsel %vm1286, %v3044, 0
      %3051 = vmatprep.subr.bf16.mxu0 0
      %3052 = vmatpush1.bf16.xpose.msra.mxu0 %v3049
      %3053 = vmatprep.subr.bf16.mxu0 0
      %3054 = vmatpush1.bf16.xpose.msra.mxu0 0
      %3055 = vmatprep.subr.bf16.mxu0 0
      %3056 = vmatpush1.bf16.xpose.msra.mxu0 0
      %3057 = vmatprep.subr.bf16.mxu0 0
      %3058 = vmatpush1.bf16.xpose.msra.mxu0 0
      %3059 = vmatprep.subr.bf16.mxu0 0
      %3060 = vmatpush1.bf16.xpose.msra.mxu0 0
      %3061 = vmatprep.subr.bf16.mxu0 0
      %3062 = vmatpush1.bf16.xpose.msra.mxu0 0
      %3063 = vmatprep.subr.bf16.mxu0 0
      %3064 = vmatpush1.bf16.xpose.msra.mxu0 0
      %3065 = vmatprep.subr.bf16.mxu0 0
      %3066 = vmatpush1.bf16.xpose.msra.mxu0 0
      %3067 = vmatprep.subr.bf16.mxu0 0
      %3068 = vmatpush1.bf16.xpose.msra.mxu0 0
      %3069 = vmatprep.subr.bf16.mxu0 0
      %3070 = vmatpush1.bf16.xpose.msra.mxu0 0
      %3071 = vmatprep.subr.bf16.mxu0 0
      %3072 = vmatpush1.bf16.xpose.msra.mxu0 0
      %3073 = vmatprep.subr.bf16.mxu0 0
      %3074 = vmatpush1.bf16.xpose.msra.mxu0 0
      %3075 = vmatprep.subr.bf16.mxu0 0
      %3076 = vmatpush1.bf16.xpose.msra.mxu0 0
      %3077 = vmatprep.subr.bf16.mxu0 0
      %3078 = vmatpush1.bf16.xpose.msra.mxu0 0
      %3079 = vmatprep.subr.bf16.mxu0 0
      %3080 = vmatpush1.bf16.xpose.msra.mxu0 0
      %3081 = vmatprep.subr.bf16.mxu0 0
      %3082 = vmatpush1.bf16.xpose.msra.mxu0 0
      %3083 = vmatprep.mubr.bf16.mxu0 0
      %3084 = vmatmul.mubr.bf16.gmra.mrb[0].mxu0 %v3046
      %v3085 = vpop.f32.mrb[0].mxu0
      %v3086 = vadd.f32 %v1211, %v3085
      %v3087 = vpop.f32.mrb[0].mxu0
      %v3088 = vpop.f32.mrb[0].mxu0
      %v3089 = vpop.f32.mrb[0].mxu0
      %3090 = vdwg.mxu0
      %3091 = vrot.lane.b32.xlu0 %v1032, 112
      %v3092 = vpop.permute.xlu0 %3091
      %3093 = vrot.lane.b32.xlu0 %v1032, 48
      %v3094 = vpop.permute.xlu0 %3093
      %v3096 = vsel %vm1286, %v3092, 0
      %v3099 = vsel %vm1286, %v3094, 0
      %3101 = vmatprep.subr.bf16.mxu0 0
      %3102 = vmatpush1.bf16.xpose.msra.mxu0 %v3099
      %3103 = vmatprep.subr.bf16.mxu0 0
      %3104 = vmatpush1.bf16.xpose.msra.mxu0 0
      %3105 = vmatprep.subr.bf16.mxu0 0
      %3106 = vmatpush1.bf16.xpose.msra.mxu0 0
      %3107 = vmatprep.subr.bf16.mxu0 0
      %3108 = vmatpush1.bf16.xpose.msra.mxu0 0
      %3109 = vmatprep.subr.bf16.mxu0 0
      %3110 = vmatpush1.bf16.xpose.msra.mxu0 0
      %3111 = vmatprep.subr.bf16.mxu0 0
      %3112 = vmatpush1.bf16.xpose.msra.mxu0 0
      %3113 = vmatprep.subr.bf16.mxu0 0
      %3114 = vmatpush1.bf16.xpose.msra.mxu0 0
      %3115 = vmatprep.subr.bf16.mxu0 0
      %3116 = vmatpush1.bf16.xpose.msra.mxu0 0
      %3117 = vmatprep.subr.bf16.mxu0 0
      %3118 = vmatpush1.bf16.xpose.msra.mxu0 0
      %3119 = vmatprep.subr.bf16.mxu0 0
      %3120 = vmatpush1.bf16.xpose.msra.mxu0 0
      %3121 = vmatprep.subr.bf16.mxu0 0
      %3122 = vmatpush1.bf16.xpose.msra.mxu0 0
      %3123 = vmatprep.subr.bf16.mxu0 0
      %3124 = vmatpush1.bf16.xpose.msra.mxu0 0
      %3125 = vmatprep.subr.bf16.mxu0 0
      %3126 = vmatpush1.bf16.xpose.msra.mxu0 0
      %3127 = vmatprep.subr.bf16.mxu0 0
      %3128 = vmatpush1.bf16.xpose.msra.mxu0 0
      %3129 = vmatprep.subr.bf16.mxu0 0
      %3130 = vmatpush1.bf16.xpose.msra.mxu0 0
      %3131 = vmatprep.subr.bf16.mxu0 0
      %3132 = vmatpush1.bf16.xpose.msra.mxu0 0
      %3133 = vmatprep.mubr.bf16.mxu0 0
      %3134 = vmatmul.mubr.bf16.gmra.mrb[0].mxu0 %v3096
      %v3135 = vpop.f32.mrb[0].mxu0
      %v3136 = vadd.f32 %v1215, %v3135
      %v3137 = vpop.f32.mrb[0].mxu0
      %v3138 = vpop.f32.mrb[0].mxu0
      %v3139 = vpop.f32.mrb[0].mxu0
      %3140 = vdwg.mxu0
      %3141 = vrot.lane.b32.xlu0 %v1033, 112
      %v3142 = vpop.permute.xlu0 %3141
      %3143 = vrot.lane.b32.xlu0 %v1033, 48
      %v3144 = vpop.permute.xlu0 %3143
      %v3146 = vsel %vm1286, %v3142, 0
      %v3149 = vsel %vm1286, %v3144, 0
      %3151 = vmatprep.subr.bf16.mxu0 0
      %3152 = vmatpush1.bf16.xpose.msra.mxu0 %v3149
      %3153 = vmatprep.subr.bf16.mxu0 0
      %3154 = vmatpush1.bf16.xpose.msra.mxu0 0
      %3155 = vmatprep.subr.bf16.mxu0 0
      %3156 = vmatpush1.bf16.xpose.msra.mxu0 0
      %3157 = vmatprep.subr.bf16.mxu0 0
      %3158 = vmatpush1.bf16.xpose.msra.mxu0 0
      %3159 = vmatprep.subr.bf16.mxu0 0
      %3160 = vmatpush1.bf16.xpose.msra.mxu0 0
      %3161 = vmatprep.subr.bf16.mxu0 0
      %3162 = vmatpush1.bf16.xpose.msra.mxu0 0
      %3163 = vmatprep.subr.bf16.mxu0 0
      %3164 = vmatpush1.bf16.xpose.msra.mxu0 0
      %3165 = vmatprep.subr.bf16.mxu0 0
      %3166 = vmatpush1.bf16.xpose.msra.mxu0 0
      %3167 = vmatprep.subr.bf16.mxu0 0
      %3168 = vmatpush1.bf16.xpose.msra.mxu0 0
      %3169 = vmatprep.subr.bf16.mxu0 0
      %3170 = vmatpush1.bf16.xpose.msra.mxu0 0
      %3171 = vmatprep.subr.bf16.mxu0 0
      %3172 = vmatpush1.bf16.xpose.msra.mxu0 0
      %3173 = vmatprep.subr.bf16.mxu0 0
      %3174 = vmatpush1.bf16.xpose.msra.mxu0 0
      %3175 = vmatprep.subr.bf16.mxu0 0
      %3176 = vmatpush1.bf16.xpose.msra.mxu0 0
      %3177 = vmatprep.subr.bf16.mxu0 0
      %3178 = vmatpush1.bf16.xpose.msra.mxu0 0
      %3179 = vmatprep.subr.bf16.mxu0 0
      %3180 = vmatpush1.bf16.xpose.msra.mxu0 0
      %3181 = vmatprep.subr.bf16.mxu0 0
      %3182 = vmatpush1.bf16.xpose.msra.mxu0 0
      %3183 = vmatprep.mubr.bf16.mxu0 0
      %3184 = vmatmul.mubr.bf16.gmra.mrb[0].mxu0 %v3146
      %v3185 = vpop.f32.mrb[0].mxu0
      %v3186 = vadd.f32 %v1219, %v3185
      %v3187 = vpop.f32.mrb[0].mxu0
      %v3188 = vpop.f32.mrb[0].mxu0
      %v3189 = vpop.f32.mrb[0].mxu0
      %3190 = vdwg.mxu0
      %3191 = vrot.lane.b32.xlu0 %v1034, 112
      %v3192 = vpop.permute.xlu0 %3191
      %3193 = vrot.lane.b32.xlu0 %v1034, 48
      %v3194 = vpop.permute.xlu0 %3193
      %v3196 = vsel %vm1286, %v3192, 0
      %v3199 = vsel %vm1286, %v3194, 0
      %3201 = vmatprep.subr.bf16.mxu0 0
      %3202 = vmatpush1.bf16.xpose.msra.mxu0 %v3199
      %3203 = vmatprep.subr.bf16.mxu0 0
      %3204 = vmatpush1.bf16.xpose.msra.mxu0 0
      %3205 = vmatprep.subr.bf16.mxu0 0
      %3206 = vmatpush1.bf16.xpose.msra.mxu0 0
      %3207 = vmatprep.subr.bf16.mxu0 0
      %3208 = vmatpush1.bf16.xpose.msra.mxu0 0
      %3209 = vmatprep.subr.bf16.mxu0 0
      %3210 = vmatpush1.bf16.xpose.msra.mxu0 0
      %3211 = vmatprep.subr.bf16.mxu0 0
      %3212 = vmatpush1.bf16.xpose.msra.mxu0 0
      %3213 = vmatprep.subr.bf16.mxu0 0
      %3214 = vmatpush1.bf16.xpose.msra.mxu0 0
      %3215 = vmatprep.subr.bf16.mxu0 0
      %3216 = vmatpush1.bf16.xpose.msra.mxu0 0
      %3217 = vmatprep.subr.bf16.mxu0 0
      %3218 = vmatpush1.bf16.xpose.msra.mxu0 0
      %3219 = vmatprep.subr.bf16.mxu0 0
      %3220 = vmatpush1.bf16.xpose.msra.mxu0 0
      %3221 = vmatprep.subr.bf16.mxu0 0
      %3222 = vmatpush1.bf16.xpose.msra.mxu0 0
      %3223 = vmatprep.subr.bf16.mxu0 0
      %3224 = vmatpush1.bf16.xpose.msra.mxu0 0
      %3225 = vmatprep.subr.bf16.mxu0 0
      %3226 = vmatpush1.bf16.xpose.msra.mxu0 0
      %3227 = vmatprep.subr.bf16.mxu0 0
      %3228 = vmatpush1.bf16.xpose.msra.mxu0 0
      %3229 = vmatprep.subr.bf16.mxu0 0
      %3230 = vmatpush1.bf16.xpose.msra.mxu0 0
      %3231 = vmatprep.subr.bf16.mxu0 0
      %3232 = vmatpush1.bf16.xpose.msra.mxu0 0
      %3233 = vmatprep.mubr.bf16.mxu0 0
      %3234 = vmatmul.mubr.bf16.gmra.mrb[0].mxu0 %v3196
      %v3235 = vpop.f32.mrb[0].mxu0
      %v3236 = vadd.f32 %v1223, %v3235
      %v3237 = vpop.f32.mrb[0].mxu0
      %v3238 = vpop.f32.mrb[0].mxu0
      %v3239 = vpop.f32.mrb[0].mxu0
      %3240 = vdwg.mxu0
      %3241 = vrot.lane.b32.xlu0 %v1035, 112
      %v3242 = vpop.permute.xlu0 %3241
      %3243 = vrot.lane.b32.xlu0 %v1035, 48
      %v3244 = vpop.permute.xlu0 %3243
      %v3246 = vsel %vm1286, %v3242, 0
      %v3249 = vsel %vm1286, %v3244, 0
      %3251 = vmatprep.subr.bf16.mxu0 0
      %3252 = vmatpush1.bf16.xpose.msra.mxu0 %v3249
      %3253 = vmatprep.subr.bf16.mxu0 0
      %3254 = vmatpush1.bf16.xpose.msra.mxu0 0
      %3255 = vmatprep.subr.bf16.mxu0 0
      %3256 = vmatpush1.bf16.xpose.msra.mxu0 0
      %3257 = vmatprep.subr.bf16.mxu0 0
      %3258 = vmatpush1.bf16.xpose.msra.mxu0 0
      %3259 = vmatprep.subr.bf16.mxu0 0
      %3260 = vmatpush1.bf16.xpose.msra.mxu0 0
      %3261 = vmatprep.subr.bf16.mxu0 0
      %3262 = vmatpush1.bf16.xpose.msra.mxu0 0
      %3263 = vmatprep.subr.bf16.mxu0 0
      %3264 = vmatpush1.bf16.xpose.msra.mxu0 0
      %3265 = vmatprep.subr.bf16.mxu0 0
      %3266 = vmatpush1.bf16.xpose.msra.mxu0 0
      %3267 = vmatprep.subr.bf16.mxu0 0
      %3268 = vmatpush1.bf16.xpose.msra.mxu0 0
      %3269 = vmatprep.subr.bf16.mxu0 0
      %3270 = vmatpush1.bf16.xpose.msra.mxu0 0
      %3271 = vmatprep.subr.bf16.mxu0 0
      %3272 = vmatpush1.bf16.xpose.msra.mxu0 0
      %3273 = vmatprep.subr.bf16.mxu0 0
      %3274 = vmatpush1.bf16.xpose.msra.mxu0 0
      %3275 = vmatprep.subr.bf16.mxu0 0
      %3276 = vmatpush1.bf16.xpose.msra.mxu0 0
      %3277 = vmatprep.subr.bf16.mxu0 0
      %3278 = vmatpush1.bf16.xpose.msra.mxu0 0
      %3279 = vmatprep.subr.bf16.mxu0 0
      %3280 = vmatpush1.bf16.xpose.msra.mxu0 0
      %3281 = vmatprep.subr.bf16.mxu0 0
      %3282 = vmatpush1.bf16.xpose.msra.mxu0 0
      %3283 = vmatprep.mubr.bf16.mxu0 0
      %3284 = vmatmul.mubr.bf16.gmra.mrb[0].mxu0 %v3246
      %v3285 = vpop.f32.mrb[0].mxu0
      %v3286 = vadd.f32 %v1227, %v3285
      %v3287 = vpop.f32.mrb[0].mxu0
      %v3288 = vpop.f32.mrb[0].mxu0
      %v3289 = vpop.f32.mrb[0].mxu0
      %3290 = vdwg.mxu0
      %3291 = vrot.lane.b32.xlu0 %v1036, 112
      %v3292 = vpop.permute.xlu0 %3291
      %3293 = vrot.lane.b32.xlu0 %v1036, 48
      %v3294 = vpop.permute.xlu0 %3293
      %v3296 = vsel %vm1286, %v3292, 0
      %v3299 = vsel %vm1286, %v3294, 0
      %3301 = vmatprep.subr.bf16.mxu0 0
      %3302 = vmatpush1.bf16.xpose.msra.mxu0 %v3299
      %3303 = vmatprep.subr.bf16.mxu0 0
      %3304 = vmatpush1.bf16.xpose.msra.mxu0 0
      %3305 = vmatprep.subr.bf16.mxu0 0
      %3306 = vmatpush1.bf16.xpose.msra.mxu0 0
      %3307 = vmatprep.subr.bf16.mxu0 0
      %3308 = vmatpush1.bf16.xpose.msra.mxu0 0
      %3309 = vmatprep.subr.bf16.mxu0 0
      %3310 = vmatpush1.bf16.xpose.msra.mxu0 0
      %3311 = vmatprep.subr.bf16.mxu0 0
      %3312 = vmatpush1.bf16.xpose.msra.mxu0 0
      %3313 = vmatprep.subr.bf16.mxu0 0
      %3314 = vmatpush1.bf16.xpose.msra.mxu0 0
      %3315 = vmatprep.subr.bf16.mxu0 0
      %3316 = vmatpush1.bf16.xpose.msra.mxu0 0
      %3317 = vmatprep.subr.bf16.mxu0 0
      %3318 = vmatpush1.bf16.xpose.msra.mxu0 0
      %3319 = vmatprep.subr.bf16.mxu0 0
      %3320 = vmatpush1.bf16.xpose.msra.mxu0 0
      %3321 = vmatprep.subr.bf16.mxu0 0
      %3322 = vmatpush1.bf16.xpose.msra.mxu0 0
      %3323 = vmatprep.subr.bf16.mxu0 0
      %3324 = vmatpush1.bf16.xpose.msra.mxu0 0
      %3325 = vmatprep.subr.bf16.mxu0 0
      %3326 = vmatpush1.bf16.xpose.msra.mxu0 0
      %3327 = vmatprep.subr.bf16.mxu0 0
      %3328 = vmatpush1.bf16.xpose.msra.mxu0 0
      %3329 = vmatprep.subr.bf16.mxu0 0
      %3330 = vmatpush1.bf16.xpose.msra.mxu0 0
      %3331 = vmatprep.subr.bf16.mxu0 0
      %3332 = vmatpush1.bf16.xpose.msra.mxu0 0
      %3333 = vmatprep.mubr.bf16.mxu0 0
      %3334 = vmatmul.mubr.bf16.gmra.mrb[0].mxu0 %v3296
      %v3335 = vpop.f32.mrb[0].mxu0
      %v3336 = vadd.f32 %v1231, %v3335
      %v3337 = vpop.f32.mrb[0].mxu0
      %v3338 = vpop.f32.mrb[0].mxu0
      %v3339 = vpop.f32.mrb[0].mxu0
      %3340 = vdwg.mxu0
      %3341 = vrot.lane.b32.xlu0 %v1037, 112
      %v3342 = vpop.permute.xlu0 %3341
      %3343 = vrot.lane.b32.xlu0 %v1037, 48
      %v3344 = vpop.permute.xlu0 %3343
      %v3346 = vsel %vm1286, %v3342, 0
      %v3349 = vsel %vm1286, %v3344, 0
      %3351 = vmatprep.subr.bf16.mxu0 0
      %3352 = vmatpush1.bf16.xpose.msra.mxu0 %v3349
      %3353 = vmatprep.subr.bf16.mxu0 0
      %3354 = vmatpush1.bf16.xpose.msra.mxu0 0
      %3355 = vmatprep.subr.bf16.mxu0 0
      %3356 = vmatpush1.bf16.xpose.msra.mxu0 0
      %3357 = vmatprep.subr.bf16.mxu0 0
      %3358 = vmatpush1.bf16.xpose.msra.mxu0 0
      %3359 = vmatprep.subr.bf16.mxu0 0
      %3360 = vmatpush1.bf16.xpose.msra.mxu0 0
      %3361 = vmatprep.subr.bf16.mxu0 0
      %3362 = vmatpush1.bf16.xpose.msra.mxu0 0
      %3363 = vmatprep.subr.bf16.mxu0 0
      %3364 = vmatpush1.bf16.xpose.msra.mxu0 0
      %3365 = vmatprep.subr.bf16.mxu0 0
      %3366 = vmatpush1.bf16.xpose.msra.mxu0 0
      %3367 = vmatprep.subr.bf16.mxu0 0
      %3368 = vmatpush1.bf16.xpose.msra.mxu0 0
      %3369 = vmatprep.subr.bf16.mxu0 0
      %3370 = vmatpush1.bf16.xpose.msra.mxu0 0
      %3371 = vmatprep.subr.bf16.mxu0 0
      %3372 = vmatpush1.bf16.xpose.msra.mxu0 0
      %3373 = vmatprep.subr.bf16.mxu0 0
      %3374 = vmatpush1.bf16.xpose.msra.mxu0 0
      %3375 = vmatprep.subr.bf16.mxu0 0
      %3376 = vmatpush1.bf16.xpose.msra.mxu0 0
      %3377 = vmatprep.subr.bf16.mxu0 0
      %3378 = vmatpush1.bf16.xpose.msra.mxu0 0
      %3379 = vmatprep.subr.bf16.mxu0 0
      %3380 = vmatpush1.bf16.xpose.msra.mxu0 0
      %3381 = vmatprep.subr.bf16.mxu0 0
      %3382 = vmatpush1.bf16.xpose.msra.mxu0 0
      %3383 = vmatprep.mubr.bf16.mxu0 0
      %3384 = vmatmul.mubr.bf16.gmra.mrb[0].mxu0 %v3346
      %v3385 = vpop.f32.mrb[0].mxu0
      %v3386 = vadd.f32 %v1235, %v3385
      %v3387 = vpop.f32.mrb[0].mxu0
      %v3388 = vpop.f32.mrb[0].mxu0
      %v3389 = vpop.f32.mrb[0].mxu0
      %3390 = vdwg.mxu0
      %3391 = vrot.lane.b32.xlu0 %v1038, 112
      %v3392 = vpop.permute.xlu0 %3391
      %3393 = vrot.lane.b32.xlu0 %v1038, 48
      %v3394 = vpop.permute.xlu0 %3393
      %v3396 = vsel %vm1286, %v3392, 0
      %v3399 = vsel %vm1286, %v3394, 0
      %3401 = vmatprep.subr.bf16.mxu0 0
      %3402 = vmatpush1.bf16.xpose.msra.mxu0 %v3399
      %3403 = vmatprep.subr.bf16.mxu0 0
      %3404 = vmatpush1.bf16.xpose.msra.mxu0 0
      %3405 = vmatprep.subr.bf16.mxu0 0
      %3406 = vmatpush1.bf16.xpose.msra.mxu0 0
      %3407 = vmatprep.subr.bf16.mxu0 0
      %3408 = vmatpush1.bf16.xpose.msra.mxu0 0
      %3409 = vmatprep.subr.bf16.mxu0 0
      %3410 = vmatpush1.bf16.xpose.msra.mxu0 0
      %3411 = vmatprep.subr.bf16.mxu0 0
      %3412 = vmatpush1.bf16.xpose.msra.mxu0 0
      %3413 = vmatprep.subr.bf16.mxu0 0
      %3414 = vmatpush1.bf16.xpose.msra.mxu0 0
      %3415 = vmatprep.subr.bf16.mxu0 0
      %3416 = vmatpush1.bf16.xpose.msra.mxu0 0
      %3417 = vmatprep.subr.bf16.mxu0 0
      %3418 = vmatpush1.bf16.xpose.msra.mxu0 0
      %3419 = vmatprep.subr.bf16.mxu0 0
      %3420 = vmatpush1.bf16.xpose.msra.mxu0 0
      %3421 = vmatprep.subr.bf16.mxu0 0
      %3422 = vmatpush1.bf16.xpose.msra.mxu0 0
      %3423 = vmatprep.subr.bf16.mxu0 0
      %3424 = vmatpush1.bf16.xpose.msra.mxu0 0
      %3425 = vmatprep.subr.bf16.mxu0 0
      %3426 = vmatpush1.bf16.xpose.msra.mxu0 0
      %3427 = vmatprep.subr.bf16.mxu0 0
      %3428 = vmatpush1.bf16.xpose.msra.mxu0 0
      %3429 = vmatprep.subr.bf16.mxu0 0
      %3430 = vmatpush1.bf16.xpose.msra.mxu0 0
      %3431 = vmatprep.subr.bf16.mxu0 0
      %3432 = vmatpush1.bf16.xpose.msra.mxu0 0
      %3433 = vmatprep.mubr.bf16.mxu0 0
      %3434 = vmatmul.mubr.bf16.gmra.mrb[0].mxu0 %v3396
      %v3435 = vpop.f32.mrb[0].mxu0
      %v3436 = vadd.f32 %v1239, %v3435
      %v3437 = vpop.f32.mrb[0].mxu0
      %v3438 = vpop.f32.mrb[0].mxu0
      %v3439 = vpop.f32.mrb[0].mxu0
      %3440 = vdwg.mxu0
      %3441 = vrot.lane.b32.xlu0 %v1039, 112
      %v3442 = vpop.permute.xlu0 %3441
      %3443 = vrot.lane.b32.xlu0 %v1039, 48
      %v3444 = vpop.permute.xlu0 %3443
      %v3446 = vsel %vm1286, %v3442, 0
      %v3449 = vsel %vm1286, %v3444, 0
      %3451 = vmatprep.subr.bf16.mxu0 0
      %3452 = vmatpush1.bf16.xpose.msra.mxu0 %v3449
      %3453 = vmatprep.subr.bf16.mxu0 0
      %3454 = vmatpush1.bf16.xpose.msra.mxu0 0
      %3455 = vmatprep.subr.bf16.mxu0 0
      %3456 = vmatpush1.bf16.xpose.msra.mxu0 0
      %3457 = vmatprep.subr.bf16.mxu0 0
      %3458 = vmatpush1.bf16.xpose.msra.mxu0 0
      %3459 = vmatprep.subr.bf16.mxu0 0
      %3460 = vmatpush1.bf16.xpose.msra.mxu0 0
      %3461 = vmatprep.subr.bf16.mxu0 0
      %3462 = vmatpush1.bf16.xpose.msra.mxu0 0
      %3463 = vmatprep.subr.bf16.mxu0 0
      %3464 = vmatpush1.bf16.xpose.msra.mxu0 0
      %3465 = vmatprep.subr.bf16.mxu0 0
      %3466 = vmatpush1.bf16.xpose.msra.mxu0 0
      %3467 = vmatprep.subr.bf16.mxu0 0
      %3468 = vmatpush1.bf16.xpose.msra.mxu0 0
      %3469 = vmatprep.subr.bf16.mxu0 0
      %3470 = vmatpush1.bf16.xpose.msra.mxu0 0
      %3471 = vmatprep.subr.bf16.mxu0 0
      %3472 = vmatpush1.bf16.xpose.msra.mxu0 0
      %3473 = vmatprep.subr.bf16.mxu0 0
      %3474 = vmatpush1.bf16.xpose.msra.mxu0 0
      %3475 = vmatprep.subr.bf16.mxu0 0
      %3476 = vmatpush1.bf16.xpose.msra.mxu0 0
      %3477 = vmatprep.subr.bf16.mxu0 0
      %3478 = vmatpush1.bf16.xpose.msra.mxu0 0
      %3479 = vmatprep.subr.bf16.mxu0 0
      %3480 = vmatpush1.bf16.xpose.msra.mxu0 0
      %3481 = vmatprep.subr.bf16.mxu0 0
      %3482 = vmatpush1.bf16.xpose.msra.mxu0 0
      %3483 = vmatprep.mubr.bf16.mxu0 0
      %3484 = vmatmul.mubr.bf16.gmra.mrb[0].mxu0 %v3446
      %v3485 = vpop.f32.mrb[0].mxu0
      %v3486 = vadd.f32 %v1243, %v3485
      %v3487 = vpop.f32.mrb[0].mxu0
      %v3488 = vpop.f32.mrb[0].mxu0
      %v3489 = vpop.f32.mrb[0].mxu0
      %3490 = vdwg.mxu0
      %3491 = vrot.lane.b32.xlu0 %v1040, 112
      %v3492 = vpop.permute.xlu0 %3491
      %3493 = vrot.lane.b32.xlu0 %v1040, 48
      %v3494 = vpop.permute.xlu0 %3493
      %v3496 = vsel %vm1286, %v3492, 0
      %v3499 = vsel %vm1286, %v3494, 0
      %3501 = vmatprep.subr.bf16.mxu0 0
      %3502 = vmatpush1.bf16.xpose.msra.mxu0 %v3499
      %3503 = vmatprep.subr.bf16.mxu0 0
      %3504 = vmatpush1.bf16.xpose.msra.mxu0 0
      %3505 = vmatprep.subr.bf16.mxu0 0
      %3506 = vmatpush1.bf16.xpose.msra.mxu0 0
      %3507 = vmatprep.subr.bf16.mxu0 0
      %3508 = vmatpush1.bf16.xpose.msra.mxu0 0
      %3509 = vmatprep.subr.bf16.mxu0 0
      %3510 = vmatpush1.bf16.xpose.msra.mxu0 0
      %3511 = vmatprep.subr.bf16.mxu0 0
      %3512 = vmatpush1.bf16.xpose.msra.mxu0 0
      %3513 = vmatprep.subr.bf16.mxu0 0
      %3514 = vmatpush1.bf16.xpose.msra.mxu0 0
      %3515 = vmatprep.subr.bf16.mxu0 0
      %3516 = vmatpush1.bf16.xpose.msra.mxu0 0
      %3517 = vmatprep.subr.bf16.mxu0 0
      %3518 = vmatpush1.bf16.xpose.msra.mxu0 0
      %3519 = vmatprep.subr.bf16.mxu0 0
      %3520 = vmatpush1.bf16.xpose.msra.mxu0 0
      %3521 = vmatprep.subr.bf16.mxu0 0
      %3522 = vmatpush1.bf16.xpose.msra.mxu0 0
      %3523 = vmatprep.subr.bf16.mxu0 0
      %3524 = vmatpush1.bf16.xpose.msra.mxu0 0
      %3525 = vmatprep.subr.bf16.mxu0 0
      %3526 = vmatpush1.bf16.xpose.msra.mxu0 0
      %3527 = vmatprep.subr.bf16.mxu0 0
      %3528 = vmatpush1.bf16.xpose.msra.mxu0 0
      %3529 = vmatprep.subr.bf16.mxu0 0
      %3530 = vmatpush1.bf16.xpose.msra.mxu0 0
      %3531 = vmatprep.subr.bf16.mxu0 0
      %3532 = vmatpush1.bf16.xpose.msra.mxu0 0
      %3533 = vmatprep.mubr.bf16.mxu0 0
      %3534 = vmatmul.mubr.bf16.gmra.mrb[0].mxu0 %v3496
      %v3535 = vpop.f32.mrb[0].mxu0
      %v3536 = vadd.f32 %v1247, %v3535
      %v3537 = vpop.f32.mrb[0].mxu0
      %v3538 = vpop.f32.mrb[0].mxu0
      %v3539 = vpop.f32.mrb[0].mxu0
      %3540 = vdwg.mxu0
      %3541 = vrot.lane.b32.xlu0 %v1041, 112
      %v3542 = vpop.permute.xlu0 %3541
      %3543 = vrot.lane.b32.xlu0 %v1041, 48
      %v3544 = vpop.permute.xlu0 %3543
      %v3546 = vsel %vm1286, %v3542, 0
      %v3549 = vsel %vm1286, %v3544, 0
      %3551 = vmatprep.subr.bf16.mxu0 0
      %3552 = vmatpush1.bf16.xpose.msra.mxu0 %v3549
      %3553 = vmatprep.subr.bf16.mxu0 0
      %3554 = vmatpush1.bf16.xpose.msra.mxu0 0
      %3555 = vmatprep.subr.bf16.mxu0 0
      %3556 = vmatpush1.bf16.xpose.msra.mxu0 0
      %3557 = vmatprep.subr.bf16.mxu0 0
      %3558 = vmatpush1.bf16.xpose.msra.mxu0 0
      %3559 = vmatprep.subr.bf16.mxu0 0
      %3560 = vmatpush1.bf16.xpose.msra.mxu0 0
      %3561 = vmatprep.subr.bf16.mxu0 0
      %3562 = vmatpush1.bf16.xpose.msra.mxu0 0
      %3563 = vmatprep.subr.bf16.mxu0 0
      %3564 = vmatpush1.bf16.xpose.msra.mxu0 0
      %3565 = vmatprep.subr.bf16.mxu0 0
      %3566 = vmatpush1.bf16.xpose.msra.mxu0 0
      %3567 = vmatprep.subr.bf16.mxu0 0
      %3568 = vmatpush1.bf16.xpose.msra.mxu0 0
      %3569 = vmatprep.subr.bf16.mxu0 0
      %3570 = vmatpush1.bf16.xpose.msra.mxu0 0
      %3571 = vmatprep.subr.bf16.mxu0 0
      %3572 = vmatpush1.bf16.xpose.msra.mxu0 0
      %3573 = vmatprep.subr.bf16.mxu0 0
      %3574 = vmatpush1.bf16.xpose.msra.mxu0 0
      %3575 = vmatprep.subr.bf16.mxu0 0
      %3576 = vmatpush1.bf16.xpose.msra.mxu0 0
      %3577 = vmatprep.subr.bf16.mxu0 0
      %3578 = vmatpush1.bf16.xpose.msra.mxu0 0
      %3579 = vmatprep.subr.bf16.mxu0 0
      %3580 = vmatpush1.bf16.xpose.msra.mxu0 0
      %3581 = vmatprep.subr.bf16.mxu0 0
      %3582 = vmatpush1.bf16.xpose.msra.mxu0 0
      %3583 = vmatprep.mubr.bf16.mxu0 0
      %3584 = vmatmul.mubr.bf16.gmra.mrb[0].mxu0 %v3546
      %v3585 = vpop.f32.mrb[0].mxu0
      %v3586 = vadd.f32 %v1251, %v3585
      %v3587 = vpop.f32.mrb[0].mxu0
      %v3588 = vpop.f32.mrb[0].mxu0
      %v3589 = vpop.f32.mrb[0].mxu0
      %3590 = vdwg.mxu0
      %3591 = vrot.lane.b32.xlu0 %v1042, 112
      %v3592 = vpop.permute.xlu0 %3591
      %3593 = vrot.lane.b32.xlu0 %v1042, 48
      %v3594 = vpop.permute.xlu0 %3593
      %v3596 = vsel %vm1286, %v3592, 0
      %v3599 = vsel %vm1286, %v3594, 0
      %3601 = vmatprep.subr.bf16.mxu0 0
      %3602 = vmatpush1.bf16.xpose.msra.mxu0 %v3599
      %3603 = vmatprep.subr.bf16.mxu0 0
      %3604 = vmatpush1.bf16.xpose.msra.mxu0 0
      %3605 = vmatprep.subr.bf16.mxu0 0
      %3606 = vmatpush1.bf16.xpose.msra.mxu0 0
      %3607 = vmatprep.subr.bf16.mxu0 0
      %3608 = vmatpush1.bf16.xpose.msra.mxu0 0
      %3609 = vmatprep.subr.bf16.mxu0 0
      %3610 = vmatpush1.bf16.xpose.msra.mxu0 0
      %3611 = vmatprep.subr.bf16.mxu0 0
      %3612 = vmatpush1.bf16.xpose.msra.mxu0 0
      %3613 = vmatprep.subr.bf16.mxu0 0
      %3614 = vmatpush1.bf16.xpose.msra.mxu0 0
      %3615 = vmatprep.subr.bf16.mxu0 0
      %3616 = vmatpush1.bf16.xpose.msra.mxu0 0
      %3617 = vmatprep.subr.bf16.mxu0 0
      %3618 = vmatpush1.bf16.xpose.msra.mxu0 0
      %3619 = vmatprep.subr.bf16.mxu0 0
      %3620 = vmatpush1.bf16.xpose.msra.mxu0 0
      %3621 = vmatprep.subr.bf16.mxu0 0
      %3622 = vmatpush1.bf16.xpose.msra.mxu0 0
      %3623 = vmatprep.subr.bf16.mxu0 0
      %3624 = vmatpush1.bf16.xpose.msra.mxu0 0
      %3625 = vmatprep.subr.bf16.mxu0 0
      %3626 = vmatpush1.bf16.xpose.msra.mxu0 0
      %3627 = vmatprep.subr.bf16.mxu0 0
      %3628 = vmatpush1.bf16.xpose.msra.mxu0 0
      %3629 = vmatprep.subr.bf16.mxu0 0
      %3630 = vmatpush1.bf16.xpose.msra.mxu0 0
      %3631 = vmatprep.subr.bf16.mxu0 0
      %3632 = vmatpush1.bf16.xpose.msra.mxu0 0
      %3633 = vmatprep.mubr.bf16.mxu0 0
      %3634 = vmatmul.mubr.bf16.gmra.mrb[0].mxu0 %v3596
      %v3635 = vpop.f32.mrb[0].mxu0
      %v3636 = vadd.f32 %v1255, %v3635
      %v3637 = vpop.f32.mrb[0].mxu0
      %v3638 = vpop.f32.mrb[0].mxu0
      %v3639 = vpop.f32.mrb[0].mxu0
      %3640 = vdwg.mxu0
      %3641 = vrot.lane.b32.xlu0 %v1043, 112
      %v3642 = vpop.permute.xlu0 %3641
      %3643 = vrot.lane.b32.xlu0 %v1043, 48
      %v3644 = vpop.permute.xlu0 %3643
      %v3646 = vsel %vm1286, %v3642, 0
      %v3649 = vsel %vm1286, %v3644, 0
      %3651 = vmatprep.subr.bf16.mxu0 0
      %3652 = vmatpush1.bf16.xpose.msra.mxu0 %v3649
      %3653 = vmatprep.subr.bf16.mxu0 0
      %3654 = vmatpush1.bf16.xpose.msra.mxu0 0
      %3655 = vmatprep.subr.bf16.mxu0 0
      %3656 = vmatpush1.bf16.xpose.msra.mxu0 0
      %3657 = vmatprep.subr.bf16.mxu0 0
      %3658 = vmatpush1.bf16.xpose.msra.mxu0 0
      %3659 = vmatprep.subr.bf16.mxu0 0
      %3660 = vmatpush1.bf16.xpose.msra.mxu0 0
      %3661 = vmatprep.subr.bf16.mxu0 0
      %3662 = vmatpush1.bf16.xpose.msra.mxu0 0
      %3663 = vmatprep.subr.bf16.mxu0 0
      %3664 = vmatpush1.bf16.xpose.msra.mxu0 0
      %3665 = vmatprep.subr.bf16.mxu0 0
      %3666 = vmatpush1.bf16.xpose.msra.mxu0 0
      %3667 = vmatprep.subr.bf16.mxu0 0
      %3668 = vmatpush1.bf16.xpose.msra.mxu0 0
      %3669 = vmatprep.subr.bf16.mxu0 0
      %3670 = vmatpush1.bf16.xpose.msra.mxu0 0
      %3671 = vmatprep.subr.bf16.mxu0 0
      %3672 = vmatpush1.bf16.xpose.msra.mxu0 0
      %3673 = vmatprep.subr.bf16.mxu0 0
      %3674 = vmatpush1.bf16.xpose.msra.mxu0 0
      %3675 = vmatprep.subr.bf16.mxu0 0
      %3676 = vmatpush1.bf16.xpose.msra.mxu0 0
      %3677 = vmatprep.subr.bf16.mxu0 0
      %3678 = vmatpush1.bf16.xpose.msra.mxu0 0
      %3679 = vmatprep.subr.bf16.mxu0 0
      %3680 = vmatpush1.bf16.xpose.msra.mxu0 0
      %3681 = vmatprep.subr.bf16.mxu0 0
      %3682 = vmatpush1.bf16.xpose.msra.mxu0 0
      %3683 = vmatprep.mubr.bf16.mxu0 0
      %3684 = vmatmul.mubr.bf16.gmra.mrb[0].mxu0 %v3646
      %v3685 = vpop.f32.mrb[0].mxu0
      %v3686 = vadd.f32 %v1259, %v3685
      %v3687 = vpop.f32.mrb[0].mxu0
      %v3688 = vpop.f32.mrb[0].mxu0
      %v3689 = vpop.f32.mrb[0].mxu0
      %3690 = vdwg.mxu0
      %3691 = vrot.lane.b32.xlu0 %v1044, 112
      %v3692 = vpop.permute.xlu0 %3691
      %3693 = vrot.lane.b32.xlu0 %v1044, 48
      %v3694 = vpop.permute.xlu0 %3693
      %v3696 = vsel %vm1286, %v3692, 0
      %v3699 = vsel %vm1286, %v3694, 0
      %3701 = vmatprep.subr.bf16.mxu0 0
      %3702 = vmatpush1.bf16.xpose.msra.mxu0 %v3699
      %3703 = vmatprep.subr.bf16.mxu0 0
      %3704 = vmatpush1.bf16.xpose.msra.mxu0 0
      %3705 = vmatprep.subr.bf16.mxu0 0
      %3706 = vmatpush1.bf16.xpose.msra.mxu0 0
      %3707 = vmatprep.subr.bf16.mxu0 0
      %3708 = vmatpush1.bf16.xpose.msra.mxu0 0
      %3709 = vmatprep.subr.bf16.mxu0 0
      %3710 = vmatpush1.bf16.xpose.msra.mxu0 0
      %3711 = vmatprep.subr.bf16.mxu0 0
      %3712 = vmatpush1.bf16.xpose.msra.mxu0 0
      %3713 = vmatprep.subr.bf16.mxu0 0
      %3714 = vmatpush1.bf16.xpose.msra.mxu0 0
      %3715 = vmatprep.subr.bf16.mxu0 0
      %3716 = vmatpush1.bf16.xpose.msra.mxu0 0
      %3717 = vmatprep.subr.bf16.mxu0 0
      %3718 = vmatpush1.bf16.xpose.msra.mxu0 0
      %3719 = vmatprep.subr.bf16.mxu0 0
      %3720 = vmatpush1.bf16.xpose.msra.mxu0 0
      %3721 = vmatprep.subr.bf16.mxu0 0
      %3722 = vmatpush1.bf16.xpose.msra.mxu0 0
      %3723 = vmatprep.subr.bf16.mxu0 0
      %3724 = vmatpush1.bf16.xpose.msra.mxu0 0
      %3725 = vmatprep.subr.bf16.mxu0 0
      %3726 = vmatpush1.bf16.xpose.msra.mxu0 0
      %3727 = vmatprep.subr.bf16.mxu0 0
      %3728 = vmatpush1.bf16.xpose.msra.mxu0 0
      %3729 = vmatprep.subr.bf16.mxu0 0
      %3730 = vmatpush1.bf16.xpose.msra.mxu0 0
      %3731 = vmatprep.subr.bf16.mxu0 0
      %3732 = vmatpush1.bf16.xpose.msra.mxu0 0
      %3733 = vmatprep.mubr.bf16.mxu0 0
      %3734 = vmatmul.mubr.bf16.gmra.mrb[0].mxu0 %v3696
      %v3735 = vpop.f32.mrb[0].mxu0
      %v3736 = vadd.f32 %v1263, %v3735
      %v3737 = vpop.f32.mrb[0].mxu0
      %v3738 = vpop.f32.mrb[0].mxu0
      %v3739 = vpop.f32.mrb[0].mxu0
      %3740 = vdwg.mxu0
      %3741 = vrot.lane.b32.xlu0 %v1045, 112
      %v3742 = vpop.permute.xlu0 %3741
      %3743 = vrot.lane.b32.xlu0 %v1045, 48
      %v3744 = vpop.permute.xlu0 %3743
      %v3746 = vsel %vm1286, %v3742, 0
      %v3749 = vsel %vm1286, %v3744, 0
      %3751 = vmatprep.subr.bf16.mxu0 0
      %3752 = vmatpush1.bf16.xpose.msra.mxu0 %v3749
      %3753 = vmatprep.subr.bf16.mxu0 0
      %3754 = vmatpush1.bf16.xpose.msra.mxu0 0
      %3755 = vmatprep.subr.bf16.mxu0 0
      %3756 = vmatpush1.bf16.xpose.msra.mxu0 0
      %3757 = vmatprep.subr.bf16.mxu0 0
      %3758 = vmatpush1.bf16.xpose.msra.mxu0 0
      %3759 = vmatprep.subr.bf16.mxu0 0
      %3760 = vmatpush1.bf16.xpose.msra.mxu0 0
      %3761 = vmatprep.subr.bf16.mxu0 0
      %3762 = vmatpush1.bf16.xpose.msra.mxu0 0
      %3763 = vmatprep.subr.bf16.mxu0 0
      %3764 = vmatpush1.bf16.xpose.msra.mxu0 0
      %3765 = vmatprep.subr.bf16.mxu0 0
      %3766 = vmatpush1.bf16.xpose.msra.mxu0 0
      %3767 = vmatprep.subr.bf16.mxu0 0
      %3768 = vmatpush1.bf16.xpose.msra.mxu0 0
      %3769 = vmatprep.subr.bf16.mxu0 0
      %3770 = vmatpush1.bf16.xpose.msra.mxu0 0
      %3771 = vmatprep.subr.bf16.mxu0 0
      %3772 = vmatpush1.bf16.xpose.msra.mxu0 0
      %3773 = vmatprep.subr.bf16.mxu0 0
      %3774 = vmatpush1.bf16.xpose.msra.mxu0 0
      %3775 = vmatprep.subr.bf16.mxu0 0
      %3776 = vmatpush1.bf16.xpose.msra.mxu0 0
      %3777 = vmatprep.subr.bf16.mxu0 0
      %3778 = vmatpush1.bf16.xpose.msra.mxu0 0
      %3779 = vmatprep.subr.bf16.mxu0 0
      %3780 = vmatpush1.bf16.xpose.msra.mxu0 0
      %3781 = vmatprep.subr.bf16.mxu0 0
      %3782 = vmatpush1.bf16.xpose.msra.mxu0 0
      %3783 = vmatprep.mubr.bf16.mxu0 0
      %3784 = vmatmul.mubr.bf16.gmra.mrb[0].mxu0 %v3746
      %v3785 = vpop.f32.mrb[0].mxu0
      %v3786 = vadd.f32 %v1267, %v3785
      %v3787 = vpop.f32.mrb[0].mxu0
      %v3788 = vpop.f32.mrb[0].mxu0
      %v3789 = vpop.f32.mrb[0].mxu0
      %3790 = vdwg.mxu0
      %v3791 = vsel %vm2053, %v3036, -inf
      %3792 = vmax.xlane.f32.xlu0 %v3791
      %v3793 = vpop.xlane.xlu0 %3792
      %v3794 = vsel %vm2053, %v3086, -inf
      %3795 = vmax.xlane.f32.xlu0 %v3794
      %v3796 = vpop.xlane.xlu0 %3795
      %v3797 = vsel %vm2053, %v3136, -inf
      %3798 = vmax.xlane.f32.xlu0 %v3797
      %v3799 = vpop.xlane.xlu0 %3798
      %v3800 = vsel %vm2053, %v3186, -inf
      %3801 = vmax.xlane.f32.xlu0 %v3800
      %v3802 = vpop.xlane.xlu0 %3801
      %v3803 = vsel %vm2053, %v3236, -inf
      %3804 = vmax.xlane.f32.xlu0 %v3803
      %v3805 = vpop.xlane.xlu0 %3804
      %v3806 = vsel %vm2053, %v3286, -inf
      %3807 = vmax.xlane.f32.xlu0 %v3806
      %v3808 = vpop.xlane.xlu0 %3807
      %v3809 = vsel %vm2053, %v3336, -inf
      %3810 = vmax.xlane.f32.xlu0 %v3809
      %v3811 = vpop.xlane.xlu0 %3810
      %v3812 = vsel %vm2053, %v3386, -inf
      %3813 = vmax.xlane.f32.xlu0 %v3812
      %v3814 = vpop.xlane.xlu0 %3813
      %v3815 = vsel %vm2053, %v3436, -inf
      %3816 = vmax.xlane.f32.xlu0 %v3815
      %v3817 = vpop.xlane.xlu0 %3816
      %v3818 = vsel %vm2053, %v3486, -inf
      %3819 = vmax.xlane.f32.xlu0 %v3818
      %v3820 = vpop.xlane.xlu0 %3819
      %v3821 = vsel %vm2053, %v3536, -inf
      %3822 = vmax.xlane.f32.xlu0 %v3821
      %v3823 = vpop.xlane.xlu0 %3822
      %v3824 = vsel %vm2053, %v3586, -inf
      %3825 = vmax.xlane.f32.xlu0 %v3824
      %v3826 = vpop.xlane.xlu0 %3825
      %v3827 = vsel %vm2053, %v3636, -inf
      %3828 = vmax.xlane.f32.xlu0 %v3827
      %v3829 = vpop.xlane.xlu0 %3828
      %v3830 = vsel %vm2053, %v3686, -inf
      %3831 = vmax.xlane.f32.xlu0 %v3830
      %v3832 = vpop.xlane.xlu0 %3831
      %v3833 = vsel %vm2053, %v3736, -inf
      %3834 = vmax.xlane.f32.xlu0 %v3833
      %v3835 = vpop.xlane.xlu0 %3834
      %v3836 = vsel %vm2053, %v3786, -inf
      %3837 = vmax.xlane.f32.xlu0 %v3836
      %v3838 = vpop.xlane.xlu0 %3837
      %v3839 = vsub.f32 %v3036, %v3793
      %v3840 = vsub.f32 %v3086, %v3796
      %v3841 = vsub.f32 %v3136, %v3799
      %v3842 = vsub.f32 %v3186, %v3802
      %v3843 = vsub.f32 %v3236, %v3805
      %v3844 = vsub.f32 %v3286, %v3808
      %v3845 = vsub.f32 %v3336, %v3811
      %v3846 = vsub.f32 %v3386, %v3814
      %v3847 = vsub.f32 %v3436, %v3817
      %v3848 = vsub.f32 %v3486, %v3820
      %v3849 = vsub.f32 %v3536, %v3823
      %v3850 = vsub.f32 %v3586, %v3826
      %v3851 = vsub.f32 %v3636, %v3829
      %v3852 = vsub.f32 %v3686, %v3832
      %v3853 = vsub.f32 %v3736, %v3835
      %v3854 = vsub.f32 %v3786, %v3838
      %v3855 = vmul.f32 %v3839, 1.442695
      %v3856 = vpow.pop %v3855
      %v3857 = vmul.f32 %v3840, 1.442695
      %v3858 = vpow.pop %v3857
      %v3859 = vmul.f32 %v3841, 1.442695
      %v3860 = vpow.pop %v3859
      %v3861 = vmul.f32 %v3842, 1.442695
      %v3862 = vpow.pop %v3861
      %v3863 = vmul.f32 %v3843, 1.442695
      %v3864 = vpow.pop %v3863
      %v3865 = vmul.f32 %v3844, 1.442695
      %v3866 = vpow.pop %v3865
      %v3867 = vmul.f32 %v3845, 1.442695
      %v3868 = vpow.pop %v3867
      %v3869 = vmul.f32 %v3846, 1.442695
      %v3870 = vpow.pop %v3869
      %v3871 = vmul.f32 %v3847, 1.442695
      %v3872 = vpow.pop %v3871
      %v3873 = vmul.f32 %v3848, 1.442695
      %v3874 = vpow.pop %v3873
      %v3875 = vmul.f32 %v3849, 1.442695
      %v3876 = vpow.pop %v3875
      %v3877 = vmul.f32 %v3850, 1.442695
      %v3878 = vpow.pop %v3877
      %v3879 = vmul.f32 %v3851, 1.442695
      %v3880 = vpow.pop %v3879
      %v3881 = vmul.f32 %v3852, 1.442695
      %v3882 = vpow.pop %v3881
      %v3883 = vmul.f32 %v3853, 1.442695
      %v3884 = vpow.pop %v3883
      %v3885 = vmul.f32 %v3854, 1.442695
      %v3886 = vpow.pop %v3885
      %v3887 = vsel %vm2053, %v3856, 0.0
      %3888 = vadd.xlane.f32.xlu0 %v3887
      %v3889 = vpop.xlane.xlu0 %3888
      %v3890 = vsel %vm2053, %v3858, 0.0
      %3891 = vadd.xlane.f32.xlu0 %v3890
      %v3892 = vpop.xlane.xlu0 %3891
      %v3893 = vsel %vm2053, %v3860, 0.0
      %3894 = vadd.xlane.f32.xlu0 %v3893
      %v3895 = vpop.xlane.xlu0 %3894
      %v3896 = vsel %vm2053, %v3862, 0.0
      %3897 = vadd.xlane.f32.xlu0 %v3896
      %v3898 = vpop.xlane.xlu0 %3897
      %v3899 = vsel %vm2053, %v3864, 0.0
      %3900 = vadd.xlane.f32.xlu0 %v3899
      %v3901 = vpop.xlane.xlu0 %3900
      %v3902 = vsel %vm2053, %v3866, 0.0
      %3903 = vadd.xlane.f32.xlu0 %v3902
      %v3904 = vpop.xlane.xlu0 %3903
      %v3905 = vsel %vm2053, %v3868, 0.0
      %3906 = vadd.xlane.f32.xlu0 %v3905
      %v3907 = vpop.xlane.xlu0 %3906
      %v3908 = vsel %vm2053, %v3870, 0.0
      %3909 = vadd.xlane.f32.xlu0 %v3908
      %v3910 = vpop.xlane.xlu0 %3909
      %v3911 = vsel %vm2053, %v3872, 0.0
      %3912 = vadd.xlane.f32.xlu0 %v3911
      %v3913 = vpop.xlane.xlu0 %3912
      %v3914 = vsel %vm2053, %v3874, 0.0
      %3915 = vadd.xlane.f32.xlu0 %v3914
      %v3916 = vpop.xlane.xlu0 %3915
      %v3917 = vsel %vm2053, %v3876, 0.0
      %3918 = vadd.xlane.f32.xlu0 %v3917
      %v3919 = vpop.xlane.xlu0 %3918
      %v3920 = vsel %vm2053, %v3878, 0.0
      %3921 = vadd.xlane.f32.xlu0 %v3920
      %v3922 = vpop.xlane.xlu0 %3921
      %v3923 = vsel %vm2053, %v3880, 0.0
      %3924 = vadd.xlane.f32.xlu0 %v3923
      %v3925 = vpop.xlane.xlu0 %3924
      %v3926 = vsel %vm2053, %v3882, 0.0
      %3927 = vadd.xlane.f32.xlu0 %v3926
      %v3928 = vpop.xlane.xlu0 %3927
      %v3929 = vsel %vm2053, %v3884, 0.0
      %3930 = vadd.xlane.f32.xlu0 %v3929
      %v3931 = vpop.xlane.xlu0 %3930
      %v3932 = vsel %vm2053, %v3886, 0.0
      %3933 = vadd.xlane.f32.xlu0 %v3932
      %v3934 = vpop.xlane.xlu0 %3933
      %v3935 = vrcp.pop %v3889
      %v3936 = vrcp.pop %v3892
      %v3937 = vrcp.pop %v3895
      %v3938 = vrcp.pop %v3898
      %v3939 = vrcp.pop %v3901
      %v3940 = vrcp.pop %v3904
      %v3941 = vrcp.pop %v3907
      %v3942 = vrcp.pop %v3910
      %v3943 = vrcp.pop %v3913
      %v3944 = vrcp.pop %v3916
      %v3945 = vrcp.pop %v3919
      %v3946 = vrcp.pop %v3922
      %v3947 = vrcp.pop %v3925
      %v3948 = vrcp.pop %v3928
      %v3949 = vrcp.pop %v3931
      %v3950 = vrcp.pop %v3934
      %v3951 = vmul.f32 %v3856, %v3935
      %v3952 = vmul.f32 %v3858, %v3936
      %v3953 = vmul.f32 %v3860, %v3937
      %v3954 = vmul.f32 %v3862, %v3938
      %v3955 = vmul.f32 %v3864, %v3939
      %v3956 = vmul.f32 %v3866, %v3940
      %v3957 = vmul.f32 %v3868, %v3941
      %v3958 = vmul.f32 %v3870, %v3942
      %v3959 = vmul.f32 %v3872, %v3943
      %v3960 = vmul.f32 %v3874, %v3944
      %v3961 = vmul.f32 %v3876, %v3945
      %v3962 = vmul.f32 %v3878, %v3946
      %v3963 = vmul.f32 %v3880, %v3947
      %v3964 = vmul.f32 %v3882, %v3948
      %v3965 = vmul.f32 %v3884, %v3949
      %v3966 = vmul.f32 %v3886, %v3950
      %v3967 = vpack.c.bf16 %v3951, %v3951
      %v3968 = vpack.c.bf16 %v3952, %v3952
      %v3969 = vpack.c.bf16 %v3953, %v3953
      %v3970 = vpack.c.bf16 %v3954, %v3954
      %v3971 = vpack.c.bf16 %v3955, %v3955
      %v3972 = vpack.c.bf16 %v3956, %v3956
      %v3973 = vpack.c.bf16 %v3957, %v3957
      %v3974 = vpack.c.bf16 %v3958, %v3958
      %v3975 = vpack.c.bf16 %v3959, %v3959
      %v3976 = vpack.c.bf16 %v3960, %v3960
      %v3977 = vpack.c.bf16 %v3961, %v3961
      %v3978 = vpack.c.bf16 %v3962, %v3962
      %v3979 = vpack.c.bf16 %v3963, %v3963
      %v3980 = vpack.c.bf16 %v3964, %v3964
      %v3981 = vpack.c.bf16 %v3965, %v3965
      %v3982 = vpack.c.bf16 %v3966, %v3966
      %3983 = vrot.lane.b32.xlu0 %v1078, 112
      %v3984 = vpop.permute.xlu0 %3983
      %v3986 = vsel %vm2053, %v3967, 0
      %v3989 = vsel %vm2249, %v3984, 0
      %3991 = vmatprep.subr.bf16.mxu0 0
      %3992 = vmatpush1.bf16.msra.mxu0 %v3989
      %3993 = vmatprep.subr.bf16.mxu0 0
      %3994 = vmatpush1.bf16.msra.mxu0 0
      %3995 = vmatprep.subr.bf16.mxu0 0
      %3996 = vmatpush1.bf16.msra.mxu0 0
      %3997 = vmatprep.subr.bf16.mxu0 0
      %3998 = vmatpush1.bf16.msra.mxu0 0
      %3999 = vmatprep.subr.bf16.mxu0 0
      %4000 = vmatpush1.bf16.msra.mxu0 0
      %4001 = vmatprep.subr.bf16.mxu0 0
      %4002 = vmatpush1.bf16.msra.mxu0 0
      %4003 = vmatprep.subr.bf16.mxu0 0
      %4004 = vmatpush1.bf16.msra.mxu0 0
      %4005 = vmatprep.subr.bf16.mxu0 0
      %4006 = vmatpush1.bf16.msra.mxu0 0
      %4007 = vmatprep.subr.bf16.mxu0 0
      %4008 = vmatpush1.bf16.msra.mxu0 0
      %4009 = vmatprep.subr.bf16.mxu0 0
      %4010 = vmatpush1.bf16.msra.mxu0 0
      %4011 = vmatprep.subr.bf16.mxu0 0
      %4012 = vmatpush1.bf16.msra.mxu0 0
      %4013 = vmatprep.subr.bf16.mxu0 0
      %4014 = vmatpush1.bf16.msra.mxu0 0
      %4015 = vmatprep.subr.bf16.mxu0 0
      %4016 = vmatpush1.bf16.msra.mxu0 0
      %4017 = vmatprep.subr.bf16.mxu0 0
      %4018 = vmatpush1.bf16.msra.mxu0 0
      %4019 = vmatprep.subr.bf16.mxu0 0
      %4020 = vmatpush1.bf16.msra.mxu0 0
      %4021 = vmatprep.subr.bf16.mxu0 0
      %4022 = vmatpush1.bf16.msra.mxu0 0
      %4023 = vmatprep.mubr.bf16.mxu0 0
      %4024 = vmatmul.mubr.bf16.gmra.mrb[0].mxu0 %v3986
      %v4025 = vpop.f32.mrb[0].mxu0
      %v4026 = vadd.f32 0.0, %v4025
      %v4027 = vpop.f32.mrb[0].mxu0
      %v4028 = vpop.f32.mrb[0].mxu0
      %v4029 = vpop.f32.mrb[0].mxu0
      %4030 = vdwg.mxu0
      %4031 = vrot.lane.b32.xlu0 %v1079, 112
      %v4032 = vpop.permute.xlu0 %4031
      %v4034 = vsel %vm2053, %v3968, 0
      %v4037 = vsel %vm2249, %v4032, 0
      %4039 = vmatprep.subr.bf16.mxu0 0
      %4040 = vmatpush1.bf16.msra.mxu0 %v4037
      %4041 = vmatprep.subr.bf16.mxu0 0
      %4042 = vmatpush1.bf16.msra.mxu0 0
      %4043 = vmatprep.subr.bf16.mxu0 0
      %4044 = vmatpush1.bf16.msra.mxu0 0
      %4045 = vmatprep.subr.bf16.mxu0 0
      %4046 = vmatpush1.bf16.msra.mxu0 0
      %4047 = vmatprep.subr.bf16.mxu0 0
      %4048 = vmatpush1.bf16.msra.mxu0 0
      %4049 = vmatprep.subr.bf16.mxu0 0
      %4050 = vmatpush1.bf16.msra.mxu0 0
      %4051 = vmatprep.subr.bf16.mxu0 0
      %4052 = vmatpush1.bf16.msra.mxu0 0
      %4053 = vmatprep.subr.bf16.mxu0 0
      %4054 = vmatpush1.bf16.msra.mxu0 0
      %4055 = vmatprep.subr.bf16.mxu0 0
      %4056 = vmatpush1.bf16.msra.mxu0 0
      %4057 = vmatprep.subr.bf16.mxu0 0
      %4058 = vmatpush1.bf16.msra.mxu0 0
      %4059 = vmatprep.subr.bf16.mxu0 0
      %4060 = vmatpush1.bf16.msra.mxu0 0
      %4061 = vmatprep.subr.bf16.mxu0 0
      %4062 = vmatpush1.bf16.msra.mxu0 0
      %4063 = vmatprep.subr.bf16.mxu0 0
      %4064 = vmatpush1.bf16.msra.mxu0 0
      %4065 = vmatprep.subr.bf16.mxu0 0
      %4066 = vmatpush1.bf16.msra.mxu0 0
      %4067 = vmatprep.subr.bf16.mxu0 0
      %4068 = vmatpush1.bf16.msra.mxu0 0
      %4069 = vmatprep.subr.bf16.mxu0 0
      %4070 = vmatpush1.bf16.msra.mxu0 0
      %4071 = vmatprep.mubr.bf16.mxu0 0
      %4072 = vmatmul.mubr.bf16.gmra.mrb[0].mxu0 %v4034
      %v4073 = vpop.f32.mrb[0].mxu0
      %v4074 = vadd.f32 0.0, %v4073
      %v4075 = vpop.f32.mrb[0].mxu0
      %v4076 = vpop.f32.mrb[0].mxu0
      %v4077 = vpop.f32.mrb[0].mxu0
      %4078 = vdwg.mxu0
      %4079 = vrot.lane.b32.xlu0 %v1080, 112
      %v4080 = vpop.permute.xlu0 %4079
      %v4082 = vsel %vm2053, %v3969, 0
      %v4085 = vsel %vm2249, %v4080, 0
      %4087 = vmatprep.subr.bf16.mxu0 0
      %4088 = vmatpush1.bf16.msra.mxu0 %v4085
      %4089 = vmatprep.subr.bf16.mxu0 0
      %4090 = vmatpush1.bf16.msra.mxu0 0
      %4091 = vmatprep.subr.bf16.mxu0 0
      %4092 = vmatpush1.bf16.msra.mxu0 0
      %4093 = vmatprep.subr.bf16.mxu0 0
      %4094 = vmatpush1.bf16.msra.mxu0 0
      %4095 = vmatprep.subr.bf16.mxu0 0
      %4096 = vmatpush1.bf16.msra.mxu0 0
      %4097 = vmatprep.subr.bf16.mxu0 0
      %4098 = vmatpush1.bf16.msra.mxu0 0
      %4099 = vmatprep.subr.bf16.mxu0 0
      %4100 = vmatpush1.bf16.msra.mxu0 0
      %4101 = vmatprep.subr.bf16.mxu0 0
      %4102 = vmatpush1.bf16.msra.mxu0 0
      %4103 = vmatprep.subr.bf16.mxu0 0
      %4104 = vmatpush1.bf16.msra.mxu0 0
      %4105 = vmatprep.subr.bf16.mxu0 0
      %4106 = vmatpush1.bf16.msra.mxu0 0
      %4107 = vmatprep.subr.bf16.mxu0 0
      %4108 = vmatpush1.bf16.msra.mxu0 0
      %4109 = vmatprep.subr.bf16.mxu0 0
      %4110 = vmatpush1.bf16.msra.mxu0 0
      %4111 = vmatprep.subr.bf16.mxu0 0
      %4112 = vmatpush1.bf16.msra.mxu0 0
      %4113 = vmatprep.subr.bf16.mxu0 0
      %4114 = vmatpush1.bf16.msra.mxu0 0
      %4115 = vmatprep.subr.bf16.mxu0 0
      %4116 = vmatpush1.bf16.msra.mxu0 0
      %4117 = vmatprep.subr.bf16.mxu0 0
      %4118 = vmatpush1.bf16.msra.mxu0 0
      %4119 = vmatprep.mubr.bf16.mxu0 0
      %4120 = vmatmul.mubr.bf16.gmra.mrb[0].mxu0 %v4082
      %v4121 = vpop.f32.mrb[0].mxu0
      %v4122 = vadd.f32 0.0, %v4121
      %v4123 = vpop.f32.mrb[0].mxu0
      %v4124 = vpop.f32.mrb[0].mxu0
      %v4125 = vpop.f32.mrb[0].mxu0
      %4126 = vdwg.mxu0
      %4127 = vrot.lane.b32.xlu0 %v1081, 112
      %v4128 = vpop.permute.xlu0 %4127
      %v4130 = vsel %vm2053, %v3970, 0
      %v4133 = vsel %vm2249, %v4128, 0
      %4135 = vmatprep.subr.bf16.mxu0 0
      %4136 = vmatpush1.bf16.msra.mxu0 %v4133
      %4137 = vmatprep.subr.bf16.mxu0 0
      %4138 = vmatpush1.bf16.msra.mxu0 0
      %4139 = vmatprep.subr.bf16.mxu0 0
      %4140 = vmatpush1.bf16.msra.mxu0 0
      %4141 = vmatprep.subr.bf16.mxu0 0
      %4142 = vmatpush1.bf16.msra.mxu0 0
      %4143 = vmatprep.subr.bf16.mxu0 0
      %4144 = vmatpush1.bf16.msra.mxu0 0
      %4145 = vmatprep.subr.bf16.mxu0 0
      %4146 = vmatpush1.bf16.msra.mxu0 0
      %4147 = vmatprep.subr.bf16.mxu0 0
      %4148 = vmatpush1.bf16.msra.mxu0 0
      %4149 = vmatprep.subr.bf16.mxu0 0
      %4150 = vmatpush1.bf16.msra.mxu0 0
      %4151 = vmatprep.subr.bf16.mxu0 0
      %4152 = vmatpush1.bf16.msra.mxu0 0
      %4153 = vmatprep.subr.bf16.mxu0 0
      %4154 = vmatpush1.bf16.msra.mxu0 0
      %4155 = vmatprep.subr.bf16.mxu0 0
      %4156 = vmatpush1.bf16.msra.mxu0 0
      %4157 = vmatprep.subr.bf16.mxu0 0
      %4158 = vmatpush1.bf16.msra.mxu0 0
      %4159 = vmatprep.subr.bf16.mxu0 0
      %4160 = vmatpush1.bf16.msra.mxu0 0
      %4161 = vmatprep.subr.bf16.mxu0 0
      %4162 = vmatpush1.bf16.msra.mxu0 0
      %4163 = vmatprep.subr.bf16.mxu0 0
      %4164 = vmatpush1.bf16.msra.mxu0 0
      %4165 = vmatprep.subr.bf16.mxu0 0
      %4166 = vmatpush1.bf16.msra.mxu0 0
      %4167 = vmatprep.mubr.bf16.mxu0 0
      %4168 = vmatmul.mubr.bf16.gmra.mrb[0].mxu0 %v4130
      %v4169 = vpop.f32.mrb[0].mxu0
      %v4170 = vadd.f32 0.0, %v4169
      %v4171 = vpop.f32.mrb[0].mxu0
      %v4172 = vpop.f32.mrb[0].mxu0
      %v4173 = vpop.f32.mrb[0].mxu0
      %4174 = vdwg.mxu0
      %4175 = vrot.lane.b32.xlu0 %v1082, 112
      %v4176 = vpop.permute.xlu0 %4175
      %v4178 = vsel %vm2053, %v3971, 0
      %v4181 = vsel %vm2249, %v4176, 0
      %4183 = vmatprep.subr.bf16.mxu0 0
      %4184 = vmatpush1.bf16.msra.mxu0 %v4181
      %4185 = vmatprep.subr.bf16.mxu0 0
      %4186 = vmatpush1.bf16.msra.mxu0 0
      %4187 = vmatprep.subr.bf16.mxu0 0
      %4188 = vmatpush1.bf16.msra.mxu0 0
      %4189 = vmatprep.subr.bf16.mxu0 0
      %4190 = vmatpush1.bf16.msra.mxu0 0
      %4191 = vmatprep.subr.bf16.mxu0 0
      %4192 = vmatpush1.bf16.msra.mxu0 0
      %4193 = vmatprep.subr.bf16.mxu0 0
      %4194 = vmatpush1.bf16.msra.mxu0 0
      %4195 = vmatprep.subr.bf16.mxu0 0
      %4196 = vmatpush1.bf16.msra.mxu0 0
      %4197 = vmatprep.subr.bf16.mxu0 0
      %4198 = vmatpush1.bf16.msra.mxu0 0
      %4199 = vmatprep.subr.bf16.mxu0 0
      %4200 = vmatpush1.bf16.msra.mxu0 0
      %4201 = vmatprep.subr.bf16.mxu0 0
      %4202 = vmatpush1.bf16.msra.mxu0 0
      %4203 = vmatprep.subr.bf16.mxu0 0
      %4204 = vmatpush1.bf16.msra.mxu0 0
      %4205 = vmatprep.subr.bf16.mxu0 0
      %4206 = vmatpush1.bf16.msra.mxu0 0
      %4207 = vmatprep.subr.bf16.mxu0 0
      %4208 = vmatpush1.bf16.msra.mxu0 0
      %4209 = vmatprep.subr.bf16.mxu0 0
      %4210 = vmatpush1.bf16.msra.mxu0 0
      %4211 = vmatprep.subr.bf16.mxu0 0
      %4212 = vmatpush1.bf16.msra.mxu0 0
      %4213 = vmatprep.subr.bf16.mxu0 0
      %4214 = vmatpush1.bf16.msra.mxu0 0
      %4215 = vmatprep.mubr.bf16.mxu0 0
      %4216 = vmatmul.mubr.bf16.gmra.mrb[0].mxu0 %v4178
      %v4217 = vpop.f32.mrb[0].mxu0
      %v4218 = vadd.f32 0.0, %v4217
      %v4219 = vpop.f32.mrb[0].mxu0
      %v4220 = vpop.f32.mrb[0].mxu0
      %v4221 = vpop.f32.mrb[0].mxu0
      %4222 = vdwg.mxu0
      %4223 = vrot.lane.b32.xlu0 %v1083, 112
      %v4224 = vpop.permute.xlu0 %4223
      %v4226 = vsel %vm2053, %v3972, 0
      %v4229 = vsel %vm2249, %v4224, 0
      %4231 = vmatprep.subr.bf16.mxu0 0
      %4232 = vmatpush1.bf16.msra.mxu0 %v4229
      %4233 = vmatprep.subr.bf16.mxu0 0
      %4234 = vmatpush1.bf16.msra.mxu0 0
      %4235 = vmatprep.subr.bf16.mxu0 0
      %4236 = vmatpush1.bf16.msra.mxu0 0
      %4237 = vmatprep.subr.bf16.mxu0 0
      %4238 = vmatpush1.bf16.msra.mxu0 0
      %4239 = vmatprep.subr.bf16.mxu0 0
      %4240 = vmatpush1.bf16.msra.mxu0 0
      %4241 = vmatprep.subr.bf16.mxu0 0
      %4242 = vmatpush1.bf16.msra.mxu0 0
      %4243 = vmatprep.subr.bf16.mxu0 0
      %4244 = vmatpush1.bf16.msra.mxu0 0
      %4245 = vmatprep.subr.bf16.mxu0 0
      %4246 = vmatpush1.bf16.msra.mxu0 0
      %4247 = vmatprep.subr.bf16.mxu0 0
      %4248 = vmatpush1.bf16.msra.mxu0 0
      %4249 = vmatprep.subr.bf16.mxu0 0
      %4250 = vmatpush1.bf16.msra.mxu0 0
      %4251 = vmatprep.subr.bf16.mxu0 0
      %4252 = vmatpush1.bf16.msra.mxu0 0
      %4253 = vmatprep.subr.bf16.mxu0 0
      %4254 = vmatpush1.bf16.msra.mxu0 0
      %4255 = vmatprep.subr.bf16.mxu0 0
      %4256 = vmatpush1.bf16.msra.mxu0 0
      %4257 = vmatprep.subr.bf16.mxu0 0
      %4258 = vmatpush1.bf16.msra.mxu0 0
      %4259 = vmatprep.subr.bf16.mxu0 0
      %4260 = vmatpush1.bf16.msra.mxu0 0
      %4261 = vmatprep.subr.bf16.mxu0 0
      %4262 = vmatpush1.bf16.msra.mxu0 0
      %4263 = vmatprep.mubr.bf16.mxu0 0
      %4264 = vmatmul.mubr.bf16.gmra.mrb[0].mxu0 %v4226
      %v4265 = vpop.f32.mrb[0].mxu0
      %v4266 = vadd.f32 0.0, %v4265
      %v4267 = vpop.f32.mrb[0].mxu0
      %v4268 = vpop.f32.mrb[0].mxu0
      %v4269 = vpop.f32.mrb[0].mxu0
      %4270 = vdwg.mxu0
      %4271 = vrot.lane.b32.xlu0 %v1084, 112
      %v4272 = vpop.permute.xlu0 %4271
      %v4274 = vsel %vm2053, %v3973, 0
      %v4277 = vsel %vm2249, %v4272, 0
      %4279 = vmatprep.subr.bf16.mxu0 0
      %4280 = vmatpush1.bf16.msra.mxu0 %v4277
      %4281 = vmatprep.subr.bf16.mxu0 0
      %4282 = vmatpush1.bf16.msra.mxu0 0
      %4283 = vmatprep.subr.bf16.mxu0 0
      %4284 = vmatpush1.bf16.msra.mxu0 0
      %4285 = vmatprep.subr.bf16.mxu0 0
      %4286 = vmatpush1.bf16.msra.mxu0 0
      %4287 = vmatprep.subr.bf16.mxu0 0
      %4288 = vmatpush1.bf16.msra.mxu0 0
      %4289 = vmatprep.subr.bf16.mxu0 0
      %4290 = vmatpush1.bf16.msra.mxu0 0
      %4291 = vmatprep.subr.bf16.mxu0 0
      %4292 = vmatpush1.bf16.msra.mxu0 0
      %4293 = vmatprep.subr.bf16.mxu0 0
      %4294 = vmatpush1.bf16.msra.mxu0 0
      %4295 = vmatprep.subr.bf16.mxu0 0
      %4296 = vmatpush1.bf16.msra.mxu0 0
      %4297 = vmatprep.subr.bf16.mxu0 0
      %4298 = vmatpush1.bf16.msra.mxu0 0
      %4299 = vmatprep.subr.bf16.mxu0 0
      %4300 = vmatpush1.bf16.msra.mxu0 0
      %4301 = vmatprep.subr.bf16.mxu0 0
      %4302 = vmatpush1.bf16.msra.mxu0 0
      %4303 = vmatprep.subr.bf16.mxu0 0
      %4304 = vmatpush1.bf16.msra.mxu0 0
      %4305 = vmatprep.subr.bf16.mxu0 0
      %4306 = vmatpush1.bf16.msra.mxu0 0
      %4307 = vmatprep.subr.bf16.mxu0 0
      %4308 = vmatpush1.bf16.msra.mxu0 0
      %4309 = vmatprep.subr.bf16.mxu0 0
      %4310 = vmatpush1.bf16.msra.mxu0 0
      %4311 = vmatprep.mubr.bf16.mxu0 0
      %4312 = vmatmul.mubr.bf16.gmra.mrb[0].mxu0 %v4274
      %v4313 = vpop.f32.mrb[0].mxu0
      %v4314 = vadd.f32 0.0, %v4313
      %v4315 = vpop.f32.mrb[0].mxu0
      %v4316 = vpop.f32.mrb[0].mxu0
      %v4317 = vpop.f32.mrb[0].mxu0
      %4318 = vdwg.mxu0
      %4319 = vrot.lane.b32.xlu0 %v1085, 112
      %v4320 = vpop.permute.xlu0 %4319
      %v4322 = vsel %vm2053, %v3974, 0
      %v4325 = vsel %vm2249, %v4320, 0
      %4327 = vmatprep.subr.bf16.mxu0 0
      %4328 = vmatpush1.bf16.msra.mxu0 %v4325
      %4329 = vmatprep.subr.bf16.mxu0 0
      %4330 = vmatpush1.bf16.msra.mxu0 0
      %4331 = vmatprep.subr.bf16.mxu0 0
      %4332 = vmatpush1.bf16.msra.mxu0 0
      %4333 = vmatprep.subr.bf16.mxu0 0
      %4334 = vmatpush1.bf16.msra.mxu0 0
      %4335 = vmatprep.subr.bf16.mxu0 0
      %4336 = vmatpush1.bf16.msra.mxu0 0
      %4337 = vmatprep.subr.bf16.mxu0 0
      %4338 = vmatpush1.bf16.msra.mxu0 0
      %4339 = vmatprep.subr.bf16.mxu0 0
      %4340 = vmatpush1.bf16.msra.mxu0 0
      %4341 = vmatprep.subr.bf16.mxu0 0
      %4342 = vmatpush1.bf16.msra.mxu0 0
      %4343 = vmatprep.subr.bf16.mxu0 0
      %4344 = vmatpush1.bf16.msra.mxu0 0
      %4345 = vmatprep.subr.bf16.mxu0 0
      %4346 = vmatpush1.bf16.msra.mxu0 0
      %4347 = vmatprep.subr.bf16.mxu0 0
      %4348 = vmatpush1.bf16.msra.mxu0 0
      %4349 = vmatprep.subr.bf16.mxu0 0
      %4350 = vmatpush1.bf16.msra.mxu0 0
      %4351 = vmatprep.subr.bf16.mxu0 0
      %4352 = vmatpush1.bf16.msra.mxu0 0
      %4353 = vmatprep.subr.bf16.mxu0 0
      %4354 = vmatpush1.bf16.msra.mxu0 0
      %4355 = vmatprep.subr.bf16.mxu0 0
      %4356 = vmatpush1.bf16.msra.mxu0 0
      %4357 = vmatprep.subr.bf16.mxu0 0
      %4358 = vmatpush1.bf16.msra.mxu0 0
      %4359 = vmatprep.mubr.bf16.mxu0 0
      %4360 = vmatmul.mubr.bf16.gmra.mrb[0].mxu0 %v4322
      %v4361 = vpop.f32.mrb[0].mxu0
      %v4362 = vadd.f32 0.0, %v4361
      %v4363 = vpop.f32.mrb[0].mxu0
      %v4364 = vpop.f32.mrb[0].mxu0
      %v4365 = vpop.f32.mrb[0].mxu0
      %4366 = vdwg.mxu0
      %4367 = vrot.lane.b32.xlu0 %v1086, 112
      %v4368 = vpop.permute.xlu0 %4367
      %v4370 = vsel %vm2053, %v3975, 0
      %v4373 = vsel %vm2249, %v4368, 0
      %4375 = vmatprep.subr.bf16.mxu0 0
      %4376 = vmatpush1.bf16.msra.mxu0 %v4373
      %4377 = vmatprep.subr.bf16.mxu0 0
      %4378 = vmatpush1.bf16.msra.mxu0 0
      %4379 = vmatprep.subr.bf16.mxu0 0
      %4380 = vmatpush1.bf16.msra.mxu0 0
      %4381 = vmatprep.subr.bf16.mxu0 0
      %4382 = vmatpush1.bf16.msra.mxu0 0
      %4383 = vmatprep.subr.bf16.mxu0 0
      %4384 = vmatpush1.bf16.msra.mxu0 0
      %4385 = vmatprep.subr.bf16.mxu0 0
      %4386 = vmatpush1.bf16.msra.mxu0 0
      %4387 = vmatprep.subr.bf16.mxu0 0
      %4388 = vmatpush1.bf16.msra.mxu0 0
      %4389 = vmatprep.subr.bf16.mxu0 0
      %4390 = vmatpush1.bf16.msra.mxu0 0
      %4391 = vmatprep.subr.bf16.mxu0 0
      %4392 = vmatpush1.bf16.msra.mxu0 0
      %4393 = vmatprep.subr.bf16.mxu0 0
      %4394 = vmatpush1.bf16.msra.mxu0 0
      %4395 = vmatprep.subr.bf16.mxu0 0
      %4396 = vmatpush1.bf16.msra.mxu0 0
      %4397 = vmatprep.subr.bf16.mxu0 0
      %4398 = vmatpush1.bf16.msra.mxu0 0
      %4399 = vmatprep.subr.bf16.mxu0 0
      %4400 = vmatpush1.bf16.msra.mxu0 0
      %4401 = vmatprep.subr.bf16.mxu0 0
      %4402 = vmatpush1.bf16.msra.mxu0 0
      %4403 = vmatprep.subr.bf16.mxu0 0
      %4404 = vmatpush1.bf16.msra.mxu0 0
      %4405 = vmatprep.subr.bf16.mxu0 0
      %4406 = vmatpush1.bf16.msra.mxu0 0
      %4407 = vmatprep.mubr.bf16.mxu0 0
      %4408 = vmatmul.mubr.bf16.gmra.mrb[0].mxu0 %v4370
      %v4409 = vpop.f32.mrb[0].mxu0
      %v4410 = vadd.f32 0.0, %v4409
      %v4411 = vpop.f32.mrb[0].mxu0
      %v4412 = vpop.f32.mrb[0].mxu0
      %v4413 = vpop.f32.mrb[0].mxu0
      %4414 = vdwg.mxu0
      %4415 = vrot.lane.b32.xlu0 %v1087, 112
      %v4416 = vpop.permute.xlu0 %4415
      %v4418 = vsel %vm2053, %v3976, 0
      %v4421 = vsel %vm2249, %v4416, 0
      %4423 = vmatprep.subr.bf16.mxu0 0
      %4424 = vmatpush1.bf16.msra.mxu0 %v4421
      %4425 = vmatprep.subr.bf16.mxu0 0
      %4426 = vmatpush1.bf16.msra.mxu0 0
      %4427 = vmatprep.subr.bf16.mxu0 0
      %4428 = vmatpush1.bf16.msra.mxu0 0
      %4429 = vmatprep.subr.bf16.mxu0 0
      %4430 = vmatpush1.bf16.msra.mxu0 0
      %4431 = vmatprep.subr.bf16.mxu0 0
      %4432 = vmatpush1.bf16.msra.mxu0 0
      %4433 = vmatprep.subr.bf16.mxu0 0
      %4434 = vmatpush1.bf16.msra.mxu0 0
      %4435 = vmatprep.subr.bf16.mxu0 0
      %4436 = vmatpush1.bf16.msra.mxu0 0
      %4437 = vmatprep.subr.bf16.mxu0 0
      %4438 = vmatpush1.bf16.msra.mxu0 0
      %4439 = vmatprep.subr.bf16.mxu0 0
      %4440 = vmatpush1.bf16.msra.mxu0 0
      %4441 = vmatprep.subr.bf16.mxu0 0
      %4442 = vmatpush1.bf16.msra.mxu0 0
      %4443 = vmatprep.subr.bf16.mxu0 0
      %4444 = vmatpush1.bf16.msra.mxu0 0
      %4445 = vmatprep.subr.bf16.mxu0 0
      %4446 = vmatpush1.bf16.msra.mxu0 0
      %4447 = vmatprep.subr.bf16.mxu0 0
      %4448 = vmatpush1.bf16.msra.mxu0 0
      %4449 = vmatprep.subr.bf16.mxu0 0
      %4450 = vmatpush1.bf16.msra.mxu0 0
      %4451 = vmatprep.subr.bf16.mxu0 0
      %4452 = vmatpush1.bf16.msra.mxu0 0
      %4453 = vmatprep.subr.bf16.mxu0 0
      %4454 = vmatpush1.bf16.msra.mxu0 0
      %4455 = vmatprep.mubr.bf16.mxu0 0
      %4456 = vmatmul.mubr.bf16.gmra.mrb[0].mxu0 %v4418
      %v4457 = vpop.f32.mrb[0].mxu0
      %v4458 = vadd.f32 0.0, %v4457
      %v4459 = vpop.f32.mrb[0].mxu0
      %v4460 = vpop.f32.mrb[0].mxu0
      %v4461 = vpop.f32.mrb[0].mxu0
      %4462 = vdwg.mxu0
      %4463 = vrot.lane.b32.xlu0 %v1088, 112
      %v4464 = vpop.permute.xlu0 %4463
      %v4466 = vsel %vm2053, %v3977, 0
      %v4469 = vsel %vm2249, %v4464, 0
      %4471 = vmatprep.subr.bf16.mxu0 0
      %4472 = vmatpush1.bf16.msra.mxu0 %v4469
      %4473 = vmatprep.subr.bf16.mxu0 0
      %4474 = vmatpush1.bf16.msra.mxu0 0
      %4475 = vmatprep.subr.bf16.mxu0 0
      %4476 = vmatpush1.bf16.msra.mxu0 0
      %4477 = vmatprep.subr.bf16.mxu0 0
      %4478 = vmatpush1.bf16.msra.mxu0 0
      %4479 = vmatprep.subr.bf16.mxu0 0
      %4480 = vmatpush1.bf16.msra.mxu0 0
      %4481 = vmatprep.subr.bf16.mxu0 0
      %4482 = vmatpush1.bf16.msra.mxu0 0
      %4483 = vmatprep.subr.bf16.mxu0 0
      %4484 = vmatpush1.bf16.msra.mxu0 0
      %4485 = vmatprep.subr.bf16.mxu0 0
      %4486 = vmatpush1.bf16.msra.mxu0 0
      %4487 = vmatprep.subr.bf16.mxu0 0
      %4488 = vmatpush1.bf16.msra.mxu0 0
      %4489 = vmatprep.subr.bf16.mxu0 0
      %4490 = vmatpush1.bf16.msra.mxu0 0
      %4491 = vmatprep.subr.bf16.mxu0 0
      %4492 = vmatpush1.bf16.msra.mxu0 0
      %4493 = vmatprep.subr.bf16.mxu0 0
      %4494 = vmatpush1.bf16.msra.mxu0 0
      %4495 = vmatprep.subr.bf16.mxu0 0
      %4496 = vmatpush1.bf16.msra.mxu0 0
      %4497 = vmatprep.subr.bf16.mxu0 0
      %4498 = vmatpush1.bf16.msra.mxu0 0
      %4499 = vmatprep.subr.bf16.mxu0 0
      %4500 = vmatpush1.bf16.msra.mxu0 0
      %4501 = vmatprep.subr.bf16.mxu0 0
      %4502 = vmatpush1.bf16.msra.mxu0 0
      %4503 = vmatprep.mubr.bf16.mxu0 0
      %4504 = vmatmul.mubr.bf16.gmra.mrb[0].mxu0 %v4466
      %v4505 = vpop.f32.mrb[0].mxu0
      %v4506 = vadd.f32 0.0, %v4505
      %v4507 = vpop.f32.mrb[0].mxu0
      %v4508 = vpop.f32.mrb[0].mxu0
      %v4509 = vpop.f32.mrb[0].mxu0
      %4510 = vdwg.mxu0
      %4511 = vrot.lane.b32.xlu0 %v1089, 112
      %v4512 = vpop.permute.xlu0 %4511
      %v4514 = vsel %vm2053, %v3978, 0
      %v4517 = vsel %vm2249, %v4512, 0
      %4519 = vmatprep.subr.bf16.mxu0 0
      %4520 = vmatpush1.bf16.msra.mxu0 %v4517
      %4521 = vmatprep.subr.bf16.mxu0 0
      %4522 = vmatpush1.bf16.msra.mxu0 0
      %4523 = vmatprep.subr.bf16.mxu0 0
      %4524 = vmatpush1.bf16.msra.mxu0 0
      %4525 = vmatprep.subr.bf16.mxu0 0
      %4526 = vmatpush1.bf16.msra.mxu0 0
      %4527 = vmatprep.subr.bf16.mxu0 0
      %4528 = vmatpush1.bf16.msra.mxu0 0
      %4529 = vmatprep.subr.bf16.mxu0 0
      %4530 = vmatpush1.bf16.msra.mxu0 0
      %4531 = vmatprep.subr.bf16.mxu0 0
      %4532 = vmatpush1.bf16.msra.mxu0 0
      %4533 = vmatprep.subr.bf16.mxu0 0
      %4534 = vmatpush1.bf16.msra.mxu0 0
      %4535 = vmatprep.subr.bf16.mxu0 0
      %4536 = vmatpush1.bf16.msra.mxu0 0
      %4537 = vmatprep.subr.bf16.mxu0 0
      %4538 = vmatpush1.bf16.msra.mxu0 0
      %4539 = vmatprep.subr.bf16.mxu0 0
      %4540 = vmatpush1.bf16.msra.mxu0 0
      %4541 = vmatprep.subr.bf16.mxu0 0
      %4542 = vmatpush1.bf16.msra.mxu0 0
      %4543 = vmatprep.subr.bf16.mxu0 0
      %4544 = vmatpush1.bf16.msra.mxu0 0
      %4545 = vmatprep.subr.bf16.mxu0 0
      %4546 = vmatpush1.bf16.msra.mxu0 0
      %4547 = vmatprep.subr.bf16.mxu0 0
      %4548 = vmatpush1.bf16.msra.mxu0 0
      %4549 = vmatprep.subr.bf16.mxu0 0
      %4550 = vmatpush1.bf16.msra.mxu0 0
      %4551 = vmatprep.mubr.bf16.mxu0 0
      %4552 = vmatmul.mubr.bf16.gmra.mrb[0].mxu0 %v4514
      %v4553 = vpop.f32.mrb[0].mxu0
      %v4554 = vadd.f32 0.0, %v4553
      %v4555 = vpop.f32.mrb[0].mxu0
      %v4556 = vpop.f32.mrb[0].mxu0
      %v4557 = vpop.f32.mrb[0].mxu0
      %4558 = vdwg.mxu0
      %4559 = vrot.lane.b32.xlu0 %v1090, 112
      %v4560 = vpop.permute.xlu0 %4559
      %v4562 = vsel %vm2053, %v3979, 0
      %v4565 = vsel %vm2249, %v4560, 0
      %4567 = vmatprep.subr.bf16.mxu0 0
      %4568 = vmatpush1.bf16.msra.mxu0 %v4565
      %4569 = vmatprep.subr.bf16.mxu0 0
      %4570 = vmatpush1.bf16.msra.mxu0 0
      %4571 = vmatprep.subr.bf16.mxu0 0
      %4572 = vmatpush1.bf16.msra.mxu0 0
      %4573 = vmatprep.subr.bf16.mxu0 0
      %4574 = vmatpush1.bf16.msra.mxu0 0
      %4575 = vmatprep.subr.bf16.mxu0 0
      %4576 = vmatpush1.bf16.msra.mxu0 0
      %4577 = vmatprep.subr.bf16.mxu0 0
      %4578 = vmatpush1.bf16.msra.mxu0 0
      %4579 = vmatprep.subr.bf16.mxu0 0
      %4580 = vmatpush1.bf16.msra.mxu0 0
      %4581 = vmatprep.subr.bf16.mxu0 0
      %4582 = vmatpush1.bf16.msra.mxu0 0
      %4583 = vmatprep.subr.bf16.mxu0 0
      %4584 = vmatpush1.bf16.msra.mxu0 0
      %4585 = vmatprep.subr.bf16.mxu0 0
      %4586 = vmatpush1.bf16.msra.mxu0 0
      %4587 = vmatprep.subr.bf16.mxu0 0
      %4588 = vmatpush1.bf16.msra.mxu0 0
      %4589 = vmatprep.subr.bf16.mxu0 0
      %4590 = vmatpush1.bf16.msra.mxu0 0
      %4591 = vmatprep.subr.bf16.mxu0 0
      %4592 = vmatpush1.bf16.msra.mxu0 0
      %4593 = vmatprep.subr.bf16.mxu0 0
      %4594 = vmatpush1.bf16.msra.mxu0 0
      %4595 = vmatprep.subr.bf16.mxu0 0
      %4596 = vmatpush1.bf16.msra.mxu0 0
      %4597 = vmatprep.subr.bf16.mxu0 0
      %4598 = vmatpush1.bf16.msra.mxu0 0
      %4599 = vmatprep.mubr.bf16.mxu0 0
      %4600 = vmatmul.mubr.bf16.gmra.mrb[0].mxu0 %v4562
      %v4601 = vpop.f32.mrb[0].mxu0
      %v4602 = vadd.f32 0.0, %v4601
      %v4603 = vpop.f32.mrb[0].mxu0
      %v4604 = vpop.f32.mrb[0].mxu0
      %v4605 = vpop.f32.mrb[0].mxu0
      %4606 = vdwg.mxu0
      %4607 = vrot.lane.b32.xlu0 %v1091, 112
      %v4608 = vpop.permute.xlu0 %4607
      %v4610 = vsel %vm2053, %v3980, 0
      %v4613 = vsel %vm2249, %v4608, 0
      %4615 = vmatprep.subr.bf16.mxu0 0
      %4616 = vmatpush1.bf16.msra.mxu0 %v4613
      %4617 = vmatprep.subr.bf16.mxu0 0
      %4618 = vmatpush1.bf16.msra.mxu0 0
      %4619 = vmatprep.subr.bf16.mxu0 0
      %4620 = vmatpush1.bf16.msra.mxu0 0
      %4621 = vmatprep.subr.bf16.mxu0 0
      %4622 = vmatpush1.bf16.msra.mxu0 0
      %4623 = vmatprep.subr.bf16.mxu0 0
      %4624 = vmatpush1.bf16.msra.mxu0 0
      %4625 = vmatprep.subr.bf16.mxu0 0
      %4626 = vmatpush1.bf16.msra.mxu0 0
      %4627 = vmatprep.subr.bf16.mxu0 0
      %4628 = vmatpush1.bf16.msra.mxu0 0
      %4629 = vmatprep.subr.bf16.mxu0 0
      %4630 = vmatpush1.bf16.msra.mxu0 0
      %4631 = vmatprep.subr.bf16.mxu0 0
      %4632 = vmatpush1.bf16.msra.mxu0 0
      %4633 = vmatprep.subr.bf16.mxu0 0
      %4634 = vmatpush1.bf16.msra.mxu0 0
      %4635 = vmatprep.subr.bf16.mxu0 0
      %4636 = vmatpush1.bf16.msra.mxu0 0
      %4637 = vmatprep.subr.bf16.mxu0 0
      %4638 = vmatpush1.bf16.msra.mxu0 0
      %4639 = vmatprep.subr.bf16.mxu0 0
      %4640 = vmatpush1.bf16.msra.mxu0 0
      %4641 = vmatprep.subr.bf16.mxu0 0
      %4642 = vmatpush1.bf16.msra.mxu0 0
      %4643 = vmatprep.subr.bf16.mxu0 0
      %4644 = vmatpush1.bf16.msra.mxu0 0
      %4645 = vmatprep.subr.bf16.mxu0 0
      %4646 = vmatpush1.bf16.msra.mxu0 0
      %4647 = vmatprep.mubr.bf16.mxu0 0
      %4648 = vmatmul.mubr.bf16.gmra.mrb[0].mxu0 %v4610
      %v4649 = vpop.f32.mrb[0].mxu0
      %v4650 = vadd.f32 0.0, %v4649
      %v4651 = vpop.f32.mrb[0].mxu0
      %v4652 = vpop.f32.mrb[0].mxu0
      %v4653 = vpop.f32.mrb[0].mxu0
      %4654 = vdwg.mxu0
      %4655 = vrot.lane.b32.xlu0 %v1092, 112
      %v4656 = vpop.permute.xlu0 %4655
      %v4658 = vsel %vm2053, %v3981, 0
      %v4661 = vsel %vm2249, %v4656, 0
      %4663 = vmatprep.subr.bf16.mxu0 0
      %4664 = vmatpush1.bf16.msra.mxu0 %v4661
      %4665 = vmatprep.subr.bf16.mxu0 0
      %4666 = vmatpush1.bf16.msra.mxu0 0
      %4667 = vmatprep.subr.bf16.mxu0 0
      %4668 = vmatpush1.bf16.msra.mxu0 0
      %4669 = vmatprep.subr.bf16.mxu0 0
      %4670 = vmatpush1.bf16.msra.mxu0 0
      %4671 = vmatprep.subr.bf16.mxu0 0
      %4672 = vmatpush1.bf16.msra.mxu0 0
      %4673 = vmatprep.subr.bf16.mxu0 0
      %4674 = vmatpush1.bf16.msra.mxu0 0
      %4675 = vmatprep.subr.bf16.mxu0 0
      %4676 = vmatpush1.bf16.msra.mxu0 0
      %4677 = vmatprep.subr.bf16.mxu0 0
      %4678 = vmatpush1.bf16.msra.mxu0 0
      %4679 = vmatprep.subr.bf16.mxu0 0
      %4680 = vmatpush1.bf16.msra.mxu0 0
      %4681 = vmatprep.subr.bf16.mxu0 0
      %4682 = vmatpush1.bf16.msra.mxu0 0
      %4683 = vmatprep.subr.bf16.mxu0 0
      %4684 = vmatpush1.bf16.msra.mxu0 0
      %4685 = vmatprep.subr.bf16.mxu0 0
      %4686 = vmatpush1.bf16.msra.mxu0 0
      %4687 = vmatprep.subr.bf16.mxu0 0
      %4688 = vmatpush1.bf16.msra.mxu0 0
      %4689 = vmatprep.subr.bf16.mxu0 0
      %4690 = vmatpush1.bf16.msra.mxu0 0
      %4691 = vmatprep.subr.bf16.mxu0 0
      %4692 = vmatpush1.bf16.msra.mxu0 0
      %4693 = vmatprep.subr.bf16.mxu0 0
      %4694 = vmatpush1.bf16.msra.mxu0 0
      %4695 = vmatprep.mubr.bf16.mxu0 0
      %4696 = vmatmul.mubr.bf16.gmra.mrb[0].mxu0 %v4658
      %v4697 = vpop.f32.mrb[0].mxu0
      %v4698 = vadd.f32 0.0, %v4697
      %v4699 = vpop.f32.mrb[0].mxu0
      %v4700 = vpop.f32.mrb[0].mxu0
      %v4701 = vpop.f32.mrb[0].mxu0
      %4702 = vdwg.mxu0
      %4703 = vrot.lane.b32.xlu0 %v1093, 112
      %v4704 = vpop.permute.xlu0 %4703
      %v4706 = vsel %vm2053, %v3982, 0
      %v4709 = vsel %vm2249, %v4704, 0
      %4711 = vmatprep.subr.bf16.mxu0 0
      %4712 = vmatpush1.bf16.msra.mxu0 %v4709
      %4713 = vmatprep.subr.bf16.mxu0 0
      %4714 = vmatpush1.bf16.msra.mxu0 0
      %4715 = vmatprep.subr.bf16.mxu0 0
      %4716 = vmatpush1.bf16.msra.mxu0 0
      %4717 = vmatprep.subr.bf16.mxu0 0
      %4718 = vmatpush1.bf16.msra.mxu0 0
      %4719 = vmatprep.subr.bf16.mxu0 0
      %4720 = vmatpush1.bf16.msra.mxu0 0
      %4721 = vmatprep.subr.bf16.mxu0 0
      %4722 = vmatpush1.bf16.msra.mxu0 0
      %4723 = vmatprep.subr.bf16.mxu0 0
      %4724 = vmatpush1.bf16.msra.mxu0 0
      %4725 = vmatprep.subr.bf16.mxu0 0
      %4726 = vmatpush1.bf16.msra.mxu0 0
      %4727 = vmatprep.subr.bf16.mxu0 0
      %4728 = vmatpush1.bf16.msra.mxu0 0
      %4729 = vmatprep.subr.bf16.mxu0 0
      %4730 = vmatpush1.bf16.msra.mxu0 0
      %4731 = vmatprep.subr.bf16.mxu0 0
      %4732 = vmatpush1.bf16.msra.mxu0 0
      %4733 = vmatprep.subr.bf16.mxu0 0
      %4734 = vmatpush1.bf16.msra.mxu0 0
      %4735 = vmatprep.subr.bf16.mxu0 0
      %4736 = vmatpush1.bf16.msra.mxu0 0
      %4737 = vmatprep.subr.bf16.mxu0 0
      %4738 = vmatpush1.bf16.msra.mxu0 0
      %4739 = vmatprep.subr.bf16.mxu0 0
      %4740 = vmatpush1.bf16.msra.mxu0 0
      %4741 = vmatprep.subr.bf16.mxu0 0
      %4742 = vmatpush1.bf16.msra.mxu0 0
      %4743 = vmatprep.mubr.bf16.mxu0 0
      %4744 = vmatmul.mubr.bf16.gmra.mrb[0].mxu0 %v4706
      %v4745 = vpop.f32.mrb[0].mxu0
      %v4746 = vadd.f32 0.0, %v4745
      %v4747 = vpop.f32.mrb[0].mxu0
      %v4748 = vpop.f32.mrb[0].mxu0
      %v4749 = vpop.f32.mrb[0].mxu0
      %4750 = vdwg.mxu0
      %v4751 = vpack.c.bf16 %v4074, %v4026
      %v4752 = vpack.c.bf16 %v4170, %v4122
      %v4753 = vpack.c.bf16 %v4266, %v4218
      %v4754 = vpack.c.bf16 %v4362, %v4314
      %v4755 = vpack.c.bf16 %v4458, %v4410
      %v4756 = vpack.c.bf16 %v4554, %v4506
      %v4757 = vpack.c.bf16 %v4650, %v4602
      %v4758 = vpack.c.bf16 %v4746, %v4698
      %v4761 = vunpack.c.l.b16 %v1198
      %v4762 = vunpack.c.l.b16 %v1199
      %v4763 = vpack.c.b16 %v4762, %v4761
      %v4766 = vsel %vm1286, %v4751, 0
      %v4769 = vsel %vm1286, %v4752, 0
      %v4772 = vsel %vm1286, %v4753, 0
      %v4775 = vsel %vm1286, %v4754, 0
      %v4778 = vsel %vm1286, %v4755, 0
      %v4781 = vsel %vm1286, %v4756, 0
      %v4784 = vsel %vm1286, %v4757, 0
      %v4787 = vsel %vm1286, %v4758, 0
      %4789 = vmatprep.subr.bf16.mxu0 0
      %4790 = vmatpush1.bf16.msra.mxu0 %v4763
      %4791 = vmatprep.subr.bf16.mxu0 0
      %4792 = vmatpush1.bf16.msra.mxu0 0
      %4793 = vmatprep.subr.bf16.mxu0 0
      %4794 = vmatpush1.bf16.msra.mxu0 0
      %4795 = vmatprep.subr.bf16.mxu0 0
      %4796 = vmatpush1.bf16.msra.mxu0 0
      %4797 = vmatprep.subr.bf16.mxu0 0
      %4798 = vmatpush1.bf16.msra.mxu0 0
      %4799 = vmatprep.subr.bf16.mxu0 0
      %4800 = vmatpush1.bf16.msra.mxu0 0
      %4801 = vmatprep.subr.bf16.mxu0 0
      %4802 = vmatpush1.bf16.msra.mxu0 0
      %4803 = vmatprep.subr.bf16.mxu0 0
      %4804 = vmatpush1.bf16.msra.mxu0 0
      %4805 = vmatprep.subr.bf16.mxu0 0
      %4806 = vmatpush1.bf16.msra.mxu0 0
      %4807 = vmatprep.subr.bf16.mxu0 0
      %4808 = vmatpush1.bf16.msra.mxu0 0
      %4809 = vmatprep.subr.bf16.mxu0 0
      %4810 = vmatpush1.bf16.msra.mxu0 0
      %4811 = vmatprep.subr.bf16.mxu0 0
      %4812 = vmatpush1.bf16.msra.mxu0 0
      %4813 = vmatprep.subr.bf16.mxu0 0
      %4814 = vmatpush1.bf16.msra.mxu0 0
      %4815 = vmatprep.subr.bf16.mxu0 0
      %4816 = vmatpush1.bf16.msra.mxu0 0
      %4817 = vmatprep.subr.bf16.mxu0 0
      %4818 = vmatpush1.bf16.msra.mxu0 0
      %4819 = vmatprep.subr.bf16.mxu0 0
      %4820 = vmatpush1.bf16.msra.mxu0 0
      %4821 = vmatprep.mubr.bf16.mxu0 0
      %4822 = vmatmul.mubr.bf16.gmra.mrb[0].mxu0 %v4766
      %v4823 = vpop.f32.mrb[0].mxu0
      %v4824 = vadd.f32 0.0, %v4823
      %v4825 = vpop.f32.mrb[0].mxu0
      %v4826 = vpop.f32.mrb[0].mxu0
      %v4827 = vadd.f32 0.0, %v4826
      %v4828 = vpop.f32.mrb[0].mxu0
      %4829 = vmatprep.mubr.bf16.mxu0 0
      %4830 = vmatmul.mubr.bf16.gmra.mrb[0].mxu0 %v4769
      %v4831 = vpop.f32.mrb[0].mxu0
      %v4832 = vadd.f32 0.0, %v4831
      %v4833 = vpop.f32.mrb[0].mxu0
      %v4834 = vpop.f32.mrb[0].mxu0
      %v4835 = vadd.f32 0.0, %v4834
      %v4836 = vpop.f32.mrb[0].mxu0
      %4837 = vmatprep.mubr.bf16.mxu0 0
      %4838 = vmatmul.mubr.bf16.gmra.mrb[0].mxu0 %v4772
      %v4839 = vpop.f32.mrb[0].mxu0
      %v4840 = vadd.f32 0.0, %v4839
      %v4841 = vpop.f32.mrb[0].mxu0
      %v4842 = vpop.f32.mrb[0].mxu0
      %v4843 = vadd.f32 0.0, %v4842
      %v4844 = vpop.f32.mrb[0].mxu0
      %4845 = vmatprep.mubr.bf16.mxu0 0
      %4846 = vmatmul.mubr.bf16.gmra.mrb[0].mxu0 %v4775
      %v4847 = vpop.f32.mrb[0].mxu0
      %v4848 = vadd.f32 0.0, %v4847
      %v4849 = vpop.f32.mrb[0].mxu0
      %v4850 = vpop.f32.mrb[0].mxu0
      %v4851 = vadd.f32 0.0, %v4850
      %v4852 = vpop.f32.mrb[0].mxu0
      %4853 = vmatprep.mubr.bf16.mxu0 0
      %4854 = vmatmul.mubr.bf16.gmra.mrb[0].mxu0 %v4778
      %v4855 = vpop.f32.mrb[0].mxu0
      %v4856 = vadd.f32 0.0, %v4855
      %v4857 = vpop.f32.mrb[0].mxu0
      %v4858 = vpop.f32.mrb[0].mxu0
      %v4859 = vadd.f32 0.0, %v4858
      %v4860 = vpop.f32.mrb[0].mxu0
      %4861 = vmatprep.mubr.bf16.mxu0 0
      %4862 = vmatmul.mubr.bf16.gmra.mrb[0].mxu0 %v4781
      %v4863 = vpop.f32.mrb[0].mxu0
      %v4864 = vadd.f32 0.0, %v4863
      %v4865 = vpop.f32.mrb[0].mxu0
      %v4866 = vpop.f32.mrb[0].mxu0
      %v4867 = vadd.f32 0.0, %v4866
      %v4868 = vpop.f32.mrb[0].mxu0
      %4869 = vmatprep.mubr.bf16.mxu0 0
      %4870 = vmatmul.mubr.bf16.gmra.mrb[0].mxu0 %v4784
      %v4871 = vpop.f32.mrb[0].mxu0
      %v4872 = vadd.f32 0.0, %v4871
      %v4873 = vpop.f32.mrb[0].mxu0
      %v4874 = vpop.f32.mrb[0].mxu0
      %v4875 = vadd.f32 0.0, %v4874
      %v4876 = vpop.f32.mrb[0].mxu0
      %4877 = vmatprep.mubr.bf16.mxu0 0
      %4878 = vmatmul.mubr.bf16.gmra.mrb[0].mxu0 %v4787
      %v4879 = vpop.f32.mrb[0].mxu0
      %v4880 = vadd.f32 0.0, %v4879
      %v4881 = vpop.f32.mrb[0].mxu0
      %v4882 = vpop.f32.mrb[0].mxu0
      %v4883 = vadd.f32 0.0, %v4882
      %v4884 = vpop.f32.mrb[0].mxu0
      %4885 = vdwg.mxu0
      %v4888 = vunpack.c.l.b16 %v1196
      %v4889 = vunpack.c.l.b16 %v1197
      %v4890 = vpack.c.b16 %v4889, %v4888
      %v4893 = vsel %vm1286, %v2983, 0
      %v4896 = vsel %vm1286, %v2984, 0
      %v4899 = vsel %vm1286, %v2985, 0
      %v4902 = vsel %vm1286, %v2986, 0
      %v4905 = vsel %vm1286, %v2987, 0
      %v4908 = vsel %vm1286, %v2988, 0
      %v4911 = vsel %vm1286, %v2989, 0
      %v4914 = vsel %vm1286, %v2990, 0
      %4916 = vmatprep.subr.bf16.mxu0 0
      %4917 = vmatpush1.bf16.msra.mxu0 %v4890
      %4918 = vmatprep.subr.bf16.mxu0 0
      %4919 = vmatpush1.bf16.msra.mxu0 0
      %4920 = vmatprep.subr.bf16.mxu0 0
      %4921 = vmatpush1.bf16.msra.mxu0 0
      %4922 = vmatprep.subr.bf16.mxu0 0
      %4923 = vmatpush1.bf16.msra.mxu0 0
      %4924 = vmatprep.subr.bf16.mxu0 0
      %4925 = vmatpush1.bf16.msra.mxu0 0
      %4926 = vmatprep.subr.bf16.mxu0 0
      %4927 = vmatpush1.bf16.msra.mxu0 0
      %4928 = vmatprep.subr.bf16.mxu0 0
      %4929 = vmatpush1.bf16.msra.mxu0 0
      %4930 = vmatprep.subr.bf16.mxu0 0
      %4931 = vmatpush1.bf16.msra.mxu0 0
      %4932 = vmatprep.subr.bf16.mxu0 0
      %4933 = vmatpush1.bf16.msra.mxu0 0
      %4934 = vmatprep.subr.bf16.mxu0 0
      %4935 = vmatpush1.bf16.msra.mxu0 0
      %4936 = vmatprep.subr.bf16.mxu0 0
      %4937 = vmatpush1.bf16.msra.mxu0 0
      %4938 = vmatprep.subr.bf16.mxu0 0
      %4939 = vmatpush1.bf16.msra.mxu0 0
      %4940 = vmatprep.subr.bf16.mxu0 0
      %4941 = vmatpush1.bf16.msra.mxu0 0
      %4942 = vmatprep.subr.bf16.mxu0 0
      %4943 = vmatpush1.bf16.msra.mxu0 0
      %4944 = vmatprep.subr.bf16.mxu0 0
      %4945 = vmatpush1.bf16.msra.mxu0 0
      %4946 = vmatprep.subr.bf16.mxu0 0
      %4947 = vmatpush1.bf16.msra.mxu0 0
      %4948 = vmatprep.mubr.bf16.mxu0 0
      %4949 = vmatmul.mubr.bf16.gmra.mrb[0].mxu0 %v4893
      %v4950 = vpop.f32.mrb[0].mxu0
      %v4951 = vadd.f32 %v4824, %v4950
      %v4952 = vpop.f32.mrb[0].mxu0
      %v4953 = vpop.f32.mrb[0].mxu0
      %v4954 = vadd.f32 %v4827, %v4953
      %v4955 = vpop.f32.mrb[0].mxu0
      %4956 = vmatprep.mubr.bf16.mxu0 0
      %4957 = vmatmul.mubr.bf16.gmra.mrb[0].mxu0 %v4896
      %v4958 = vpop.f32.mrb[0].mxu0
      %v4959 = vadd.f32 %v4832, %v4958
      %v4960 = vpop.f32.mrb[0].mxu0
      %v4961 = vpop.f32.mrb[0].mxu0
      %v4962 = vadd.f32 %v4835, %v4961
      %v4963 = vpop.f32.mrb[0].mxu0
      %4964 = vmatprep.mubr.bf16.mxu0 0
      %4965 = vmatmul.mubr.bf16.gmra.mrb[0].mxu0 %v4899
      %v4966 = vpop.f32.mrb[0].mxu0
      %v4967 = vadd.f32 %v4840, %v4966
      %v4968 = vpop.f32.mrb[0].mxu0
      %v4969 = vpop.f32.mrb[0].mxu0
      %v4970 = vadd.f32 %v4843, %v4969
      %v4971 = vpop.f32.mrb[0].mxu0
      %4972 = vmatprep.mubr.bf16.mxu0 0
      %4973 = vmatmul.mubr.bf16.gmra.mrb[0].mxu0 %v4902
      %v4974 = vpop.f32.mrb[0].mxu0
      %v4975 = vadd.f32 %v4848, %v4974
      %v4976 = vpop.f32.mrb[0].mxu0
      %v4977 = vpop.f32.mrb[0].mxu0
      %v4978 = vadd.f32 %v4851, %v4977
      %v4979 = vpop.f32.mrb[0].mxu0
      %4980 = vmatprep.mubr.bf16.mxu0 0
      %4981 = vmatmul.mubr.bf16.gmra.mrb[0].mxu0 %v4905
      %v4982 = vpop.f32.mrb[0].mxu0
      %v4983 = vadd.f32 %v4856, %v4982
      %v4984 = vpop.f32.mrb[0].mxu0
      %v4985 = vpop.f32.mrb[0].mxu0
      %v4986 = vadd.f32 %v4859, %v4985
      %v4987 = vpop.f32.mrb[0].mxu0
      %4988 = vmatprep.mubr.bf16.mxu0 0
      %4989 = vmatmul.mubr.bf16.gmra.mrb[0].mxu0 %v4908
      %v4990 = vpop.f32.mrb[0].mxu0
      %v4991 = vadd.f32 %v4864, %v4990
      %v4992 = vpop.f32.mrb[0].mxu0
      %v4993 = vpop.f32.mrb[0].mxu0
      %v4994 = vadd.f32 %v4867, %v4993
      %v4995 = vpop.f32.mrb[0].mxu0
      %4996 = vmatprep.mubr.bf16.mxu0 0
      %4997 = vmatmul.mubr.bf16.gmra.mrb[0].mxu0 %v4911
      %v4998 = vpop.f32.mrb[0].mxu0
      %v4999 = vadd.f32 %v4872, %v4998
      %v5000 = vpop.f32.mrb[0].mxu0
      %v5001 = vpop.f32.mrb[0].mxu0
      %v5002 = vadd.f32 %v4875, %v5001
      %v5003 = vpop.f32.mrb[0].mxu0
      %5004 = vmatprep.mubr.bf16.mxu0 0
      %5005 = vmatmul.mubr.bf16.gmra.mrb[0].mxu0 %v4914
      %v5006 = vpop.f32.mrb[0].mxu0
      %v5007 = vadd.f32 %v4880, %v5006
      %v5008 = vpop.f32.mrb[0].mxu0
      %v5009 = vpop.f32.mrb[0].mxu0
      %v5010 = vadd.f32 %v4883, %v5009
      %v5011 = vpop.f32.mrb[0].mxu0
      %5012 = vdwg.mxu0
      %5013 = vrot.lane.b32.xlu0 %v1030, 96
      %v5014 = vpop.permute.xlu0 %5013
      %5015 = vrot.lane.b32.xlu0 %v1030, 32
      %v5016 = vpop.permute.xlu0 %5015
      %v5018 = vsel %vm1286, %v5014, 0
      %v5021 = vsel %vm1286, %v5016, 0
      %5023 = vmatprep.subr.bf16.mxu0 0
      %5024 = vmatpush1.bf16.xpose.msra.mxu0 %v5021
      %5025 = vmatprep.subr.bf16.mxu0 0
      %5026 = vmatpush1.bf16.xpose.msra.mxu0 0
      %5027 = vmatprep.subr.bf16.mxu0 0
      %5028 = vmatpush1.bf16.xpose.msra.mxu0 0
      %5029 = vmatprep.subr.bf16.mxu0 0
      %5030 = vmatpush1.bf16.xpose.msra.mxu0 0
      %5031 = vmatprep.subr.bf16.mxu0 0
      %5032 = vmatpush1.bf16.xpose.msra.mxu0 0
      %5033 = vmatprep.subr.bf16.mxu0 0
      %5034 = vmatpush1.bf16.xpose.msra.mxu0 0
      %5035 = vmatprep.subr.bf16.mxu0 0
      %5036 = vmatpush1.bf16.xpose.msra.mxu0 0
      %5037 = vmatprep.subr.bf16.mxu0 0
      %5038 = vmatpush1.bf16.xpose.msra.mxu0 0
      %5039 = vmatprep.subr.bf16.mxu0 0
      %5040 = vmatpush1.bf16.xpose.msra.mxu0 0
      %5041 = vmatprep.subr.bf16.mxu0 0
      %5042 = vmatpush1.bf16.xpose.msra.mxu0 0
      %5043 = vmatprep.subr.bf16.mxu0 0
      %5044 = vmatpush1.bf16.xpose.msra.mxu0 0
      %5045 = vmatprep.subr.bf16.mxu0 0
      %5046 = vmatpush1.bf16.xpose.msra.mxu0 0
      %5047 = vmatprep.subr.bf16.mxu0 0
      %5048 = vmatpush1.bf16.xpose.msra.mxu0 0
      %5049 = vmatprep.subr.bf16.mxu0 0
      %5050 = vmatpush1.bf16.xpose.msra.mxu0 0
      %5051 = vmatprep.subr.bf16.mxu0 0
      %5052 = vmatpush1.bf16.xpose.msra.mxu0 0
      %5053 = vmatprep.subr.bf16.mxu0 0
      %5054 = vmatpush1.bf16.xpose.msra.mxu0 0
      %5055 = vmatprep.mubr.bf16.mxu0 0
      %5056 = vmatmul.mubr.bf16.gmra.mrb[0].mxu0 %v5018
      %v5057 = vpop.f32.mrb[0].mxu0
      %v5058 = vadd.f32 %v1207, %v5057
      %v5059 = vpop.f32.mrb[0].mxu0
      %v5060 = vpop.f32.mrb[0].mxu0
      %v5061 = vpop.f32.mrb[0].mxu0
      %5062 = vdwg.mxu0
      %5063 = vrot.lane.b32.xlu0 %v1031, 96
      %v5064 = vpop.permute.xlu0 %5063
      %5065 = vrot.lane.b32.xlu0 %v1031, 32
      %v5066 = vpop.permute.xlu0 %5065
      %v5068 = vsel %vm1286, %v5064, 0
      %v5071 = vsel %vm1286, %v5066, 0
      %5073 = vmatprep.subr.bf16.mxu0 0
      %5074 = vmatpush1.bf16.xpose.msra.mxu0 %v5071
      %5075 = vmatprep.subr.bf16.mxu0 0
      %5076 = vmatpush1.bf16.xpose.msra.mxu0 0
      %5077 = vmatprep.subr.bf16.mxu0 0
      %5078 = vmatpush1.bf16.xpose.msra.mxu0 0
      %5079 = vmatprep.subr.bf16.mxu0 0
      %5080 = vmatpush1.bf16.xpose.msra.mxu0 0
      %5081 = vmatprep.subr.bf16.mxu0 0
      %5082 = vmatpush1.bf16.xpose.msra.mxu0 0
      %5083 = vmatprep.subr.bf16.mxu0 0
      %5084 = vmatpush1.bf16.xpose.msra.mxu0 0
      %5085 = vmatprep.subr.bf16.mxu0 0
      %5086 = vmatpush1.bf16.xpose.msra.mxu0 0
      %5087 = vmatprep.subr.bf16.mxu0 0
      %5088 = vmatpush1.bf16.xpose.msra.mxu0 0
      %5089 = vmatprep.subr.bf16.mxu0 0
      %5090 = vmatpush1.bf16.xpose.msra.mxu0 0
      %5091 = vmatprep.subr.bf16.mxu0 0
      %5092 = vmatpush1.bf16.xpose.msra.mxu0 0
      %5093 = vmatprep.subr.bf16.mxu0 0
      %5094 = vmatpush1.bf16.xpose.msra.mxu0 0
      %5095 = vmatprep.subr.bf16.mxu0 0
      %5096 = vmatpush1.bf16.xpose.msra.mxu0 0
      %5097 = vmatprep.subr.bf16.mxu0 0
      %5098 = vmatpush1.bf16.xpose.msra.mxu0 0
      %5099 = vmatprep.subr.bf16.mxu0 0
      %5100 = vmatpush1.bf16.xpose.msra.mxu0 0
      %5101 = vmatprep.subr.bf16.mxu0 0
      %5102 = vmatpush1.bf16.xpose.msra.mxu0 0
      %5103 = vmatprep.subr.bf16.mxu0 0
      %5104 = vmatpush1.bf16.xpose.msra.mxu0 0
      %5105 = vmatprep.mubr.bf16.mxu0 0
      %5106 = vmatmul.mubr.bf16.gmra.mrb[0].mxu0 %v5068
      %v5107 = vpop.f32.mrb[0].mxu0
      %v5108 = vadd.f32 %v1211, %v5107
      %v5109 = vpop.f32.mrb[0].mxu0
      %v5110 = vpop.f32.mrb[0].mxu0
      %v5111 = vpop.f32.mrb[0].mxu0
      %5112 = vdwg.mxu0
      %5113 = vrot.lane.b32.xlu0 %v1032, 96
      %v5114 = vpop.permute.xlu0 %5113
      %5115 = vrot.lane.b32.xlu0 %v1032, 32
      %v5116 = vpop.permute.xlu0 %5115
      %v5118 = vsel %vm1286, %v5114, 0
      %v5121 = vsel %vm1286, %v5116, 0
      %5123 = vmatprep.subr.bf16.mxu0 0
      %5124 = vmatpush1.bf16.xpose.msra.mxu0 %v5121
      %5125 = vmatprep.subr.bf16.mxu0 0
      %5126 = vmatpush1.bf16.xpose.msra.mxu0 0
      %5127 = vmatprep.subr.bf16.mxu0 0
      %5128 = vmatpush1.bf16.xpose.msra.mxu0 0
      %5129 = vmatprep.subr.bf16.mxu0 0
      %5130 = vmatpush1.bf16.xpose.msra.mxu0 0
      %5131 = vmatprep.subr.bf16.mxu0 0
      %5132 = vmatpush1.bf16.xpose.msra.mxu0 0
      %5133 = vmatprep.subr.bf16.mxu0 0
      %5134 = vmatpush1.bf16.xpose.msra.mxu0 0
      %5135 = vmatprep.subr.bf16.mxu0 0
      %5136 = vmatpush1.bf16.xpose.msra.mxu0 0
      %5137 = vmatprep.subr.bf16.mxu0 0
      %5138 = vmatpush1.bf16.xpose.msra.mxu0 0
      %5139 = vmatprep.subr.bf16.mxu0 0
      %5140 = vmatpush1.bf16.xpose.msra.mxu0 0
      %5141 = vmatprep.subr.bf16.mxu0 0
      %5142 = vmatpush1.bf16.xpose.msra.mxu0 0
      %5143 = vmatprep.subr.bf16.mxu0 0
      %5144 = vmatpush1.bf16.xpose.msra.mxu0 0
      %5145 = vmatprep.subr.bf16.mxu0 0
      %5146 = vmatpush1.bf16.xpose.msra.mxu0 0
      %5147 = vmatprep.subr.bf16.mxu0 0
      %5148 = vmatpush1.bf16.xpose.msra.mxu0 0
      %5149 = vmatprep.subr.bf16.mxu0 0
      %5150 = vmatpush1.bf16.xpose.msra.mxu0 0
      %5151 = vmatprep.subr.bf16.mxu0 0
      %5152 = vmatpush1.bf16.xpose.msra.mxu0 0
      %5153 = vmatprep.subr.bf16.mxu0 0
      %5154 = vmatpush1.bf16.xpose.msra.mxu0 0
      %5155 = vmatprep.mubr.bf16.mxu0 0
      %5156 = vmatmul.mubr.bf16.gmra.mrb[0].mxu0 %v5118
      %v5157 = vpop.f32.mrb[0].mxu0
      %v5158 = vadd.f32 %v1215, %v5157
      %v5159 = vpop.f32.mrb[0].mxu0
      %v5160 = vpop.f32.mrb[0].mxu0
      %v5161 = vpop.f32.mrb[0].mxu0
      %5162 = vdwg.mxu0
      %5163 = vrot.lane.b32.xlu0 %v1033, 96
      %v5164 = vpop.permute.xlu0 %5163
      %5165 = vrot.lane.b32.xlu0 %v1033, 32
      %v5166 = vpop.permute.xlu0 %5165
      %v5168 = vsel %vm1286, %v5164, 0
      %v5171 = vsel %vm1286, %v5166, 0
      %5173 = vmatprep.subr.bf16.mxu0 0
      %5174 = vmatpush1.bf16.xpose.msra.mxu0 %v5171
      %5175 = vmatprep.subr.bf16.mxu0 0
      %5176 = vmatpush1.bf16.xpose.msra.mxu0 0
      %5177 = vmatprep.subr.bf16.mxu0 0
      %5178 = vmatpush1.bf16.xpose.msra.mxu0 0
      %5179 = vmatprep.subr.bf16.mxu0 0
      %5180 = vmatpush1.bf16.xpose.msra.mxu0 0
      %5181 = vmatprep.subr.bf16.mxu0 0
      %5182 = vmatpush1.bf16.xpose.msra.mxu0 0
      %5183 = vmatprep.subr.bf16.mxu0 0
      %5184 = vmatpush1.bf16.xpose.msra.mxu0 0
      %5185 = vmatprep.subr.bf16.mxu0 0
      %5186 = vmatpush1.bf16.xpose.msra.mxu0 0
      %5187 = vmatprep.subr.bf16.mxu0 0
      %5188 = vmatpush1.bf16.xpose.msra.mxu0 0
      %5189 = vmatprep.subr.bf16.mxu0 0
      %5190 = vmatpush1.bf16.xpose.msra.mxu0 0
      %5191 = vmatprep.subr.bf16.mxu0 0
      %5192 = vmatpush1.bf16.xpose.msra.mxu0 0
      %5193 = vmatprep.subr.bf16.mxu0 0
      %5194 = vmatpush1.bf16.xpose.msra.mxu0 0
      %5195 = vmatprep.subr.bf16.mxu0 0
      %5196 = vmatpush1.bf16.xpose.msra.mxu0 0
      %5197 = vmatprep.subr.bf16.mxu0 0
      %5198 = vmatpush1.bf16.xpose.msra.mxu0 0
      %5199 = vmatprep.subr.bf16.mxu0 0
      %5200 = vmatpush1.bf16.xpose.msra.mxu0 0
      %5201 = vmatprep.subr.bf16.mxu0 0
      %5202 = vmatpush1.bf16.xpose.msra.mxu0 0
      %5203 = vmatprep.subr.bf16.mxu0 0
      %5204 = vmatpush1.bf16.xpose.msra.mxu0 0
      %5205 = vmatprep.mubr.bf16.mxu0 0
      %5206 = vmatmul.mubr.bf16.gmra.mrb[0].mxu0 %v5168
      %v5207 = vpop.f32.mrb[0].mxu0
      %v5208 = vadd.f32 %v1219, %v5207
      %v5209 = vpop.f32.mrb[0].mxu0
      %v5210 = vpop.f32.mrb[0].mxu0
      %v5211 = vpop.f32.mrb[0].mxu0
      %5212 = vdwg.mxu0
      %5213 = vrot.lane.b32.xlu0 %v1034, 96
      %v5214 = vpop.permute.xlu0 %5213
      %5215 = vrot.lane.b32.xlu0 %v1034, 32
      %v5216 = vpop.permute.xlu0 %5215
      %v5218 = vsel %vm1286, %v5214, 0
      %v5221 = vsel %vm1286, %v5216, 0
      %5223 = vmatprep.subr.bf16.mxu0 0
      %5224 = vmatpush1.bf16.xpose.msra.mxu0 %v5221
      %5225 = vmatprep.subr.bf16.mxu0 0
      %5226 = vmatpush1.bf16.xpose.msra.mxu0 0
      %5227 = vmatprep.subr.bf16.mxu0 0
      %5228 = vmatpush1.bf16.xpose.msra.mxu0 0
      %5229 = vmatprep.subr.bf16.mxu0 0
      %5230 = vmatpush1.bf16.xpose.msra.mxu0 0
      %5231 = vmatprep.subr.bf16.mxu0 0
      %5232 = vmatpush1.bf16.xpose.msra.mxu0 0
      %5233 = vmatprep.subr.bf16.mxu0 0
      %5234 = vmatpush1.bf16.xpose.msra.mxu0 0
      %5235 = vmatprep.subr.bf16.mxu0 0
      %5236 = vmatpush1.bf16.xpose.msra.mxu0 0
      %5237 = vmatprep.subr.bf16.mxu0 0
      %5238 = vmatpush1.bf16.xpose.msra.mxu0 0
      %5239 = vmatprep.subr.bf16.mxu0 0
      %5240 = vmatpush1.bf16.xpose.msra.mxu0 0
      %5241 = vmatprep.subr.bf16.mxu0 0
      %5242 = vmatpush1.bf16.xpose.msra.mxu0 0
      %5243 = vmatprep.subr.bf16.mxu0 0
      %5244 = vmatpush1.bf16.xpose.msra.mxu0 0
      %5245 = vmatprep.subr.bf16.mxu0 0
      %5246 = vmatpush1.bf16.xpose.msra.mxu0 0
      %5247 = vmatprep.subr.bf16.mxu0 0
      %5248 = vmatpush1.bf16.xpose.msra.mxu0 0
      %5249 = vmatprep.subr.bf16.mxu0 0
      %5250 = vmatpush1.bf16.xpose.msra.mxu0 0
      %5251 = vmatprep.subr.bf16.mxu0 0
      %5252 = vmatpush1.bf16.xpose.msra.mxu0 0
      %5253 = vmatprep.subr.bf16.mxu0 0
      %5254 = vmatpush1.bf16.xpose.msra.mxu0 0
      %5255 = vmatprep.mubr.bf16.mxu0 0
      %5256 = vmatmul.mubr.bf16.gmra.mrb[0].mxu0 %v5218
      %v5257 = vpop.f32.mrb[0].mxu0
      %v5258 = vadd.f32 %v1223, %v5257
      %v5259 = vpop.f32.mrb[0].mxu0
      %v5260 = vpop.f32.mrb[0].mxu0
      %v5261 = vpop.f32.mrb[0].mxu0
      %5262 = vdwg.mxu0
      %5263 = vrot.lane.b32.xlu0 %v1035, 96
      %v5264 = vpop.permute.xlu0 %5263
      %5265 = vrot.lane.b32.xlu0 %v1035, 32
      %v5266 = vpop.permute.xlu0 %5265
      %v5268 = vsel %vm1286, %v5264, 0
      %v5271 = vsel %vm1286, %v5266, 0
      %5273 = vmatprep.subr.bf16.mxu0 0
      %5274 = vmatpush1.bf16.xpose.msra.mxu0 %v5271
      %5275 = vmatprep.subr.bf16.mxu0 0
      %5276 = vmatpush1.bf16.xpose.msra.mxu0 0
      %5277 = vmatprep.subr.bf16.mxu0 0
      %5278 = vmatpush1.bf16.xpose.msra.mxu0 0
      %5279 = vmatprep.subr.bf16.mxu0 0
      %5280 = vmatpush1.bf16.xpose.msra.mxu0 0
      %5281 = vmatprep.subr.bf16.mxu0 0
      %5282 = vmatpush1.bf16.xpose.msra.mxu0 0
      %5283 = vmatprep.subr.bf16.mxu0 0
      %5284 = vmatpush1.bf16.xpose.msra.mxu0 0
      %5285 = vmatprep.subr.bf16.mxu0 0
      %5286 = vmatpush1.bf16.xpose.msra.mxu0 0
      %5287 = vmatprep.subr.bf16.mxu0 0
      %5288 = vmatpush1.bf16.xpose.msra.mxu0 0
      %5289 = vmatprep.subr.bf16.mxu0 0
      %5290 = vmatpush1.bf16.xpose.msra.mxu0 0
      %5291 = vmatprep.subr.bf16.mxu0 0
      %5292 = vmatpush1.bf16.xpose.msra.mxu0 0
      %5293 = vmatprep.subr.bf16.mxu0 0
      %5294 = vmatpush1.bf16.xpose.msra.mxu0 0
      %5295 = vmatprep.subr.bf16.mxu0 0
      %5296 = vmatpush1.bf16.xpose.msra.mxu0 0
      %5297 = vmatprep.subr.bf16.mxu0 0
      %5298 = vmatpush1.bf16.xpose.msra.mxu0 0
      %5299 = vmatprep.subr.bf16.mxu0 0
      %5300 = vmatpush1.bf16.xpose.msra.mxu0 0
      %5301 = vmatprep.subr.bf16.mxu0 0
      %5302 = vmatpush1.bf16.xpose.msra.mxu0 0
      %5303 = vmatprep.subr.bf16.mxu0 0
      %5304 = vmatpush1.bf16.xpose.msra.mxu0 0
      %5305 = vmatprep.mubr.bf16.mxu0 0
      %5306 = vmatmul.mubr.bf16.gmra.mrb[0].mxu0 %v5268
      %v5307 = vpop.f32.mrb[0].mxu0
      %v5308 = vadd.f32 %v1227, %v5307
      %v5309 = vpop.f32.mrb[0].mxu0
      %v5310 = vpop.f32.mrb[0].mxu0
      %v5311 = vpop.f32.mrb[0].mxu0
      %5312 = vdwg.mxu0
      %5313 = vrot.lane.b32.xlu0 %v1036, 96
      %v5314 = vpop.permute.xlu0 %5313
      %5315 = vrot.lane.b32.xlu0 %v1036, 32
      %v5316 = vpop.permute.xlu0 %5315
      %v5318 = vsel %vm1286, %v5314, 0
      %v5321 = vsel %vm1286, %v5316, 0
      %5323 = vmatprep.subr.bf16.mxu0 0
      %5324 = vmatpush1.bf16.xpose.msra.mxu0 %v5321
      %5325 = vmatprep.subr.bf16.mxu0 0
      %5326 = vmatpush1.bf16.xpose.msra.mxu0 0
      %5327 = vmatprep.subr.bf16.mxu0 0
      %5328 = vmatpush1.bf16.xpose.msra.mxu0 0
      %5329 = vmatprep.subr.bf16.mxu0 0
      %5330 = vmatpush1.bf16.xpose.msra.mxu0 0
      %5331 = vmatprep.subr.bf16.mxu0 0
      %5332 = vmatpush1.bf16.xpose.msra.mxu0 0
      %5333 = vmatprep.subr.bf16.mxu0 0
      %5334 = vmatpush1.bf16.xpose.msra.mxu0 0
      %5335 = vmatprep.subr.bf16.mxu0 0
      %5336 = vmatpush1.bf16.xpose.msra.mxu0 0
      %5337 = vmatprep.subr.bf16.mxu0 0
      %5338 = vmatpush1.bf16.xpose.msra.mxu0 0
      %5339 = vmatprep.subr.bf16.mxu0 0
      %5340 = vmatpush1.bf16.xpose.msra.mxu0 0
      %5341 = vmatprep.subr.bf16.mxu0 0
      %5342 = vmatpush1.bf16.xpose.msra.mxu0 0
      %5343 = vmatprep.subr.bf16.mxu0 0
      %5344 = vmatpush1.bf16.xpose.msra.mxu0 0
      %5345 = vmatprep.subr.bf16.mxu0 0
      %5346 = vmatpush1.bf16.xpose.msra.mxu0 0
      %5347 = vmatprep.subr.bf16.mxu0 0
      %5348 = vmatpush1.bf16.xpose.msra.mxu0 0
      %5349 = vmatprep.subr.bf16.mxu0 0
      %5350 = vmatpush1.bf16.xpose.msra.mxu0 0
      %5351 = vmatprep.subr.bf16.mxu0 0
      %5352 = vmatpush1.bf16.xpose.msra.mxu0 0
      %5353 = vmatprep.subr.bf16.mxu0 0
      %5354 = vmatpush1.bf16.xpose.msra.mxu0 0
      %5355 = vmatprep.mubr.bf16.mxu0 0
      %5356 = vmatmul.mubr.bf16.gmra.mrb[0].mxu0 %v5318
      %v5357 = vpop.f32.mrb[0].mxu0
      %v5358 = vadd.f32 %v1231, %v5357
      %v5359 = vpop.f32.mrb[0].mxu0
      %v5360 = vpop.f32.mrb[0].mxu0
      %v5361 = vpop.f32.mrb[0].mxu0
      %5362 = vdwg.mxu0
      %5363 = vrot.lane.b32.xlu0 %v1037, 96
      %v5364 = vpop.permute.xlu0 %5363
      %5365 = vrot.lane.b32.xlu0 %v1037, 32
      %v5366 = vpop.permute.xlu0 %5365
      %v5368 = vsel %vm1286, %v5364, 0
      %v5371 = vsel %vm1286, %v5366, 0
      %5373 = vmatprep.subr.bf16.mxu0 0
      %5374 = vmatpush1.bf16.xpose.msra.mxu0 %v5371
      %5375 = vmatprep.subr.bf16.mxu0 0
      %5376 = vmatpush1.bf16.xpose.msra.mxu0 0
      %5377 = vmatprep.subr.bf16.mxu0 0
      %5378 = vmatpush1.bf16.xpose.msra.mxu0 0
      %5379 = vmatprep.subr.bf16.mxu0 0
      %5380 = vmatpush1.bf16.xpose.msra.mxu0 0
      %5381 = vmatprep.subr.bf16.mxu0 0
      %5382 = vmatpush1.bf16.xpose.msra.mxu0 0
      %5383 = vmatprep.subr.bf16.mxu0 0
      %5384 = vmatpush1.bf16.xpose.msra.mxu0 0
      %5385 = vmatprep.subr.bf16.mxu0 0
      %5386 = vmatpush1.bf16.xpose.msra.mxu0 0
      %5387 = vmatprep.subr.bf16.mxu0 0
      %5388 = vmatpush1.bf16.xpose.msra.mxu0 0
      %5389 = vmatprep.subr.bf16.mxu0 0
      %5390 = vmatpush1.bf16.xpose.msra.mxu0 0
      %5391 = vmatprep.subr.bf16.mxu0 0
      %5392 = vmatpush1.bf16.xpose.msra.mxu0 0
      %5393 = vmatprep.subr.bf16.mxu0 0
      %5394 = vmatpush1.bf16.xpose.msra.mxu0 0
      %5395 = vmatprep.subr.bf16.mxu0 0
      %5396 = vmatpush1.bf16.xpose.msra.mxu0 0
      %5397 = vmatprep.subr.bf16.mxu0 0
      %5398 = vmatpush1.bf16.xpose.msra.mxu0 0
      %5399 = vmatprep.subr.bf16.mxu0 0
      %5400 = vmatpush1.bf16.xpose.msra.mxu0 0
      %5401 = vmatprep.subr.bf16.mxu0 0
      %5402 = vmatpush1.bf16.xpose.msra.mxu0 0
      %5403 = vmatprep.subr.bf16.mxu0 0
      %5404 = vmatpush1.bf16.xpose.msra.mxu0 0
      %5405 = vmatprep.mubr.bf16.mxu0 0
      %5406 = vmatmul.mubr.bf16.gmra.mrb[0].mxu0 %v5368
      %v5407 = vpop.f32.mrb[0].mxu0
      %v5408 = vadd.f32 %v1235, %v5407
      %v5409 = vpop.f32.mrb[0].mxu0
      %v5410 = vpop.f32.mrb[0].mxu0
      %v5411 = vpop.f32.mrb[0].mxu0
      %5412 = vdwg.mxu0
      %5413 = vrot.lane.b32.xlu0 %v1038, 96
      %v5414 = vpop.permute.xlu0 %5413
      %5415 = vrot.lane.b32.xlu0 %v1038, 32
      %v5416 = vpop.permute.xlu0 %5415
      %v5418 = vsel %vm1286, %v5414, 0
      %v5421 = vsel %vm1286, %v5416, 0
      %5423 = vmatprep.subr.bf16.mxu0 0
      %5424 = vmatpush1.bf16.xpose.msra.mxu0 %v5421
      %5425 = vmatprep.subr.bf16.mxu0 0
      %5426 = vmatpush1.bf16.xpose.msra.mxu0 0
      %5427 = vmatprep.subr.bf16.mxu0 0
      %5428 = vmatpush1.bf16.xpose.msra.mxu0 0
      %5429 = vmatprep.subr.bf16.mxu0 0
      %5430 = vmatpush1.bf16.xpose.msra.mxu0 0
      %5431 = vmatprep.subr.bf16.mxu0 0
      %5432 = vmatpush1.bf16.xpose.msra.mxu0 0
      %5433 = vmatprep.subr.bf16.mxu0 0
      %5434 = vmatpush1.bf16.xpose.msra.mxu0 0
      %5435 = vmatprep.subr.bf16.mxu0 0
      %5436 = vmatpush1.bf16.xpose.msra.mxu0 0
      %5437 = vmatprep.subr.bf16.mxu0 0
      %5438 = vmatpush1.bf16.xpose.msra.mxu0 0
      %5439 = vmatprep.subr.bf16.mxu0 0
      %5440 = vmatpush1.bf16.xpose.msra.mxu0 0
      %5441 = vmatprep.subr.bf16.mxu0 0
      %5442 = vmatpush1.bf16.xpose.msra.mxu0 0
      %5443 = vmatprep.subr.bf16.mxu0 0
      %5444 = vmatpush1.bf16.xpose.msra.mxu0 0
      %5445 = vmatprep.subr.bf16.mxu0 0
      %5446 = vmatpush1.bf16.xpose.msra.mxu0 0
      %5447 = vmatprep.subr.bf16.mxu0 0
      %5448 = vmatpush1.bf16.xpose.msra.mxu0 0
      %5449 = vmatprep.subr.bf16.mxu0 0
      %5450 = vmatpush1.bf16.xpose.msra.mxu0 0
      %5451 = vmatprep.subr.bf16.mxu0 0
      %5452 = vmatpush1.bf16.xpose.msra.mxu0 0
      %5453 = vmatprep.subr.bf16.mxu0 0
      %5454 = vmatpush1.bf16.xpose.msra.mxu0 0
      %5455 = vmatprep.mubr.bf16.mxu0 0
      %5456 = vmatmul.mubr.bf16.gmra.mrb[0].mxu0 %v5418
      %v5457 = vpop.f32.mrb[0].mxu0
      %v5458 = vadd.f32 %v1239, %v5457
      %v5459 = vpop.f32.mrb[0].mxu0
      %v5460 = vpop.f32.mrb[0].mxu0
      %v5461 = vpop.f32.mrb[0].mxu0
      %5462 = vdwg.mxu0
      %5463 = vrot.lane.b32.xlu0 %v1039, 96
      %v5464 = vpop.permute.xlu0 %5463
      %5465 = vrot.lane.b32.xlu0 %v1039, 32
      %v5466 = vpop.permute.xlu0 %5465
      %v5468 = vsel %vm1286, %v5464, 0
      %v5471 = vsel %vm1286, %v5466, 0
      %5473 = vmatprep.subr.bf16.mxu0 0
      %5474 = vmatpush1.bf16.xpose.msra.mxu0 %v5471
      %5475 = vmatprep.subr.bf16.mxu0 0
      %5476 = vmatpush1.bf16.xpose.msra.mxu0 0
      %5477 = vmatprep.subr.bf16.mxu0 0
      %5478 = vmatpush1.bf16.xpose.msra.mxu0 0
      %5479 = vmatprep.subr.bf16.mxu0 0
      %5480 = vmatpush1.bf16.xpose.msra.mxu0 0
      %5481 = vmatprep.subr.bf16.mxu0 0
      %5482 = vmatpush1.bf16.xpose.msra.mxu0 0
      %5483 = vmatprep.subr.bf16.mxu0 0
      %5484 = vmatpush1.bf16.xpose.msra.mxu0 0
      %5485 = vmatprep.subr.bf16.mxu0 0
      %5486 = vmatpush1.bf16.xpose.msra.mxu0 0
      %5487 = vmatprep.subr.bf16.mxu0 0
      %5488 = vmatpush1.bf16.xpose.msra.mxu0 0
      %5489 = vmatprep.subr.bf16.mxu0 0
      %5490 = vmatpush1.bf16.xpose.msra.mxu0 0
      %5491 = vmatprep.subr.bf16.mxu0 0
      %5492 = vmatpush1.bf16.xpose.msra.mxu0 0
      %5493 = vmatprep.subr.bf16.mxu0 0
      %5494 = vmatpush1.bf16.xpose.msra.mxu0 0
      %5495 = vmatprep.subr.bf16.mxu0 0
      %5496 = vmatpush1.bf16.xpose.msra.mxu0 0
      %5497 = vmatprep.subr.bf16.mxu0 0
      %5498 = vmatpush1.bf16.xpose.msra.mxu0 0
      %5499 = vmatprep.subr.bf16.mxu0 0
      %5500 = vmatpush1.bf16.xpose.msra.mxu0 0
      %5501 = vmatprep.subr.bf16.mxu0 0
      %5502 = vmatpush1.bf16.xpose.msra.mxu0 0
      %5503 = vmatprep.subr.bf16.mxu0 0
      %5504 = vmatpush1.bf16.xpose.msra.mxu0 0
      %5505 = vmatprep.mubr.bf16.mxu0 0
      %5506 = vmatmul.mubr.bf16.gmra.mrb[0].mxu0 %v5468
      %v5507 = vpop.f32.mrb[0].mxu0
      %v5508 = vadd.f32 %v1243, %v5507
      %v5509 = vpop.f32.mrb[0].mxu0
      %v5510 = vpop.f32.mrb[0].mxu0
      %v5511 = vpop.f32.mrb[0].mxu0
      %5512 = vdwg.mxu0
      %5513 = vrot.lane.b32.xlu0 %v1040, 96
      %v5514 = vpop.permute.xlu0 %5513
      %5515 = vrot.lane.b32.xlu0 %v1040, 32
      %v5516 = vpop.permute.xlu0 %5515
      %v5518 = vsel %vm1286, %v5514, 0
      %v5521 = vsel %vm1286, %v5516, 0
      %5523 = vmatprep.subr.bf16.mxu0 0
      %5524 = vmatpush1.bf16.xpose.msra.mxu0 %v5521
      %5525 = vmatprep.subr.bf16.mxu0 0
      %5526 = vmatpush1.bf16.xpose.msra.mxu0 0
      %5527 = vmatprep.subr.bf16.mxu0 0
      %5528 = vmatpush1.bf16.xpose.msra.mxu0 0
      %5529 = vmatprep.subr.bf16.mxu0 0
      %5530 = vmatpush1.bf16.xpose.msra.mxu0 0
      %5531 = vmatprep.subr.bf16.mxu0 0
      %5532 = vmatpush1.bf16.xpose.msra.mxu0 0
      %5533 = vmatprep.subr.bf16.mxu0 0
      %5534 = vmatpush1.bf16.xpose.msra.mxu0 0
      %5535 = vmatprep.subr.bf16.mxu0 0
      %5536 = vmatpush1.bf16.xpose.msra.mxu0 0
      %5537 = vmatprep.subr.bf16.mxu0 0
      %5538 = vmatpush1.bf16.xpose.msra.mxu0 0
      %5539 = vmatprep.subr.bf16.mxu0 0
      %5540 = vmatpush1.bf16.xpose.msra.mxu0 0
      %5541 = vmatprep.subr.bf16.mxu0 0
      %5542 = vmatpush1.bf16.xpose.msra.mxu0 0
      %5543 = vmatprep.subr.bf16.mxu0 0
      %5544 = vmatpush1.bf16.xpose.msra.mxu0 0
      %5545 = vmatprep.subr.bf16.mxu0 0
      %5546 = vmatpush1.bf16.xpose.msra.mxu0 0
      %5547 = vmatprep.subr.bf16.mxu0 0
      %5548 = vmatpush1.bf16.xpose.msra.mxu0 0
      %5549 = vmatprep.subr.bf16.mxu0 0
      %5550 = vmatpush1.bf16.xpose.msra.mxu0 0
      %5551 = vmatprep.subr.bf16.mxu0 0
      %5552 = vmatpush1.bf16.xpose.msra.mxu0 0
      %5553 = vmatprep.subr.bf16.mxu0 0
      %5554 = vmatpush1.bf16.xpose.msra.mxu0 0
      %5555 = vmatprep.mubr.bf16.mxu0 0
      %5556 = vmatmul.mubr.bf16.gmra.mrb[0].mxu0 %v5518
      %v5557 = vpop.f32.mrb[0].mxu0
      %v5558 = vadd.f32 %v1247, %v5557
      %v5559 = vpop.f32.mrb[0].mxu0
      %v5560 = vpop.f32.mrb[0].mxu0
      %v5561 = vpop.f32.mrb[0].mxu0
      %5562 = vdwg.mxu0
      %5563 = vrot.lane.b32.xlu0 %v1041, 96
      %v5564 = vpop.permute.xlu0 %5563
      %5565 = vrot.lane.b32.xlu0 %v1041, 32
      %v5566 = vpop.permute.xlu0 %5565
      %v5568 = vsel %vm1286, %v5564, 0
      %v5571 = vsel %vm1286, %v5566, 0
      %5573 = vmatprep.subr.bf16.mxu0 0
      %5574 = vmatpush1.bf16.xpose.msra.mxu0 %v5571
      %5575 = vmatprep.subr.bf16.mxu0 0
      %5576 = vmatpush1.bf16.xpose.msra.mxu0 0
      %5577 = vmatprep.subr.bf16.mxu0 0
      %5578 = vmatpush1.bf16.xpose.msra.mxu0 0
      %5579 = vmatprep.subr.bf16.mxu0 0
      %5580 = vmatpush1.bf16.xpose.msra.mxu0 0
      %5581 = vmatprep.subr.bf16.mxu0 0
      %5582 = vmatpush1.bf16.xpose.msra.mxu0 0
      %5583 = vmatprep.subr.bf16.mxu0 0
      %5584 = vmatpush1.bf16.xpose.msra.mxu0 0
      %5585 = vmatprep.subr.bf16.mxu0 0
      %5586 = vmatpush1.bf16.xpose.msra.mxu0 0
      %5587 = vmatprep.subr.bf16.mxu0 0
      %5588 = vmatpush1.bf16.xpose.msra.mxu0 0
      %5589 = vmatprep.subr.bf16.mxu0 0
      %5590 = vmatpush1.bf16.xpose.msra.mxu0 0
      %5591 = vmatprep.subr.bf16.mxu0 0
      %5592 = vmatpush1.bf16.xpose.msra.mxu0 0
      %5593 = vmatprep.subr.bf16.mxu0 0
      %5594 = vmatpush1.bf16.xpose.msra.mxu0 0
      %5595 = vmatprep.subr.bf16.mxu0 0
      %5596 = vmatpush1.bf16.xpose.msra.mxu0 0
      %5597 = vmatprep.subr.bf16.mxu0 0
      %5598 = vmatpush1.bf16.xpose.msra.mxu0 0
      %5599 = vmatprep.subr.bf16.mxu0 0
      %5600 = vmatpush1.bf16.xpose.msra.mxu0 0
      %5601 = vmatprep.subr.bf16.mxu0 0
      %5602 = vmatpush1.bf16.xpose.msra.mxu0 0
      %5603 = vmatprep.subr.bf16.mxu0 0
      %5604 = vmatpush1.bf16.xpose.msra.mxu0 0
      %5605 = vmatprep.mubr.bf16.mxu0 0
      %5606 = vmatmul.mubr.bf16.gmra.mrb[0].mxu0 %v5568
      %v5607 = vpop.f32.mrb[0].mxu0
      %v5608 = vadd.f32 %v1251, %v5607
      %v5609 = vpop.f32.mrb[0].mxu0
      %v5610 = vpop.f32.mrb[0].mxu0
      %v5611 = vpop.f32.mrb[0].mxu0
      %5612 = vdwg.mxu0
      %5613 = vrot.lane.b32.xlu0 %v1042, 96
      %v5614 = vpop.permute.xlu0 %5613
      %5615 = vrot.lane.b32.xlu0 %v1042, 32
      %v5616 = vpop.permute.xlu0 %5615
      %v5618 = vsel %vm1286, %v5614, 0
      %v5621 = vsel %vm1286, %v5616, 0
      %5623 = vmatprep.subr.bf16.mxu0 0
      %5624 = vmatpush1.bf16.xpose.msra.mxu0 %v5621
      %5625 = vmatprep.subr.bf16.mxu0 0
      %5626 = vmatpush1.bf16.xpose.msra.mxu0 0
      %5627 = vmatprep.subr.bf16.mxu0 0
      %5628 = vmatpush1.bf16.xpose.msra.mxu0 0
      %5629 = vmatprep.subr.bf16.mxu0 0
      %5630 = vmatpush1.bf16.xpose.msra.mxu0 0
      %5631 = vmatprep.subr.bf16.mxu0 0
      %5632 = vmatpush1.bf16.xpose.msra.mxu0 0
      %5633 = vmatprep.subr.bf16.mxu0 0
      %5634 = vmatpush1.bf16.xpose.msra.mxu0 0
      %5635 = vmatprep.subr.bf16.mxu0 0
      %5636 = vmatpush1.bf16.xpose.msra.mxu0 0
      %5637 = vmatprep.subr.bf16.mxu0 0
      %5638 = vmatpush1.bf16.xpose.msra.mxu0 0
      %5639 = vmatprep.subr.bf16.mxu0 0
      %5640 = vmatpush1.bf16.xpose.msra.mxu0 0
      %5641 = vmatprep.subr.bf16.mxu0 0
      %5642 = vmatpush1.bf16.xpose.msra.mxu0 0
      %5643 = vmatprep.subr.bf16.mxu0 0
      %5644 = vmatpush1.bf16.xpose.msra.mxu0 0
      %5645 = vmatprep.subr.bf16.mxu0 0
      %5646 = vmatpush1.bf16.xpose.msra.mxu0 0
      %5647 = vmatprep.subr.bf16.mxu0 0
      %5648 = vmatpush1.bf16.xpose.msra.mxu0 0
      %5649 = vmatprep.subr.bf16.mxu0 0
      %5650 = vmatpush1.bf16.xpose.msra.mxu0 0
      %5651 = vmatprep.subr.bf16.mxu0 0
      %5652 = vmatpush1.bf16.xpose.msra.mxu0 0
      %5653 = vmatprep.subr.bf16.mxu0 0
      %5654 = vmatpush1.bf16.xpose.msra.mxu0 0
      %5655 = vmatprep.mubr.bf16.mxu0 0
      %5656 = vmatmul.mubr.bf16.gmra.mrb[0].mxu0 %v5618
      %v5657 = vpop.f32.mrb[0].mxu0
      %v5658 = vadd.f32 %v1255, %v5657
      %v5659 = vpop.f32.mrb[0].mxu0
      %v5660 = vpop.f32.mrb[0].mxu0
      %v5661 = vpop.f32.mrb[0].mxu0
      %5662 = vdwg.mxu0
      %5663 = vrot.lane.b32.xlu0 %v1043, 96
      %v5664 = vpop.permute.xlu0 %5663
      %5665 = vrot.lane.b32.xlu0 %v1043, 32
      %v5666 = vpop.permute.xlu0 %5665
      %v5668 = vsel %vm1286, %v5664, 0
      %v5671 = vsel %vm1286, %v5666, 0
      %5673 = vmatprep.subr.bf16.mxu0 0
      %5674 = vmatpush1.bf16.xpose.msra.mxu0 %v5671
      %5675 = vmatprep.subr.bf16.mxu0 0
      %5676 = vmatpush1.bf16.xpose.msra.mxu0 0
      %5677 = vmatprep.subr.bf16.mxu0 0
      %5678 = vmatpush1.bf16.xpose.msra.mxu0 0
      %5679 = vmatprep.subr.bf16.mxu0 0
      %5680 = vmatpush1.bf16.xpose.msra.mxu0 0
      %5681 = vmatprep.subr.bf16.mxu0 0
      %5682 = vmatpush1.bf16.xpose.msra.mxu0 0
      %5683 = vmatprep.subr.bf16.mxu0 0
      %5684 = vmatpush1.bf16.xpose.msra.mxu0 0
      %5685 = vmatprep.subr.bf16.mxu0 0
      %5686 = vmatpush1.bf16.xpose.msra.mxu0 0
      %5687 = vmatprep.subr.bf16.mxu0 0
      %5688 = vmatpush1.bf16.xpose.msra.mxu0 0
      %5689 = vmatprep.subr.bf16.mxu0 0
      %5690 = vmatpush1.bf16.xpose.msra.mxu0 0
      %5691 = vmatprep.subr.bf16.mxu0 0
      %5692 = vmatpush1.bf16.xpose.msra.mxu0 0
      %5693 = vmatprep.subr.bf16.mxu0 0
      %5694 = vmatpush1.bf16.xpose.msra.mxu0 0
      %5695 = vmatprep.subr.bf16.mxu0 0
      %5696 = vmatpush1.bf16.xpose.msra.mxu0 0
      %5697 = vmatprep.subr.bf16.mxu0 0
      %5698 = vmatpush1.bf16.xpose.msra.mxu0 0
      %5699 = vmatprep.subr.bf16.mxu0 0
      %5700 = vmatpush1.bf16.xpose.msra.mxu0 0
      %5701 = vmatprep.subr.bf16.mxu0 0
      %5702 = vmatpush1.bf16.xpose.msra.mxu0 0
      %5703 = vmatprep.subr.bf16.mxu0 0
      %5704 = vmatpush1.bf16.xpose.msra.mxu0 0
      %5705 = vmatprep.mubr.bf16.mxu0 0
      %5706 = vmatmul.mubr.bf16.gmra.mrb[0].mxu0 %v5668
      %v5707 = vpop.f32.mrb[0].mxu0
      %v5708 = vadd.f32 %v1259, %v5707
      %v5709 = vpop.f32.mrb[0].mxu0
      %v5710 = vpop.f32.mrb[0].mxu0
      %v5711 = vpop.f32.mrb[0].mxu0
      %5712 = vdwg.mxu0
      %5713 = vrot.lane.b32.xlu0 %v1044, 96
      %v5714 = vpop.permute.xlu0 %5713
      %5715 = vrot.lane.b32.xlu0 %v1044, 32
      %v5716 = vpop.permute.xlu0 %5715
      %v5718 = vsel %vm1286, %v5714, 0
      %v5721 = vsel %vm1286, %v5716, 0
      %5723 = vmatprep.subr.bf16.mxu0 0
      %5724 = vmatpush1.bf16.xpose.msra.mxu0 %v5721
      %5725 = vmatprep.subr.bf16.mxu0 0
      %5726 = vmatpush1.bf16.xpose.msra.mxu0 0
      %5727 = vmatprep.subr.bf16.mxu0 0
      %5728 = vmatpush1.bf16.xpose.msra.mxu0 0
      %5729 = vmatprep.subr.bf16.mxu0 0
      %5730 = vmatpush1.bf16.xpose.msra.mxu0 0
      %5731 = vmatprep.subr.bf16.mxu0 0
      %5732 = vmatpush1.bf16.xpose.msra.mxu0 0
      %5733 = vmatprep.subr.bf16.mxu0 0
      %5734 = vmatpush1.bf16.xpose.msra.mxu0 0
      %5735 = vmatprep.subr.bf16.mxu0 0
      %5736 = vmatpush1.bf16.xpose.msra.mxu0 0
      %5737 = vmatprep.subr.bf16.mxu0 0
      %5738 = vmatpush1.bf16.xpose.msra.mxu0 0
      %5739 = vmatprep.subr.bf16.mxu0 0
      %5740 = vmatpush1.bf16.xpose.msra.mxu0 0
      %5741 = vmatprep.subr.bf16.mxu0 0
      %5742 = vmatpush1.bf16.xpose.msra.mxu0 0
      %5743 = vmatprep.subr.bf16.mxu0 0
      %5744 = vmatpush1.bf16.xpose.msra.mxu0 0
      %5745 = vmatprep.subr.bf16.mxu0 0
      %5746 = vmatpush1.bf16.xpose.msra.mxu0 0
      %5747 = vmatprep.subr.bf16.mxu0 0
      %5748 = vmatpush1.bf16.xpose.msra.mxu0 0
      %5749 = vmatprep.subr.bf16.mxu0 0
      %5750 = vmatpush1.bf16.xpose.msra.mxu0 0
      %5751 = vmatprep.subr.bf16.mxu0 0
      %5752 = vmatpush1.bf16.xpose.msra.mxu0 0
      %5753 = vmatprep.subr.bf16.mxu0 0
      %5754 = vmatpush1.bf16.xpose.msra.mxu0 0
      %5755 = vmatprep.mubr.bf16.mxu0 0
      %5756 = vmatmul.mubr.bf16.gmra.mrb[0].mxu0 %v5718
      %v5757 = vpop.f32.mrb[0].mxu0
      %v5758 = vadd.f32 %v1263, %v5757
      %v5759 = vpop.f32.mrb[0].mxu0
      %v5760 = vpop.f32.mrb[0].mxu0
      %v5761 = vpop.f32.mrb[0].mxu0
      %5762 = vdwg.mxu0
      %5763 = vrot.lane.b32.xlu0 %v1045, 96
      %v5764 = vpop.permute.xlu0 %5763
      %5765 = vrot.lane.b32.xlu0 %v1045, 32
      %v5766 = vpop.permute.xlu0 %5765
      %v5768 = vsel %vm1286, %v5764, 0
      %v5771 = vsel %vm1286, %v5766, 0
      %5773 = vmatprep.subr.bf16.mxu0 0
      %5774 = vmatpush1.bf16.xpose.msra.mxu0 %v5771
      %5775 = vmatprep.subr.bf16.mxu0 0
      %5776 = vmatpush1.bf16.xpose.msra.mxu0 0
      %5777 = vmatprep.subr.bf16.mxu0 0
      %5778 = vmatpush1.bf16.xpose.msra.mxu0 0
      %5779 = vmatprep.subr.bf16.mxu0 0
      %5780 = vmatpush1.bf16.xpose.msra.mxu0 0
      %5781 = vmatprep.subr.bf16.mxu0 0
      %5782 = vmatpush1.bf16.xpose.msra.mxu0 0
      %5783 = vmatprep.subr.bf16.mxu0 0
      %5784 = vmatpush1.bf16.xpose.msra.mxu0 0
      %5785 = vmatprep.subr.bf16.mxu0 0
      %5786 = vmatpush1.bf16.xpose.msra.mxu0 0
      %5787 = vmatprep.subr.bf16.mxu0 0
      %5788 = vmatpush1.bf16.xpose.msra.mxu0 0
      %5789 = vmatprep.subr.bf16.mxu0 0
      %5790 = vmatpush1.bf16.xpose.msra.mxu0 0
      %5791 = vmatprep.subr.bf16.mxu0 0
      %5792 = vmatpush1.bf16.xpose.msra.mxu0 0
      %5793 = vmatprep.subr.bf16.mxu0 0
      %5794 = vmatpush1.bf16.xpose.msra.mxu0 0
      %5795 = vmatprep.subr.bf16.mxu0 0
      %5796 = vmatpush1.bf16.xpose.msra.mxu0 0
      %5797 = vmatprep.subr.bf16.mxu0 0
      %5798 = vmatpush1.bf16.xpose.msra.mxu0 0
      %5799 = vmatprep.subr.bf16.mxu0 0
      %5800 = vmatpush1.bf16.xpose.msra.mxu0 0
      %5801 = vmatprep.subr.bf16.mxu0 0
      %5802 = vmatpush1.bf16.xpose.msra.mxu0 0
      %5803 = vmatprep.subr.bf16.mxu0 0
      %5804 = vmatpush1.bf16.xpose.msra.mxu0 0
      %5805 = vmatprep.mubr.bf16.mxu0 0
      %5806 = vmatmul.mubr.bf16.gmra.mrb[0].mxu0 %v5768
      %v5807 = vpop.f32.mrb[0].mxu0
      %v5808 = vadd.f32 %v1267, %v5807
      %v5809 = vpop.f32.mrb[0].mxu0
      %v5810 = vpop.f32.mrb[0].mxu0
      %v5811 = vpop.f32.mrb[0].mxu0
      %5812 = vdwg.mxu0
      %v5813 = vsel %vm2053, %v5058, -inf
      %5814 = vmax.xlane.f32.xlu0 %v5813
      %v5815 = vpop.xlane.xlu0 %5814
      %v5816 = vsel %vm2053, %v5108, -inf
      %5817 = vmax.xlane.f32.xlu0 %v5816
      %v5818 = vpop.xlane.xlu0 %5817
      %v5819 = vsel %vm2053, %v5158, -inf
      %5820 = vmax.xlane.f32.xlu0 %v5819
      %v5821 = vpop.xlane.xlu0 %5820
      %v5822 = vsel %vm2053, %v5208, -inf
      %5823 = vmax.xlane.f32.xlu0 %v5822
      %v5824 = vpop.xlane.xlu0 %5823
      %v5825 = vsel %vm2053, %v5258, -inf
      %5826 = vmax.xlane.f32.xlu0 %v5825
      %v5827 = vpop.xlane.xlu0 %5826
      %v5828 = vsel %vm2053, %v5308, -inf
      %5829 = vmax.xlane.f32.xlu0 %v5828
      %v5830 = vpop.xlane.xlu0 %5829
      %v5831 = vsel %vm2053, %v5358, -inf
      %5832 = vmax.xlane.f32.xlu0 %v5831
      %v5833 = vpop.xlane.xlu0 %5832
      %v5834 = vsel %vm2053, %v5408, -inf
      %5835 = vmax.xlane.f32.xlu0 %v5834
      %v5836 = vpop.xlane.xlu0 %5835
      %v5837 = vsel %vm2053, %v5458, -inf
      %5838 = vmax.xlane.f32.xlu0 %v5837
      %v5839 = vpop.xlane.xlu0 %5838
      %v5840 = vsel %vm2053, %v5508, -inf
      %5841 = vmax.xlane.f32.xlu0 %v5840
      %v5842 = vpop.xlane.xlu0 %5841
      %v5843 = vsel %vm2053, %v5558, -inf
      %5844 = vmax.xlane.f32.xlu0 %v5843
      %v5845 = vpop.xlane.xlu0 %5844
      %v5846 = vsel %vm2053, %v5608, -inf
      %5847 = vmax.xlane.f32.xlu0 %v5846
      %v5848 = vpop.xlane.xlu0 %5847
      %v5849 = vsel %vm2053, %v5658, -inf
      %5850 = vmax.xlane.f32.xlu0 %v5849
      %v5851 = vpop.xlane.xlu0 %5850
      %v5852 = vsel %vm2053, %v5708, -inf
      %5853 = vmax.xlane.f32.xlu0 %v5852
      %v5854 = vpop.xlane.xlu0 %5853
      %v5855 = vsel %vm2053, %v5758, -inf
      %5856 = vmax.xlane.f32.xlu0 %v5855
      %v5857 = vpop.xlane.xlu0 %5856
      %v5858 = vsel %vm2053, %v5808, -inf
      %5859 = vmax.xlane.f32.xlu0 %v5858
      %v5860 = vpop.xlane.xlu0 %5859
      %v5861 = vsub.f32 %v5058, %v5815
      %v5862 = vsub.f32 %v5108, %v5818
      %v5863 = vsub.f32 %v5158, %v5821
      %v5864 = vsub.f32 %v5208, %v5824
      %v5865 = vsub.f32 %v5258, %v5827
      %v5866 = vsub.f32 %v5308, %v5830
      %v5867 = vsub.f32 %v5358, %v5833
      %v5868 = vsub.f32 %v5408, %v5836
      %v5869 = vsub.f32 %v5458, %v5839
      %v5870 = vsub.f32 %v5508, %v5842
      %v5871 = vsub.f32 %v5558, %v5845
      %v5872 = vsub.f32 %v5608, %v5848
      %v5873 = vsub.f32 %v5658, %v5851
      %v5874 = vsub.f32 %v5708, %v5854
      %v5875 = vsub.f32 %v5758, %v5857
      %v5876 = vsub.f32 %v5808, %v5860
      %v5877 = vmul.f32 %v5861, 1.442695
      %v5878 = vpow.pop %v5877
      %v5879 = vmul.f32 %v5862, 1.442695
      %v5880 = vpow.pop %v5879
      %v5881 = vmul.f32 %v5863, 1.442695
      %v5882 = vpow.pop %v5881
      %v5883 = vmul.f32 %v5864, 1.442695
      %v5884 = vpow.pop %v5883
      %v5885 = vmul.f32 %v5865, 1.442695
      %v5886 = vpow.pop %v5885
      %v5887 = vmul.f32 %v5866, 1.442695
      %v5888 = vpow.pop %v5887
      %v5889 = vmul.f32 %v5867, 1.442695
      %v5890 = vpow.pop %v5889
      %v5891 = vmul.f32 %v5868, 1.442695
      %v5892 = vpow.pop %v5891
      %v5893 = vmul.f32 %v5869, 1.442695
      %v5894 = vpow.pop %v5893
      %v5895 = vmul.f32 %v5870, 1.442695
      %v5896 = vpow.pop %v5895
      %v5897 = vmul.f32 %v5871, 1.442695
      %v5898 = vpow.pop %v5897
      %v5899 = vmul.f32 %v5872, 1.442695
      %v5900 = vpow.pop %v5899
      %v5901 = vmul.f32 %v5873, 1.442695
      %v5902 = vpow.pop %v5901
      %v5903 = vmul.f32 %v5874, 1.442695
      %v5904 = vpow.pop %v5903
      %v5905 = vmul.f32 %v5875, 1.442695
      %v5906 = vpow.pop %v5905
      %v5907 = vmul.f32 %v5876, 1.442695
      %v5908 = vpow.pop %v5907
      %v5909 = vsel %vm2053, %v5878, 0.0
      %5910 = vadd.xlane.f32.xlu0 %v5909
      %v5911 = vpop.xlane.xlu0 %5910
      %v5912 = vsel %vm2053, %v5880, 0.0
      %5913 = vadd.xlane.f32.xlu0 %v5912
      %v5914 = vpop.xlane.xlu0 %5913
      %v5915 = vsel %vm2053, %v5882, 0.0
      %5916 = vadd.xlane.f32.xlu0 %v5915
      %v5917 = vpop.xlane.xlu0 %5916
      %v5918 = vsel %vm2053, %v5884, 0.0
      %5919 = vadd.xlane.f32.xlu0 %v5918
      %v5920 = vpop.xlane.xlu0 %5919
      %v5921 = vsel %vm2053, %v5886, 0.0
      %5922 = vadd.xlane.f32.xlu0 %v5921
      %v5923 = vpop.xlane.xlu0 %5922
      %v5924 = vsel %vm2053, %v5888, 0.0
      %5925 = vadd.xlane.f32.xlu0 %v5924
      %v5926 = vpop.xlane.xlu0 %5925
      %v5927 = vsel %vm2053, %v5890, 0.0
      %5928 = vadd.xlane.f32.xlu0 %v5927
      %v5929 = vpop.xlane.xlu0 %5928
      %v5930 = vsel %vm2053, %v5892, 0.0
      %5931 = vadd.xlane.f32.xlu0 %v5930
      %v5932 = vpop.xlane.xlu0 %5931
      %v5933 = vsel %vm2053, %v5894, 0.0
      %5934 = vadd.xlane.f32.xlu0 %v5933
      %v5935 = vpop.xlane.xlu0 %5934
      %v5936 = vsel %vm2053, %v5896, 0.0
      %5937 = vadd.xlane.f32.xlu0 %v5936
      %v5938 = vpop.xlane.xlu0 %5937
      %v5939 = vsel %vm2053, %v5898, 0.0
      %5940 = vadd.xlane.f32.xlu0 %v5939
      %v5941 = vpop.xlane.xlu0 %5940
      %v5942 = vsel %vm2053, %v5900, 0.0
      %5943 = vadd.xlane.f32.xlu0 %v5942
      %v5944 = vpop.xlane.xlu0 %5943
      %v5945 = vsel %vm2053, %v5902, 0.0
      %5946 = vadd.xlane.f32.xlu0 %v5945
      %v5947 = vpop.xlane.xlu0 %5946
      %v5948 = vsel %vm2053, %v5904, 0.0
      %5949 = vadd.xlane.f32.xlu0 %v5948
      %v5950 = vpop.xlane.xlu0 %5949
      %v5951 = vsel %vm2053, %v5906, 0.0
      %5952 = vadd.xlane.f32.xlu0 %v5951
      %v5953 = vpop.xlane.xlu0 %5952
      %v5954 = vsel %vm2053, %v5908, 0.0
      %5955 = vadd.xlane.f32.xlu0 %v5954
      %v5956 = vpop.xlane.xlu0 %5955
      %v5957 = vrcp.pop %v5911
      %v5958 = vrcp.pop %v5914
      %v5959 = vrcp.pop %v5917
      %v5960 = vrcp.pop %v5920
      %v5961 = vrcp.pop %v5923
      %v5962 = vrcp.pop %v5926
      %v5963 = vrcp.pop %v5929
      %v5964 = vrcp.pop %v5932
      %v5965 = vrcp.pop %v5935
      %v5966 = vrcp.pop %v5938
      %v5967 = vrcp.pop %v5941
      %v5968 = vrcp.pop %v5944
      %v5969 = vrcp.pop %v5947
      %v5970 = vrcp.pop %v5950
      %v5971 = vrcp.pop %v5953
      %v5972 = vrcp.pop %v5956
      %v5973 = vmul.f32 %v5878, %v5957
      %v5974 = vmul.f32 %v5880, %v5958
      %v5975 = vmul.f32 %v5882, %v5959
      %v5976 = vmul.f32 %v5884, %v5960
      %v5977 = vmul.f32 %v5886, %v5961
      %v5978 = vmul.f32 %v5888, %v5962
      %v5979 = vmul.f32 %v5890, %v5963
      %v5980 = vmul.f32 %v5892, %v5964
      %v5981 = vmul.f32 %v5894, %v5965
      %v5982 = vmul.f32 %v5896, %v5966
      %v5983 = vmul.f32 %v5898, %v5967
      %v5984 = vmul.f32 %v5900, %v5968
      %v5985 = vmul.f32 %v5902, %v5969
      %v5986 = vmul.f32 %v5904, %v5970
      %v5987 = vmul.f32 %v5906, %v5971
      %v5988 = vmul.f32 %v5908, %v5972
      %v5989 = vpack.c.bf16 %v5973, %v5973
      %v5990 = vpack.c.bf16 %v5974, %v5974
      %v5991 = vpack.c.bf16 %v5975, %v5975
      %v5992 = vpack.c.bf16 %v5976, %v5976
      %v5993 = vpack.c.bf16 %v5977, %v5977
      %v5994 = vpack.c.bf16 %v5978, %v5978
      %v5995 = vpack.c.bf16 %v5979, %v5979
      %v5996 = vpack.c.bf16 %v5980, %v5980
      %v5997 = vpack.c.bf16 %v5981, %v5981
      %v5998 = vpack.c.bf16 %v5982, %v5982
      %v5999 = vpack.c.bf16 %v5983, %v5983
      %v6000 = vpack.c.bf16 %v5984, %v5984
      %v6001 = vpack.c.bf16 %v5985, %v5985
      %v6002 = vpack.c.bf16 %v5986, %v5986
      %v6003 = vpack.c.bf16 %v5987, %v5987
      %v6004 = vpack.c.bf16 %v5988, %v5988
      %6005 = vrot.lane.b32.xlu0 %v1078, 96
      %v6006 = vpop.permute.xlu0 %6005
      %v6008 = vsel %vm2053, %v5989, 0
      %v6011 = vsel %vm2249, %v6006, 0
      %6013 = vmatprep.subr.bf16.mxu0 0
      %6014 = vmatpush1.bf16.msra.mxu0 %v6011
      %6015 = vmatprep.subr.bf16.mxu0 0
      %6016 = vmatpush1.bf16.msra.mxu0 0
      %6017 = vmatprep.subr.bf16.mxu0 0
      %6018 = vmatpush1.bf16.msra.mxu0 0
      %6019 = vmatprep.subr.bf16.mxu0 0
      %6020 = vmatpush1.bf16.msra.mxu0 0
      %6021 = vmatprep.subr.bf16.mxu0 0
      %6022 = vmatpush1.bf16.msra.mxu0 0
      %6023 = vmatprep.subr.bf16.mxu0 0
      %6024 = vmatpush1.bf16.msra.mxu0 0
      %6025 = vmatprep.subr.bf16.mxu0 0
      %6026 = vmatpush1.bf16.msra.mxu0 0
      %6027 = vmatprep.subr.bf16.mxu0 0
      %6028 = vmatpush1.bf16.msra.mxu0 0
      %6029 = vmatprep.subr.bf16.mxu0 0
      %6030 = vmatpush1.bf16.msra.mxu0 0
      %6031 = vmatprep.subr.bf16.mxu0 0
      %6032 = vmatpush1.bf16.msra.mxu0 0
      %6033 = vmatprep.subr.bf16.mxu0 0
      %6034 = vmatpush1.bf16.msra.mxu0 0
      %6035 = vmatprep.subr.bf16.mxu0 0
      %6036 = vmatpush1.bf16.msra.mxu0 0
      %6037 = vmatprep.subr.bf16.mxu0 0
      %6038 = vmatpush1.bf16.msra.mxu0 0
      %6039 = vmatprep.subr.bf16.mxu0 0
      %6040 = vmatpush1.bf16.msra.mxu0 0
      %6041 = vmatprep.subr.bf16.mxu0 0
      %6042 = vmatpush1.bf16.msra.mxu0 0
      %6043 = vmatprep.subr.bf16.mxu0 0
      %6044 = vmatpush1.bf16.msra.mxu0 0
      %6045 = vmatprep.mubr.bf16.mxu0 0
      %6046 = vmatmul.mubr.bf16.gmra.mrb[0].mxu0 %v6008
      %v6047 = vpop.f32.mrb[0].mxu0
      %v6048 = vadd.f32 0.0, %v6047
      %v6049 = vpop.f32.mrb[0].mxu0
      %v6050 = vpop.f32.mrb[0].mxu0
      %v6051 = vpop.f32.mrb[0].mxu0
      %6052 = vdwg.mxu0
      %6053 = vrot.lane.b32.xlu0 %v1079, 96
      %v6054 = vpop.permute.xlu0 %6053
      %v6056 = vsel %vm2053, %v5990, 0
      %v6059 = vsel %vm2249, %v6054, 0
      %6061 = vmatprep.subr.bf16.mxu0 0
      %6062 = vmatpush1.bf16.msra.mxu0 %v6059
      %6063 = vmatprep.subr.bf16.mxu0 0
      %6064 = vmatpush1.bf16.msra.mxu0 0
      %6065 = vmatprep.subr.bf16.mxu0 0
      %6066 = vmatpush1.bf16.msra.mxu0 0
      %6067 = vmatprep.subr.bf16.mxu0 0
      %6068 = vmatpush1.bf16.msra.mxu0 0
      %6069 = vmatprep.subr.bf16.mxu0 0
      %6070 = vmatpush1.bf16.msra.mxu0 0
      %6071 = vmatprep.subr.bf16.mxu0 0
      %6072 = vmatpush1.bf16.msra.mxu0 0
      %6073 = vmatprep.subr.bf16.mxu0 0
      %6074 = vmatpush1.bf16.msra.mxu0 0
      %6075 = vmatprep.subr.bf16.mxu0 0
      %6076 = vmatpush1.bf16.msra.mxu0 0
      %6077 = vmatprep.subr.bf16.mxu0 0
      %6078 = vmatpush1.bf16.msra.mxu0 0
      %6079 = vmatprep.subr.bf16.mxu0 0
      %6080 = vmatpush1.bf16.msra.mxu0 0
      %6081 = vmatprep.subr.bf16.mxu0 0
      %6082 = vmatpush1.bf16.msra.mxu0 0
      %6083 = vmatprep.subr.bf16.mxu0 0
      %6084 = vmatpush1.bf16.msra.mxu0 0
      %6085 = vmatprep.subr.bf16.mxu0 0
      %6086 = vmatpush1.bf16.msra.mxu0 0
      %6087 = vmatprep.subr.bf16.mxu0 0
      %6088 = vmatpush1.bf16.msra.mxu0 0
      %6089 = vmatprep.subr.bf16.mxu0 0
      %6090 = vmatpush1.bf16.msra.mxu0 0
      %6091 = vmatprep.subr.bf16.mxu0 0
      %6092 = vmatpush1.bf16.msra.mxu0 0
      %6093 = vmatprep.mubr.bf16.mxu0 0
      %6094 = vmatmul.mubr.bf16.gmra.mrb[0].mxu0 %v6056
      %v6095 = vpop.f32.mrb[0].mxu0
      %v6096 = vadd.f32 0.0, %v6095
      %v6097 = vpop.f32.mrb[0].mxu0
      %v6098 = vpop.f32.mrb[0].mxu0
      %v6099 = vpop.f32.mrb[0].mxu0
      %6100 = vdwg.mxu0
      %6101 = vrot.lane.b32.xlu0 %v1080, 96
      %v6102 = vpop.permute.xlu0 %6101
      %v6104 = vsel %vm2053, %v5991, 0
      %v6107 = vsel %vm2249, %v6102, 0
      %6109 = vmatprep.subr.bf16.mxu0 0
      %6110 = vmatpush1.bf16.msra.mxu0 %v6107
      %6111 = vmatprep.subr.bf16.mxu0 0
      %6112 = vmatpush1.bf16.msra.mxu0 0
      %6113 = vmatprep.subr.bf16.mxu0 0
      %6114 = vmatpush1.bf16.msra.mxu0 0
      %6115 = vmatprep.subr.bf16.mxu0 0
      %6116 = vmatpush1.bf16.msra.mxu0 0
      %6117 = vmatprep.subr.bf16.mxu0 0
      %6118 = vmatpush1.bf16.msra.mxu0 0
      %6119 = vmatprep.subr.bf16.mxu0 0
      %6120 = vmatpush1.bf16.msra.mxu0 0
      %6121 = vmatprep.subr.bf16.mxu0 0
      %6122 = vmatpush1.bf16.msra.mxu0 0
      %6123 = vmatprep.subr.bf16.mxu0 0
      %6124 = vmatpush1.bf16.msra.mxu0 0
      %6125 = vmatprep.subr.bf16.mxu0 0
      %6126 = vmatpush1.bf16.msra.mxu0 0
      %6127 = vmatprep.subr.bf16.mxu0 0
      %6128 = vmatpush1.bf16.msra.mxu0 0
      %6129 = vmatprep.subr.bf16.mxu0 0
      %6130 = vmatpush1.bf16.msra.mxu0 0
      %6131 = vmatprep.subr.bf16.mxu0 0
      %6132 = vmatpush1.bf16.msra.mxu0 0
      %6133 = vmatprep.subr.bf16.mxu0 0
      %6134 = vmatpush1.bf16.msra.mxu0 0
      %6135 = vmatprep.subr.bf16.mxu0 0
      %6136 = vmatpush1.bf16.msra.mxu0 0
      %6137 = vmatprep.subr.bf16.mxu0 0
      %6138 = vmatpush1.bf16.msra.mxu0 0
      %6139 = vmatprep.subr.bf16.mxu0 0
      %6140 = vmatpush1.bf16.msra.mxu0 0
      %6141 = vmatprep.mubr.bf16.mxu0 0
      %6142 = vmatmul.mubr.bf16.gmra.mrb[0].mxu0 %v6104
      %v6143 = vpop.f32.mrb[0].mxu0
      %v6144 = vadd.f32 0.0, %v6143
      %v6145 = vpop.f32.mrb[0].mxu0
      %v6146 = vpop.f32.mrb[0].mxu0
      %v6147 = vpop.f32.mrb[0].mxu0
      %6148 = vdwg.mxu0
      %6149 = vrot.lane.b32.xlu0 %v1081, 96
      %v6150 = vpop.permute.xlu0 %6149
      %v6152 = vsel %vm2053, %v5992, 0
      %v6155 = vsel %vm2249, %v6150, 0
      %6157 = vmatprep.subr.bf16.mxu0 0
      %6158 = vmatpush1.bf16.msra.mxu0 %v6155
      %6159 = vmatprep.subr.bf16.mxu0 0
      %6160 = vmatpush1.bf16.msra.mxu0 0
      %6161 = vmatprep.subr.bf16.mxu0 0
      %6162 = vmatpush1.bf16.msra.mxu0 0
      %6163 = vmatprep.subr.bf16.mxu0 0
      %6164 = vmatpush1.bf16.msra.mxu0 0
      %6165 = vmatprep.subr.bf16.mxu0 0
      %6166 = vmatpush1.bf16.msra.mxu0 0
      %6167 = vmatprep.subr.bf16.mxu0 0
      %6168 = vmatpush1.bf16.msra.mxu0 0
      %6169 = vmatprep.subr.bf16.mxu0 0
      %6170 = vmatpush1.bf16.msra.mxu0 0
      %6171 = vmatprep.subr.bf16.mxu0 0
      %6172 = vmatpush1.bf16.msra.mxu0 0
      %6173 = vmatprep.subr.bf16.mxu0 0
      %6174 = vmatpush1.bf16.msra.mxu0 0
      %6175 = vmatprep.subr.bf16.mxu0 0
      %6176 = vmatpush1.bf16.msra.mxu0 0
      %6177 = vmatprep.subr.bf16.mxu0 0
      %6178 = vmatpush1.bf16.msra.mxu0 0
      %6179 = vmatprep.subr.bf16.mxu0 0
      %6180 = vmatpush1.bf16.msra.mxu0 0
      %6181 = vmatprep.subr.bf16.mxu0 0
      %6182 = vmatpush1.bf16.msra.mxu0 0
      %6183 = vmatprep.subr.bf16.mxu0 0
      %6184 = vmatpush1.bf16.msra.mxu0 0
      %6185 = vmatprep.subr.bf16.mxu0 0
      %6186 = vmatpush1.bf16.msra.mxu0 0
      %6187 = vmatprep.subr.bf16.mxu0 0
      %6188 = vmatpush1.bf16.msra.mxu0 0
      %6189 = vmatprep.mubr.bf16.mxu0 0
      %6190 = vmatmul.mubr.bf16.gmra.mrb[0].mxu0 %v6152
      %v6191 = vpop.f32.mrb[0].mxu0
      %v6192 = vadd.f32 0.0, %v6191
      %v6193 = vpop.f32.mrb[0].mxu0
      %v6194 = vpop.f32.mrb[0].mxu0
      %v6195 = vpop.f32.mrb[0].mxu0
      %6196 = vdwg.mxu0
      %6197 = vrot.lane.b32.xlu0 %v1082, 96
      %v6198 = vpop.permute.xlu0 %6197
      %v6200 = vsel %vm2053, %v5993, 0
      %v6203 = vsel %vm2249, %v6198, 0
      %6205 = vmatprep.subr.bf16.mxu0 0
      %6206 = vmatpush1.bf16.msra.mxu0 %v6203
      %6207 = vmatprep.subr.bf16.mxu0 0
      %6208 = vmatpush1.bf16.msra.mxu0 0
      %6209 = vmatprep.subr.bf16.mxu0 0
      %6210 = vmatpush1.bf16.msra.mxu0 0
      %6211 = vmatprep.subr.bf16.mxu0 0
      %6212 = vmatpush1.bf16.msra.mxu0 0
      %6213 = vmatprep.subr.bf16.mxu0 0
      %6214 = vmatpush1.bf16.msra.mxu0 0
      %6215 = vmatprep.subr.bf16.mxu0 0
      %6216 = vmatpush1.bf16.msra.mxu0 0
      %6217 = vmatprep.subr.bf16.mxu0 0
      %6218 = vmatpush1.bf16.msra.mxu0 0
      %6219 = vmatprep.subr.bf16.mxu0 0
      %6220 = vmatpush1.bf16.msra.mxu0 0
      %6221 = vmatprep.subr.bf16.mxu0 0
      %6222 = vmatpush1.bf16.msra.mxu0 0
      %6223 = vmatprep.subr.bf16.mxu0 0
      %6224 = vmatpush1.bf16.msra.mxu0 0
      %6225 = vmatprep.subr.bf16.mxu0 0
      %6226 = vmatpush1.bf16.msra.mxu0 0
      %6227 = vmatprep.subr.bf16.mxu0 0
      %6228 = vmatpush1.bf16.msra.mxu0 0
      %6229 = vmatprep.subr.bf16.mxu0 0
      %6230 = vmatpush1.bf16.msra.mxu0 0
      %6231 = vmatprep.subr.bf16.mxu0 0
      %6232 = vmatpush1.bf16.msra.mxu0 0
      %6233 = vmatprep.subr.bf16.mxu0 0
      %6234 = vmatpush1.bf16.msra.mxu0 0
      %6235 = vmatprep.subr.bf16.mxu0 0
      %6236 = vmatpush1.bf16.msra.mxu0 0
      %6237 = vmatprep.mubr.bf16.mxu0 0
      %6238 = vmatmul.mubr.bf16.gmra.mrb[0].mxu0 %v6200
      %v6239 = vpop.f32.mrb[0].mxu0
      %v6240 = vadd.f32 0.0, %v6239
      %v6241 = vpop.f32.mrb[0].mxu0
      %v6242 = vpop.f32.mrb[0].mxu0
      %v6243 = vpop.f32.mrb[0].mxu0
      %6244 = vdwg.mxu0
      %6245 = vrot.lane.b32.xlu0 %v1083, 96
      %v6246 = vpop.permute.xlu0 %6245
      %v6248 = vsel %vm2053, %v5994, 0
      %v6251 = vsel %vm2249, %v6246, 0
      %6253 = vmatprep.subr.bf16.mxu0 0
      %6254 = vmatpush1.bf16.msra.mxu0 %v6251
      %6255 = vmatprep.subr.bf16.mxu0 0
      %6256 = vmatpush1.bf16.msra.mxu0 0
      %6257 = vmatprep.subr.bf16.mxu0 0
      %6258 = vmatpush1.bf16.msra.mxu0 0
      %6259 = vmatprep.subr.bf16.mxu0 0
      %6260 = vmatpush1.bf16.msra.mxu0 0
      %6261 = vmatprep.subr.bf16.mxu0 0
      %6262 = vmatpush1.bf16.msra.mxu0 0
      %6263 = vmatprep.subr.bf16.mxu0 0
      %6264 = vmatpush1.bf16.msra.mxu0 0
      %6265 = vmatprep.subr.bf16.mxu0 0
      %6266 = vmatpush1.bf16.msra.mxu0 0
      %6267 = vmatprep.subr.bf16.mxu0 0
      %6268 = vmatpush1.bf16.msra.mxu0 0
      %6269 = vmatprep.subr.bf16.mxu0 0
      %6270 = vmatpush1.bf16.msra.mxu0 0
      %6271 = vmatprep.subr.bf16.mxu0 0
      %6272 = vmatpush1.bf16.msra.mxu0 0
      %6273 = vmatprep.subr.bf16.mxu0 0
      %6274 = vmatpush1.bf16.msra.mxu0 0
      %6275 = vmatprep.subr.bf16.mxu0 0
      %6276 = vmatpush1.bf16.msra.mxu0 0
      %6277 = vmatprep.subr.bf16.mxu0 0
      %6278 = vmatpush1.bf16.msra.mxu0 0
      %6279 = vmatprep.subr.bf16.mxu0 0
      %6280 = vmatpush1.bf16.msra.mxu0 0
      %6281 = vmatprep.subr.bf16.mxu0 0
      %6282 = vmatpush1.bf16.msra.mxu0 0
      %6283 = vmatprep.subr.bf16.mxu0 0
      %6284 = vmatpush1.bf16.msra.mxu0 0
      %6285 = vmatprep.mubr.bf16.mxu0 0
      %6286 = vmatmul.mubr.bf16.gmra.mrb[0].mxu0 %v6248
      %v6287 = vpop.f32.mrb[0].mxu0
      %v6288 = vadd.f32 0.0, %v6287
      %v6289 = vpop.f32.mrb[0].mxu0
      %v6290 = vpop.f32.mrb[0].mxu0
      %v6291 = vpop.f32.mrb[0].mxu0
      %6292 = vdwg.mxu0
      %6293 = vrot.lane.b32.xlu0 %v1084, 96
      %v6294 = vpop.permute.xlu0 %6293
      %v6296 = vsel %vm2053, %v5995, 0
      %v6299 = vsel %vm2249, %v6294, 0
      %6301 = vmatprep.subr.bf16.mxu0 0
      %6302 = vmatpush1.bf16.msra.mxu0 %v6299
      %6303 = vmatprep.subr.bf16.mxu0 0
      %6304 = vmatpush1.bf16.msra.mxu0 0
      %6305 = vmatprep.subr.bf16.mxu0 0
      %6306 = vmatpush1.bf16.msra.mxu0 0
      %6307 = vmatprep.subr.bf16.mxu0 0
      %6308 = vmatpush1.bf16.msra.mxu0 0
      %6309 = vmatprep.subr.bf16.mxu0 0
      %6310 = vmatpush1.bf16.msra.mxu0 0
      %6311 = vmatprep.subr.bf16.mxu0 0
      %6312 = vmatpush1.bf16.msra.mxu0 0
      %6313 = vmatprep.subr.bf16.mxu0 0
      %6314 = vmatpush1.bf16.msra.mxu0 0
      %6315 = vmatprep.subr.bf16.mxu0 0
      %6316 = vmatpush1.bf16.msra.mxu0 0
      %6317 = vmatprep.subr.bf16.mxu0 0
      %6318 = vmatpush1.bf16.msra.mxu0 0
      %6319 = vmatprep.subr.bf16.mxu0 0
      %6320 = vmatpush1.bf16.msra.mxu0 0
      %6321 = vmatprep.subr.bf16.mxu0 0
      %6322 = vmatpush1.bf16.msra.mxu0 0
      %6323 = vmatprep.subr.bf16.mxu0 0
      %6324 = vmatpush1.bf16.msra.mxu0 0
      %6325 = vmatprep.subr.bf16.mxu0 0
      %6326 = vmatpush1.bf16.msra.mxu0 0
      %6327 = vmatprep.subr.bf16.mxu0 0
      %6328 = vmatpush1.bf16.msra.mxu0 0
      %6329 = vmatprep.subr.bf16.mxu0 0
      %6330 = vmatpush1.bf16.msra.mxu0 0
      %6331 = vmatprep.subr.bf16.mxu0 0
      %6332 = vmatpush1.bf16.msra.mxu0 0
      %6333 = vmatprep.mubr.bf16.mxu0 0
      %6334 = vmatmul.mubr.bf16.gmra.mrb[0].mxu0 %v6296
      %v6335 = vpop.f32.mrb[0].mxu0
      %v6336 = vadd.f32 0.0, %v6335
      %v6337 = vpop.f32.mrb[0].mxu0
      %v6338 = vpop.f32.mrb[0].mxu0
      %v6339 = vpop.f32.mrb[0].mxu0
      %6340 = vdwg.mxu0
      %6341 = vrot.lane.b32.xlu0 %v1085, 96
      %v6342 = vpop.permute.xlu0 %6341
      %v6344 = vsel %vm2053, %v5996, 0
      %v6347 = vsel %vm2249, %v6342, 0
      %6349 = vmatprep.subr.bf16.mxu0 0
      %6350 = vmatpush1.bf16.msra.mxu0 %v6347
      %6351 = vmatprep.subr.bf16.mxu0 0
      %6352 = vmatpush1.bf16.msra.mxu0 0
      %6353 = vmatprep.subr.bf16.mxu0 0
      %6354 = vmatpush1.bf16.msra.mxu0 0
      %6355 = vmatprep.subr.bf16.mxu0 0
      %6356 = vmatpush1.bf16.msra.mxu0 0
      %6357 = vmatprep.subr.bf16.mxu0 0
      %6358 = vmatpush1.bf16.msra.mxu0 0
      %6359 = vmatprep.subr.bf16.mxu0 0
      %6360 = vmatpush1.bf16.msra.mxu0 0
      %6361 = vmatprep.subr.bf16.mxu0 0
      %6362 = vmatpush1.bf16.msra.mxu0 0
      %6363 = vmatprep.subr.bf16.mxu0 0
      %6364 = vmatpush1.bf16.msra.mxu0 0
      %6365 = vmatprep.subr.bf16.mxu0 0
      %6366 = vmatpush1.bf16.msra.mxu0 0
      %6367 = vmatprep.subr.bf16.mxu0 0
      %6368 = vmatpush1.bf16.msra.mxu0 0
      %6369 = vmatprep.subr.bf16.mxu0 0
      %6370 = vmatpush1.bf16.msra.mxu0 0
      %6371 = vmatprep.subr.bf16.mxu0 0
      %6372 = vmatpush1.bf16.msra.mxu0 0
      %6373 = vmatprep.subr.bf16.mxu0 0
      %6374 = vmatpush1.bf16.msra.mxu0 0
      %6375 = vmatprep.subr.bf16.mxu0 0
      %6376 = vmatpush1.bf16.msra.mxu0 0
      %6377 = vmatprep.subr.bf16.mxu0 0
      %6378 = vmatpush1.bf16.msra.mxu0 0
      %6379 = vmatprep.subr.bf16.mxu0 0
      %6380 = vmatpush1.bf16.msra.mxu0 0
      %6381 = vmatprep.mubr.bf16.mxu0 0
      %6382 = vmatmul.mubr.bf16.gmra.mrb[0].mxu0 %v6344
      %v6383 = vpop.f32.mrb[0].mxu0
      %v6384 = vadd.f32 0.0, %v6383
      %v6385 = vpop.f32.mrb[0].mxu0
      %v6386 = vpop.f32.mrb[0].mxu0
      %v6387 = vpop.f32.mrb[0].mxu0
      %6388 = vdwg.mxu0
      %6389 = vrot.lane.b32.xlu0 %v1086, 96
      %v6390 = vpop.permute.xlu0 %6389
      %v6392 = vsel %vm2053, %v5997, 0
      %v6395 = vsel %vm2249, %v6390, 0
      %6397 = vmatprep.subr.bf16.mxu0 0
      %6398 = vmatpush1.bf16.msra.mxu0 %v6395
      %6399 = vmatprep.subr.bf16.mxu0 0
      %6400 = vmatpush1.bf16.msra.mxu0 0
      %6401 = vmatprep.subr.bf16.mxu0 0
      %6402 = vmatpush1.bf16.msra.mxu0 0
      %6403 = vmatprep.subr.bf16.mxu0 0
      %6404 = vmatpush1.bf16.msra.mxu0 0
      %6405 = vmatprep.subr.bf16.mxu0 0
      %6406 = vmatpush1.bf16.msra.mxu0 0
      %6407 = vmatprep.subr.bf16.mxu0 0
      %6408 = vmatpush1.bf16.msra.mxu0 0
      %6409 = vmatprep.subr.bf16.mxu0 0
      %6410 = vmatpush1.bf16.msra.mxu0 0
      %6411 = vmatprep.subr.bf16.mxu0 0
      %6412 = vmatpush1.bf16.msra.mxu0 0
      %6413 = vmatprep.subr.bf16.mxu0 0
      %6414 = vmatpush1.bf16.msra.mxu0 0
      %6415 = vmatprep.subr.bf16.mxu0 0
      %6416 = vmatpush1.bf16.msra.mxu0 0
      %6417 = vmatprep.subr.bf16.mxu0 0
      %6418 = vmatpush1.bf16.msra.mxu0 0
      %6419 = vmatprep.subr.bf16.mxu0 0
      %6420 = vmatpush1.bf16.msra.mxu0 0
      %6421 = vmatprep.subr.bf16.mxu0 0
      %6422 = vmatpush1.bf16.msra.mxu0 0
      %6423 = vmatprep.subr.bf16.mxu0 0
      %6424 = vmatpush1.bf16.msra.mxu0 0
      %6425 = vmatprep.subr.bf16.mxu0 0
      %6426 = vmatpush1.bf16.msra.mxu0 0
      %6427 = vmatprep.subr.bf16.mxu0 0
      %6428 = vmatpush1.bf16.msra.mxu0 0
      %6429 = vmatprep.mubr.bf16.mxu0 0
      %6430 = vmatmul.mubr.bf16.gmra.mrb[0].mxu0 %v6392
      %v6431 = vpop.f32.mrb[0].mxu0
      %v6432 = vadd.f32 0.0, %v6431
      %v6433 = vpop.f32.mrb[0].mxu0
      %v6434 = vpop.f32.mrb[0].mxu0
      %v6435 = vpop.f32.mrb[0].mxu0
      %6436 = vdwg.mxu0
      %6437 = vrot.lane.b32.xlu0 %v1087, 96
      %v6438 = vpop.permute.xlu0 %6437
      %v6440 = vsel %vm2053, %v5998, 0
      %v6443 = vsel %vm2249, %v6438, 0
      %6445 = vmatprep.subr.bf16.mxu0 0
      %6446 = vmatpush1.bf16.msra.mxu0 %v6443
      %6447 = vmatprep.subr.bf16.mxu0 0
      %6448 = vmatpush1.bf16.msra.mxu0 0
      %6449 = vmatprep.subr.bf16.mxu0 0
      %6450 = vmatpush1.bf16.msra.mxu0 0
      %6451 = vmatprep.subr.bf16.mxu0 0
      %6452 = vmatpush1.bf16.msra.mxu0 0
      %6453 = vmatprep.subr.bf16.mxu0 0
      %6454 = vmatpush1.bf16.msra.mxu0 0
      %6455 = vmatprep.subr.bf16.mxu0 0
      %6456 = vmatpush1.bf16.msra.mxu0 0
      %6457 = vmatprep.subr.bf16.mxu0 0
      %6458 = vmatpush1.bf16.msra.mxu0 0
      %6459 = vmatprep.subr.bf16.mxu0 0
      %6460 = vmatpush1.bf16.msra.mxu0 0
      %6461 = vmatprep.subr.bf16.mxu0 0
      %6462 = vmatpush1.bf16.msra.mxu0 0
      %6463 = vmatprep.subr.bf16.mxu0 0
      %6464 = vmatpush1.bf16.msra.mxu0 0
      %6465 = vmatprep.subr.bf16.mxu0 0
      %6466 = vmatpush1.bf16.msra.mxu0 0
      %6467 = vmatprep.subr.bf16.mxu0 0
      %6468 = vmatpush1.bf16.msra.mxu0 0
      %6469 = vmatprep.subr.bf16.mxu0 0
      %6470 = vmatpush1.bf16.msra.mxu0 0
      %6471 = vmatprep.subr.bf16.mxu0 0
      %6472 = vmatpush1.bf16.msra.mxu0 0
      %6473 = vmatprep.subr.bf16.mxu0 0
      %6474 = vmatpush1.bf16.msra.mxu0 0
      %6475 = vmatprep.subr.bf16.mxu0 0
      %6476 = vmatpush1.bf16.msra.mxu0 0
      %6477 = vmatprep.mubr.bf16.mxu0 0
      %6478 = vmatmul.mubr.bf16.gmra.mrb[0].mxu0 %v6440
      %v6479 = vpop.f32.mrb[0].mxu0
      %v6480 = vadd.f32 0.0, %v6479
      %v6481 = vpop.f32.mrb[0].mxu0
      %v6482 = vpop.f32.mrb[0].mxu0
      %v6483 = vpop.f32.mrb[0].mxu0
      %6484 = vdwg.mxu0
      %6485 = vrot.lane.b32.xlu0 %v1088, 96
      %v6486 = vpop.permute.xlu0 %6485
      %v6488 = vsel %vm2053, %v5999, 0
      %v6491 = vsel %vm2249, %v6486, 0
      %6493 = vmatprep.subr.bf16.mxu0 0
      %6494 = vmatpush1.bf16.msra.mxu0 %v6491
      %6495 = vmatprep.subr.bf16.mxu0 0
      %6496 = vmatpush1.bf16.msra.mxu0 0
      %6497 = vmatprep.subr.bf16.mxu0 0
      %6498 = vmatpush1.bf16.msra.mxu0 0
      %6499 = vmatprep.subr.bf16.mxu0 0
      %6500 = vmatpush1.bf16.msra.mxu0 0
      %6501 = vmatprep.subr.bf16.mxu0 0
      %6502 = vmatpush1.bf16.msra.mxu0 0
      %6503 = vmatprep.subr.bf16.mxu0 0
      %6504 = vmatpush1.bf16.msra.mxu0 0
      %6505 = vmatprep.subr.bf16.mxu0 0
      %6506 = vmatpush1.bf16.msra.mxu0 0
      %6507 = vmatprep.subr.bf16.mxu0 0
      %6508 = vmatpush1.bf16.msra.mxu0 0
      %6509 = vmatprep.subr.bf16.mxu0 0
      %6510 = vmatpush1.bf16.msra.mxu0 0
      %6511 = vmatprep.subr.bf16.mxu0 0
      %6512 = vmatpush1.bf16.msra.mxu0 0
      %6513 = vmatprep.subr.bf16.mxu0 0
      %6514 = vmatpush1.bf16.msra.mxu0 0
      %6515 = vmatprep.subr.bf16.mxu0 0
      %6516 = vmatpush1.bf16.msra.mxu0 0
      %6517 = vmatprep.subr.bf16.mxu0 0
      %6518 = vmatpush1.bf16.msra.mxu0 0
      %6519 = vmatprep.subr.bf16.mxu0 0
      %6520 = vmatpush1.bf16.msra.mxu0 0
      %6521 = vmatprep.subr.bf16.mxu0 0
      %6522 = vmatpush1.bf16.msra.mxu0 0
      %6523 = vmatprep.subr.bf16.mxu0 0
      %6524 = vmatpush1.bf16.msra.mxu0 0
      %6525 = vmatprep.mubr.bf16.mxu0 0
      %6526 = vmatmul.mubr.bf16.gmra.mrb[0].mxu0 %v6488
      %v6527 = vpop.f32.mrb[0].mxu0
      %v6528 = vadd.f32 0.0, %v6527
      %v6529 = vpop.f32.mrb[0].mxu0
      %v6530 = vpop.f32.mrb[0].mxu0
      %v6531 = vpop.f32.mrb[0].mxu0
      %6532 = vdwg.mxu0
      %6533 = vrot.lane.b32.xlu0 %v1089, 96
      %v6534 = vpop.permute.xlu0 %6533
      %v6536 = vsel %vm2053, %v6000, 0
      %v6539 = vsel %vm2249, %v6534, 0
      %6541 = vmatprep.subr.bf16.mxu0 0
      %6542 = vmatpush1.bf16.msra.mxu0 %v6539
      %6543 = vmatprep.subr.bf16.mxu0 0
      %6544 = vmatpush1.bf16.msra.mxu0 0
      %6545 = vmatprep.subr.bf16.mxu0 0
      %6546 = vmatpush1.bf16.msra.mxu0 0
      %6547 = vmatprep.subr.bf16.mxu0 0
      %6548 = vmatpush1.bf16.msra.mxu0 0
      %6549 = vmatprep.subr.bf16.mxu0 0
      %6550 = vmatpush1.bf16.msra.mxu0 0
      %6551 = vmatprep.subr.bf16.mxu0 0
      %6552 = vmatpush1.bf16.msra.mxu0 0
      %6553 = vmatprep.subr.bf16.mxu0 0
      %6554 = vmatpush1.bf16.msra.mxu0 0
      %6555 = vmatprep.subr.bf16.mxu0 0
      %6556 = vmatpush1.bf16.msra.mxu0 0
      %6557 = vmatprep.subr.bf16.mxu0 0
      %6558 = vmatpush1.bf16.msra.mxu0 0
      %6559 = vmatprep.subr.bf16.mxu0 0
      %6560 = vmatpush1.bf16.msra.mxu0 0
      %6561 = vmatprep.subr.bf16.mxu0 0
      %6562 = vmatpush1.bf16.msra.mxu0 0
      %6563 = vmatprep.subr.bf16.mxu0 0
      %6564 = vmatpush1.bf16.msra.mxu0 0
      %6565 = vmatprep.subr.bf16.mxu0 0
      %6566 = vmatpush1.bf16.msra.mxu0 0
      %6567 = vmatprep.subr.bf16.mxu0 0
      %6568 = vmatpush1.bf16.msra.mxu0 0
      %6569 = vmatprep.subr.bf16.mxu0 0
      %6570 = vmatpush1.bf16.msra.mxu0 0
      %6571 = vmatprep.subr.bf16.mxu0 0
      %6572 = vmatpush1.bf16.msra.mxu0 0
      %6573 = vmatprep.mubr.bf16.mxu0 0
      %6574 = vmatmul.mubr.bf16.gmra.mrb[0].mxu0 %v6536
      %v6575 = vpop.f32.mrb[0].mxu0
      %v6576 = vadd.f32 0.0, %v6575
      %v6577 = vpop.f32.mrb[0].mxu0
      %v6578 = vpop.f32.mrb[0].mxu0
      %v6579 = vpop.f32.mrb[0].mxu0
      %6580 = vdwg.mxu0
      %6581 = vrot.lane.b32.xlu0 %v1090, 96
      %v6582 = vpop.permute.xlu0 %6581
      %v6584 = vsel %vm2053, %v6001, 0
      %v6587 = vsel %vm2249, %v6582, 0
      %6589 = vmatprep.subr.bf16.mxu0 0
      %6590 = vmatpush1.bf16.msra.mxu0 %v6587
      %6591 = vmatprep.subr.bf16.mxu0 0
      %6592 = vmatpush1.bf16.msra.mxu0 0
      %6593 = vmatprep.subr.bf16.mxu0 0
      %6594 = vmatpush1.bf16.msra.mxu0 0
      %6595 = vmatprep.subr.bf16.mxu0 0
      %6596 = vmatpush1.bf16.msra.mxu0 0
      %6597 = vmatprep.subr.bf16.mxu0 0
      %6598 = vmatpush1.bf16.msra.mxu0 0
      %6599 = vmatprep.subr.bf16.mxu0 0
      %6600 = vmatpush1.bf16.msra.mxu0 0
      %6601 = vmatprep.subr.bf16.mxu0 0
      %6602 = vmatpush1.bf16.msra.mxu0 0
      %6603 = vmatprep.subr.bf16.mxu0 0
      %6604 = vmatpush1.bf16.msra.mxu0 0
      %6605 = vmatprep.subr.bf16.mxu0 0
      %6606 = vmatpush1.bf16.msra.mxu0 0
      %6607 = vmatprep.subr.bf16.mxu0 0
      %6608 = vmatpush1.bf16.msra.mxu0 0
      %6609 = vmatprep.subr.bf16.mxu0 0
      %6610 = vmatpush1.bf16.msra.mxu0 0
      %6611 = vmatprep.subr.bf16.mxu0 0
      %6612 = vmatpush1.bf16.msra.mxu0 0
      %6613 = vmatprep.subr.bf16.mxu0 0
      %6614 = vmatpush1.bf16.msra.mxu0 0
      %6615 = vmatprep.subr.bf16.mxu0 0
      %6616 = vmatpush1.bf16.msra.mxu0 0
      %6617 = vmatprep.subr.bf16.mxu0 0
      %6618 = vmatpush1.bf16.msra.mxu0 0
      %6619 = vmatprep.subr.bf16.mxu0 0
      %6620 = vmatpush1.bf16.msra.mxu0 0
      %6621 = vmatprep.mubr.bf16.mxu0 0
      %6622 = vmatmul.mubr.bf16.gmra.mrb[0].mxu0 %v6584
      %v6623 = vpop.f32.mrb[0].mxu0
      %v6624 = vadd.f32 0.0, %v6623
      %v6625 = vpop.f32.mrb[0].mxu0
      %v6626 = vpop.f32.mrb[0].mxu0
      %v6627 = vpop.f32.mrb[0].mxu0
      %6628 = vdwg.mxu0
      %6629 = vrot.lane.b32.xlu0 %v1091, 96
      %v6630 = vpop.permute.xlu0 %6629
      %v6632 = vsel %vm2053, %v6002, 0
      %v6635 = vsel %vm2249, %v6630, 0
      %6637 = vmatprep.subr.bf16.mxu0 0
      %6638 = vmatpush1.bf16.msra.mxu0 %v6635
      %6639 = vmatprep.subr.bf16.mxu0 0
      %6640 = vmatpush1.bf16.msra.mxu0 0
      %6641 = vmatprep.subr.bf16.mxu0 0
      %6642 = vmatpush1.bf16.msra.mxu0 0
      %6643 = vmatprep.subr.bf16.mxu0 0
      %6644 = vmatpush1.bf16.msra.mxu0 0
      %6645 = vmatprep.subr.bf16.mxu0 0
      %6646 = vmatpush1.bf16.msra.mxu0 0
      %6647 = vmatprep.subr.bf16.mxu0 0
      %6648 = vmatpush1.bf16.msra.mxu0 0
      %6649 = vmatprep.subr.bf16.mxu0 0
      %6650 = vmatpush1.bf16.msra.mxu0 0
      %6651 = vmatprep.subr.bf16.mxu0 0
      %6652 = vmatpush1.bf16.msra.mxu0 0
      %6653 = vmatprep.subr.bf16.mxu0 0
      %6654 = vmatpush1.bf16.msra.mxu0 0
      %6655 = vmatprep.subr.bf16.mxu0 0
      %6656 = vmatpush1.bf16.msra.mxu0 0
      %6657 = vmatprep.subr.bf16.mxu0 0
      %6658 = vmatpush1.bf16.msra.mxu0 0
      %6659 = vmatprep.subr.bf16.mxu0 0
      %6660 = vmatpush1.bf16.msra.mxu0 0
      %6661 = vmatprep.subr.bf16.mxu0 0
      %6662 = vmatpush1.bf16.msra.mxu0 0
      %6663 = vmatprep.subr.bf16.mxu0 0
      %6664 = vmatpush1.bf16.msra.mxu0 0
      %6665 = vmatprep.subr.bf16.mxu0 0
      %6666 = vmatpush1.bf16.msra.mxu0 0
      %6667 = vmatprep.subr.bf16.mxu0 0
      %6668 = vmatpush1.bf16.msra.mxu0 0
      %6669 = vmatprep.mubr.bf16.mxu0 0
      %6670 = vmatmul.mubr.bf16.gmra.mrb[0].mxu0 %v6632
      %v6671 = vpop.f32.mrb[0].mxu0
      %v6672 = vadd.f32 0.0, %v6671
      %v6673 = vpop.f32.mrb[0].mxu0
      %v6674 = vpop.f32.mrb[0].mxu0
      %v6675 = vpop.f32.mrb[0].mxu0
      %6676 = vdwg.mxu0
      %6677 = vrot.lane.b32.xlu0 %v1092, 96
      %v6678 = vpop.permute.xlu0 %6677
      %v6680 = vsel %vm2053, %v6003, 0
      %v6683 = vsel %vm2249, %v6678, 0
      %6685 = vmatprep.subr.bf16.mxu0 0
      %6686 = vmatpush1.bf16.msra.mxu0 %v6683
      %6687 = vmatprep.subr.bf16.mxu0 0
      %6688 = vmatpush1.bf16.msra.mxu0 0
      %6689 = vmatprep.subr.bf16.mxu0 0
      %6690 = vmatpush1.bf16.msra.mxu0 0
      %6691 = vmatprep.subr.bf16.mxu0 0
      %6692 = vmatpush1.bf16.msra.mxu0 0
      %6693 = vmatprep.subr.bf16.mxu0 0
      %6694 = vmatpush1.bf16.msra.mxu0 0
      %6695 = vmatprep.subr.bf16.mxu0 0
      %6696 = vmatpush1.bf16.msra.mxu0 0
      %6697 = vmatprep.subr.bf16.mxu0 0
      %6698 = vmatpush1.bf16.msra.mxu0 0
      %6699 = vmatprep.subr.bf16.mxu0 0
      %6700 = vmatpush1.bf16.msra.mxu0 0
      %6701 = vmatprep.subr.bf16.mxu0 0
      %6702 = vmatpush1.bf16.msra.mxu0 0
      %6703 = vmatprep.subr.bf16.mxu0 0
      %6704 = vmatpush1.bf16.msra.mxu0 0
      %6705 = vmatprep.subr.bf16.mxu0 0
      %6706 = vmatpush1.bf16.msra.mxu0 0
      %6707 = vmatprep.subr.bf16.mxu0 0
      %6708 = vmatpush1.bf16.msra.mxu0 0
      %6709 = vmatprep.subr.bf16.mxu0 0
      %6710 = vmatpush1.bf16.msra.mxu0 0
      %6711 = vmatprep.subr.bf16.mxu0 0
      %6712 = vmatpush1.bf16.msra.mxu0 0
      %6713 = vmatprep.subr.bf16.mxu0 0
      %6714 = vmatpush1.bf16.msra.mxu0 0
      %6715 = vmatprep.subr.bf16.mxu0 0
      %6716 = vmatpush1.bf16.msra.mxu0 0
      %6717 = vmatprep.mubr.bf16.mxu0 0
      %6718 = vmatmul.mubr.bf16.gmra.mrb[0].mxu0 %v6680
      %v6719 = vpop.f32.mrb[0].mxu0
      %v6720 = vadd.f32 0.0, %v6719
      %v6721 = vpop.f32.mrb[0].mxu0
      %v6722 = vpop.f32.mrb[0].mxu0
      %v6723 = vpop.f32.mrb[0].mxu0
      %6724 = vdwg.mxu0
      %6725 = vrot.lane.b32.xlu0 %v1093, 96
      %v6726 = vpop.permute.xlu0 %6725
      %v6728 = vsel %vm2053, %v6004, 0
      %v6731 = vsel %vm2249, %v6726, 0
      %6733 = vmatprep.subr.bf16.mxu0 0
      %6734 = vmatpush1.bf16.msra.mxu0 %v6731
      %6735 = vmatprep.subr.bf16.mxu0 0
      %6736 = vmatpush1.bf16.msra.mxu0 0
      %6737 = vmatprep.subr.bf16.mxu0 0
      %6738 = vmatpush1.bf16.msra.mxu0 0
      %6739 = vmatprep.subr.bf16.mxu0 0
      %6740 = vmatpush1.bf16.msra.mxu0 0
      %6741 = vmatprep.subr.bf16.mxu0 0
      %6742 = vmatpush1.bf16.msra.mxu0 0
      %6743 = vmatprep.subr.bf16.mxu0 0
      %6744 = vmatpush1.bf16.msra.mxu0 0
      %6745 = vmatprep.subr.bf16.mxu0 0
      %6746 = vmatpush1.bf16.msra.mxu0 0
      %6747 = vmatprep.subr.bf16.mxu0 0
      %6748 = vmatpush1.bf16.msra.mxu0 0
      %6749 = vmatprep.subr.bf16.mxu0 0
      %6750 = vmatpush1.bf16.msra.mxu0 0
      %6751 = vmatprep.subr.bf16.mxu0 0
      %6752 = vmatpush1.bf16.msra.mxu0 0
      %6753 = vmatprep.subr.bf16.mxu0 0
      %6754 = vmatpush1.bf16.msra.mxu0 0
      %6755 = vmatprep.subr.bf16.mxu0 0
      %6756 = vmatpush1.bf16.msra.mxu0 0
      %6757 = vmatprep.subr.bf16.mxu0 0
      %6758 = vmatpush1.bf16.msra.mxu0 0
      %6759 = vmatprep.subr.bf16.mxu0 0
      %6760 = vmatpush1.bf16.msra.mxu0 0
      %6761 = vmatprep.subr.bf16.mxu0 0
      %6762 = vmatpush1.bf16.msra.mxu0 0
      %6763 = vmatprep.subr.bf16.mxu0 0
      %6764 = vmatpush1.bf16.msra.mxu0 0
      %6765 = vmatprep.mubr.bf16.mxu0 0
      %6766 = vmatmul.mubr.bf16.gmra.mrb[0].mxu0 %v6728
      %v6767 = vpop.f32.mrb[0].mxu0
      %v6768 = vadd.f32 0.0, %v6767
      %v6769 = vpop.f32.mrb[0].mxu0
      %v6770 = vpop.f32.mrb[0].mxu0
      %v6771 = vpop.f32.mrb[0].mxu0
      %6772 = vdwg.mxu0
      %v6773 = vpack.c.bf16 %v6096, %v6048
      %v6774 = vpack.c.bf16 %v6192, %v6144
      %v6775 = vpack.c.bf16 %v6288, %v6240
      %v6776 = vpack.c.bf16 %v6384, %v6336
      %v6777 = vpack.c.bf16 %v6480, %v6432
      %v6778 = vpack.c.bf16 %v6576, %v6528
      %v6779 = vpack.c.bf16 %v6672, %v6624
      %v6780 = vpack.c.bf16 %v6768, %v6720
      %v6783 = vunpack.c.l.b16 %v1200
      %v6784 = vunpack.c.l.b16 %v1201
      %v6785 = vpack.c.b16 %v6784, %v6783
      %v6788 = vsel %vm1286, %v6773, 0
      %v6791 = vsel %vm1286, %v6774, 0
      %v6794 = vsel %vm1286, %v6775, 0
      %v6797 = vsel %vm1286, %v6776, 0
      %v6800 = vsel %vm1286, %v6777, 0
      %v6803 = vsel %vm1286, %v6778, 0
      %v6806 = vsel %vm1286, %v6779, 0
      %v6809 = vsel %vm1286, %v6780, 0
      %6811 = vmatprep.subr.bf16.mxu0 0
      %6812 = vmatpush1.bf16.msra.mxu0 %v6785
      %6813 = vmatprep.subr.bf16.mxu0 0
      %6814 = vmatpush1.bf16.msra.mxu0 0
      %6815 = vmatprep.subr.bf16.mxu0 0
      %6816 = vmatpush1.bf16.msra.mxu0 0
      %6817 = vmatprep.subr.bf16.mxu0 0
      %6818 = vmatpush1.bf16.msra.mxu0 0
      %6819 = vmatprep.subr.bf16.mxu0 0
      %6820 = vmatpush1.bf16.msra.mxu0 0
      %6821 = vmatprep.subr.bf16.mxu0 0
      %6822 = vmatpush1.bf16.msra.mxu0 0
      %6823 = vmatprep.subr.bf16.mxu0 0
      %6824 = vmatpush1.bf16.msra.mxu0 0
      %6825 = vmatprep.subr.bf16.mxu0 0
      %6826 = vmatpush1.bf16.msra.mxu0 0
      %6827 = vmatprep.subr.bf16.mxu0 0
      %6828 = vmatpush1.bf16.msra.mxu0 0
      %6829 = vmatprep.subr.bf16.mxu0 0
      %6830 = vmatpush1.bf16.msra.mxu0 0
      %6831 = vmatprep.subr.bf16.mxu0 0
      %6832 = vmatpush1.bf16.msra.mxu0 0
      %6833 = vmatprep.subr.bf16.mxu0 0
      %6834 = vmatpush1.bf16.msra.mxu0 0
      %6835 = vmatprep.subr.bf16.mxu0 0
      %6836 = vmatpush1.bf16.msra.mxu0 0
      %6837 = vmatprep.subr.bf16.mxu0 0
      %6838 = vmatpush1.bf16.msra.mxu0 0
      %6839 = vmatprep.subr.bf16.mxu0 0
      %6840 = vmatpush1.bf16.msra.mxu0 0
      %6841 = vmatprep.subr.bf16.mxu0 0
      %6842 = vmatpush1.bf16.msra.mxu0 0
      %6843 = vmatprep.mubr.bf16.mxu0 0
      %6844 = vmatmul.mubr.bf16.gmra.mrb[0].mxu0 %v6788
      %v6845 = vpop.f32.mrb[0].mxu0
      %v6846 = vadd.f32 0.0, %v6845
      %v6847 = vpop.f32.mrb[0].mxu0
      %v6848 = vpop.f32.mrb[0].mxu0
      %v6849 = vadd.f32 0.0, %v6848
      %v6850 = vpop.f32.mrb[0].mxu0
      %6851 = vmatprep.mubr.bf16.mxu0 0
      %6852 = vmatmul.mubr.bf16.gmra.mrb[0].mxu0 %v6791
      %v6853 = vpop.f32.mrb[0].mxu0
      %v6854 = vadd.f32 0.0, %v6853
      %v6855 = vpop.f32.mrb[0].mxu0
      %v6856 = vpop.f32.mrb[0].mxu0
      %v6857 = vadd.f32 0.0, %v6856
      %v6858 = vpop.f32.mrb[0].mxu0
      %6859 = vmatprep.mubr.bf16.mxu0 0
      %6860 = vmatmul.mubr.bf16.gmra.mrb[0].mxu0 %v6794
      %v6861 = vpop.f32.mrb[0].mxu0
      %v6862 = vadd.f32 0.0, %v6861
      %v6863 = vpop.f32.mrb[0].mxu0
      %v6864 = vpop.f32.mrb[0].mxu0
      %v6865 = vadd.f32 0.0, %v6864
      %v6866 = vpop.f32.mrb[0].mxu0
      %6867 = vmatprep.mubr.bf16.mxu0 0
      %6868 = vmatmul.mubr.bf16.gmra.mrb[0].mxu0 %v6797
      %v6869 = vpop.f32.mrb[0].mxu0
      %v6870 = vadd.f32 0.0, %v6869
      %v6871 = vpop.f32.mrb[0].mxu0
      %v6872 = vpop.f32.mrb[0].mxu0
      %v6873 = vadd.f32 0.0, %v6872
      %v6874 = vpop.f32.mrb[0].mxu0
      %6875 = vmatprep.mubr.bf16.mxu0 0
      %6876 = vmatmul.mubr.bf16.gmra.mrb[0].mxu0 %v6800
      %v6877 = vpop.f32.mrb[0].mxu0
      %v6878 = vadd.f32 0.0, %v6877
      %v6879 = vpop.f32.mrb[0].mxu0
      %v6880 = vpop.f32.mrb[0].mxu0
      %v6881 = vadd.f32 0.0, %v6880
      %v6882 = vpop.f32.mrb[0].mxu0
      %6883 = vmatprep.mubr.bf16.mxu0 0
      %6884 = vmatmul.mubr.bf16.gmra.mrb[0].mxu0 %v6803
      %v6885 = vpop.f32.mrb[0].mxu0
      %v6886 = vadd.f32 0.0, %v6885
      %v6887 = vpop.f32.mrb[0].mxu0
      %v6888 = vpop.f32.mrb[0].mxu0
      %v6889 = vadd.f32 0.0, %v6888
      %v6890 = vpop.f32.mrb[0].mxu0
      %6891 = vmatprep.mubr.bf16.mxu0 0
      %6892 = vmatmul.mubr.bf16.gmra.mrb[0].mxu0 %v6806
      %v6893 = vpop.f32.mrb[0].mxu0
      %v6894 = vadd.f32 0.0, %v6893
      %v6895 = vpop.f32.mrb[0].mxu0
      %v6896 = vpop.f32.mrb[0].mxu0
      %v6897 = vadd.f32 0.0, %v6896
      %v6898 = vpop.f32.mrb[0].mxu0
      %6899 = vmatprep.mubr.bf16.mxu0 0
      %6900 = vmatmul.mubr.bf16.gmra.mrb[0].mxu0 %v6809
      %v6901 = vpop.f32.mrb[0].mxu0
      %v6902 = vadd.f32 0.0, %v6901
      %v6903 = vpop.f32.mrb[0].mxu0
      %v6904 = vpop.f32.mrb[0].mxu0
      %v6905 = vadd.f32 0.0, %v6904
      %v6906 = vpop.f32.mrb[0].mxu0
      %6907 = vdwg.mxu0
      %v6908 = vadd.f32 %v4951, %v6846
      %v6909 = vadd.f32 %v4954, %v6849
      %v6910 = vadd.f32 %v4959, %v6854
      %v6911 = vadd.f32 %v4962, %v6857
      %v6912 = vadd.f32 %v4967, %v6862
      %v6913 = vadd.f32 %v4970, %v6865
      %v6914 = vadd.f32 %v4975, %v6870
      %v6915 = vadd.f32 %v4978, %v6873
      %v6916 = vadd.f32 %v4983, %v6878
      %v6917 = vadd.f32 %v4986, %v6881
      %v6918 = vadd.f32 %v4991, %v6886
      %v6919 = vadd.f32 %v4994, %v6889
      %v6920 = vadd.f32 %v4999, %v6894
      %v6921 = vadd.f32 %v5002, %v6897
      %v6922 = vadd.f32 %v5007, %v6902
      %v6923 = vadd.f32 %v5010, %v6905
      %6924 = vrot.lane.b32.xlu0 %v1030, 80
      %v6925 = vpop.permute.xlu0 %6924
      %6926 = vrot.lane.b32.xlu0 %v1030, 16
      %v6927 = vpop.permute.xlu0 %6926
      %v6929 = vsel %vm1286, %v6925, 0
      %v6932 = vsel %vm1286, %v6927, 0
      %6934 = vmatprep.subr.bf16.mxu0 0
      %6935 = vmatpush1.bf16.xpose.msra.mxu0 %v6932
      %6936 = vmatprep.subr.bf16.mxu0 0
      %6937 = vmatpush1.bf16.xpose.msra.mxu0 0
      %6938 = vmatprep.subr.bf16.mxu0 0
      %6939 = vmatpush1.bf16.xpose.msra.mxu0 0
      %6940 = vmatprep.subr.bf16.mxu0 0
      %6941 = vmatpush1.bf16.xpose.msra.mxu0 0
      %6942 = vmatprep.subr.bf16.mxu0 0
      %6943 = vmatpush1.bf16.xpose.msra.mxu0 0
      %6944 = vmatprep.subr.bf16.mxu0 0
      %6945 = vmatpush1.bf16.xpose.msra.mxu0 0
      %6946 = vmatprep.subr.bf16.mxu0 0
      %6947 = vmatpush1.bf16.xpose.msra.mxu0 0
      %6948 = vmatprep.subr.bf16.mxu0 0
      %6949 = vmatpush1.bf16.xpose.msra.mxu0 0
      %6950 = vmatprep.subr.bf16.mxu0 0
      %6951 = vmatpush1.bf16.xpose.msra.mxu0 0
      %6952 = vmatprep.subr.bf16.mxu0 0
      %6953 = vmatpush1.bf16.xpose.msra.mxu0 0
      %6954 = vmatprep.subr.bf16.mxu0 0
      %6955 = vmatpush1.bf16.xpose.msra.mxu0 0
      %6956 = vmatprep.subr.bf16.mxu0 0
      %6957 = vmatpush1.bf16.xpose.msra.mxu0 0
      %6958 = vmatprep.subr.bf16.mxu0 0
      %6959 = vmatpush1.bf16.xpose.msra.mxu0 0
      %6960 = vmatprep.subr.bf16.mxu0 0
      %6961 = vmatpush1.bf16.xpose.msra.mxu0 0
      %6962 = vmatprep.subr.bf16.mxu0 0
      %6963 = vmatpush1.bf16.xpose.msra.mxu0 0
      %6964 = vmatprep.subr.bf16.mxu0 0
      %6965 = vmatpush1.bf16.xpose.msra.mxu0 0
      %6966 = vmatprep.mubr.bf16.mxu0 0
      %6967 = vmatmul.mubr.bf16.gmra.mrb[0].mxu0 %v6929
      %v6968 = vpop.f32.mrb[0].mxu0
      %v6969 = vadd.f32 %v1207, %v6968
      %v6970 = vpop.f32.mrb[0].mxu0
      %v6971 = vpop.f32.mrb[0].mxu0
      %v6972 = vpop.f32.mrb[0].mxu0
      %6973 = vdwg.mxu0
      %6974 = vrot.lane.b32.xlu0 %v1031, 80
      %v6975 = vpop.permute.xlu0 %6974
      %6976 = vrot.lane.b32.xlu0 %v1031, 16
      %v6977 = vpop.permute.xlu0 %6976
      %v6979 = vsel %vm1286, %v6975, 0
      %v6982 = vsel %vm1286, %v6977, 0
      %6984 = vmatprep.subr.bf16.mxu0 0
      %6985 = vmatpush1.bf16.xpose.msra.mxu0 %v6982
      %6986 = vmatprep.subr.bf16.mxu0 0
      %6987 = vmatpush1.bf16.xpose.msra.mxu0 0
      %6988 = vmatprep.subr.bf16.mxu0 0
      %6989 = vmatpush1.bf16.xpose.msra.mxu0 0
      %6990 = vmatprep.subr.bf16.mxu0 0
      %6991 = vmatpush1.bf16.xpose.msra.mxu0 0
      %6992 = vmatprep.subr.bf16.mxu0 0
      %6993 = vmatpush1.bf16.xpose.msra.mxu0 0
      %6994 = vmatprep.subr.bf16.mxu0 0
      %6995 = vmatpush1.bf16.xpose.msra.mxu0 0
      %6996 = vmatprep.subr.bf16.mxu0 0
      %6997 = vmatpush1.bf16.xpose.msra.mxu0 0
      %6998 = vmatprep.subr.bf16.mxu0 0
      %6999 = vmatpush1.bf16.xpose.msra.mxu0 0
      %7000 = vmatprep.subr.bf16.mxu0 0
      %7001 = vmatpush1.bf16.xpose.msra.mxu0 0
      %7002 = vmatprep.subr.bf16.mxu0 0
      %7003 = vmatpush1.bf16.xpose.msra.mxu0 0
      %7004 = vmatprep.subr.bf16.mxu0 0
      %7005 = vmatpush1.bf16.xpose.msra.mxu0 0
      %7006 = vmatprep.subr.bf16.mxu0 0
      %7007 = vmatpush1.bf16.xpose.msra.mxu0 0
      %7008 = vmatprep.subr.bf16.mxu0 0
      %7009 = vmatpush1.bf16.xpose.msra.mxu0 0
      %7010 = vmatprep.subr.bf16.mxu0 0
      %7011 = vmatpush1.bf16.xpose.msra.mxu0 0
      %7012 = vmatprep.subr.bf16.mxu0 0
      %7013 = vmatpush1.bf16.xpose.msra.mxu0 0
      %7014 = vmatprep.subr.bf16.mxu0 0
      %7015 = vmatpush1.bf16.xpose.msra.mxu0 0
      %7016 = vmatprep.mubr.bf16.mxu0 0
      %7017 = vmatmul.mubr.bf16.gmra.mrb[0].mxu0 %v6979
      %v7018 = vpop.f32.mrb[0].mxu0
      %v7019 = vadd.f32 %v1211, %v7018
      %v7020 = vpop.f32.mrb[0].mxu0
      %v7021 = vpop.f32.mrb[0].mxu0
      %v7022 = vpop.f32.mrb[0].mxu0
      %7023 = vdwg.mxu0
      %7024 = vrot.lane.b32.xlu0 %v1032, 80
      %v7025 = vpop.permute.xlu0 %7024
      %7026 = vrot.lane.b32.xlu0 %v1032, 16
      %v7027 = vpop.permute.xlu0 %7026
      %v7029 = vsel %vm1286, %v7025, 0
      %v7032 = vsel %vm1286, %v7027, 0
      %7034 = vmatprep.subr.bf16.mxu0 0
      %7035 = vmatpush1.bf16.xpose.msra.mxu0 %v7032
      %7036 = vmatprep.subr.bf16.mxu0 0
      %7037 = vmatpush1.bf16.xpose.msra.mxu0 0
      %7038 = vmatprep.subr.bf16.mxu0 0
      %7039 = vmatpush1.bf16.xpose.msra.mxu0 0
      %7040 = vmatprep.subr.bf16.mxu0 0
      %7041 = vmatpush1.bf16.xpose.msra.mxu0 0
      %7042 = vmatprep.subr.bf16.mxu0 0
      %7043 = vmatpush1.bf16.xpose.msra.mxu0 0
      %7044 = vmatprep.subr.bf16.mxu0 0
      %7045 = vmatpush1.bf16.xpose.msra.mxu0 0
      %7046 = vmatprep.subr.bf16.mxu0 0
      %7047 = vmatpush1.bf16.xpose.msra.mxu0 0
      %7048 = vmatprep.subr.bf16.mxu0 0
      %7049 = vmatpush1.bf16.xpose.msra.mxu0 0
      %7050 = vmatprep.subr.bf16.mxu0 0
      %7051 = vmatpush1.bf16.xpose.msra.mxu0 0
      %7052 = vmatprep.subr.bf16.mxu0 0
      %7053 = vmatpush1.bf16.xpose.msra.mxu0 0
      %7054 = vmatprep.subr.bf16.mxu0 0
      %7055 = vmatpush1.bf16.xpose.msra.mxu0 0
      %7056 = vmatprep.subr.bf16.mxu0 0
      %7057 = vmatpush1.bf16.xpose.msra.mxu0 0
      %7058 = vmatprep.subr.bf16.mxu0 0
      %7059 = vmatpush1.bf16.xpose.msra.mxu0 0
      %7060 = vmatprep.subr.bf16.mxu0 0
      %7061 = vmatpush1.bf16.xpose.msra.mxu0 0
      %7062 = vmatprep.subr.bf16.mxu0 0
      %7063 = vmatpush1.bf16.xpose.msra.mxu0 0
      %7064 = vmatprep.subr.bf16.mxu0 0
      %7065 = vmatpush1.bf16.xpose.msra.mxu0 0
      %7066 = vmatprep.mubr.bf16.mxu0 0
      %7067 = vmatmul.mubr.bf16.gmra.mrb[0].mxu0 %v7029
      %v7068 = vpop.f32.mrb[0].mxu0
      %v7069 = vadd.f32 %v1215, %v7068
      %v7070 = vpop.f32.mrb[0].mxu0
      %v7071 = vpop.f32.mrb[0].mxu0
      %v7072 = vpop.f32.mrb[0].mxu0
      %7073 = vdwg.mxu0
      %7074 = vrot.lane.b32.xlu0 %v1033, 80
      %v7075 = vpop.permute.xlu0 %7074
      %7076 = vrot.lane.b32.xlu0 %v1033, 16
      %v7077 = vpop.permute.xlu0 %7076
      %v7079 = vsel %vm1286, %v7075, 0
      %v7082 = vsel %vm1286, %v7077, 0
      %7084 = vmatprep.subr.bf16.mxu0 0
      %7085 = vmatpush1.bf16.xpose.msra.mxu0 %v7082
      %7086 = vmatprep.subr.bf16.mxu0 0
      %7087 = vmatpush1.bf16.xpose.msra.mxu0 0
      %7088 = vmatprep.subr.bf16.mxu0 0
      %7089 = vmatpush1.bf16.xpose.msra.mxu0 0
      %7090 = vmatprep.subr.bf16.mxu0 0
      %7091 = vmatpush1.bf16.xpose.msra.mxu0 0
      %7092 = vmatprep.subr.bf16.mxu0 0
      %7093 = vmatpush1.bf16.xpose.msra.mxu0 0
      %7094 = vmatprep.subr.bf16.mxu0 0
      %7095 = vmatpush1.bf16.xpose.msra.mxu0 0
      %7096 = vmatprep.subr.bf16.mxu0 0
      %7097 = vmatpush1.bf16.xpose.msra.mxu0 0
      %7098 = vmatprep.subr.bf16.mxu0 0
      %7099 = vmatpush1.bf16.xpose.msra.mxu0 0
      %7100 = vmatprep.subr.bf16.mxu0 0
      %7101 = vmatpush1.bf16.xpose.msra.mxu0 0
      %7102 = vmatprep.subr.bf16.mxu0 0
      %7103 = vmatpush1.bf16.xpose.msra.mxu0 0
      %7104 = vmatprep.subr.bf16.mxu0 0
      %7105 = vmatpush1.bf16.xpose.msra.mxu0 0
      %7106 = vmatprep.subr.bf16.mxu0 0
      %7107 = vmatpush1.bf16.xpose.msra.mxu0 0
      %7108 = vmatprep.subr.bf16.mxu0 0
      %7109 = vmatpush1.bf16.xpose.msra.mxu0 0
      %7110 = vmatprep.subr.bf16.mxu0 0
      %7111 = vmatpush1.bf16.xpose.msra.mxu0 0
      %7112 = vmatprep.subr.bf16.mxu0 0
      %7113 = vmatpush1.bf16.xpose.msra.mxu0 0
      %7114 = vmatprep.subr.bf16.mxu0 0
      %7115 = vmatpush1.bf16.xpose.msra.mxu0 0
      %7116 = vmatprep.mubr.bf16.mxu0 0
      %7117 = vmatmul.mubr.bf16.gmra.mrb[0].mxu0 %v7079
      %v7118 = vpop.f32.mrb[0].mxu0
      %v7119 = vadd.f32 %v1219, %v7118
      %v7120 = vpop.f32.mrb[0].mxu0
      %v7121 = vpop.f32.mrb[0].mxu0
      %v7122 = vpop.f32.mrb[0].mxu0
      %7123 = vdwg.mxu0
      %7124 = vrot.lane.b32.xlu0 %v1034, 80
      %v7125 = vpop.permute.xlu0 %7124
      %7126 = vrot.lane.b32.xlu0 %v1034, 16
      %v7127 = vpop.permute.xlu0 %7126
      %v7129 = vsel %vm1286, %v7125, 0
      %v7132 = vsel %vm1286, %v7127, 0
      %7134 = vmatprep.subr.bf16.mxu0 0
      %7135 = vmatpush1.bf16.xpose.msra.mxu0 %v7132
      %7136 = vmatprep.subr.bf16.mxu0 0
      %7137 = vmatpush1.bf16.xpose.msra.mxu0 0
      %7138 = vmatprep.subr.bf16.mxu0 0
      %7139 = vmatpush1.bf16.xpose.msra.mxu0 0
      %7140 = vmatprep.subr.bf16.mxu0 0
      %7141 = vmatpush1.bf16.xpose.msra.mxu0 0
      %7142 = vmatprep.subr.bf16.mxu0 0
      %7143 = vmatpush1.bf16.xpose.msra.mxu0 0
      %7144 = vmatprep.subr.bf16.mxu0 0
      %7145 = vmatpush1.bf16.xpose.msra.mxu0 0
      %7146 = vmatprep.subr.bf16.mxu0 0
      %7147 = vmatpush1.bf16.xpose.msra.mxu0 0
      %7148 = vmatprep.subr.bf16.mxu0 0
      %7149 = vmatpush1.bf16.xpose.msra.mxu0 0
      %7150 = vmatprep.subr.bf16.mxu0 0
      %7151 = vmatpush1.bf16.xpose.msra.mxu0 0
      %7152 = vmatprep.subr.bf16.mxu0 0
      %7153 = vmatpush1.bf16.xpose.msra.mxu0 0
      %7154 = vmatprep.subr.bf16.mxu0 0
      %7155 = vmatpush1.bf16.xpose.msra.mxu0 0
      %7156 = vmatprep.subr.bf16.mxu0 0
      %7157 = vmatpush1.bf16.xpose.msra.mxu0 0
      %7158 = vmatprep.subr.bf16.mxu0 0
      %7159 = vmatpush1.bf16.xpose.msra.mxu0 0
      %7160 = vmatprep.subr.bf16.mxu0 0
      %7161 = vmatpush1.bf16.xpose.msra.mxu0 0
      %7162 = vmatprep.subr.bf16.mxu0 0
      %7163 = vmatpush1.bf16.xpose.msra.mxu0 0
      %7164 = vmatprep.subr.bf16.mxu0 0
      %7165 = vmatpush1.bf16.xpose.msra.mxu0 0
      %7166 = vmatprep.mubr.bf16.mxu0 0
      %7167 = vmatmul.mubr.bf16.gmra.mrb[0].mxu0 %v7129
      %v7168 = vpop.f32.mrb[0].mxu0
      %v7169 = vadd.f32 %v1223, %v7168
      %v7170 = vpop.f32.mrb[0].mxu0
      %v7171 = vpop.f32.mrb[0].mxu0
      %v7172 = vpop.f32.mrb[0].mxu0
      %7173 = vdwg.mxu0
      %7174 = vrot.lane.b32.xlu0 %v1035, 80
      %v7175 = vpop.permute.xlu0 %7174
      %7176 = vrot.lane.b32.xlu0 %v1035, 16
      %v7177 = vpop.permute.xlu0 %7176
      %v7179 = vsel %vm1286, %v7175, 0
      %v7182 = vsel %vm1286, %v7177, 0
      %7184 = vmatprep.subr.bf16.mxu0 0
      %7185 = vmatpush1.bf16.xpose.msra.mxu0 %v7182
      %7186 = vmatprep.subr.bf16.mxu0 0
      %7187 = vmatpush1.bf16.xpose.msra.mxu0 0
      %7188 = vmatprep.subr.bf16.mxu0 0
      %7189 = vmatpush1.bf16.xpose.msra.mxu0 0
      %7190 = vmatprep.subr.bf16.mxu0 0
      %7191 = vmatpush1.bf16.xpose.msra.mxu0 0
      %7192 = vmatprep.subr.bf16.mxu0 0
      %7193 = vmatpush1.bf16.xpose.msra.mxu0 0
      %7194 = vmatprep.subr.bf16.mxu0 0
      %7195 = vmatpush1.bf16.xpose.msra.mxu0 0
      %7196 = vmatprep.subr.bf16.mxu0 0
      %7197 = vmatpush1.bf16.xpose.msra.mxu0 0
      %7198 = vmatprep.subr.bf16.mxu0 0
      %7199 = vmatpush1.bf16.xpose.msra.mxu0 0
      %7200 = vmatprep.subr.bf16.mxu0 0
      %7201 = vmatpush1.bf16.xpose.msra.mxu0 0
      %7202 = vmatprep.subr.bf16.mxu0 0
      %7203 = vmatpush1.bf16.xpose.msra.mxu0 0
      %7204 = vmatprep.subr.bf16.mxu0 0
      %7205 = vmatpush1.bf16.xpose.msra.mxu0 0
      %7206 = vmatprep.subr.bf16.mxu0 0
      %7207 = vmatpush1.bf16.xpose.msra.mxu0 0
      %7208 = vmatprep.subr.bf16.mxu0 0
      %7209 = vmatpush1.bf16.xpose.msra.mxu0 0
      %7210 = vmatprep.subr.bf16.mxu0 0
      %7211 = vmatpush1.bf16.xpose.msra.mxu0 0
      %7212 = vmatprep.subr.bf16.mxu0 0
      %7213 = vmatpush1.bf16.xpose.msra.mxu0 0
      %7214 = vmatprep.subr.bf16.mxu0 0
      %7215 = vmatpush1.bf16.xpose.msra.mxu0 0
      %7216 = vmatprep.mubr.bf16.mxu0 0
      %7217 = vmatmul.mubr.bf16.gmra.mrb[0].mxu0 %v7179
      %v7218 = vpop.f32.mrb[0].mxu0
      %v7219 = vadd.f32 %v1227, %v7218
      %v7220 = vpop.f32.mrb[0].mxu0
      %v7221 = vpop.f32.mrb[0].mxu0
      %v7222 = vpop.f32.mrb[0].mxu0
      %7223 = vdwg.mxu0
      %7224 = vrot.lane.b32.xlu0 %v1036, 80
      %v7225 = vpop.permute.xlu0 %7224
      %7226 = vrot.lane.b32.xlu0 %v1036, 16
      %v7227 = vpop.permute.xlu0 %7226
      %v7229 = vsel %vm1286, %v7225, 0
      %v7232 = vsel %vm1286, %v7227, 0
      %7234 = vmatprep.subr.bf16.mxu0 0
      %7235 = vmatpush1.bf16.xpose.msra.mxu0 %v7232
      %7236 = vmatprep.subr.bf16.mxu0 0
      %7237 = vmatpush1.bf16.xpose.msra.mxu0 0
      %7238 = vmatprep.subr.bf16.mxu0 0
      %7239 = vmatpush1.bf16.xpose.msra.mxu0 0
      %7240 = vmatprep.subr.bf16.mxu0 0
      %7241 = vmatpush1.bf16.xpose.msra.mxu0 0
      %7242 = vmatprep.subr.bf16.mxu0 0
      %7243 = vmatpush1.bf16.xpose.msra.mxu0 0
      %7244 = vmatprep.subr.bf16.mxu0 0
      %7245 = vmatpush1.bf16.xpose.msra.mxu0 0
      %7246 = vmatprep.subr.bf16.mxu0 0
      %7247 = vmatpush1.bf16.xpose.msra.mxu0 0
      %7248 = vmatprep.subr.bf16.mxu0 0
      %7249 = vmatpush1.bf16.xpose.msra.mxu0 0
      %7250 = vmatprep.subr.bf16.mxu0 0
      %7251 = vmatpush1.bf16.xpose.msra.mxu0 0
      %7252 = vmatprep.subr.bf16.mxu0 0
      %7253 = vmatpush1.bf16.xpose.msra.mxu0 0
      %7254 = vmatprep.subr.bf16.mxu0 0
      %7255 = vmatpush1.bf16.xpose.msra.mxu0 0
      %7256 = vmatprep.subr.bf16.mxu0 0
      %7257 = vmatpush1.bf16.xpose.msra.mxu0 0
      %7258 = vmatprep.subr.bf16.mxu0 0
      %7259 = vmatpush1.bf16.xpose.msra.mxu0 0
      %7260 = vmatprep.subr.bf16.mxu0 0
      %7261 = vmatpush1.bf16.xpose.msra.mxu0 0
      %7262 = vmatprep.subr.bf16.mxu0 0
      %7263 = vmatpush1.bf16.xpose.msra.mxu0 0
      %7264 = vmatprep.subr.bf16.mxu0 0
      %7265 = vmatpush1.bf16.xpose.msra.mxu0 0
      %7266 = vmatprep.mubr.bf16.mxu0 0
      %7267 = vmatmul.mubr.bf16.gmra.mrb[0].mxu0 %v7229
      %v7268 = vpop.f32.mrb[0].mxu0
      %v7269 = vadd.f32 %v1231, %v7268
      %v7270 = vpop.f32.mrb[0].mxu0
      %v7271 = vpop.f32.mrb[0].mxu0
      %v7272 = vpop.f32.mrb[0].mxu0
      %7273 = vdwg.mxu0
      %7274 = vrot.lane.b32.xlu0 %v1037, 80
      %v7275 = vpop.permute.xlu0 %7274
      %7276 = vrot.lane.b32.xlu0 %v1037, 16
      %v7277 = vpop.permute.xlu0 %7276
      %v7279 = vsel %vm1286, %v7275, 0
      %v7282 = vsel %vm1286, %v7277, 0
      %7284 = vmatprep.subr.bf16.mxu0 0
      %7285 = vmatpush1.bf16.xpose.msra.mxu0 %v7282
      %7286 = vmatprep.subr.bf16.mxu0 0
      %7287 = vmatpush1.bf16.xpose.msra.mxu0 0
      %7288 = vmatprep.subr.bf16.mxu0 0
      %7289 = vmatpush1.bf16.xpose.msra.mxu0 0
      %7290 = vmatprep.subr.bf16.mxu0 0
      %7291 = vmatpush1.bf16.xpose.msra.mxu0 0
      %7292 = vmatprep.subr.bf16.mxu0 0
      %7293 = vmatpush1.bf16.xpose.msra.mxu0 0
      %7294 = vmatprep.subr.bf16.mxu0 0
      %7295 = vmatpush1.bf16.xpose.msra.mxu0 0
      %7296 = vmatprep.subr.bf16.mxu0 0
      %7297 = vmatpush1.bf16.xpose.msra.mxu0 0
      %7298 = vmatprep.subr.bf16.mxu0 0
      %7299 = vmatpush1.bf16.xpose.msra.mxu0 0
      %7300 = vmatprep.subr.bf16.mxu0 0
      %7301 = vmatpush1.bf16.xpose.msra.mxu0 0
      %7302 = vmatprep.subr.bf16.mxu0 0
      %7303 = vmatpush1.bf16.xpose.msra.mxu0 0
      %7304 = vmatprep.subr.bf16.mxu0 0
      %7305 = vmatpush1.bf16.xpose.msra.mxu0 0
      %7306 = vmatprep.subr.bf16.mxu0 0
      %7307 = vmatpush1.bf16.xpose.msra.mxu0 0
      %7308 = vmatprep.subr.bf16.mxu0 0
      %7309 = vmatpush1.bf16.xpose.msra.mxu0 0
      %7310 = vmatprep.subr.bf16.mxu0 0
      %7311 = vmatpush1.bf16.xpose.msra.mxu0 0
      %7312 = vmatprep.subr.bf16.mxu0 0
      %7313 = vmatpush1.bf16.xpose.msra.mxu0 0
      %7314 = vmatprep.subr.bf16.mxu0 0
      %7315 = vmatpush1.bf16.xpose.msra.mxu0 0
      %7316 = vmatprep.mubr.bf16.mxu0 0
      %7317 = vmatmul.mubr.bf16.gmra.mrb[0].mxu0 %v7279
      %v7318 = vpop.f32.mrb[0].mxu0
      %v7319 = vadd.f32 %v1235, %v7318
      %v7320 = vpop.f32.mrb[0].mxu0
      %v7321 = vpop.f32.mrb[0].mxu0
      %v7322 = vpop.f32.mrb[0].mxu0
      %7323 = vdwg.mxu0
      %7324 = vrot.lane.b32.xlu0 %v1038, 80
      %v7325 = vpop.permute.xlu0 %7324
      %7326 = vrot.lane.b32.xlu0 %v1038, 16
      %v7327 = vpop.permute.xlu0 %7326
      %v7329 = vsel %vm1286, %v7325, 0
      %v7332 = vsel %vm1286, %v7327, 0
      %7334 = vmatprep.subr.bf16.mxu0 0
      %7335 = vmatpush1.bf16.xpose.msra.mxu0 %v7332
      %7336 = vmatprep.subr.bf16.mxu0 0
      %7337 = vmatpush1.bf16.xpose.msra.mxu0 0
      %7338 = vmatprep.subr.bf16.mxu0 0
      %7339 = vmatpush1.bf16.xpose.msra.mxu0 0
      %7340 = vmatprep.subr.bf16.mxu0 0
      %7341 = vmatpush1.bf16.xpose.msra.mxu0 0
      %7342 = vmatprep.subr.bf16.mxu0 0
      %7343 = vmatpush1.bf16.xpose.msra.mxu0 0
      %7344 = vmatprep.subr.bf16.mxu0 0
      %7345 = vmatpush1.bf16.xpose.msra.mxu0 0
      %7346 = vmatprep.subr.bf16.mxu0 0
      %7347 = vmatpush1.bf16.xpose.msra.mxu0 0
      %7348 = vmatprep.subr.bf16.mxu0 0
      %7349 = vmatpush1.bf16.xpose.msra.mxu0 0
      %7350 = vmatprep.subr.bf16.mxu0 0
      %7351 = vmatpush1.bf16.xpose.msra.mxu0 0
      %7352 = vmatprep.subr.bf16.mxu0 0
      %7353 = vmatpush1.bf16.xpose.msra.mxu0 0
      %7354 = vmatprep.subr.bf16.mxu0 0
      %7355 = vmatpush1.bf16.xpose.msra.mxu0 0
      %7356 = vmatprep.subr.bf16.mxu0 0
      %7357 = vmatpush1.bf16.xpose.msra.mxu0 0
      %7358 = vmatprep.subr.bf16.mxu0 0
      %7359 = vmatpush1.bf16.xpose.msra.mxu0 0
      %7360 = vmatprep.subr.bf16.mxu0 0
      %7361 = vmatpush1.bf16.xpose.msra.mxu0 0
      %7362 = vmatprep.subr.bf16.mxu0 0
      %7363 = vmatpush1.bf16.xpose.msra.mxu0 0
      %7364 = vmatprep.subr.bf16.mxu0 0
      %7365 = vmatpush1.bf16.xpose.msra.mxu0 0
      %7366 = vmatprep.mubr.bf16.mxu0 0
      %7367 = vmatmul.mubr.bf16.gmra.mrb[0].mxu0 %v7329
      %v7368 = vpop.f32.mrb[0].mxu0
      %v7369 = vadd.f32 %v1239, %v7368
      %v7370 = vpop.f32.mrb[0].mxu0
      %v7371 = vpop.f32.mrb[0].mxu0
      %v7372 = vpop.f32.mrb[0].mxu0
      %7373 = vdwg.mxu0
      %7374 = vrot.lane.b32.xlu0 %v1039, 80
      %v7375 = vpop.permute.xlu0 %7374
      %7376 = vrot.lane.b32.xlu0 %v1039, 16
      %v7377 = vpop.permute.xlu0 %7376
      %v7379 = vsel %vm1286, %v7375, 0
      %v7382 = vsel %vm1286, %v7377, 0
      %7384 = vmatprep.subr.bf16.mxu0 0
      %7385 = vmatpush1.bf16.xpose.msra.mxu0 %v7382
      %7386 = vmatprep.subr.bf16.mxu0 0
      %7387 = vmatpush1.bf16.xpose.msra.mxu0 0
      %7388 = vmatprep.subr.bf16.mxu0 0
      %7389 = vmatpush1.bf16.xpose.msra.mxu0 0
      %7390 = vmatprep.subr.bf16.mxu0 0
      %7391 = vmatpush1.bf16.xpose.msra.mxu0 0
      %7392 = vmatprep.subr.bf16.mxu0 0
      %7393 = vmatpush1.bf16.xpose.msra.mxu0 0
      %7394 = vmatprep.subr.bf16.mxu0 0
      %7395 = vmatpush1.bf16.xpose.msra.mxu0 0
      %7396 = vmatprep.subr.bf16.mxu0 0
      %7397 = vmatpush1.bf16.xpose.msra.mxu0 0
      %7398 = vmatprep.subr.bf16.mxu0 0
      %7399 = vmatpush1.bf16.xpose.msra.mxu0 0
      %7400 = vmatprep.subr.bf16.mxu0 0
      %7401 = vmatpush1.bf16.xpose.msra.mxu0 0
      %7402 = vmatprep.subr.bf16.mxu0 0
      %7403 = vmatpush1.bf16.xpose.msra.mxu0 0
      %7404 = vmatprep.subr.bf16.mxu0 0
      %7405 = vmatpush1.bf16.xpose.msra.mxu0 0
      %7406 = vmatprep.subr.bf16.mxu0 0
      %7407 = vmatpush1.bf16.xpose.msra.mxu0 0
      %7408 = vmatprep.subr.bf16.mxu0 0
      %7409 = vmatpush1.bf16.xpose.msra.mxu0 0
      %7410 = vmatprep.subr.bf16.mxu0 0
      %7411 = vmatpush1.bf16.xpose.msra.mxu0 0
      %7412 = vmatprep.subr.bf16.mxu0 0
      %7413 = vmatpush1.bf16.xpose.msra.mxu0 0
      %7414 = vmatprep.subr.bf16.mxu0 0
      %7415 = vmatpush1.bf16.xpose.msra.mxu0 0
      %7416 = vmatprep.mubr.bf16.mxu0 0
      %7417 = vmatmul.mubr.bf16.gmra.mrb[0].mxu0 %v7379
      %v7418 = vpop.f32.mrb[0].mxu0
      %v7419 = vadd.f32 %v1243, %v7418
      %v7420 = vpop.f32.mrb[0].mxu0
      %v7421 = vpop.f32.mrb[0].mxu0
      %v7422 = vpop.f32.mrb[0].mxu0
      %7423 = vdwg.mxu0
      %7424 = vrot.lane.b32.xlu0 %v1040, 80
      %v7425 = vpop.permute.xlu0 %7424
      %7426 = vrot.lane.b32.xlu0 %v1040, 16
      %v7427 = vpop.permute.xlu0 %7426
      %v7429 = vsel %vm1286, %v7425, 0
      %v7432 = vsel %vm1286, %v7427, 0
      %7434 = vmatprep.subr.bf16.mxu0 0
      %7435 = vmatpush1.bf16.xpose.msra.mxu0 %v7432
      %7436 = vmatprep.subr.bf16.mxu0 0
      %7437 = vmatpush1.bf16.xpose.msra.mxu0 0
      %7438 = vmatprep.subr.bf16.mxu0 0
      %7439 = vmatpush1.bf16.xpose.msra.mxu0 0
      %7440 = vmatprep.subr.bf16.mxu0 0
      %7441 = vmatpush1.bf16.xpose.msra.mxu0 0
      %7442 = vmatprep.subr.bf16.mxu0 0
      %7443 = vmatpush1.bf16.xpose.msra.mxu0 0
      %7444 = vmatprep.subr.bf16.mxu0 0
      %7445 = vmatpush1.bf16.xpose.msra.mxu0 0
      %7446 = vmatprep.subr.bf16.mxu0 0
      %7447 = vmatpush1.bf16.xpose.msra.mxu0 0
      %7448 = vmatprep.subr.bf16.mxu0 0
      %7449 = vmatpush1.bf16.xpose.msra.mxu0 0
      %7450 = vmatprep.subr.bf16.mxu0 0
      %7451 = vmatpush1.bf16.xpose.msra.mxu0 0
      %7452 = vmatprep.subr.bf16.mxu0 0
      %7453 = vmatpush1.bf16.xpose.msra.mxu0 0
      %7454 = vmatprep.subr.bf16.mxu0 0
      %7455 = vmatpush1.bf16.xpose.msra.mxu0 0
      %7456 = vmatprep.subr.bf16.mxu0 0
      %7457 = vmatpush1.bf16.xpose.msra.mxu0 0
      %7458 = vmatprep.subr.bf16.mxu0 0
      %7459 = vmatpush1.bf16.xpose.msra.mxu0 0
      %7460 = vmatprep.subr.bf16.mxu0 0
      %7461 = vmatpush1.bf16.xpose.msra.mxu0 0
      %7462 = vmatprep.subr.bf16.mxu0 0
      %7463 = vmatpush1.bf16.xpose.msra.mxu0 0
      %7464 = vmatprep.subr.bf16.mxu0 0
      %7465 = vmatpush1.bf16.xpose.msra.mxu0 0
      %7466 = vmatprep.mubr.bf16.mxu0 0
      %7467 = vmatmul.mubr.bf16.gmra.mrb[0].mxu0 %v7429
      %v7468 = vpop.f32.mrb[0].mxu0
      %v7469 = vadd.f32 %v1247, %v7468
      %v7470 = vpop.f32.mrb[0].mxu0
      %v7471 = vpop.f32.mrb[0].mxu0
      %v7472 = vpop.f32.mrb[0].mxu0
      %7473 = vdwg.mxu0
      %7474 = vrot.lane.b32.xlu0 %v1041, 80
      %v7475 = vpop.permute.xlu0 %7474
      %7476 = vrot.lane.b32.xlu0 %v1041, 16
      %v7477 = vpop.permute.xlu0 %7476
      %v7479 = vsel %vm1286, %v7475, 0
      %v7482 = vsel %vm1286, %v7477, 0
      %7484 = vmatprep.subr.bf16.mxu0 0
      %7485 = vmatpush1.bf16.xpose.msra.mxu0 %v7482
      %7486 = vmatprep.subr.bf16.mxu0 0
      %7487 = vmatpush1.bf16.xpose.msra.mxu0 0
      %7488 = vmatprep.subr.bf16.mxu0 0
      %7489 = vmatpush1.bf16.xpose.msra.mxu0 0
      %7490 = vmatprep.subr.bf16.mxu0 0
      %7491 = vmatpush1.bf16.xpose.msra.mxu0 0
      %7492 = vmatprep.subr.bf16.mxu0 0
      %7493 = vmatpush1.bf16.xpose.msra.mxu0 0
      %7494 = vmatprep.subr.bf16.mxu0 0
      %7495 = vmatpush1.bf16.xpose.msra.mxu0 0
      %7496 = vmatprep.subr.bf16.mxu0 0
      %7497 = vmatpush1.bf16.xpose.msra.mxu0 0
      %7498 = vmatprep.subr.bf16.mxu0 0
      %7499 = vmatpush1.bf16.xpose.msra.mxu0 0
      %7500 = vmatprep.subr.bf16.mxu0 0
      %7501 = vmatpush1.bf16.xpose.msra.mxu0 0
      %7502 = vmatprep.subr.bf16.mxu0 0
      %7503 = vmatpush1.bf16.xpose.msra.mxu0 0
      %7504 = vmatprep.subr.bf16.mxu0 0
      %7505 = vmatpush1.bf16.xpose.msra.mxu0 0
      %7506 = vmatprep.subr.bf16.mxu0 0
      %7507 = vmatpush1.bf16.xpose.msra.mxu0 0
      %7508 = vmatprep.subr.bf16.mxu0 0
      %7509 = vmatpush1.bf16.xpose.msra.mxu0 0
      %7510 = vmatprep.subr.bf16.mxu0 0
      %7511 = vmatpush1.bf16.xpose.msra.mxu0 0
      %7512 = vmatprep.subr.bf16.mxu0 0
      %7513 = vmatpush1.bf16.xpose.msra.mxu0 0
      %7514 = vmatprep.subr.bf16.mxu0 0
      %7515 = vmatpush1.bf16.xpose.msra.mxu0 0
      %7516 = vmatprep.mubr.bf16.mxu0 0
      %7517 = vmatmul.mubr.bf16.gmra.mrb[0].mxu0 %v7479
      %v7518 = vpop.f32.mrb[0].mxu0
      %v7519 = vadd.f32 %v1251, %v7518
      %v7520 = vpop.f32.mrb[0].mxu0
      %v7521 = vpop.f32.mrb[0].mxu0
      %v7522 = vpop.f32.mrb[0].mxu0
      %7523 = vdwg.mxu0
      %7524 = vrot.lane.b32.xlu0 %v1042, 80
      %v7525 = vpop.permute.xlu0 %7524
      %7526 = vrot.lane.b32.xlu0 %v1042, 16
      %v7527 = vpop.permute.xlu0 %7526
      %v7529 = vsel %vm1286, %v7525, 0
      %v7532 = vsel %vm1286, %v7527, 0
      %7534 = vmatprep.subr.bf16.mxu0 0
      %7535 = vmatpush1.bf16.xpose.msra.mxu0 %v7532
      %7536 = vmatprep.subr.bf16.mxu0 0
      %7537 = vmatpush1.bf16.xpose.msra.mxu0 0
      %7538 = vmatprep.subr.bf16.mxu0 0
      %7539 = vmatpush1.bf16.xpose.msra.mxu0 0
      %7540 = vmatprep.subr.bf16.mxu0 0
      %7541 = vmatpush1.bf16.xpose.msra.mxu0 0
      %7542 = vmatprep.subr.bf16.mxu0 0
      %7543 = vmatpush1.bf16.xpose.msra.mxu0 0
      %7544 = vmatprep.subr.bf16.mxu0 0
      %7545 = vmatpush1.bf16.xpose.msra.mxu0 0
      %7546 = vmatprep.subr.bf16.mxu0 0
      %7547 = vmatpush1.bf16.xpose.msra.mxu0 0
      %7548 = vmatprep.subr.bf16.mxu0 0
      %7549 = vmatpush1.bf16.xpose.msra.mxu0 0
      %7550 = vmatprep.subr.bf16.mxu0 0
      %7551 = vmatpush1.bf16.xpose.msra.mxu0 0
      %7552 = vmatprep.subr.bf16.mxu0 0
      %7553 = vmatpush1.bf16.xpose.msra.mxu0 0
      %7554 = vmatprep.subr.bf16.mxu0 0
      %7555 = vmatpush1.bf16.xpose.msra.mxu0 0
      %7556 = vmatprep.subr.bf16.mxu0 0
      %7557 = vmatpush1.bf16.xpose.msra.mxu0 0
      %7558 = vmatprep.subr.bf16.mxu0 0
      %7559 = vmatpush1.bf16.xpose.msra.mxu0 0
      %7560 = vmatprep.subr.bf16.mxu0 0
      %7561 = vmatpush1.bf16.xpose.msra.mxu0 0
      %7562 = vmatprep.subr.bf16.mxu0 0
      %7563 = vmatpush1.bf16.xpose.msra.mxu0 0
      %7564 = vmatprep.subr.bf16.mxu0 0
      %7565 = vmatpush1.bf16.xpose.msra.mxu0 0
      %7566 = vmatprep.mubr.bf16.mxu0 0
      %7567 = vmatmul.mubr.bf16.gmra.mrb[0].mxu0 %v7529
      %v7568 = vpop.f32.mrb[0].mxu0
      %v7569 = vadd.f32 %v1255, %v7568
      %v7570 = vpop.f32.mrb[0].mxu0
      %v7571 = vpop.f32.mrb[0].mxu0
      %v7572 = vpop.f32.mrb[0].mxu0
      %7573 = vdwg.mxu0
      %7574 = vrot.lane.b32.xlu0 %v1043, 80
      %v7575 = vpop.permute.xlu0 %7574
      %7576 = vrot.lane.b32.xlu0 %v1043, 16
      %v7577 = vpop.permute.xlu0 %7576
      %v7579 = vsel %vm1286, %v7575, 0
      %v7582 = vsel %vm1286, %v7577, 0
      %7584 = vmatprep.subr.bf16.mxu0 0
      %7585 = vmatpush1.bf16.xpose.msra.mxu0 %v7582
      %7586 = vmatprep.subr.bf16.mxu0 0
      %7587 = vmatpush1.bf16.xpose.msra.mxu0 0
      %7588 = vmatprep.subr.bf16.mxu0 0
      %7589 = vmatpush1.bf16.xpose.msra.mxu0 0
      %7590 = vmatprep.subr.bf16.mxu0 0
      %7591 = vmatpush1.bf16.xpose.msra.mxu0 0
      %7592 = vmatprep.subr.bf16.mxu0 0
      %7593 = vmatpush1.bf16.xpose.msra.mxu0 0
      %7594 = vmatprep.subr.bf16.mxu0 0
      %7595 = vmatpush1.bf16.xpose.msra.mxu0 0
      %7596 = vmatprep.subr.bf16.mxu0 0
      %7597 = vmatpush1.bf16.xpose.msra.mxu0 0
      %7598 = vmatprep.subr.bf16.mxu0 0
      %7599 = vmatpush1.bf16.xpose.msra.mxu0 0
      %7600 = vmatprep.subr.bf16.mxu0 0
      %7601 = vmatpush1.bf16.xpose.msra.mxu0 0
      %7602 = vmatprep.subr.bf16.mxu0 0
      %7603 = vmatpush1.bf16.xpose.msra.mxu0 0
      %7604 = vmatprep.subr.bf16.mxu0 0
      %7605 = vmatpush1.bf16.xpose.msra.mxu0 0
      %7606 = vmatprep.subr.bf16.mxu0 0
      %7607 = vmatpush1.bf16.xpose.msra.mxu0 0
      %7608 = vmatprep.subr.bf16.mxu0 0
      %7609 = vmatpush1.bf16.xpose.msra.mxu0 0
      %7610 = vmatprep.subr.bf16.mxu0 0
      %7611 = vmatpush1.bf16.xpose.msra.mxu0 0
      %7612 = vmatprep.subr.bf16.mxu0 0
      %7613 = vmatpush1.bf16.xpose.msra.mxu0 0
      %7614 = vmatprep.subr.bf16.mxu0 0
      %7615 = vmatpush1.bf16.xpose.msra.mxu0 0
      %7616 = vmatprep.mubr.bf16.mxu0 0
      %7617 = vmatmul.mubr.bf16.gmra.mrb[0].mxu0 %v7579
      %v7618 = vpop.f32.mrb[0].mxu0
      %v7619 = vadd.f32 %v1259, %v7618
      %v7620 = vpop.f32.mrb[0].mxu0
      %v7621 = vpop.f32.mrb[0].mxu0
      %v7622 = vpop.f32.mrb[0].mxu0
      %7623 = vdwg.mxu0
      %7624 = vrot.lane.b32.xlu0 %v1044, 80
      %v7625 = vpop.permute.xlu0 %7624
      %7626 = vrot.lane.b32.xlu0 %v1044, 16
      %v7627 = vpop.permute.xlu0 %7626
      %v7629 = vsel %vm1286, %v7625, 0
      %v7632 = vsel %vm1286, %v7627, 0
      %7634 = vmatprep.subr.bf16.mxu0 0
      %7635 = vmatpush1.bf16.xpose.msra.mxu0 %v7632
      %7636 = vmatprep.subr.bf16.mxu0 0
      %7637 = vmatpush1.bf16.xpose.msra.mxu0 0
      %7638 = vmatprep.subr.bf16.mxu0 0
      %7639 = vmatpush1.bf16.xpose.msra.mxu0 0
      %7640 = vmatprep.subr.bf16.mxu0 0
      %7641 = vmatpush1.bf16.xpose.msra.mxu0 0
      %7642 = vmatprep.subr.bf16.mxu0 0
      %7643 = vmatpush1.bf16.xpose.msra.mxu0 0
      %7644 = vmatprep.subr.bf16.mxu0 0
      %7645 = vmatpush1.bf16.xpose.msra.mxu0 0
      %7646 = vmatprep.subr.bf16.mxu0 0
      %7647 = vmatpush1.bf16.xpose.msra.mxu0 0
      %7648 = vmatprep.subr.bf16.mxu0 0
      %7649 = vmatpush1.bf16.xpose.msra.mxu0 0
      %7650 = vmatprep.subr.bf16.mxu0 0
      %7651 = vmatpush1.bf16.xpose.msra.mxu0 0
      %7652 = vmatprep.subr.bf16.mxu0 0
      %7653 = vmatpush1.bf16.xpose.msra.mxu0 0
      %7654 = vmatprep.subr.bf16.mxu0 0
      %7655 = vmatpush1.bf16.xpose.msra.mxu0 0
      %7656 = vmatprep.subr.bf16.mxu0 0
      %7657 = vmatpush1.bf16.xpose.msra.mxu0 0
      %7658 = vmatprep.subr.bf16.mxu0 0
      %7659 = vmatpush1.bf16.xpose.msra.mxu0 0
      %7660 = vmatprep.subr.bf16.mxu0 0
      %7661 = vmatpush1.bf16.xpose.msra.mxu0 0
      %7662 = vmatprep.subr.bf16.mxu0 0
      %7663 = vmatpush1.bf16.xpose.msra.mxu0 0
      %7664 = vmatprep.subr.bf16.mxu0 0
      %7665 = vmatpush1.bf16.xpose.msra.mxu0 0
      %7666 = vmatprep.mubr.bf16.mxu0 0
      %7667 = vmatmul.mubr.bf16.gmra.mrb[0].mxu0 %v7629
      %v7668 = vpop.f32.mrb[0].mxu0
      %v7669 = vadd.f32 %v1263, %v7668
      %v7670 = vpop.f32.mrb[0].mxu0
      %v7671 = vpop.f32.mrb[0].mxu0
      %v7672 = vpop.f32.mrb[0].mxu0
      %7673 = vdwg.mxu0
      %7674 = vrot.lane.b32.xlu0 %v1045, 80
      %v7675 = vpop.permute.xlu0 %7674
      %7676 = vrot.lane.b32.xlu0 %v1045, 16
      %v7677 = vpop.permute.xlu0 %7676
      %v7679 = vsel %vm1286, %v7675, 0
      %v7682 = vsel %vm1286, %v7677, 0
      %7684 = vmatprep.subr.bf16.mxu0 0
      %7685 = vmatpush1.bf16.xpose.msra.mxu0 %v7682
      %7686 = vmatprep.subr.bf16.mxu0 0
      %7687 = vmatpush1.bf16.xpose.msra.mxu0 0
      %7688 = vmatprep.subr.bf16.mxu0 0
      %7689 = vmatpush1.bf16.xpose.msra.mxu0 0
      %7690 = vmatprep.subr.bf16.mxu0 0
      %7691 = vmatpush1.bf16.xpose.msra.mxu0 0
      %7692 = vmatprep.subr.bf16.mxu0 0
      %7693 = vmatpush1.bf16.xpose.msra.mxu0 0
      %7694 = vmatprep.subr.bf16.mxu0 0
      %7695 = vmatpush1.bf16.xpose.msra.mxu0 0
      %7696 = vmatprep.subr.bf16.mxu0 0
      %7697 = vmatpush1.bf16.xpose.msra.mxu0 0
      %7698 = vmatprep.subr.bf16.mxu0 0
      %7699 = vmatpush1.bf16.xpose.msra.mxu0 0
      %7700 = vmatprep.subr.bf16.mxu0 0
      %7701 = vmatpush1.bf16.xpose.msra.mxu0 0
      %7702 = vmatprep.subr.bf16.mxu0 0
      %7703 = vmatpush1.bf16.xpose.msra.mxu0 0
      %7704 = vmatprep.subr.bf16.mxu0 0
      %7705 = vmatpush1.bf16.xpose.msra.mxu0 0
      %7706 = vmatprep.subr.bf16.mxu0 0
      %7707 = vmatpush1.bf16.xpose.msra.mxu0 0
      %7708 = vmatprep.subr.bf16.mxu0 0
      %7709 = vmatpush1.bf16.xpose.msra.mxu0 0
      %7710 = vmatprep.subr.bf16.mxu0 0
      %7711 = vmatpush1.bf16.xpose.msra.mxu0 0
      %7712 = vmatprep.subr.bf16.mxu0 0
      %7713 = vmatpush1.bf16.xpose.msra.mxu0 0
      %7714 = vmatprep.subr.bf16.mxu0 0
      %7715 = vmatpush1.bf16.xpose.msra.mxu0 0
      %7716 = vmatprep.mubr.bf16.mxu0 0
      %7717 = vmatmul.mubr.bf16.gmra.mrb[0].mxu0 %v7679
      %v7718 = vpop.f32.mrb[0].mxu0
      %v7719 = vadd.f32 %v1267, %v7718
      %v7720 = vpop.f32.mrb[0].mxu0
      %v7721 = vpop.f32.mrb[0].mxu0
      %v7722 = vpop.f32.mrb[0].mxu0
      %7723 = vdwg.mxu0
      %v7724 = vsel %vm2053, %v6969, -inf
      %7725 = vmax.xlane.f32.xlu0 %v7724
      %v7726 = vpop.xlane.xlu0 %7725
      %v7727 = vsel %vm2053, %v7019, -inf
      %7728 = vmax.xlane.f32.xlu0 %v7727
      %v7729 = vpop.xlane.xlu0 %7728
      %v7730 = vsel %vm2053, %v7069, -inf
      %7731 = vmax.xlane.f32.xlu0 %v7730
      %v7732 = vpop.xlane.xlu0 %7731
      %v7733 = vsel %vm2053, %v7119, -inf
      %7734 = vmax.xlane.f32.xlu0 %v7733
      %v7735 = vpop.xlane.xlu0 %7734
      %v7736 = vsel %vm2053, %v7169, -inf
      %7737 = vmax.xlane.f32.xlu0 %v7736
      %v7738 = vpop.xlane.xlu0 %7737
      %v7739 = vsel %vm2053, %v7219, -inf
      %7740 = vmax.xlane.f32.xlu0 %v7739
      %v7741 = vpop.xlane.xlu0 %7740
      %v7742 = vsel %vm2053, %v7269, -inf
      %7743 = vmax.xlane.f32.xlu0 %v7742
      %v7744 = vpop.xlane.xlu0 %7743
      %v7745 = vsel %vm2053, %v7319, -inf
      %7746 = vmax.xlane.f32.xlu0 %v7745
      %v7747 = vpop.xlane.xlu0 %7746
      %v7748 = vsel %vm2053, %v7369, -inf
      %7749 = vmax.xlane.f32.xlu0 %v7748
      %v7750 = vpop.xlane.xlu0 %7749
      %v7751 = vsel %vm2053, %v7419, -inf
      %7752 = vmax.xlane.f32.xlu0 %v7751
      %v7753 = vpop.xlane.xlu0 %7752
      %v7754 = vsel %vm2053, %v7469, -inf
      %7755 = vmax.xlane.f32.xlu0 %v7754
      %v7756 = vpop.xlane.xlu0 %7755
      %v7757 = vsel %vm2053, %v7519, -inf
      %7758 = vmax.xlane.f32.xlu0 %v7757
      %v7759 = vpop.xlane.xlu0 %7758
      %v7760 = vsel %vm2053, %v7569, -inf
      %7761 = vmax.xlane.f32.xlu0 %v7760
      %v7762 = vpop.xlane.xlu0 %7761
      %v7763 = vsel %vm2053, %v7619, -inf
      %7764 = vmax.xlane.f32.xlu0 %v7763
      %v7765 = vpop.xlane.xlu0 %7764
      %v7766 = vsel %vm2053, %v7669, -inf
      %7767 = vmax.xlane.f32.xlu0 %v7766
      %v7768 = vpop.xlane.xlu0 %7767
      %v7769 = vsel %vm2053, %v7719, -inf
      %7770 = vmax.xlane.f32.xlu0 %v7769
      %v7771 = vpop.xlane.xlu0 %7770
      %v7772 = vsub.f32 %v6969, %v7726
      %v7773 = vsub.f32 %v7019, %v7729
      %v7774 = vsub.f32 %v7069, %v7732
      %v7775 = vsub.f32 %v7119, %v7735
      %v7776 = vsub.f32 %v7169, %v7738
      %v7777 = vsub.f32 %v7219, %v7741
      %v7778 = vsub.f32 %v7269, %v7744
      %v7779 = vsub.f32 %v7319, %v7747
      %v7780 = vsub.f32 %v7369, %v7750
      %v7781 = vsub.f32 %v7419, %v7753
      %v7782 = vsub.f32 %v7469, %v7756
      %v7783 = vsub.f32 %v7519, %v7759
      %v7784 = vsub.f32 %v7569, %v7762
      %v7785 = vsub.f32 %v7619, %v7765
      %v7786 = vsub.f32 %v7669, %v7768
      %v7787 = vsub.f32 %v7719, %v7771
      %v7788 = vmul.f32 %v7772, 1.442695
      %v7789 = vpow.pop %v7788
      %v7790 = vmul.f32 %v7773, 1.442695
      %v7791 = vpow.pop %v7790
      %v7792 = vmul.f32 %v7774, 1.442695
      %v7793 = vpow.pop %v7792
      %v7794 = vmul.f32 %v7775, 1.442695
      %v7795 = vpow.pop %v7794
      %v7796 = vmul.f32 %v7776, 1.442695
      %v7797 = vpow.pop %v7796
      %v7798 = vmul.f32 %v7777, 1.442695
      %v7799 = vpow.pop %v7798
      %v7800 = vmul.f32 %v7778, 1.442695
      %v7801 = vpow.pop %v7800
      %v7802 = vmul.f32 %v7779, 1.442695
      %v7803 = vpow.pop %v7802
      %v7804 = vmul.f32 %v7780, 1.442695
      %v7805 = vpow.pop %v7804
      %v7806 = vmul.f32 %v7781, 1.442695
      %v7807 = vpow.pop %v7806
      %v7808 = vmul.f32 %v7782, 1.442695
      %v7809 = vpow.pop %v7808
      %v7810 = vmul.f32 %v7783, 1.442695
      %v7811 = vpow.pop %v7810
      %v7812 = vmul.f32 %v7784, 1.442695
      %v7813 = vpow.pop %v7812
      %v7814 = vmul.f32 %v7785, 1.442695
      %v7815 = vpow.pop %v7814
      %v7816 = vmul.f32 %v7786, 1.442695
      %v7817 = vpow.pop %v7816
      %v7818 = vmul.f32 %v7787, 1.442695
      %v7819 = vpow.pop %v7818
      %v7820 = vsel %vm2053, %v7789, 0.0
      %7821 = vadd.xlane.f32.xlu0 %v7820
      %v7822 = vpop.xlane.xlu0 %7821
      %v7823 = vsel %vm2053, %v7791, 0.0
      %7824 = vadd.xlane.f32.xlu0 %v7823
      %v7825 = vpop.xlane.xlu0 %7824
      %v7826 = vsel %vm2053, %v7793, 0.0
      %7827 = vadd.xlane.f32.xlu0 %v7826
      %v7828 = vpop.xlane.xlu0 %7827
      %v7829 = vsel %vm2053, %v7795, 0.0
      %7830 = vadd.xlane.f32.xlu0 %v7829
      %v7831 = vpop.xlane.xlu0 %7830
      %v7832 = vsel %vm2053, %v7797, 0.0
      %7833 = vadd.xlane.f32.xlu0 %v7832
      %v7834 = vpop.xlane.xlu0 %7833
      %v7835 = vsel %vm2053, %v7799, 0.0
      %7836 = vadd.xlane.f32.xlu0 %v7835
      %v7837 = vpop.xlane.xlu0 %7836
      %v7838 = vsel %vm2053, %v7801, 0.0
      %7839 = vadd.xlane.f32.xlu0 %v7838
      %v7840 = vpop.xlane.xlu0 %7839
      %v7841 = vsel %vm2053, %v7803, 0.0
      %7842 = vadd.xlane.f32.xlu0 %v7841
      %v7843 = vpop.xlane.xlu0 %7842
      %v7844 = vsel %vm2053, %v7805, 0.0
      %7845 = vadd.xlane.f32.xlu0 %v7844
      %v7846 = vpop.xlane.xlu0 %7845
      %v7847 = vsel %vm2053, %v7807, 0.0
      %7848 = vadd.xlane.f32.xlu0 %v7847
      %v7849 = vpop.xlane.xlu0 %7848
      %v7850 = vsel %vm2053, %v7809, 0.0
      %7851 = vadd.xlane.f32.xlu0 %v7850
      %v7852 = vpop.xlane.xlu0 %7851
      %v7853 = vsel %vm2053, %v7811, 0.0
      %7854 = vadd.xlane.f32.xlu0 %v7853
      %v7855 = vpop.xlane.xlu0 %7854
      %v7856 = vsel %vm2053, %v7813, 0.0
      %7857 = vadd.xlane.f32.xlu0 %v7856
      %v7858 = vpop.xlane.xlu0 %7857
      %v7859 = vsel %vm2053, %v7815, 0.0
      %7860 = vadd.xlane.f32.xlu0 %v7859
      %v7861 = vpop.xlane.xlu0 %7860
      %v7862 = vsel %vm2053, %v7817, 0.0
      %7863 = vadd.xlane.f32.xlu0 %v7862
      %v7864 = vpop.xlane.xlu0 %7863
      %v7865 = vsel %vm2053, %v7819, 0.0
      %7866 = vadd.xlane.f32.xlu0 %v7865
      %v7867 = vpop.xlane.xlu0 %7866
      %v7868 = vrcp.pop %v7822
      %v7869 = vrcp.pop %v7825
      %v7870 = vrcp.pop %v7828
      %v7871 = vrcp.pop %v7831
      %v7872 = vrcp.pop %v7834
      %v7873 = vrcp.pop %v7837
      %v7874 = vrcp.pop %v7840
      %v7875 = vrcp.pop %v7843
      %v7876 = vrcp.pop %v7846
      %v7877 = vrcp.pop %v7849
      %v7878 = vrcp.pop %v7852
      %v7879 = vrcp.pop %v7855
      %v7880 = vrcp.pop %v7858
      %v7881 = vrcp.pop %v7861
      %v7882 = vrcp.pop %v7864
      %v7883 = vrcp.pop %v7867
      %v7884 = vmul.f32 %v7789, %v7868
      %v7885 = vmul.f32 %v7791, %v7869
      %v7886 = vmul.f32 %v7793, %v7870
      %v7887 = vmul.f32 %v7795, %v7871
      %v7888 = vmul.f32 %v7797, %v7872
      %v7889 = vmul.f32 %v7799, %v7873
      %v7890 = vmul.f32 %v7801, %v7874
      %v7891 = vmul.f32 %v7803, %v7875
      %v7892 = vmul.f32 %v7805, %v7876
      %v7893 = vmul.f32 %v7807, %v7877
      %v7894 = vmul.f32 %v7809, %v7878
      %v7895 = vmul.f32 %v7811, %v7879
      %v7896 = vmul.f32 %v7813, %v7880
      %v7897 = vmul.f32 %v7815, %v7881
      %v7898 = vmul.f32 %v7817, %v7882
      %v7899 = vmul.f32 %v7819, %v7883
      %v7900 = vpack.c.bf16 %v7884, %v7884
      %v7901 = vpack.c.bf16 %v7885, %v7885
      %v7902 = vpack.c.bf16 %v7886, %v7886
      %v7903 = vpack.c.bf16 %v7887, %v7887
      %v7904 = vpack.c.bf16 %v7888, %v7888
      %v7905 = vpack.c.bf16 %v7889, %v7889
      %v7906 = vpack.c.bf16 %v7890, %v7890
      %v7907 = vpack.c.bf16 %v7891, %v7891
      %v7908 = vpack.c.bf16 %v7892, %v7892
      %v7909 = vpack.c.bf16 %v7893, %v7893
      %v7910 = vpack.c.bf16 %v7894, %v7894
      %v7911 = vpack.c.bf16 %v7895, %v7895
      %v7912 = vpack.c.bf16 %v7896, %v7896
      %v7913 = vpack.c.bf16 %v7897, %v7897
      %v7914 = vpack.c.bf16 %v7898, %v7898
      %v7915 = vpack.c.bf16 %v7899, %v7899
      %7916 = vrot.lane.b32.xlu0 %v1078, 80
      %v7917 = vpop.permute.xlu0 %7916
      %v7919 = vsel %vm2053, %v7900, 0
      %v7922 = vsel %vm2249, %v7917, 0
      %7924 = vmatprep.subr.bf16.mxu0 0
      %7925 = vmatpush1.bf16.msra.mxu0 %v7922
      %7926 = vmatprep.subr.bf16.mxu0 0
      %7927 = vmatpush1.bf16.msra.mxu0 0
      %7928 = vmatprep.subr.bf16.mxu0 0
      %7929 = vmatpush1.bf16.msra.mxu0 0
      %7930 = vmatprep.subr.bf16.mxu0 0
      %7931 = vmatpush1.bf16.msra.mxu0 0
      %7932 = vmatprep.subr.bf16.mxu0 0
      %7933 = vmatpush1.bf16.msra.mxu0 0
      %7934 = vmatprep.subr.bf16.mxu0 0
      %7935 = vmatpush1.bf16.msra.mxu0 0
      %7936 = vmatprep.subr.bf16.mxu0 0
      %7937 = vmatpush1.bf16.msra.mxu0 0
      %7938 = vmatprep.subr.bf16.mxu0 0
      %7939 = vmatpush1.bf16.msra.mxu0 0
      %7940 = vmatprep.subr.bf16.mxu0 0
      %7941 = vmatpush1.bf16.msra.mxu0 0
      %7942 = vmatprep.subr.bf16.mxu0 0
      %7943 = vmatpush1.bf16.msra.mxu0 0
      %7944 = vmatprep.subr.bf16.mxu0 0
      %7945 = vmatpush1.bf16.msra.mxu0 0
      %7946 = vmatprep.subr.bf16.mxu0 0
      %7947 = vmatpush1.bf16.msra.mxu0 0
      %7948 = vmatprep.subr.bf16.mxu0 0
      %7949 = vmatpush1.bf16.msra.mxu0 0
      %7950 = vmatprep.subr.bf16.mxu0 0
      %7951 = vmatpush1.bf16.msra.mxu0 0
      %7952 = vmatprep.subr.bf16.mxu0 0
      %7953 = vmatpush1.bf16.msra.mxu0 0
      %7954 = vmatprep.subr.bf16.mxu0 0
      %7955 = vmatpush1.bf16.msra.mxu0 0
      %7956 = vmatprep.mubr.bf16.mxu0 0
      %7957 = vmatmul.mubr.bf16.gmra.mrb[0].mxu0 %v7919
      %v7958 = vpop.f32.mrb[0].mxu0
      %v7959 = vadd.f32 0.0, %v7958
      %v7960 = vpop.f32.mrb[0].mxu0
      %v7961 = vpop.f32.mrb[0].mxu0
      %v7962 = vpop.f32.mrb[0].mxu0
      %7963 = vdwg.mxu0
      %7964 = vrot.lane.b32.xlu0 %v1079, 80
      %v7965 = vpop.permute.xlu0 %7964
      %v7967 = vsel %vm2053, %v7901, 0
      %v7970 = vsel %vm2249, %v7965, 0
      %7972 = vmatprep.subr.bf16.mxu0 0
      %7973 = vmatpush1.bf16.msra.mxu0 %v7970
      %7974 = vmatprep.subr.bf16.mxu0 0
      %7975 = vmatpush1.bf16.msra.mxu0 0
      %7976 = vmatprep.subr.bf16.mxu0 0
      %7977 = vmatpush1.bf16.msra.mxu0 0
      %7978 = vmatprep.subr.bf16.mxu0 0
      %7979 = vmatpush1.bf16.msra.mxu0 0
      %7980 = vmatprep.subr.bf16.mxu0 0
      %7981 = vmatpush1.bf16.msra.mxu0 0
      %7982 = vmatprep.subr.bf16.mxu0 0
      %7983 = vmatpush1.bf16.msra.mxu0 0
      %7984 = vmatprep.subr.bf16.mxu0 0
      %7985 = vmatpush1.bf16.msra.mxu0 0
      %7986 = vmatprep.subr.bf16.mxu0 0
      %7987 = vmatpush1.bf16.msra.mxu0 0
      %7988 = vmatprep.subr.bf16.mxu0 0
      %7989 = vmatpush1.bf16.msra.mxu0 0
      %7990 = vmatprep.subr.bf16.mxu0 0
      %7991 = vmatpush1.bf16.msra.mxu0 0
      %7992 = vmatprep.subr.bf16.mxu0 0
      %7993 = vmatpush1.bf16.msra.mxu0 0
      %7994 = vmatprep.subr.bf16.mxu0 0
      %7995 = vmatpush1.bf16.msra.mxu0 0
      %7996 = vmatprep.subr.bf16.mxu0 0
      %7997 = vmatpush1.bf16.msra.mxu0 0
      %7998 = vmatprep.subr.bf16.mxu0 0
      %7999 = vmatpush1.bf16.msra.mxu0 0
      %8000 = vmatprep.subr.bf16.mxu0 0
      %8001 = vmatpush1.bf16.msra.mxu0 0
      %8002 = vmatprep.subr.bf16.mxu0 0
      %8003 = vmatpush1.bf16.msra.mxu0 0
      %8004 = vmatprep.mubr.bf16.mxu0 0
      %8005 = vmatmul.mubr.bf16.gmra.mrb[0].mxu0 %v7967
      %v8006 = vpop.f32.mrb[0].mxu0
      %v8007 = vadd.f32 0.0, %v8006
      %v8008 = vpop.f32.mrb[0].mxu0
      %v8009 = vpop.f32.mrb[0].mxu0
      %v8010 = vpop.f32.mrb[0].mxu0
      %8011 = vdwg.mxu0
      %8012 = vrot.lane.b32.xlu0 %v1080, 80
      %v8013 = vpop.permute.xlu0 %8012
      %v8015 = vsel %vm2053, %v7902, 0
      %v8018 = vsel %vm2249, %v8013, 0
      %8020 = vmatprep.subr.bf16.mxu0 0
      %8021 = vmatpush1.bf16.msra.mxu0 %v8018
      %8022 = vmatprep.subr.bf16.mxu0 0
      %8023 = vmatpush1.bf16.msra.mxu0 0
      %8024 = vmatprep.subr.bf16.mxu0 0
      %8025 = vmatpush1.bf16.msra.mxu0 0
      %8026 = vmatprep.subr.bf16.mxu0 0
      %8027 = vmatpush1.bf16.msra.mxu0 0
      %8028 = vmatprep.subr.bf16.mxu0 0
      %8029 = vmatpush1.bf16.msra.mxu0 0
      %8030 = vmatprep.subr.bf16.mxu0 0
      %8031 = vmatpush1.bf16.msra.mxu0 0
      %8032 = vmatprep.subr.bf16.mxu0 0
      %8033 = vmatpush1.bf16.msra.mxu0 0
      %8034 = vmatprep.subr.bf16.mxu0 0
      %8035 = vmatpush1.bf16.msra.mxu0 0
      %8036 = vmatprep.subr.bf16.mxu0 0
      %8037 = vmatpush1.bf16.msra.mxu0 0
      %8038 = vmatprep.subr.bf16.mxu0 0
      %8039 = vmatpush1.bf16.msra.mxu0 0
      %8040 = vmatprep.subr.bf16.mxu0 0
      %8041 = vmatpush1.bf16.msra.mxu0 0
      %8042 = vmatprep.subr.bf16.mxu0 0
      %8043 = vmatpush1.bf16.msra.mxu0 0
      %8044 = vmatprep.subr.bf16.mxu0 0
      %8045 = vmatpush1.bf16.msra.mxu0 0
      %8046 = vmatprep.subr.bf16.mxu0 0
      %8047 = vmatpush1.bf16.msra.mxu0 0
      %8048 = vmatprep.subr.bf16.mxu0 0
      %8049 = vmatpush1.bf16.msra.mxu0 0
      %8050 = vmatprep.subr.bf16.mxu0 0
      %8051 = vmatpush1.bf16.msra.mxu0 0
      %8052 = vmatprep.mubr.bf16.mxu0 0
      %8053 = vmatmul.mubr.bf16.gmra.mrb[0].mxu0 %v8015
      %v8054 = vpop.f32.mrb[0].mxu0
      %v8055 = vadd.f32 0.0, %v8054
      %v8056 = vpop.f32.mrb[0].mxu0
      %v8057 = vpop.f32.mrb[0].mxu0
      %v8058 = vpop.f32.mrb[0].mxu0
      %8059 = vdwg.mxu0
      %8060 = vrot.lane.b32.xlu0 %v1081, 80
      %v8061 = vpop.permute.xlu0 %8060
      %v8063 = vsel %vm2053, %v7903, 0
      %v8066 = vsel %vm2249, %v8061, 0
      %8068 = vmatprep.subr.bf16.mxu0 0
      %8069 = vmatpush1.bf16.msra.mxu0 %v8066
      %8070 = vmatprep.subr.bf16.mxu0 0
      %8071 = vmatpush1.bf16.msra.mxu0 0
      %8072 = vmatprep.subr.bf16.mxu0 0
      %8073 = vmatpush1.bf16.msra.mxu0 0
      %8074 = vmatprep.subr.bf16.mxu0 0
      %8075 = vmatpush1.bf16.msra.mxu0 0
      %8076 = vmatprep.subr.bf16.mxu0 0
      %8077 = vmatpush1.bf16.msra.mxu0 0
      %8078 = vmatprep.subr.bf16.mxu0 0
      %8079 = vmatpush1.bf16.msra.mxu0 0
      %8080 = vmatprep.subr.bf16.mxu0 0
      %8081 = vmatpush1.bf16.msra.mxu0 0
      %8082 = vmatprep.subr.bf16.mxu0 0
      %8083 = vmatpush1.bf16.msra.mxu0 0
      %8084 = vmatprep.subr.bf16.mxu0 0
      %8085 = vmatpush1.bf16.msra.mxu0 0
      %8086 = vmatprep.subr.bf16.mxu0 0
      %8087 = vmatpush1.bf16.msra.mxu0 0
      %8088 = vmatprep.subr.bf16.mxu0 0
      %8089 = vmatpush1.bf16.msra.mxu0 0
      %8090 = vmatprep.subr.bf16.mxu0 0
      %8091 = vmatpush1.bf16.msra.mxu0 0
      %8092 = vmatprep.subr.bf16.mxu0 0
      %8093 = vmatpush1.bf16.msra.mxu0 0
      %8094 = vmatprep.subr.bf16.mxu0 0
      %8095 = vmatpush1.bf16.msra.mxu0 0
      %8096 = vmatprep.subr.bf16.mxu0 0
      %8097 = vmatpush1.bf16.msra.mxu0 0
      %8098 = vmatprep.subr.bf16.mxu0 0
      %8099 = vmatpush1.bf16.msra.mxu0 0
      %8100 = vmatprep.mubr.bf16.mxu0 0
      %8101 = vmatmul.mubr.bf16.gmra.mrb[0].mxu0 %v8063
      %v8102 = vpop.f32.mrb[0].mxu0
      %v8103 = vadd.f32 0.0, %v8102
      %v8104 = vpop.f32.mrb[0].mxu0
      %v8105 = vpop.f32.mrb[0].mxu0
      %v8106 = vpop.f32.mrb[0].mxu0
      %8107 = vdwg.mxu0
      %8108 = vrot.lane.b32.xlu0 %v1082, 80
      %v8109 = vpop.permute.xlu0 %8108
      %v8111 = vsel %vm2053, %v7904, 0
      %v8114 = vsel %vm2249, %v8109, 0
      %8116 = vmatprep.subr.bf16.mxu0 0
      %8117 = vmatpush1.bf16.msra.mxu0 %v8114
      %8118 = vmatprep.subr.bf16.mxu0 0
      %8119 = vmatpush1.bf16.msra.mxu0 0
      %8120 = vmatprep.subr.bf16.mxu0 0
      %8121 = vmatpush1.bf16.msra.mxu0 0
      %8122 = vmatprep.subr.bf16.mxu0 0
      %8123 = vmatpush1.bf16.msra.mxu0 0
      %8124 = vmatprep.subr.bf16.mxu0 0
      %8125 = vmatpush1.bf16.msra.mxu0 0
      %8126 = vmatprep.subr.bf16.mxu0 0
      %8127 = vmatpush1.bf16.msra.mxu0 0
      %8128 = vmatprep.subr.bf16.mxu0 0
      %8129 = vmatpush1.bf16.msra.mxu0 0
      %8130 = vmatprep.subr.bf16.mxu0 0
      %8131 = vmatpush1.bf16.msra.mxu0 0
      %8132 = vmatprep.subr.bf16.mxu0 0
      %8133 = vmatpush1.bf16.msra.mxu0 0
      %8134 = vmatprep.subr.bf16.mxu0 0
      %8135 = vmatpush1.bf16.msra.mxu0 0
      %8136 = vmatprep.subr.bf16.mxu0 0
      %8137 = vmatpush1.bf16.msra.mxu0 0
      %8138 = vmatprep.subr.bf16.mxu0 0
      %8139 = vmatpush1.bf16.msra.mxu0 0
      %8140 = vmatprep.subr.bf16.mxu0 0
      %8141 = vmatpush1.bf16.msra.mxu0 0
      %8142 = vmatprep.subr.bf16.mxu0 0
      %8143 = vmatpush1.bf16.msra.mxu0 0
      %8144 = vmatprep.subr.bf16.mxu0 0
      %8145 = vmatpush1.bf16.msra.mxu0 0
      %8146 = vmatprep.subr.bf16.mxu0 0
      %8147 = vmatpush1.bf16.msra.mxu0 0
      %8148 = vmatprep.mubr.bf16.mxu0 0
      %8149 = vmatmul.mubr.bf16.gmra.mrb[0].mxu0 %v8111
      %v8150 = vpop.f32.mrb[0].mxu0
      %v8151 = vadd.f32 0.0, %v8150
      %v8152 = vpop.f32.mrb[0].mxu0
      %v8153 = vpop.f32.mrb[0].mxu0
      %v8154 = vpop.f32.mrb[0].mxu0
      %8155 = vdwg.mxu0
      %8156 = vrot.lane.b32.xlu0 %v1083, 80
      %v8157 = vpop.permute.xlu0 %8156
      %v8159 = vsel %vm2053, %v7905, 0
      %v8162 = vsel %vm2249, %v8157, 0
      %8164 = vmatprep.subr.bf16.mxu0 0
      %8165 = vmatpush1.bf16.msra.mxu0 %v8162
      %8166 = vmatprep.subr.bf16.mxu0 0
      %8167 = vmatpush1.bf16.msra.mxu0 0
      %8168 = vmatprep.subr.bf16.mxu0 0
      %8169 = vmatpush1.bf16.msra.mxu0 0
      %8170 = vmatprep.subr.bf16.mxu0 0
      %8171 = vmatpush1.bf16.msra.mxu0 0
      %8172 = vmatprep.subr.bf16.mxu0 0
      %8173 = vmatpush1.bf16.msra.mxu0 0
      %8174 = vmatprep.subr.bf16.mxu0 0
      %8175 = vmatpush1.bf16.msra.mxu0 0
      %8176 = vmatprep.subr.bf16.mxu0 0
      %8177 = vmatpush1.bf16.msra.mxu0 0
      %8178 = vmatprep.subr.bf16.mxu0 0
      %8179 = vmatpush1.bf16.msra.mxu0 0
      %8180 = vmatprep.subr.bf16.mxu0 0
      %8181 = vmatpush1.bf16.msra.mxu0 0
      %8182 = vmatprep.subr.bf16.mxu0 0
      %8183 = vmatpush1.bf16.msra.mxu0 0
      %8184 = vmatprep.subr.bf16.mxu0 0
      %8185 = vmatpush1.bf16.msra.mxu0 0
      %8186 = vmatprep.subr.bf16.mxu0 0
      %8187 = vmatpush1.bf16.msra.mxu0 0
      %8188 = vmatprep.subr.bf16.mxu0 0
      %8189 = vmatpush1.bf16.msra.mxu0 0
      %8190 = vmatprep.subr.bf16.mxu0 0
      %8191 = vmatpush1.bf16.msra.mxu0 0
      %8192 = vmatprep.subr.bf16.mxu0 0
      %8193 = vmatpush1.bf16.msra.mxu0 0
      %8194 = vmatprep.subr.bf16.mxu0 0
      %8195 = vmatpush1.bf16.msra.mxu0 0
      %8196 = vmatprep.mubr.bf16.mxu0 0
      %8197 = vmatmul.mubr.bf16.gmra.mrb[0].mxu0 %v8159
      %v8198 = vpop.f32.mrb[0].mxu0
      %v8199 = vadd.f32 0.0, %v8198
      %v8200 = vpop.f32.mrb[0].mxu0
      %v8201 = vpop.f32.mrb[0].mxu0
      %v8202 = vpop.f32.mrb[0].mxu0
      %8203 = vdwg.mxu0
      %8204 = vrot.lane.b32.xlu0 %v1084, 80
      %v8205 = vpop.permute.xlu0 %8204
      %v8207 = vsel %vm2053, %v7906, 0
      %v8210 = vsel %vm2249, %v8205, 0
      %8212 = vmatprep.subr.bf16.mxu0 0
      %8213 = vmatpush1.bf16.msra.mxu0 %v8210
      %8214 = vmatprep.subr.bf16.mxu0 0
      %8215 = vmatpush1.bf16.msra.mxu0 0
      %8216 = vmatprep.subr.bf16.mxu0 0
      %8217 = vmatpush1.bf16.msra.mxu0 0
      %8218 = vmatprep.subr.bf16.mxu0 0
      %8219 = vmatpush1.bf16.msra.mxu0 0
      %8220 = vmatprep.subr.bf16.mxu0 0
      %8221 = vmatpush1.bf16.msra.mxu0 0
      %8222 = vmatprep.subr.bf16.mxu0 0
      %8223 = vmatpush1.bf16.msra.mxu0 0
      %8224 = vmatprep.subr.bf16.mxu0 0
      %8225 = vmatpush1.bf16.msra.mxu0 0
      %8226 = vmatprep.subr.bf16.mxu0 0
      %8227 = vmatpush1.bf16.msra.mxu0 0
      %8228 = vmatprep.subr.bf16.mxu0 0
      %8229 = vmatpush1.bf16.msra.mxu0 0
      %8230 = vmatprep.subr.bf16.mxu0 0
      %8231 = vmatpush1.bf16.msra.mxu0 0
      %8232 = vmatprep.subr.bf16.mxu0 0
      %8233 = vmatpush1.bf16.msra.mxu0 0
      %8234 = vmatprep.subr.bf16.mxu0 0
      %8235 = vmatpush1.bf16.msra.mxu0 0
      %8236 = vmatprep.subr.bf16.mxu0 0
      %8237 = vmatpush1.bf16.msra.mxu0 0
      %8238 = vmatprep.subr.bf16.mxu0 0
      %8239 = vmatpush1.bf16.msra.mxu0 0
      %8240 = vmatprep.subr.bf16.mxu0 0
      %8241 = vmatpush1.bf16.msra.mxu0 0
      %8242 = vmatprep.subr.bf16.mxu0 0
      %8243 = vmatpush1.bf16.msra.mxu0 0
      %8244 = vmatprep.mubr.bf16.mxu0 0
      %8245 = vmatmul.mubr.bf16.gmra.mrb[0].mxu0 %v8207
      %v8246 = vpop.f32.mrb[0].mxu0
      %v8247 = vadd.f32 0.0, %v8246
      %v8248 = vpop.f32.mrb[0].mxu0
      %v8249 = vpop.f32.mrb[0].mxu0
      %v8250 = vpop.f32.mrb[0].mxu0
      %8251 = vdwg.mxu0
      %8252 = vrot.lane.b32.xlu0 %v1085, 80
      %v8253 = vpop.permute.xlu0 %8252
      %v8255 = vsel %vm2053, %v7907, 0
      %v8258 = vsel %vm2249, %v8253, 0
      %8260 = vmatprep.subr.bf16.mxu0 0
      %8261 = vmatpush1.bf16.msra.mxu0 %v8258
      %8262 = vmatprep.subr.bf16.mxu0 0
      %8263 = vmatpush1.bf16.msra.mxu0 0
      %8264 = vmatprep.subr.bf16.mxu0 0
      %8265 = vmatpush1.bf16.msra.mxu0 0
      %8266 = vmatprep.subr.bf16.mxu0 0
      %8267 = vmatpush1.bf16.msra.mxu0 0
      %8268 = vmatprep.subr.bf16.mxu0 0
      %8269 = vmatpush1.bf16.msra.mxu0 0
      %8270 = vmatprep.subr.bf16.mxu0 0
      %8271 = vmatpush1.bf16.msra.mxu0 0
      %8272 = vmatprep.subr.bf16.mxu0 0
      %8273 = vmatpush1.bf16.msra.mxu0 0
      %8274 = vmatprep.subr.bf16.mxu0 0
      %8275 = vmatpush1.bf16.msra.mxu0 0
      %8276 = vmatprep.subr.bf16.mxu0 0
      %8277 = vmatpush1.bf16.msra.mxu0 0
      %8278 = vmatprep.subr.bf16.mxu0 0
      %8279 = vmatpush1.bf16.msra.mxu0 0
      %8280 = vmatprep.subr.bf16.mxu0 0
      %8281 = vmatpush1.bf16.msra.mxu0 0
      %8282 = vmatprep.subr.bf16.mxu0 0
      %8283 = vmatpush1.bf16.msra.mxu0 0
      %8284 = vmatprep.subr.bf16.mxu0 0
      %8285 = vmatpush1.bf16.msra.mxu0 0
      %8286 = vmatprep.subr.bf16.mxu0 0
      %8287 = vmatpush1.bf16.msra.mxu0 0
      %8288 = vmatprep.subr.bf16.mxu0 0
      %8289 = vmatpush1.bf16.msra.mxu0 0
      %8290 = vmatprep.subr.bf16.mxu0 0
      %8291 = vmatpush1.bf16.msra.mxu0 0
      %8292 = vmatprep.mubr.bf16.mxu0 0
      %8293 = vmatmul.mubr.bf16.gmra.mrb[0].mxu0 %v8255
      %v8294 = vpop.f32.mrb[0].mxu0
      %v8295 = vadd.f32 0.0, %v8294
      %v8296 = vpop.f32.mrb[0].mxu0
      %v8297 = vpop.f32.mrb[0].mxu0
      %v8298 = vpop.f32.mrb[0].mxu0
      %8299 = vdwg.mxu0
      %8300 = vrot.lane.b32.xlu0 %v1086, 80
      %v8301 = vpop.permute.xlu0 %8300
      %v8303 = vsel %vm2053, %v7908, 0
      %v8306 = vsel %vm2249, %v8301, 0
      %8308 = vmatprep.subr.bf16.mxu0 0
      %8309 = vmatpush1.bf16.msra.mxu0 %v8306
      %8310 = vmatprep.subr.bf16.mxu0 0
      %8311 = vmatpush1.bf16.msra.mxu0 0
      %8312 = vmatprep.subr.bf16.mxu0 0
      %8313 = vmatpush1.bf16.msra.mxu0 0
      %8314 = vmatprep.subr.bf16.mxu0 0
      %8315 = vmatpush1.bf16.msra.mxu0 0
      %8316 = vmatprep.subr.bf16.mxu0 0
      %8317 = vmatpush1.bf16.msra.mxu0 0
      %8318 = vmatprep.subr.bf16.mxu0 0
      %8319 = vmatpush1.bf16.msra.mxu0 0
      %8320 = vmatprep.subr.bf16.mxu0 0
      %8321 = vmatpush1.bf16.msra.mxu0 0
      %8322 = vmatprep.subr.bf16.mxu0 0
      %8323 = vmatpush1.bf16.msra.mxu0 0
      %8324 = vmatprep.subr.bf16.mxu0 0
      %8325 = vmatpush1.bf16.msra.mxu0 0
      %8326 = vmatprep.subr.bf16.mxu0 0
      %8327 = vmatpush1.bf16.msra.mxu0 0
      %8328 = vmatprep.subr.bf16.mxu0 0
      %8329 = vmatpush1.bf16.msra.mxu0 0
      %8330 = vmatprep.subr.bf16.mxu0 0
      %8331 = vmatpush1.bf16.msra.mxu0 0
      %8332 = vmatprep.subr.bf16.mxu0 0
      %8333 = vmatpush1.bf16.msra.mxu0 0
      %8334 = vmatprep.subr.bf16.mxu0 0
      %8335 = vmatpush1.bf16.msra.mxu0 0
      %8336 = vmatprep.subr.bf16.mxu0 0
      %8337 = vmatpush1.bf16.msra.mxu0 0
      %8338 = vmatprep.subr.bf16.mxu0 0
      %8339 = vmatpush1.bf16.msra.mxu0 0
      %8340 = vmatprep.mubr.bf16.mxu0 0
      %8341 = vmatmul.mubr.bf16.gmra.mrb[0].mxu0 %v8303
      %v8342 = vpop.f32.mrb[0].mxu0
      %v8343 = vadd.f32 0.0, %v8342
      %v8344 = vpop.f32.mrb[0].mxu0
      %v8345 = vpop.f32.mrb[0].mxu0
      %v8346 = vpop.f32.mrb[0].mxu0
      %8347 = vdwg.mxu0
      %8348 = vrot.lane.b32.xlu0 %v1087, 80
      %v8349 = vpop.permute.xlu0 %8348
      %v8351 = vsel %vm2053, %v7909, 0
      %v8354 = vsel %vm2249, %v8349, 0
      %8356 = vmatprep.subr.bf16.mxu0 0
      %8357 = vmatpush1.bf16.msra.mxu0 %v8354
      %8358 = vmatprep.subr.bf16.mxu0 0
      %8359 = vmatpush1.bf16.msra.mxu0 0
      %8360 = vmatprep.subr.bf16.mxu0 0
      %8361 = vmatpush1.bf16.msra.mxu0 0
      %8362 = vmatprep.subr.bf16.mxu0 0
      %8363 = vmatpush1.bf16.msra.mxu0 0
      %8364 = vmatprep.subr.bf16.mxu0 0
      %8365 = vmatpush1.bf16.msra.mxu0 0
      %8366 = vmatprep.subr.bf16.mxu0 0
      %8367 = vmatpush1.bf16.msra.mxu0 0
      %8368 = vmatprep.subr.bf16.mxu0 0
      %8369 = vmatpush1.bf16.msra.mxu0 0
      %8370 = vmatprep.subr.bf16.mxu0 0
      %8371 = vmatpush1.bf16.msra.mxu0 0
      %8372 = vmatprep.subr.bf16.mxu0 0
      %8373 = vmatpush1.bf16.msra.mxu0 0
      %8374 = vmatprep.subr.bf16.mxu0 0
      %8375 = vmatpush1.bf16.msra.mxu0 0
      %8376 = vmatprep.subr.bf16.mxu0 0
      %8377 = vmatpush1.bf16.msra.mxu0 0
      %8378 = vmatprep.subr.bf16.mxu0 0
      %8379 = vmatpush1.bf16.msra.mxu0 0
      %8380 = vmatprep.subr.bf16.mxu0 0
      %8381 = vmatpush1.bf16.msra.mxu0 0
      %8382 = vmatprep.subr.bf16.mxu0 0
      %8383 = vmatpush1.bf16.msra.mxu0 0
      %8384 = vmatprep.subr.bf16.mxu0 0
      %8385 = vmatpush1.bf16.msra.mxu0 0
      %8386 = vmatprep.subr.bf16.mxu0 0
      %8387 = vmatpush1.bf16.msra.mxu0 0
      %8388 = vmatprep.mubr.bf16.mxu0 0
      %8389 = vmatmul.mubr.bf16.gmra.mrb[0].mxu0 %v8351
      %v8390 = vpop.f32.mrb[0].mxu0
      %v8391 = vadd.f32 0.0, %v8390
      %v8392 = vpop.f32.mrb[0].mxu0
      %v8393 = vpop.f32.mrb[0].mxu0
      %v8394 = vpop.f32.mrb[0].mxu0
      %8395 = vdwg.mxu0
      %8396 = vrot.lane.b32.xlu0 %v1088, 80
      %v8397 = vpop.permute.xlu0 %8396
      %v8399 = vsel %vm2053, %v7910, 0
      %v8402 = vsel %vm2249, %v8397, 0
      %8404 = vmatprep.subr.bf16.mxu0 0
      %8405 = vmatpush1.bf16.msra.mxu0 %v8402
      %8406 = vmatprep.subr.bf16.mxu0 0
      %8407 = vmatpush1.bf16.msra.mxu0 0
      %8408 = vmatprep.subr.bf16.mxu0 0
      %8409 = vmatpush1.bf16.msra.mxu0 0
      %8410 = vmatprep.subr.bf16.mxu0 0
      %8411 = vmatpush1.bf16.msra.mxu0 0
      %8412 = vmatprep.subr.bf16.mxu0 0
      %8413 = vmatpush1.bf16.msra.mxu0 0
      %8414 = vmatprep.subr.bf16.mxu0 0
      %8415 = vmatpush1.bf16.msra.mxu0 0
      %8416 = vmatprep.subr.bf16.mxu0 0
      %8417 = vmatpush1.bf16.msra.mxu0 0
      %8418 = vmatprep.subr.bf16.mxu0 0
      %8419 = vmatpush1.bf16.msra.mxu0 0
      %8420 = vmatprep.subr.bf16.mxu0 0
      %8421 = vmatpush1.bf16.msra.mxu0 0
      %8422 = vmatprep.subr.bf16.mxu0 0
      %8423 = vmatpush1.bf16.msra.mxu0 0
      %8424 = vmatprep.subr.bf16.mxu0 0
      %8425 = vmatpush1.bf16.msra.mxu0 0
      %8426 = vmatprep.subr.bf16.mxu0 0
      %8427 = vmatpush1.bf16.msra.mxu0 0
      %8428 = vmatprep.subr.bf16.mxu0 0
      %8429 = vmatpush1.bf16.msra.mxu0 0
      %8430 = vmatprep.subr.bf16.mxu0 0
      %8431 = vmatpush1.bf16.msra.mxu0 0
      %8432 = vmatprep.subr.bf16.mxu0 0
      %8433 = vmatpush1.bf16.msra.mxu0 0
      %8434 = vmatprep.subr.bf16.mxu0 0
      %8435 = vmatpush1.bf16.msra.mxu0 0
      %8436 = vmatprep.mubr.bf16.mxu0 0
      %8437 = vmatmul.mubr.bf16.gmra.mrb[0].mxu0 %v8399
      %v8438 = vpop.f32.mrb[0].mxu0
      %v8439 = vadd.f32 0.0, %v8438
      %v8440 = vpop.f32.mrb[0].mxu0
      %v8441 = vpop.f32.mrb[0].mxu0
      %v8442 = vpop.f32.mrb[0].mxu0
      %8443 = vdwg.mxu0
      %8444 = vrot.lane.b32.xlu0 %v1089, 80
      %v8445 = vpop.permute.xlu0 %8444
      %v8447 = vsel %vm2053, %v7911, 0
      %v8450 = vsel %vm2249, %v8445, 0
      %8452 = vmatprep.subr.bf16.mxu0 0
      %8453 = vmatpush1.bf16.msra.mxu0 %v8450
      %8454 = vmatprep.subr.bf16.mxu0 0
      %8455 = vmatpush1.bf16.msra.mxu0 0
      %8456 = vmatprep.subr.bf16.mxu0 0
      %8457 = vmatpush1.bf16.msra.mxu0 0
      %8458 = vmatprep.subr.bf16.mxu0 0
      %8459 = vmatpush1.bf16.msra.mxu0 0
      %8460 = vmatprep.subr.bf16.mxu0 0
      %8461 = vmatpush1.bf16.msra.mxu0 0
      %8462 = vmatprep.subr.bf16.mxu0 0
      %8463 = vmatpush1.bf16.msra.mxu0 0
      %8464 = vmatprep.subr.bf16.mxu0 0
      %8465 = vmatpush1.bf16.msra.mxu0 0
      %8466 = vmatprep.subr.bf16.mxu0 0
      %8467 = vmatpush1.bf16.msra.mxu0 0
      %8468 = vmatprep.subr.bf16.mxu0 0
      %8469 = vmatpush1.bf16.msra.mxu0 0
      %8470 = vmatprep.subr.bf16.mxu0 0
      %8471 = vmatpush1.bf16.msra.mxu0 0
      %8472 = vmatprep.subr.bf16.mxu0 0
      %8473 = vmatpush1.bf16.msra.mxu0 0
      %8474 = vmatprep.subr.bf16.mxu0 0
      %8475 = vmatpush1.bf16.msra.mxu0 0
      %8476 = vmatprep.subr.bf16.mxu0 0
      %8477 = vmatpush1.bf16.msra.mxu0 0
      %8478 = vmatprep.subr.bf16.mxu0 0
      %8479 = vmatpush1.bf16.msra.mxu0 0
      %8480 = vmatprep.subr.bf16.mxu0 0
      %8481 = vmatpush1.bf16.msra.mxu0 0
      %8482 = vmatprep.subr.bf16.mxu0 0
      %8483 = vmatpush1.bf16.msra.mxu0 0
      %8484 = vmatprep.mubr.bf16.mxu0 0
      %8485 = vmatmul.mubr.bf16.gmra.mrb[0].mxu0 %v8447
      %v8486 = vpop.f32.mrb[0].mxu0
      %v8487 = vadd.f32 0.0, %v8486
      %v8488 = vpop.f32.mrb[0].mxu0
      %v8489 = vpop.f32.mrb[0].mxu0
      %v8490 = vpop.f32.mrb[0].mxu0
      %8491 = vdwg.mxu0
      %8492 = vrot.lane.b32.xlu0 %v1090, 80
      %v8493 = vpop.permute.xlu0 %8492
      %v8495 = vsel %vm2053, %v7912, 0
      %v8498 = vsel %vm2249, %v8493, 0
      %8500 = vmatprep.subr.bf16.mxu0 0
      %8501 = vmatpush1.bf16.msra.mxu0 %v8498
      %8502 = vmatprep.subr.bf16.mxu0 0
      %8503 = vmatpush1.bf16.msra.mxu0 0
      %8504 = vmatprep.subr.bf16.mxu0 0
      %8505 = vmatpush1.bf16.msra.mxu0 0
      %8506 = vmatprep.subr.bf16.mxu0 0
      %8507 = vmatpush1.bf16.msra.mxu0 0
      %8508 = vmatprep.subr.bf16.mxu0 0
      %8509 = vmatpush1.bf16.msra.mxu0 0
      %8510 = vmatprep.subr.bf16.mxu0 0
      %8511 = vmatpush1.bf16.msra.mxu0 0
      %8512 = vmatprep.subr.bf16.mxu0 0
      %8513 = vmatpush1.bf16.msra.mxu0 0
      %8514 = vmatprep.subr.bf16.mxu0 0
      %8515 = vmatpush1.bf16.msra.mxu0 0
      %8516 = vmatprep.subr.bf16.mxu0 0
      %8517 = vmatpush1.bf16.msra.mxu0 0
      %8518 = vmatprep.subr.bf16.mxu0 0
      %8519 = vmatpush1.bf16.msra.mxu0 0
      %8520 = vmatprep.subr.bf16.mxu0 0
      %8521 = vmatpush1.bf16.msra.mxu0 0
      %8522 = vmatprep.subr.bf16.mxu0 0
      %8523 = vmatpush1.bf16.msra.mxu0 0
      %8524 = vmatprep.subr.bf16.mxu0 0
      %8525 = vmatpush1.bf16.msra.mxu0 0
      %8526 = vmatprep.subr.bf16.mxu0 0
      %8527 = vmatpush1.bf16.msra.mxu0 0
      %8528 = vmatprep.subr.bf16.mxu0 0
      %8529 = vmatpush1.bf16.msra.mxu0 0
      %8530 = vmatprep.subr.bf16.mxu0 0
      %8531 = vmatpush1.bf16.msra.mxu0 0
      %8532 = vmatprep.mubr.bf16.mxu0 0
      %8533 = vmatmul.mubr.bf16.gmra.mrb[0].mxu0 %v8495
      %v8534 = vpop.f32.mrb[0].mxu0
      %v8535 = vadd.f32 0.0, %v8534
      %v8536 = vpop.f32.mrb[0].mxu0
      %v8537 = vpop.f32.mrb[0].mxu0
      %v8538 = vpop.f32.mrb[0].mxu0
      %8539 = vdwg.mxu0
      %8540 = vrot.lane.b32.xlu0 %v1091, 80
      %v8541 = vpop.permute.xlu0 %8540
      %v8543 = vsel %vm2053, %v7913, 0
      %v8546 = vsel %vm2249, %v8541, 0
      %8548 = vmatprep.subr.bf16.mxu0 0
      %8549 = vmatpush1.bf16.msra.mxu0 %v8546
      %8550 = vmatprep.subr.bf16.mxu0 0
      %8551 = vmatpush1.bf16.msra.mxu0 0
      %8552 = vmatprep.subr.bf16.mxu0 0
      %8553 = vmatpush1.bf16.msra.mxu0 0
      %8554 = vmatprep.subr.bf16.mxu0 0
      %8555 = vmatpush1.bf16.msra.mxu0 0
      %8556 = vmatprep.subr.bf16.mxu0 0
      %8557 = vmatpush1.bf16.msra.mxu0 0
      %8558 = vmatprep.subr.bf16.mxu0 0
      %8559 = vmatpush1.bf16.msra.mxu0 0
      %8560 = vmatprep.subr.bf16.mxu0 0
      %8561 = vmatpush1.bf16.msra.mxu0 0
      %8562 = vmatprep.subr.bf16.mxu0 0
      %8563 = vmatpush1.bf16.msra.mxu0 0
      %8564 = vmatprep.subr.bf16.mxu0 0
      %8565 = vmatpush1.bf16.msra.mxu0 0
      %8566 = vmatprep.subr.bf16.mxu0 0
      %8567 = vmatpush1.bf16.msra.mxu0 0
      %8568 = vmatprep.subr.bf16.mxu0 0
      %8569 = vmatpush1.bf16.msra.mxu0 0
      %8570 = vmatprep.subr.bf16.mxu0 0
      %8571 = vmatpush1.bf16.msra.mxu0 0
      %8572 = vmatprep.subr.bf16.mxu0 0
      %8573 = vmatpush1.bf16.msra.mxu0 0
      %8574 = vmatprep.subr.bf16.mxu0 0
      %8575 = vmatpush1.bf16.msra.mxu0 0
      %8576 = vmatprep.subr.bf16.mxu0 0
      %8577 = vmatpush1.bf16.msra.mxu0 0
      %8578 = vmatprep.subr.bf16.mxu0 0
      %8579 = vmatpush1.bf16.msra.mxu0 0
      %8580 = vmatprep.mubr.bf16.mxu0 0
      %8581 = vmatmul.mubr.bf16.gmra.mrb[0].mxu0 %v8543
      %v8582 = vpop.f32.mrb[0].mxu0
      %v8583 = vadd.f32 0.0, %v8582
      %v8584 = vpop.f32.mrb[0].mxu0
      %v8585 = vpop.f32.mrb[0].mxu0
      %v8586 = vpop.f32.mrb[0].mxu0
      %8587 = vdwg.mxu0
      %8588 = vrot.lane.b32.xlu0 %v1092, 80
      %v8589 = vpop.permute.xlu0 %8588
      %v8591 = vsel %vm2053, %v7914, 0
      %v8594 = vsel %vm2249, %v8589, 0
      %8596 = vmatprep.subr.bf16.mxu0 0
      %8597 = vmatpush1.bf16.msra.mxu0 %v8594
      %8598 = vmatprep.subr.bf16.mxu0 0
      %8599 = vmatpush1.bf16.msra.mxu0 0
      %8600 = vmatprep.subr.bf16.mxu0 0
      %8601 = vmatpush1.bf16.msra.mxu0 0
      %8602 = vmatprep.subr.bf16.mxu0 0
      %8603 = vmatpush1.bf16.msra.mxu0 0
      %8604 = vmatprep.subr.bf16.mxu0 0
      %8605 = vmatpush1.bf16.msra.mxu0 0
      %8606 = vmatprep.subr.bf16.mxu0 0
      %8607 = vmatpush1.bf16.msra.mxu0 0
      %8608 = vmatprep.subr.bf16.mxu0 0
      %8609 = vmatpush1.bf16.msra.mxu0 0
      %8610 = vmatprep.subr.bf16.mxu0 0
      %8611 = vmatpush1.bf16.msra.mxu0 0
      %8612 = vmatprep.subr.bf16.mxu0 0
      %8613 = vmatpush1.bf16.msra.mxu0 0
      %8614 = vmatprep.subr.bf16.mxu0 0
      %8615 = vmatpush1.bf16.msra.mxu0 0
      %8616 = vmatprep.subr.bf16.mxu0 0
      %8617 = vmatpush1.bf16.msra.mxu0 0
      %8618 = vmatprep.subr.bf16.mxu0 0
      %8619 = vmatpush1.bf16.msra.mxu0 0
      %8620 = vmatprep.subr.bf16.mxu0 0
      %8621 = vmatpush1.bf16.msra.mxu0 0
      %8622 = vmatprep.subr.bf16.mxu0 0
      %8623 = vmatpush1.bf16.msra.mxu0 0
      %8624 = vmatprep.subr.bf16.mxu0 0
      %8625 = vmatpush1.bf16.msra.mxu0 0
      %8626 = vmatprep.subr.bf16.mxu0 0
      %8627 = vmatpush1.bf16.msra.mxu0 0
      %8628 = vmatprep.mubr.bf16.mxu0 0
      %8629 = vmatmul.mubr.bf16.gmra.mrb[0].mxu0 %v8591
      %v8630 = vpop.f32.mrb[0].mxu0
      %v8631 = vadd.f32 0.0, %v8630
      %v8632 = vpop.f32.mrb[0].mxu0
      %v8633 = vpop.f32.mrb[0].mxu0
      %v8634 = vpop.f32.mrb[0].mxu0
      %8635 = vdwg.mxu0
      %8636 = vrot.lane.b32.xlu0 %v1093, 80
      %v8637 = vpop.permute.xlu0 %8636
      %v8639 = vsel %vm2053, %v7915, 0
      %v8642 = vsel %vm2249, %v8637, 0
      %8644 = vmatprep.subr.bf16.mxu0 0
      %8645 = vmatpush1.bf16.msra.mxu0 %v8642
      %8646 = vmatprep.subr.bf16.mxu0 0
      %8647 = vmatpush1.bf16.msra.mxu0 0
      %8648 = vmatprep.subr.bf16.mxu0 0
      %8649 = vmatpush1.bf16.msra.mxu0 0
      %8650 = vmatprep.subr.bf16.mxu0 0
      %8651 = vmatpush1.bf16.msra.mxu0 0
      %8652 = vmatprep.subr.bf16.mxu0 0
      %8653 = vmatpush1.bf16.msra.mxu0 0
      %8654 = vmatprep.subr.bf16.mxu0 0
      %8655 = vmatpush1.bf16.msra.mxu0 0
      %8656 = vmatprep.subr.bf16.mxu0 0
      %8657 = vmatpush1.bf16.msra.mxu0 0
      %8658 = vmatprep.subr.bf16.mxu0 0
      %8659 = vmatpush1.bf16.msra.mxu0 0
      %8660 = vmatprep.subr.bf16.mxu0 0
      %8661 = vmatpush1.bf16.msra.mxu0 0
      %8662 = vmatprep.subr.bf16.mxu0 0
      %8663 = vmatpush1.bf16.msra.mxu0 0
      %8664 = vmatprep.subr.bf16.mxu0 0
      %8665 = vmatpush1.bf16.msra.mxu0 0
      %8666 = vmatprep.subr.bf16.mxu0 0
      %8667 = vmatpush1.bf16.msra.mxu0 0
      %8668 = vmatprep.subr.bf16.mxu0 0
      %8669 = vmatpush1.bf16.msra.mxu0 0
      %8670 = vmatprep.subr.bf16.mxu0 0
      %8671 = vmatpush1.bf16.msra.mxu0 0
      %8672 = vmatprep.subr.bf16.mxu0 0
      %8673 = vmatpush1.bf16.msra.mxu0 0
      %8674 = vmatprep.subr.bf16.mxu0 0
      %8675 = vmatpush1.bf16.msra.mxu0 0
      %8676 = vmatprep.mubr.bf16.mxu0 0
      %8677 = vmatmul.mubr.bf16.gmra.mrb[0].mxu0 %v8639
      %v8678 = vpop.f32.mrb[0].mxu0
      %v8679 = vadd.f32 0.0, %v8678
      %v8680 = vpop.f32.mrb[0].mxu0
      %v8681 = vpop.f32.mrb[0].mxu0
      %v8682 = vpop.f32.mrb[0].mxu0
      %8683 = vdwg.mxu0
      %v8684 = vpack.c.bf16 %v8007, %v7959
      %v8685 = vpack.c.bf16 %v8103, %v8055
      %v8686 = vpack.c.bf16 %v8199, %v8151
      %v8687 = vpack.c.bf16 %v8295, %v8247
      %v8688 = vpack.c.bf16 %v8391, %v8343
      %v8689 = vpack.c.bf16 %v8487, %v8439
      %v8690 = vpack.c.bf16 %v8583, %v8535
      %v8691 = vpack.c.bf16 %v8679, %v8631
      %v8694 = vunpack.c.l.b16 %v1202
      %v8695 = vunpack.c.l.b16 %v1203
      %v8696 = vpack.c.b16 %v8695, %v8694
      %v8699 = vsel %vm1286, %v8684, 0
      %v8702 = vsel %vm1286, %v8685, 0
      %v8705 = vsel %vm1286, %v8686, 0
      %v8708 = vsel %vm1286, %v8687, 0
      %v8711 = vsel %vm1286, %v8688, 0
      %v8714 = vsel %vm1286, %v8689, 0
      %v8717 = vsel %vm1286, %v8690, 0
      %v8720 = vsel %vm1286, %v8691, 0
      %8722 = vmatprep.subr.bf16.mxu0 0
      %8723 = vmatpush1.bf16.msra.mxu0 %v8696
      %8724 = vmatprep.subr.bf16.mxu0 0
      %8725 = vmatpush1.bf16.msra.mxu0 0
      %8726 = vmatprep.subr.bf16.mxu0 0
      %8727 = vmatpush1.bf16.msra.mxu0 0
      %8728 = vmatprep.subr.bf16.mxu0 0
      %8729 = vmatpush1.bf16.msra.mxu0 0
      %8730 = vmatprep.subr.bf16.mxu0 0
      %8731 = vmatpush1.bf16.msra.mxu0 0
      %8732 = vmatprep.subr.bf16.mxu0 0
      %8733 = vmatpush1.bf16.msra.mxu0 0
      %8734 = vmatprep.subr.bf16.mxu0 0
      %8735 = vmatpush1.bf16.msra.mxu0 0
      %8736 = vmatprep.subr.bf16.mxu0 0
      %8737 = vmatpush1.bf16.msra.mxu0 0
      %8738 = vmatprep.subr.bf16.mxu0 0
      %8739 = vmatpush1.bf16.msra.mxu0 0
      %8740 = vmatprep.subr.bf16.mxu0 0
      %8741 = vmatpush1.bf16.msra.mxu0 0
      %8742 = vmatprep.subr.bf16.mxu0 0
      %8743 = vmatpush1.bf16.msra.mxu0 0
      %8744 = vmatprep.subr.bf16.mxu0 0
      %8745 = vmatpush1.bf16.msra.mxu0 0
      %8746 = vmatprep.subr.bf16.mxu0 0
      %8747 = vmatpush1.bf16.msra.mxu0 0
      %8748 = vmatprep.subr.bf16.mxu0 0
      %8749 = vmatpush1.bf16.msra.mxu0 0
      %8750 = vmatprep.subr.bf16.mxu0 0
      %8751 = vmatpush1.bf16.msra.mxu0 0
      %8752 = vmatprep.subr.bf16.mxu0 0
      %8753 = vmatpush1.bf16.msra.mxu0 0
      %8754 = vmatprep.mubr.bf16.mxu0 0
      %8755 = vmatmul.mubr.bf16.gmra.mrb[0].mxu0 %v8699
      %v8756 = vpop.f32.mrb[0].mxu0
      %v8757 = vadd.f32 0.0, %v8756
      %v8758 = vpop.f32.mrb[0].mxu0
      %v8759 = vpop.f32.mrb[0].mxu0
      %v8760 = vadd.f32 0.0, %v8759
      %v8761 = vpop.f32.mrb[0].mxu0
      %8762 = vmatprep.mubr.bf16.mxu0 0
      %8763 = vmatmul.mubr.bf16.gmra.mrb[0].mxu0 %v8702
      %v8764 = vpop.f32.mrb[0].mxu0
      %v8765 = vadd.f32 0.0, %v8764
      %v8766 = vpop.f32.mrb[0].mxu0
      %v8767 = vpop.f32.mrb[0].mxu0
      %v8768 = vadd.f32 0.0, %v8767
      %v8769 = vpop.f32.mrb[0].mxu0
      %8770 = vmatprep.mubr.bf16.mxu0 0
      %8771 = vmatmul.mubr.bf16.gmra.mrb[0].mxu0 %v8705
      %v8772 = vpop.f32.mrb[0].mxu0
      %v8773 = vadd.f32 0.0, %v8772
      %v8774 = vpop.f32.mrb[0].mxu0
      %v8775 = vpop.f32.mrb[0].mxu0
      %v8776 = vadd.f32 0.0, %v8775
      %v8777 = vpop.f32.mrb[0].mxu0
      %8778 = vmatprep.mubr.bf16.mxu0 0
      %8779 = vmatmul.mubr.bf16.gmra.mrb[0].mxu0 %v8708
      %v8780 = vpop.f32.mrb[0].mxu0
      %v8781 = vadd.f32 0.0, %v8780
      %v8782 = vpop.f32.mrb[0].mxu0
      %v8783 = vpop.f32.mrb[0].mxu0
      %v8784 = vadd.f32 0.0, %v8783
      %v8785 = vpop.f32.mrb[0].mxu0
      %8786 = vmatprep.mubr.bf16.mxu0 0
      %8787 = vmatmul.mubr.bf16.gmra.mrb[0].mxu0 %v8711
      %v8788 = vpop.f32.mrb[0].mxu0
      %v8789 = vadd.f32 0.0, %v8788
      %v8790 = vpop.f32.mrb[0].mxu0
      %v8791 = vpop.f32.mrb[0].mxu0
      %v8792 = vadd.f32 0.0, %v8791
      %v8793 = vpop.f32.mrb[0].mxu0
      %8794 = vmatprep.mubr.bf16.mxu0 0
      %8795 = vmatmul.mubr.bf16.gmra.mrb[0].mxu0 %v8714
      %v8796 = vpop.f32.mrb[0].mxu0
      %v8797 = vadd.f32 0.0, %v8796
      %v8798 = vpop.f32.mrb[0].mxu0
      %v8799 = vpop.f32.mrb[0].mxu0
      %v8800 = vadd.f32 0.0, %v8799
      %v8801 = vpop.f32.mrb[0].mxu0
      %8802 = vmatprep.mubr.bf16.mxu0 0
      %8803 = vmatmul.mubr.bf16.gmra.mrb[0].mxu0 %v8717
      %v8804 = vpop.f32.mrb[0].mxu0
      %v8805 = vadd.f32 0.0, %v8804
      %v8806 = vpop.f32.mrb[0].mxu0
      %v8807 = vpop.f32.mrb[0].mxu0
      %v8808 = vadd.f32 0.0, %v8807
      %v8809 = vpop.f32.mrb[0].mxu0
      %8810 = vmatprep.mubr.bf16.mxu0 0
      %8811 = vmatmul.mubr.bf16.gmra.mrb[0].mxu0 %v8720
      %v8812 = vpop.f32.mrb[0].mxu0
      %v8813 = vadd.f32 0.0, %v8812
      %v8814 = vpop.f32.mrb[0].mxu0
      %v8815 = vpop.f32.mrb[0].mxu0
      %v8816 = vadd.f32 0.0, %v8815
      %v8817 = vpop.f32.mrb[0].mxu0
      %8818 = vdwg.mxu0
      %v8819 = vadd.f32 %v6908, %v8757
      %v8820 = vadd.f32 %v6909, %v8760
      %v8821 = vadd.f32 %v6910, %v8765
      %v8822 = vadd.f32 %v6911, %v8768
      %v8823 = vadd.f32 %v6912, %v8773
      %v8824 = vadd.f32 %v6913, %v8776
      %v8825 = vadd.f32 %v6914, %v8781
      %v8826 = vadd.f32 %v6915, %v8784
      %v8827 = vadd.f32 %v6916, %v8789
      %v8828 = vadd.f32 %v6917, %v8792
      %v8829 = vadd.f32 %v6918, %v8797
      %v8830 = vadd.f32 %v6919, %v8800
      %v8831 = vadd.f32 %v6920, %v8805
      %v8832 = vadd.f32 %v6921, %v8808
      %v8833 = vadd.f32 %v6922, %v8813
      %v8834 = vadd.f32 %v6923, %v8816
      %v8835 = vld [vmem:[%s8] sm:$0x1]
      %v8837 = vlaneseq
      %v8838 = vshrl.u32 %v8837, 7
      %v8839 = vsub.s32 0, %v8838
      %v8840 = vrot.slane %v8835, %v8839
      %v8842 = vadd.f32 %v8819, %v8840
      %v8843 = vadd.f32 %v8820, %v8840
      %v8844 = vadd.f32 %v8821, %v8840
      %v8845 = vadd.f32 %v8822, %v8840
      %v8846 = vadd.f32 %v8823, %v8840
      %v8847 = vadd.f32 %v8824, %v8840
      %v8848 = vadd.f32 %v8825, %v8840
      %v8849 = vadd.f32 %v8826, %v8840
      %v8850 = vadd.f32 %v8827, %v8840
      %v8851 = vadd.f32 %v8828, %v8840
      %v8852 = vadd.f32 %v8829, %v8840
      %v8853 = vadd.f32 %v8830, %v8840
      %v8854 = vadd.f32 %v8831, %v8840
      %v8855 = vadd.f32 %v8832, %v8840
      %v8856 = vadd.f32 %v8833, %v8840
      %v8857 = vadd.f32 %v8834, %v8840
      %v8858 = vadd.f32 %v8842, %v597
      %v8859 = vadd.f32 %v8843, %v598
      %v8860 = vadd.f32 %v8844, %v599
      %v8861 = vadd.f32 %v8845, %v600
      %v8862 = vadd.f32 %v8846, %v601
      %v8863 = vadd.f32 %v8847, %v602
      %v8864 = vadd.f32 %v8848, %v603
      %v8865 = vadd.f32 %v8849, %v604
      %v8866 = vadd.f32 %v8850, %v605
      %v8867 = vadd.f32 %v8851, %v606
      %v8868 = vadd.f32 %v8852, %v607
      %v8869 = vadd.f32 %v8853, %v608
      %v8870 = vadd.f32 %v8854, %v609
      %v8871 = vadd.f32 %v8855, %v610
      %v8872 = vadd.f32 %v8856, %v611
      %v8873 = vadd.f32 %v8857, %v612
      %v8874 = vld [vmem:[%s9] sm:$0x1]
      %v8875 = vld [vmem:[%s10] sm:$0x1]
      %v8876 = vsel %vm716, %v8858, 0.0
      %8877 = vadd.xlane.f32.xlu0 %v8876
      %v8878 = vpop.xlane.xlu0 %8877
      %v8879 = vsel %vm716, %v8859, 0.0
      %8880 = vadd.xlane.f32.xlu0 %v8879
      %v8881 = vpop.xlane.xlu0 %8880
      %v8882 = vsel %vm716, %v8860, 0.0
      %8883 = vadd.xlane.f32.xlu0 %v8882
      %v8884 = vpop.xlane.xlu0 %8883
      %v8885 = vsel %vm716, %v8861, 0.0
      %8886 = vadd.xlane.f32.xlu0 %v8885
      %v8887 = vpop.xlane.xlu0 %8886
      %v8888 = vsel %vm716, %v8862, 0.0
      %8889 = vadd.xlane.f32.xlu0 %v8888
      %v8890 = vpop.xlane.xlu0 %8889
      %v8891 = vsel %vm716, %v8863, 0.0
      %8892 = vadd.xlane.f32.xlu0 %v8891
      %v8893 = vpop.xlane.xlu0 %8892
      %v8894 = vsel %vm716, %v8864, 0.0
      %8895 = vadd.xlane.f32.xlu0 %v8894
      %v8896 = vpop.xlane.xlu0 %8895
      %v8897 = vsel %vm716, %v8865, 0.0
      %8898 = vadd.xlane.f32.xlu0 %v8897
      %v8899 = vpop.xlane.xlu0 %8898
      %v8900 = vsel %vm716, %v8866, 0.0
      %8901 = vadd.xlane.f32.xlu0 %v8900
      %v8902 = vpop.xlane.xlu0 %8901
      %v8903 = vsel %vm716, %v8867, 0.0
      %8904 = vadd.xlane.f32.xlu0 %v8903
      %v8905 = vpop.xlane.xlu0 %8904
      %v8906 = vsel %vm716, %v8868, 0.0
      %8907 = vadd.xlane.f32.xlu0 %v8906
      %v8908 = vpop.xlane.xlu0 %8907
      %v8909 = vsel %vm716, %v8869, 0.0
      %8910 = vadd.xlane.f32.xlu0 %v8909
      %v8911 = vpop.xlane.xlu0 %8910
      %v8912 = vsel %vm716, %v8870, 0.0
      %8913 = vadd.xlane.f32.xlu0 %v8912
      %v8914 = vpop.xlane.xlu0 %8913
      %v8915 = vsel %vm716, %v8871, 0.0
      %8916 = vadd.xlane.f32.xlu0 %v8915
      %v8917 = vpop.xlane.xlu0 %8916
      %v8918 = vsel %vm716, %v8872, 0.0
      %8919 = vadd.xlane.f32.xlu0 %v8918
      %v8920 = vpop.xlane.xlu0 %8919
      %v8921 = vsel %vm716, %v8873, 0.0
      %8922 = vadd.xlane.f32.xlu0 %v8921
      %v8923 = vpop.xlane.xlu0 %8922
      %v8924 = vrcp.pop 64.0
      %v8925 = vmul.f32 %v8878, %v8924
      %v8926 = vmul.f32 %v8881, %v8924
      %v8927 = vmul.f32 %v8884, %v8924
      %v8928 = vmul.f32 %v8887, %v8924
      %v8929 = vmul.f32 %v8890, %v8924
      %v8930 = vmul.f32 %v8893, %v8924
      %v8931 = vmul.f32 %v8896, %v8924
      %v8932 = vmul.f32 %v8899, %v8924
      %v8933 = vmul.f32 %v8902, %v8924
      %v8934 = vmul.f32 %v8905, %v8924
      %v8935 = vmul.f32 %v8908, %v8924
      %v8936 = vmul.f32 %v8911, %v8924
      %v8937 = vmul.f32 %v8914, %v8924
      %v8938 = vmul.f32 %v8917, %v8924
      %v8939 = vmul.f32 %v8920, %v8924
      %v8940 = vmul.f32 %v8923, %v8924
      %v8941 = vsub.f32 %v8858, %v8925
      %v8942 = vsub.f32 %v8859, %v8926
      %v8943 = vsub.f32 %v8860, %v8927
      %v8944 = vsub.f32 %v8861, %v8928
      %v8945 = vsub.f32 %v8862, %v8929
      %v8946 = vsub.f32 %v8863, %v8930
      %v8947 = vsub.f32 %v8864, %v8931
      %v8948 = vsub.f32 %v8865, %v8932
      %v8949 = vsub.f32 %v8866, %v8933
      %v8950 = vsub.f32 %v8867, %v8934
      %v8951 = vsub.f32 %v8868, %v8935
      %v8952 = vsub.f32 %v8869, %v8936
      %v8953 = vsub.f32 %v8870, %v8937
      %v8954 = vsub.f32 %v8871, %v8938
      %v8955 = vsub.f32 %v8872, %v8939
      %v8956 = vsub.f32 %v8873, %v8940
      %v8957 = vmul.f32 %v8941, %v8941
      %v8958 = vmul.f32 %v8942, %v8942
      %v8959 = vmul.f32 %v8943, %v8943
      %v8960 = vmul.f32 %v8944, %v8944
      %v8961 = vmul.f32 %v8945, %v8945
      %v8962 = vmul.f32 %v8946, %v8946
      %v8963 = vmul.f32 %v8947, %v8947
      %v8964 = vmul.f32 %v8948, %v8948
      %v8965 = vmul.f32 %v8949, %v8949
      %v8966 = vmul.f32 %v8950, %v8950
      %v8967 = vmul.f32 %v8951, %v8951
      %v8968 = vmul.f32 %v8952, %v8952
      %v8969 = vmul.f32 %v8953, %v8953
      %v8970 = vmul.f32 %v8954, %v8954
      %v8971 = vmul.f32 %v8955, %v8955
      %v8972 = vmul.f32 %v8956, %v8956
      %v8973 = vsel %vm716, %v8957, 0.0
      %8974 = vadd.xlane.f32.xlu0 %v8973
      %v8975 = vpop.xlane.xlu0 %8974
      %v8976 = vsel %vm716, %v8958, 0.0
      %8977 = vadd.xlane.f32.xlu0 %v8976
      %v8978 = vpop.xlane.xlu0 %8977
      %v8979 = vsel %vm716, %v8959, 0.0
      %8980 = vadd.xlane.f32.xlu0 %v8979
      %v8981 = vpop.xlane.xlu0 %8980
      %v8982 = vsel %vm716, %v8960, 0.0
      %8983 = vadd.xlane.f32.xlu0 %v8982
      %v8984 = vpop.xlane.xlu0 %8983
      %v8985 = vsel %vm716, %v8961, 0.0
      %8986 = vadd.xlane.f32.xlu0 %v8985
      %v8987 = vpop.xlane.xlu0 %8986
      %v8988 = vsel %vm716, %v8962, 0.0
      %8989 = vadd.xlane.f32.xlu0 %v8988
      %v8990 = vpop.xlane.xlu0 %8989
      %v8991 = vsel %vm716, %v8963, 0.0
      %8992 = vadd.xlane.f32.xlu0 %v8991
      %v8993 = vpop.xlane.xlu0 %8992
      %v8994 = vsel %vm716, %v8964, 0.0
      %8995 = vadd.xlane.f32.xlu0 %v8994
      %v8996 = vpop.xlane.xlu0 %8995
      %v8997 = vsel %vm716, %v8965, 0.0
      %8998 = vadd.xlane.f32.xlu0 %v8997
      %v8999 = vpop.xlane.xlu0 %8998
      %v9000 = vsel %vm716, %v8966, 0.0
      %9001 = vadd.xlane.f32.xlu0 %v9000
      %v9002 = vpop.xlane.xlu0 %9001
      %v9003 = vsel %vm716, %v8967, 0.0
      %9004 = vadd.xlane.f32.xlu0 %v9003
      %v9005 = vpop.xlane.xlu0 %9004
      %v9006 = vsel %vm716, %v8968, 0.0
      %9007 = vadd.xlane.f32.xlu0 %v9006
      %v9008 = vpop.xlane.xlu0 %9007
      %v9009 = vsel %vm716, %v8969, 0.0
      %9010 = vadd.xlane.f32.xlu0 %v9009
      %v9011 = vpop.xlane.xlu0 %9010
      %v9012 = vsel %vm716, %v8970, 0.0
      %9013 = vadd.xlane.f32.xlu0 %v9012
      %v9014 = vpop.xlane.xlu0 %9013
      %v9015 = vsel %vm716, %v8971, 0.0
      %9016 = vadd.xlane.f32.xlu0 %v9015
      %v9017 = vpop.xlane.xlu0 %9016
      %v9018 = vsel %vm716, %v8972, 0.0
      %9019 = vadd.xlane.f32.xlu0 %v9018
      %v9020 = vpop.xlane.xlu0 %9019
      %v9021 = vmul.f32 %v8975, %v8924
      %v9022 = vmul.f32 %v8978, %v8924
      %v9023 = vmul.f32 %v8981, %v8924
      %v9024 = vmul.f32 %v8984, %v8924
      %v9025 = vmul.f32 %v8987, %v8924
      %v9026 = vmul.f32 %v8990, %v8924
      %v9027 = vmul.f32 %v8993, %v8924
      %v9028 = vmul.f32 %v8996, %v8924
      %v9029 = vmul.f32 %v8999, %v8924
      %v9030 = vmul.f32 %v9002, %v8924
      %v9031 = vmul.f32 %v9005, %v8924
      %v9032 = vmul.f32 %v9008, %v8924
      %v9033 = vmul.f32 %v9011, %v8924
      %v9034 = vmul.f32 %v9014, %v8924
      %v9035 = vmul.f32 %v9017, %v8924
      %v9036 = vmul.f32 %v9020, %v8924
      %v9037 = vadd.f32 %v9021, 1e-05
      %v9038 = vadd.f32 %v9022, 1e-05
      %v9039 = vadd.f32 %v9023, 1e-05
      %v9040 = vadd.f32 %v9024, 1e-05
      %v9041 = vadd.f32 %v9025, 1e-05
      %v9042 = vadd.f32 %v9026, 1e-05
      %v9043 = vadd.f32 %v9027, 1e-05
      %v9044 = vadd.f32 %v9028, 1e-05
      %v9045 = vadd.f32 %v9029, 1e-05
      %v9046 = vadd.f32 %v9030, 1e-05
      %v9047 = vadd.f32 %v9031, 1e-05
      %v9048 = vadd.f32 %v9032, 1e-05
      %v9049 = vadd.f32 %v9033, 1e-05
      %v9050 = vadd.f32 %v9034, 1e-05
      %v9051 = vadd.f32 %v9035, 1e-05
      %v9052 = vadd.f32 %v9036, 1e-05
      %v9053 = vrsqrt.pop %v9037
      %v9054 = vrsqrt.pop %v9038
      %v9055 = vrsqrt.pop %v9039
      %v9056 = vrsqrt.pop %v9040
      %v9057 = vrsqrt.pop %v9041
      %v9058 = vrsqrt.pop %v9042
      %v9059 = vrsqrt.pop %v9043
      %v9060 = vrsqrt.pop %v9044
      %v9061 = vrsqrt.pop %v9045
      %v9062 = vrsqrt.pop %v9046
      %v9063 = vrsqrt.pop %v9047
      %v9064 = vrsqrt.pop %v9048
      %v9065 = vrsqrt.pop %v9049
      %v9066 = vrsqrt.pop %v9050
      %v9067 = vrsqrt.pop %v9051
      %v9068 = vrsqrt.pop %v9052
      %v9069 = vmul.f32 %v8941, %v9053
      %v9070 = vmul.f32 %v8942, %v9054
      %v9071 = vmul.f32 %v8943, %v9055
      %v9072 = vmul.f32 %v8944, %v9056
      %v9073 = vmul.f32 %v8945, %v9057
      %v9074 = vmul.f32 %v8946, %v9058
      %v9075 = vmul.f32 %v8947, %v9059
      %v9076 = vmul.f32 %v8948, %v9060
      %v9077 = vmul.f32 %v8949, %v9061
      %v9078 = vmul.f32 %v8950, %v9062
      %v9079 = vmul.f32 %v8951, %v9063
      %v9080 = vmul.f32 %v8952, %v9064
      %v9081 = vmul.f32 %v8953, %v9065
      %v9082 = vmul.f32 %v8954, %v9066
      %v9083 = vmul.f32 %v8955, %v9067
      %v9084 = vmul.f32 %v8956, %v9068
      %v9086 = vlaneseq
      %v9087 = vshrl.u32 %v9086, 7
      %v9088 = vsub.s32 0, %v9087
      %v9089 = vrot.slane %v8874, %v9088
      %v9091 = vmul.f32 %v9069, %v9089
      %v9092 = vmul.f32 %v9070, %v9089
      %v9093 = vmul.f32 %v9071, %v9089
      %v9094 = vmul.f32 %v9072, %v9089
      %v9095 = vmul.f32 %v9073, %v9089
      %v9096 = vmul.f32 %v9074, %v9089
      %v9097 = vmul.f32 %v9075, %v9089
      %v9098 = vmul.f32 %v9076, %v9089
      %v9099 = vmul.f32 %v9077, %v9089
      %v9100 = vmul.f32 %v9078, %v9089
      %v9101 = vmul.f32 %v9079, %v9089
      %v9102 = vmul.f32 %v9080, %v9089
      %v9103 = vmul.f32 %v9081, %v9089
      %v9104 = vmul.f32 %v9082, %v9089
      %v9105 = vmul.f32 %v9083, %v9089
      %v9106 = vmul.f32 %v9084, %v9089
      %v9108 = vlaneseq
      %v9109 = vshrl.u32 %v9108, 7
      %v9110 = vsub.s32 0, %v9109
      %v9111 = vrot.slane %v8875, %v9110
      %v9113 = vadd.f32 %v9091, %v9111
      %v9114 = vadd.f32 %v9092, %v9111
      %v9115 = vadd.f32 %v9093, %v9111
      %v9116 = vadd.f32 %v9094, %v9111
      %v9117 = vadd.f32 %v9095, %v9111
      %v9118 = vadd.f32 %v9096, %v9111
      %v9119 = vadd.f32 %v9097, %v9111
      %v9120 = vadd.f32 %v9098, %v9111
      %v9121 = vadd.f32 %v9099, %v9111
      %v9122 = vadd.f32 %v9100, %v9111
      %v9123 = vadd.f32 %v9101, %v9111
      %v9124 = vadd.f32 %v9102, %v9111
      %v9125 = vadd.f32 %v9103, %v9111
      %v9126 = vadd.f32 %v9104, %v9111
      %v9127 = vadd.f32 %v9105, %v9111
      %v9128 = vadd.f32 %v9106, %v9111
      %v9129 = vpack.c.bf16 %v9114, %v9113
      %v9130 = vpack.c.bf16 %v9116, %v9115
      %v9131 = vpack.c.bf16 %v9118, %v9117
      %v9132 = vpack.c.bf16 %v9120, %v9119
      %v9133 = vpack.c.bf16 %v9122, %v9121
      %v9134 = vpack.c.bf16 %v9124, %v9123
      %v9135 = vpack.c.bf16 %v9126, %v9125
      %v9136 = vpack.c.bf16 %v9128, %v9127
      %v9137 = vld [vmem:[%s11] sm:$0xf]
      %v9138 = vld [vmem:[%s11 + $0x4] sm:$0xf]
      %v9139 = vld [vmem:[%s11 + $0x8] sm:$0xf]
      %v9140 = vld [vmem:[%s11 + $0xc] sm:$0xf]
      %v9141 = vld [vmem:[%s11 + $0x10] sm:$0xf]
      %v9142 = vld [vmem:[%s11 + $0x14] sm:$0xf]
      %v9143 = vld [vmem:[%s11 + $0x18] sm:$0xf]
      %v9144 = vld [vmem:[%s11 + $0x1c] sm:$0xf]
      %v9145 = vld [vmem:[%s12] sm:$0x1]
      %v9147 = vlaneseq
      %v9148 = vshrl.u32 %v9147, 7
      %v9149 = vsub.s32 0, %v9148
      %v9150 = vrot.slane %v9145, %v9149
      %v9160 = vunpack.c.l.b16 %v9137
      %v9161 = vunpack.c.l.b16 %v9138
      %v9162 = vunpack.c.l.b16 %v9139
      %v9163 = vunpack.c.l.b16 %v9140
      %v9164 = vunpack.c.l.b16 %v9141
      %v9165 = vunpack.c.l.b16 %v9142
      %v9166 = vunpack.c.l.b16 %v9143
      %v9167 = vunpack.c.l.b16 %v9144
      %v9168 = vpack.c.b16 %v9161, %v9160
      %v9169 = vpack.c.b16 %v9163, %v9162
      %v9170 = vpack.c.b16 %v9165, %v9164
      %v9171 = vpack.c.b16 %v9167, %v9166
      %v9177 = vsel %vm716, %v9129, 0
      %v9180 = vsel %vm716, %v9130, 0
      %v9183 = vsel %vm716, %v9131, 0
      %v9186 = vsel %vm716, %v9132, 0
      %v9189 = vsel %vm716, %v9133, 0
      %v9192 = vsel %vm716, %v9134, 0
      %v9195 = vsel %vm716, %v9135, 0
      %v9198 = vsel %vm716, %v9136, 0
      %9200 = vmatprep.subr.bf16.mxu0 0
      %9201 = vmatpush1.bf16.msra.mxu0 %v9168
      %9202 = vmatprep.subr.bf16.mxu0 0
      %9203 = vmatpush1.bf16.msra.mxu0 %v9169
      %9204 = vmatprep.subr.bf16.mxu0 0
      %9205 = vmatpush1.bf16.msra.mxu0 %v9170
      %9206 = vmatprep.subr.bf16.mxu0 0
      %9207 = vmatpush1.bf16.msra.mxu0 %v9171
      %9208 = vmatprep.subr.bf16.mxu0 0
      %9209 = vmatpush1.bf16.msra.mxu0 0
      %9210 = vmatprep.subr.bf16.mxu0 0
      %9211 = vmatpush1.bf16.msra.mxu0 0
      %9212 = vmatprep.subr.bf16.mxu0 0
      %9213 = vmatpush1.bf16.msra.mxu0 0
      %9214 = vmatprep.subr.bf16.mxu0 0
      %9215 = vmatpush1.bf16.msra.mxu0 0
      %9216 = vmatprep.subr.bf16.mxu0 0
      %9217 = vmatpush1.bf16.msra.mxu0 0
      %9218 = vmatprep.subr.bf16.mxu0 0
      %9219 = vmatpush1.bf16.msra.mxu0 0
      %9220 = vmatprep.subr.bf16.mxu0 0
      %9221 = vmatpush1.bf16.msra.mxu0 0
      %9222 = vmatprep.subr.bf16.mxu0 0
      %9223 = vmatpush1.bf16.msra.mxu0 0
      %9224 = vmatprep.subr.bf16.mxu0 0
      %9225 = vmatpush1.bf16.msra.mxu0 0
      %9226 = vmatprep.subr.bf16.mxu0 0
      %9227 = vmatpush1.bf16.msra.mxu0 0
      %9228 = vmatprep.subr.bf16.mxu0 0
      %9229 = vmatpush1.bf16.msra.mxu0 0
      %9230 = vmatprep.subr.bf16.mxu0 0
      %9231 = vmatpush1.bf16.msra.mxu0 0
      %9232 = vmatprep.mubr.bf16.mxu0 0
      %9233 = vmatmul.mubr.bf16.gmra.mrb[0].mxu0 %v9177
      %v9234 = vpop.f32.mrb[0].mxu0
      %v9235 = vadd.f32 %v9150, %v9234
      %v9236 = vpop.f32.mrb[0].mxu0
      %v9237 = vpop.f32.mrb[0].mxu0
      %v9238 = vadd.f32 %v9150, %v9237
      %v9239 = vpop.f32.mrb[0].mxu0
      %9240 = vmatprep.mubr.bf16.mxu0 0
      %9241 = vmatmul.mubr.bf16.gmra.mrb[0].mxu0 %v9180
      %v9242 = vpop.f32.mrb[0].mxu0
      %v9243 = vadd.f32 %v9150, %v9242
      %v9244 = vpop.f32.mrb[0].mxu0
      %v9245 = vpop.f32.mrb[0].mxu0
      %v9246 = vadd.f32 %v9150, %v9245
      %v9247 = vpop.f32.mrb[0].mxu0
      %9248 = vmatprep.mubr.bf16.mxu0 0
      %9249 = vmatmul.mubr.bf16.gmra.mrb[0].mxu0 %v9183
      %v9250 = vpop.f32.mrb[0].mxu0
      %v9251 = vadd.f32 %v9150, %v9250
      %v9252 = vpop.f32.mrb[0].mxu0
      %v9253 = vpop.f32.mrb[0].mxu0
      %v9254 = vadd.f32 %v9150, %v9253
      %v9255 = vpop.f32.mrb[0].mxu0
      %9256 = vmatprep.mubr.bf16.mxu0 0
      %9257 = vmatmul.mubr.bf16.gmra.mrb[0].mxu0 %v9186
      %v9258 = vpop.f32.mrb[0].mxu0
      %v9259 = vadd.f32 %v9150, %v9258
      %v9260 = vpop.f32.mrb[0].mxu0
      %v9261 = vpop.f32.mrb[0].mxu0
      %v9262 = vadd.f32 %v9150, %v9261
      %v9263 = vpop.f32.mrb[0].mxu0
      %9264 = vmatprep.mubr.bf16.mxu0 0
      %9265 = vmatmul.mubr.bf16.gmra.mrb[0].mxu0 %v9189
      %v9266 = vpop.f32.mrb[0].mxu0
      %v9267 = vadd.f32 %v9150, %v9266
      %v9268 = vpop.f32.mrb[0].mxu0
      %v9269 = vpop.f32.mrb[0].mxu0
      %v9270 = vadd.f32 %v9150, %v9269
      %v9271 = vpop.f32.mrb[0].mxu0
      %9272 = vmatprep.mubr.bf16.mxu0 0
      %9273 = vmatmul.mubr.bf16.gmra.mrb[0].mxu0 %v9192
      %v9274 = vpop.f32.mrb[0].mxu0
      %v9275 = vadd.f32 %v9150, %v9274
      %v9276 = vpop.f32.mrb[0].mxu0
      %v9277 = vpop.f32.mrb[0].mxu0
      %v9278 = vadd.f32 %v9150, %v9277
      %v9279 = vpop.f32.mrb[0].mxu0
      %9280 = vmatprep.mubr.bf16.mxu0 0
      %9281 = vmatmul.mubr.bf16.gmra.mrb[0].mxu0 %v9195
      %v9282 = vpop.f32.mrb[0].mxu0
      %v9283 = vadd.f32 %v9150, %v9282
      %v9284 = vpop.f32.mrb[0].mxu0
      %v9285 = vpop.f32.mrb[0].mxu0
      %v9286 = vadd.f32 %v9150, %v9285
      %v9287 = vpop.f32.mrb[0].mxu0
      %9288 = vmatprep.mubr.bf16.mxu0 0
      %9289 = vmatmul.mubr.bf16.gmra.mrb[0].mxu0 %v9198
      %v9290 = vpop.f32.mrb[0].mxu0
      %v9291 = vadd.f32 %v9150, %v9290
      %v9292 = vpop.f32.mrb[0].mxu0
      %v9293 = vpop.f32.mrb[0].mxu0
      %v9294 = vadd.f32 %v9150, %v9293
      %v9295 = vpop.f32.mrb[0].mxu0
      %9296 = vdwg.mxu0
      %v9297 = vmax.f32 %v9235, 0.0
      %v9298 = vmax.f32 %v9238, 0.0
      %v9299 = vmax.f32 %v9243, 0.0
      %v9300 = vmax.f32 %v9246, 0.0
      %v9301 = vmax.f32 %v9251, 0.0
      %v9302 = vmax.f32 %v9254, 0.0
      %v9303 = vmax.f32 %v9259, 0.0
      %v9304 = vmax.f32 %v9262, 0.0
      %v9305 = vmax.f32 %v9267, 0.0
      %v9306 = vmax.f32 %v9270, 0.0
      %v9307 = vmax.f32 %v9275, 0.0
      %v9308 = vmax.f32 %v9278, 0.0
      %v9309 = vmax.f32 %v9283, 0.0
      %v9310 = vmax.f32 %v9286, 0.0
      %v9311 = vmax.f32 %v9291, 0.0
      %v9312 = vmax.f32 %v9294, 0.0
      %v9313 = vpack.c.bf16 %v9298, %v9297
      %v9314 = vpack.c.bf16 %v9300, %v9299
      %v9315 = vpack.c.bf16 %v9302, %v9301
      %v9316 = vpack.c.bf16 %v9304, %v9303
      %v9317 = vpack.c.bf16 %v9306, %v9305
      %v9318 = vpack.c.bf16 %v9308, %v9307
      %v9319 = vpack.c.bf16 %v9310, %v9309
      %v9320 = vpack.c.bf16 %v9312, %v9311
      %v9321 = vld [vmem:[%s13] sm:$0xf]
      %v9322 = vld [vmem:[%s13 + $0x4] sm:$0xf]
      %v9323 = vld [vmem:[%s13 + $0x8] sm:$0xf]
      %v9324 = vld [vmem:[%s13 + $0xc] sm:$0xf]
      %v9325 = vld [vmem:[%s13 + $0x10] sm:$0xf]
      %v9326 = vld [vmem:[%s13 + $0x14] sm:$0xf]
      %v9327 = vld [vmem:[%s13 + $0x18] sm:$0xf]
      %v9328 = vld [vmem:[%s13 + $0x1c] sm:$0xf]
      %v9329 = vld [vmem:[%s13 + $0x20] sm:$0xf]
      %v9330 = vld [vmem:[%s13 + $0x24] sm:$0xf]
      %v9331 = vld [vmem:[%s13 + $0x28] sm:$0xf]
      %v9332 = vld [vmem:[%s13 + $0x2c] sm:$0xf]
      %v9333 = vld [vmem:[%s13 + $0x30] sm:$0xf]
      %v9334 = vld [vmem:[%s13 + $0x34] sm:$0xf]
      %v9335 = vld [vmem:[%s13 + $0x38] sm:$0xf]
      %v9336 = vld [vmem:[%s13 + $0x3c] sm:$0xf]
      %v9337 = vld [vmem:[%s14] sm:$0x1]
      %v9339 = vlaneseq
      %v9340 = vshrl.u32 %v9339, 7
      %v9341 = vsub.s32 0, %v9340
      %v9342 = vrot.slane %v9337, %v9341
      %v9360 = vunpack.c.l.b16 %v9321
      %v9361 = vunpack.c.l.b16 %v9322
      %v9362 = vunpack.c.l.b16 %v9323
      %v9363 = vunpack.c.l.b16 %v9324
      %v9364 = vunpack.c.l.b16 %v9325
      %v9365 = vunpack.c.l.b16 %v9326
      %v9366 = vunpack.c.l.b16 %v9327
      %v9367 = vunpack.c.l.b16 %v9328
      %v9368 = vunpack.c.l.b16 %v9329
      %v9369 = vunpack.c.l.b16 %v9330
      %v9370 = vunpack.c.l.b16 %v9331
      %v9371 = vunpack.c.l.b16 %v9332
      %v9372 = vunpack.c.l.b16 %v9333
      %v9373 = vunpack.c.l.b16 %v9334
      %v9374 = vunpack.c.l.b16 %v9335
      %v9375 = vunpack.c.l.b16 %v9336
      %v9376 = vpack.c.b16 %v9361, %v9360
      %v9377 = vpack.c.b16 %v9363, %v9362
      %v9378 = vpack.c.b16 %v9365, %v9364
      %v9379 = vpack.c.b16 %v9367, %v9366
      %v9380 = vpack.c.b16 %v9369, %v9368
      %v9381 = vpack.c.b16 %v9371, %v9370
      %v9382 = vpack.c.b16 %v9373, %v9372
      %v9383 = vpack.c.b16 %v9375, %v9374
      %9392 = vmatprep.subr.bf16.mxu0 0
      %9393 = vmatpush1.bf16.msra.mxu0 %v9376
      %9394 = vmatprep.subr.bf16.mxu0 0
      %9395 = vmatpush1.bf16.msra.mxu0 %v9377
      %9396 = vmatprep.subr.bf16.mxu0 0
      %9397 = vmatpush1.bf16.msra.mxu0 %v9378
      %9398 = vmatprep.subr.bf16.mxu0 0
      %9399 = vmatpush1.bf16.msra.mxu0 %v9379
      %9400 = vmatprep.subr.bf16.mxu0 0
      %9401 = vmatpush1.bf16.msra.mxu0 %v9380
      %9402 = vmatprep.subr.bf16.mxu0 0
      %9403 = vmatpush1.bf16.msra.mxu0 %v9381
      %9404 = vmatprep.subr.bf16.mxu0 0
      %9405 = vmatpush1.bf16.msra.mxu0 %v9382
      %9406 = vmatprep.subr.bf16.mxu0 0
      %9407 = vmatpush1.bf16.msra.mxu0 %v9383
      %9408 = vmatprep.subr.bf16.mxu0 0
      %9409 = vmatpush1.bf16.msra.mxu0 0
      %9410 = vmatprep.subr.bf16.mxu0 0
      %9411 = vmatpush1.bf16.msra.mxu0 0
      %9412 = vmatprep.subr.bf16.mxu0 0
      %9413 = vmatpush1.bf16.msra.mxu0 0
      %9414 = vmatprep.subr.bf16.mxu0 0
      %9415 = vmatpush1.bf16.msra.mxu0 0
      %9416 = vmatprep.subr.bf16.mxu0 0
      %9417 = vmatpush1.bf16.msra.mxu0 0
      %9418 = vmatprep.subr.bf16.mxu0 0
      %9419 = vmatpush1.bf16.msra.mxu0 0
      %9420 = vmatprep.subr.bf16.mxu0 0
      %9421 = vmatpush1.bf16.msra.mxu0 0
      %9422 = vmatprep.subr.bf16.mxu0 0
      %9423 = vmatpush1.bf16.msra.mxu0 0
      %9424 = vmatprep.mubr.bf16.mxu0 0
      %9425 = vmatmul.mubr.bf16.gmra.mrb[0].mxu0 %v9313
      %v9426 = vpop.f32.mrb[0].mxu0
      %v9427 = vadd.f32 %v9342, %v9426
      %v9428 = vpop.f32.mrb[0].mxu0
      %v9429 = vpop.f32.mrb[0].mxu0
      %v9430 = vadd.f32 %v9342, %v9429
      %v9431 = vpop.f32.mrb[0].mxu0
      %9432 = vmatprep.mubr.bf16.mxu0 0
      %9433 = vmatmul.mubr.bf16.gmra.mrb[0].mxu0 %v9314
      %v9434 = vpop.f32.mrb[0].mxu0
      %v9435 = vadd.f32 %v9342, %v9434
      %v9436 = vpop.f32.mrb[0].mxu0
      %v9437 = vpop.f32.mrb[0].mxu0
      %v9438 = vadd.f32 %v9342, %v9437
      %v9439 = vpop.f32.mrb[0].mxu0
      %9440 = vmatprep.mubr.bf16.mxu0 0
      %9441 = vmatmul.mubr.bf16.gmra.mrb[0].mxu0 %v9315
      %v9442 = vpop.f32.mrb[0].mxu0
      %v9443 = vadd.f32 %v9342, %v9442
      %v9444 = vpop.f32.mrb[0].mxu0
      %v9445 = vpop.f32.mrb[0].mxu0
      %v9446 = vadd.f32 %v9342, %v9445
      %v9447 = vpop.f32.mrb[0].mxu0
      %9448 = vmatprep.mubr.bf16.mxu0 0
      %9449 = vmatmul.mubr.bf16.gmra.mrb[0].mxu0 %v9316
      %v9450 = vpop.f32.mrb[0].mxu0
      %v9451 = vadd.f32 %v9342, %v9450
      %v9452 = vpop.f32.mrb[0].mxu0
      %v9453 = vpop.f32.mrb[0].mxu0
      %v9454 = vadd.f32 %v9342, %v9453
      %v9455 = vpop.f32.mrb[0].mxu0
      %9456 = vmatprep.mubr.bf16.mxu0 0
      %9457 = vmatmul.mubr.bf16.gmra.mrb[0].mxu0 %v9317
      %v9458 = vpop.f32.mrb[0].mxu0
      %v9459 = vadd.f32 %v9342, %v9458
      %v9460 = vpop.f32.mrb[0].mxu0
      %v9461 = vpop.f32.mrb[0].mxu0
      %v9462 = vadd.f32 %v9342, %v9461
      %v9463 = vpop.f32.mrb[0].mxu0
      %9464 = vmatprep.mubr.bf16.mxu0 0
      %9465 = vmatmul.mubr.bf16.gmra.mrb[0].mxu0 %v9318
      %v9466 = vpop.f32.mrb[0].mxu0
      %v9467 = vadd.f32 %v9342, %v9466
      %v9468 = vpop.f32.mrb[0].mxu0
      %v9469 = vpop.f32.mrb[0].mxu0
      %v9470 = vadd.f32 %v9342, %v9469
      %v9471 = vpop.f32.mrb[0].mxu0
      %9472 = vmatprep.mubr.bf16.mxu0 0
      %9473 = vmatmul.mubr.bf16.gmra.mrb[0].mxu0 %v9319
      %v9474 = vpop.f32.mrb[0].mxu0
      %v9475 = vadd.f32 %v9342, %v9474
      %v9476 = vpop.f32.mrb[0].mxu0
      %v9477 = vpop.f32.mrb[0].mxu0
      %v9478 = vadd.f32 %v9342, %v9477
      %v9479 = vpop.f32.mrb[0].mxu0
      %9480 = vmatprep.mubr.bf16.mxu0 0
      %9481 = vmatmul.mubr.bf16.gmra.mrb[0].mxu0 %v9320
      %v9482 = vpop.f32.mrb[0].mxu0
      %v9483 = vadd.f32 %v9342, %v9482
      %v9484 = vpop.f32.mrb[0].mxu0
      %v9485 = vpop.f32.mrb[0].mxu0
      %v9486 = vadd.f32 %v9342, %v9485
      %v9487 = vpop.f32.mrb[0].mxu0
      %9488 = vdwg.mxu0
      %v9489 = vadd.f32 %v9427, %v9113
      %v9490 = vadd.f32 %v9430, %v9114
      %v9491 = vadd.f32 %v9435, %v9115
      %v9492 = vadd.f32 %v9438, %v9116
      %v9493 = vadd.f32 %v9443, %v9117
      %v9494 = vadd.f32 %v9446, %v9118
      %v9495 = vadd.f32 %v9451, %v9119
      %v9496 = vadd.f32 %v9454, %v9120
      %v9497 = vadd.f32 %v9459, %v9121
      %v9498 = vadd.f32 %v9462, %v9122
      %v9499 = vadd.f32 %v9467, %v9123
      %v9500 = vadd.f32 %v9470, %v9124
      %v9501 = vadd.f32 %v9475, %v9125
      %v9502 = vadd.f32 %v9478, %v9126
      %v9503 = vadd.f32 %v9483, %v9127
      %v9504 = vadd.f32 %v9486, %v9128
      %v9505 = vld [vmem:[%s15] sm:$0x1]
      %v9506 = vld [vmem:[%s16] sm:$0x1]
      %v9507 = vsel %vm716, %v9489, 0.0
      %9508 = vadd.xlane.f32.xlu0 %v9507
      %v9509 = vpop.xlane.xlu0 %9508
      %v9510 = vsel %vm716, %v9490, 0.0
      %9511 = vadd.xlane.f32.xlu0 %v9510
      %v9512 = vpop.xlane.xlu0 %9511
      %v9513 = vsel %vm716, %v9491, 0.0
      %9514 = vadd.xlane.f32.xlu0 %v9513
      %v9515 = vpop.xlane.xlu0 %9514
      %v9516 = vsel %vm716, %v9492, 0.0
      %9517 = vadd.xlane.f32.xlu0 %v9516
      %v9518 = vpop.xlane.xlu0 %9517
      %v9519 = vsel %vm716, %v9493, 0.0
      %9520 = vadd.xlane.f32.xlu0 %v9519
      %v9521 = vpop.xlane.xlu0 %9520
      %v9522 = vsel %vm716, %v9494, 0.0
      %9523 = vadd.xlane.f32.xlu0 %v9522
      %v9524 = vpop.xlane.xlu0 %9523
      %v9525 = vsel %vm716, %v9495, 0.0
      %9526 = vadd.xlane.f32.xlu0 %v9525
      %v9527 = vpop.xlane.xlu0 %9526
      %v9528 = vsel %vm716, %v9496, 0.0
      %9529 = vadd.xlane.f32.xlu0 %v9528
      %v9530 = vpop.xlane.xlu0 %9529
      %v9531 = vsel %vm716, %v9497, 0.0
      %9532 = vadd.xlane.f32.xlu0 %v9531
      %v9533 = vpop.xlane.xlu0 %9532
      %v9534 = vsel %vm716, %v9498, 0.0
      %9535 = vadd.xlane.f32.xlu0 %v9534
      %v9536 = vpop.xlane.xlu0 %9535
      %v9537 = vsel %vm716, %v9499, 0.0
      %9538 = vadd.xlane.f32.xlu0 %v9537
      %v9539 = vpop.xlane.xlu0 %9538
      %v9540 = vsel %vm716, %v9500, 0.0
      %9541 = vadd.xlane.f32.xlu0 %v9540
      %v9542 = vpop.xlane.xlu0 %9541
      %v9543 = vsel %vm716, %v9501, 0.0
      %9544 = vadd.xlane.f32.xlu0 %v9543
      %v9545 = vpop.xlane.xlu0 %9544
      %v9546 = vsel %vm716, %v9502, 0.0
      %9547 = vadd.xlane.f32.xlu0 %v9546
      %v9548 = vpop.xlane.xlu0 %9547
      %v9549 = vsel %vm716, %v9503, 0.0
      %9550 = vadd.xlane.f32.xlu0 %v9549
      %v9551 = vpop.xlane.xlu0 %9550
      %v9552 = vsel %vm716, %v9504, 0.0
      %9553 = vadd.xlane.f32.xlu0 %v9552
      %v9554 = vpop.xlane.xlu0 %9553
      %v9555 = vmul.f32 %v9509, %v8924
      %v9556 = vmul.f32 %v9512, %v8924
      %v9557 = vmul.f32 %v9515, %v8924
      %v9558 = vmul.f32 %v9518, %v8924
      %v9559 = vmul.f32 %v9521, %v8924
      %v9560 = vmul.f32 %v9524, %v8924
      %v9561 = vmul.f32 %v9527, %v8924
      %v9562 = vmul.f32 %v9530, %v8924
      %v9563 = vmul.f32 %v9533, %v8924
      %v9564 = vmul.f32 %v9536, %v8924
      %v9565 = vmul.f32 %v9539, %v8924
      %v9566 = vmul.f32 %v9542, %v8924
      %v9567 = vmul.f32 %v9545, %v8924
      %v9568 = vmul.f32 %v9548, %v8924
      %v9569 = vmul.f32 %v9551, %v8924
      %v9570 = vmul.f32 %v9554, %v8924
      %v9571 = vsub.f32 %v9489, %v9555
      %v9572 = vsub.f32 %v9490, %v9556
      %v9573 = vsub.f32 %v9491, %v9557
      %v9574 = vsub.f32 %v9492, %v9558
      %v9575 = vsub.f32 %v9493, %v9559
      %v9576 = vsub.f32 %v9494, %v9560
      %v9577 = vsub.f32 %v9495, %v9561
      %v9578 = vsub.f32 %v9496, %v9562
      %v9579 = vsub.f32 %v9497, %v9563
      %v9580 = vsub.f32 %v9498, %v9564
      %v9581 = vsub.f32 %v9499, %v9565
      %v9582 = vsub.f32 %v9500, %v9566
      %v9583 = vsub.f32 %v9501, %v9567
      %v9584 = vsub.f32 %v9502, %v9568
      %v9585 = vsub.f32 %v9503, %v9569
      %v9586 = vsub.f32 %v9504, %v9570
      %v9587 = vmul.f32 %v9571, %v9571
      %v9588 = vmul.f32 %v9572, %v9572
      %v9589 = vmul.f32 %v9573, %v9573
      %v9590 = vmul.f32 %v9574, %v9574
      %v9591 = vmul.f32 %v9575, %v9575
      %v9592 = vmul.f32 %v9576, %v9576
      %v9593 = vmul.f32 %v9577, %v9577
      %v9594 = vmul.f32 %v9578, %v9578
      %v9595 = vmul.f32 %v9579, %v9579
      %v9596 = vmul.f32 %v9580, %v9580
      %v9597 = vmul.f32 %v9581, %v9581
      %v9598 = vmul.f32 %v9582, %v9582
      %v9599 = vmul.f32 %v9583, %v9583
      %v9600 = vmul.f32 %v9584, %v9584
      %v9601 = vmul.f32 %v9585, %v9585
      %v9602 = vmul.f32 %v9586, %v9586
      %v9603 = vsel %vm716, %v9587, 0.0
      %9604 = vadd.xlane.f32.xlu0 %v9603
      %v9605 = vpop.xlane.xlu0 %9604
      %v9606 = vsel %vm716, %v9588, 0.0
      %9607 = vadd.xlane.f32.xlu0 %v9606
      %v9608 = vpop.xlane.xlu0 %9607
      %v9609 = vsel %vm716, %v9589, 0.0
      %9610 = vadd.xlane.f32.xlu0 %v9609
      %v9611 = vpop.xlane.xlu0 %9610
      %v9612 = vsel %vm716, %v9590, 0.0
      %9613 = vadd.xlane.f32.xlu0 %v9612
      %v9614 = vpop.xlane.xlu0 %9613
      %v9615 = vsel %vm716, %v9591, 0.0
      %9616 = vadd.xlane.f32.xlu0 %v9615
      %v9617 = vpop.xlane.xlu0 %9616
      %v9618 = vsel %vm716, %v9592, 0.0
      %9619 = vadd.xlane.f32.xlu0 %v9618
      %v9620 = vpop.xlane.xlu0 %9619
      %v9621 = vsel %vm716, %v9593, 0.0
      %9622 = vadd.xlane.f32.xlu0 %v9621
      %v9623 = vpop.xlane.xlu0 %9622
      %v9624 = vsel %vm716, %v9594, 0.0
      %9625 = vadd.xlane.f32.xlu0 %v9624
      %v9626 = vpop.xlane.xlu0 %9625
      %v9627 = vsel %vm716, %v9595, 0.0
      %9628 = vadd.xlane.f32.xlu0 %v9627
      %v9629 = vpop.xlane.xlu0 %9628
      %v9630 = vsel %vm716, %v9596, 0.0
      %9631 = vadd.xlane.f32.xlu0 %v9630
      %v9632 = vpop.xlane.xlu0 %9631
      %v9633 = vsel %vm716, %v9597, 0.0
      %9634 = vadd.xlane.f32.xlu0 %v9633
      %v9635 = vpop.xlane.xlu0 %9634
      %v9636 = vsel %vm716, %v9598, 0.0
      %9637 = vadd.xlane.f32.xlu0 %v9636
      %v9638 = vpop.xlane.xlu0 %9637
      %v9639 = vsel %vm716, %v9599, 0.0
      %9640 = vadd.xlane.f32.xlu0 %v9639
      %v9641 = vpop.xlane.xlu0 %9640
      %v9642 = vsel %vm716, %v9600, 0.0
      %9643 = vadd.xlane.f32.xlu0 %v9642
      %v9644 = vpop.xlane.xlu0 %9643
      %v9645 = vsel %vm716, %v9601, 0.0
      %9646 = vadd.xlane.f32.xlu0 %v9645
      %v9647 = vpop.xlane.xlu0 %9646
      %v9648 = vsel %vm716, %v9602, 0.0
      %9649 = vadd.xlane.f32.xlu0 %v9648
      %v9650 = vpop.xlane.xlu0 %9649
      %v9651 = vmul.f32 %v9605, %v8924
      %v9652 = vmul.f32 %v9608, %v8924
      %v9653 = vmul.f32 %v9611, %v8924
      %v9654 = vmul.f32 %v9614, %v8924
      %v9655 = vmul.f32 %v9617, %v8924
      %v9656 = vmul.f32 %v9620, %v8924
      %v9657 = vmul.f32 %v9623, %v8924
      %v9658 = vmul.f32 %v9626, %v8924
      %v9659 = vmul.f32 %v9629, %v8924
      %v9660 = vmul.f32 %v9632, %v8924
      %v9661 = vmul.f32 %v9635, %v8924
      %v9662 = vmul.f32 %v9638, %v8924
      %v9663 = vmul.f32 %v9641, %v8924
      %v9664 = vmul.f32 %v9644, %v8924
      %v9665 = vmul.f32 %v9647, %v8924
      %v9666 = vmul.f32 %v9650, %v8924
      %v9667 = vadd.f32 %v9651, 1e-05
      %v9668 = vadd.f32 %v9652, 1e-05
      %v9669 = vadd.f32 %v9653, 1e-05
      %v9670 = vadd.f32 %v9654, 1e-05
      %v9671 = vadd.f32 %v9655, 1e-05
      %v9672 = vadd.f32 %v9656, 1e-05
      %v9673 = vadd.f32 %v9657, 1e-05
      %v9674 = vadd.f32 %v9658, 1e-05
      %v9675 = vadd.f32 %v9659, 1e-05
      %v9676 = vadd.f32 %v9660, 1e-05
      %v9677 = vadd.f32 %v9661, 1e-05
      %v9678 = vadd.f32 %v9662, 1e-05
      %v9679 = vadd.f32 %v9663, 1e-05
      %v9680 = vadd.f32 %v9664, 1e-05
      %v9681 = vadd.f32 %v9665, 1e-05
      %v9682 = vadd.f32 %v9666, 1e-05
      %v9683 = vrsqrt.pop %v9667
      %v9684 = vrsqrt.pop %v9668
      %v9685 = vrsqrt.pop %v9669
      %v9686 = vrsqrt.pop %v9670
      %v9687 = vrsqrt.pop %v9671
      %v9688 = vrsqrt.pop %v9672
      %v9689 = vrsqrt.pop %v9673
      %v9690 = vrsqrt.pop %v9674
      %v9691 = vrsqrt.pop %v9675
      %v9692 = vrsqrt.pop %v9676
      %v9693 = vrsqrt.pop %v9677
      %v9694 = vrsqrt.pop %v9678
      %v9695 = vrsqrt.pop %v9679
      %v9696 = vrsqrt.pop %v9680
      %v9697 = vrsqrt.pop %v9681
      %v9698 = vrsqrt.pop %v9682
      %v9699 = vmul.f32 %v9571, %v9683
      %v9700 = vmul.f32 %v9572, %v9684
      %v9701 = vmul.f32 %v9573, %v9685
      %v9702 = vmul.f32 %v9574, %v9686
      %v9703 = vmul.f32 %v9575, %v9687
      %v9704 = vmul.f32 %v9576, %v9688
      %v9705 = vmul.f32 %v9577, %v9689
      %v9706 = vmul.f32 %v9578, %v9690
      %v9707 = vmul.f32 %v9579, %v9691
      %v9708 = vmul.f32 %v9580, %v9692
      %v9709 = vmul.f32 %v9581, %v9693
      %v9710 = vmul.f32 %v9582, %v9694
      %v9711 = vmul.f32 %v9583, %v9695
      %v9712 = vmul.f32 %v9584, %v9696
      %v9713 = vmul.f32 %v9585, %v9697
      %v9714 = vmul.f32 %v9586, %v9698
      %v9716 = vlaneseq
      %v9717 = vshrl.u32 %v9716, 7
      %v9718 = vsub.s32 0, %v9717
      %v9719 = vrot.slane %v9505, %v9718
      %v9721 = vmul.f32 %v9699, %v9719
      %v9722 = vmul.f32 %v9700, %v9719
      %v9723 = vmul.f32 %v9701, %v9719
      %v9724 = vmul.f32 %v9702, %v9719
      %v9725 = vmul.f32 %v9703, %v9719
      %v9726 = vmul.f32 %v9704, %v9719
      %v9727 = vmul.f32 %v9705, %v9719
      %v9728 = vmul.f32 %v9706, %v9719
      %v9729 = vmul.f32 %v9707, %v9719
      %v9730 = vmul.f32 %v9708, %v9719
      %v9731 = vmul.f32 %v9709, %v9719
      %v9732 = vmul.f32 %v9710, %v9719
      %v9733 = vmul.f32 %v9711, %v9719
      %v9734 = vmul.f32 %v9712, %v9719
      %v9735 = vmul.f32 %v9713, %v9719
      %v9736 = vmul.f32 %v9714, %v9719
      %v9738 = vlaneseq
      %v9739 = vshrl.u32 %v9738, 7
      %v9740 = vsub.s32 0, %v9739
      %v9741 = vrot.slane %v9506, %v9740
      %v9743 = vadd.f32 %v9721, %v9741
      %v9744 = vadd.f32 %v9722, %v9741
      %v9745 = vadd.f32 %v9723, %v9741
      %v9746 = vadd.f32 %v9724, %v9741
      %v9747 = vadd.f32 %v9725, %v9741
      %v9748 = vadd.f32 %v9726, %v9741
      %v9749 = vadd.f32 %v9727, %v9741
      %v9750 = vadd.f32 %v9728, %v9741
      %v9751 = vadd.f32 %v9729, %v9741
      %v9752 = vadd.f32 %v9730, %v9741
      %v9753 = vadd.f32 %v9731, %v9741
      %v9754 = vadd.f32 %v9732, %v9741
      %v9755 = vadd.f32 %v9733, %v9741
      %v9756 = vadd.f32 %v9734, %v9741
      %v9757 = vadd.f32 %v9735, %v9741
      %v9758 = vadd.f32 %v9736, %v9741
      %9759 = vst.msk [vmem:[%s594] sm:$0xff] %vm716, %v9743
      %9760 = vst.msk [vmem:[%s594 + $0x8] sm:$0xff] %vm716, %v9744
      %9761 = vst.msk [vmem:[%s594 + $0x10] sm:$0xff] %vm716, %v9745
      %9762 = vst.msk [vmem:[%s594 + $0x18] sm:$0xff] %vm716, %v9746
      %9763 = vst.msk [vmem:[%s594 + $0x20] sm:$0xff] %vm716, %v9747
      %9764 = vst.msk [vmem:[%s594 + $0x28] sm:$0xff] %vm716, %v9748
      %9765 = vst.msk [vmem:[%s594 + $0x30] sm:$0xff] %vm716, %v9749
      %9766 = vst.msk [vmem:[%s594 + $0x38] sm:$0xff] %vm716, %v9750
      %9767 = vst.msk [vmem:[%s594 + $0x40] sm:$0xff] %vm716, %v9751
      %9768 = vst.msk [vmem:[%s594 + $0x48] sm:$0xff] %vm716, %v9752
      %9769 = vst.msk [vmem:[%s594 + $0x50] sm:$0xff] %vm716, %v9753
      %9770 = vst.msk [vmem:[%s594 + $0x58] sm:$0xff] %vm716, %v9754
      %9771 = vst.msk [vmem:[%s594 + $0x60] sm:$0xff] %vm716, %v9755
      %9772 = vst.msk [vmem:[%s594 + $0x68] sm:$0xff] %vm716, %v9756
      %9773 = vst.msk [vmem:[%s594 + $0x70] sm:$0xff] %vm716, %v9757
      %9774 = vst.msk [vmem:[%s594 + $0x78] sm:$0xff] %vm716, %v9758
      %s9775 = smul.u32 16, %s28
      %p9776 = scmp.lt.s32.totalorder %s9775, 63
      %s9777 = scalar_select %p9776, %s9775, 63
      %s9778 = smul.addr %s9777, 8
      %s9779 = scalar_lea.vmem %s17, %s9778
      // Predicated region
      $region89: #{tpu_custom_call.1} parent=87 // pred_check
        %p9780 = pneg %p418
      $region90: #{tpu_custom_call.1} parent=87 // pred_check_branch
        %9782 = sbr.rel (%p9780) target = $region92
      $region91: #{tpu_custom_call.1} parent=87 // pred_region
        %s9783 = smul.u32 16, %s28
      $region92: #{tpu_custom_call.1} parent=87 // pred_fallthru
        _
    $region88: #{tpu_custom_call.1} parent=5 // pred_fallthru
      _
    %p9784 = scmp.le.s32.totalorder 2, %s23
    // Predicated region
    $region93: #{tpu_custom_call.1} parent=5 // pred_check
      %p9785 = pneg %p9784
    $region94: #{tpu_custom_call.1} parent=5 // pred_check_branch
      %9787 = sbr.rel (%p9785) target = $region96
    $region95: #{tpu_custom_call.1} parent=5 // pred_region
      %s9788 = ssub.s32 %s23, 2
      // Predicated region
      $region97: #{tpu_custom_call.1} parent=95 // pred_check
        %p9789 = pneg %p424
      $region98: #{tpu_custom_call.1} parent=95 // pred_check_branch
        %9791 = sbr.rel (%p9789) target = $region100
      $region99: #{tpu_custom_call.1} parent=95 // pred_region
        %s9792 = smul.u32 16, %s29
        %p9793 = scmp.lt.s32.totalorder %s9792, 63
        %s9794 = scalar_select %p9793, %s9792, 63
        %s9795 = smul.addr %s9794, 8
        %s9796 = scalar_lea.vmem %s17, %s9795
      $region100: #{tpu_custom_call.1} parent=95 // pred_fallthru
        _
    $region96: #{tpu_custom_call.1} parent=5 // pred_fallthru
      _
  $region6: #{tpu_custom_call.1} parent=0 // loop_footer
    %s27 = sadd.s32 1, %s23
  $region7: #{tpu_custom_call.1} parent=0 // loop_footer_branch
    %22 = sbr.rel target = $region3
  $region8: #{tpu_custom_call.1} parent=0 // loop_exit
    _

</llo_original>
